<compile_context>
chip_gen: v5e
topology: v5e:2x2
jax: 0.10.0
libtpu: 0.0.40
codegen_flags: <defaults>
</compile_context>

<pallas_src>
import math

import jax
import jax.numpy as jnp
from jax import lax
from jax.experimental import pallas as pl
from jax.experimental.pallas import tpu as pltpu


def gru_fc_kernel(x_ref, wih_ref, whh_ref, bgi_ref, bhn_ref, wfc_ref, bfc_ref,
                  out_ref, seq_ref, gi_ref):
    T, Bp, H = seq_ref.shape
    L = wih_ref.shape[0]
    two_h = 2 * H

    def gru_layer(l, src_ref):
        # Hoisted input-to-hidden projection (no recurrent dependency): one
        # (T*Bp, H) x (H, 3H) matmul per layer. b_ih and b_hh[:, :2H] are
        # pre-folded into bgi by the wrapper.
        src = src_ref[...].reshape(T * Bp, H)
        gi_all = jnp.dot(src, wih_ref[l],
                         preferred_element_type=jnp.float32) + bgi_ref[l]
        gi_ref[...] = gi_all.reshape(T, Bp, 3 * H)

        # Hoist the (1, H) -> (Bp, H) n-gate bias broadcast out of the time loop.
        b_hn = jnp.broadcast_to(bhn_ref[l], (Bp, H))

        # Peeled t = 0: h0 == 0, so h_prev @ W_hh == 0 and z * h_prev == 0.
        gi0 = gi_ref[0]
        rz0 = jax.nn.sigmoid(gi0[:, :two_h])          # fused r/z sigmoid (one EUP stream)
        n0 = jnp.tanh(gi0[:, two_h:] + rz0[:, :H] * b_hn)
        h_start = (1.0 - rz0[:, H:]) * n0
        seq_ref[0] = h_start

        def step(t, h_prev):
            gi = gi_ref[t]
            # Feed the dot from the weight ref at the use site so Mosaic streams the
            # RHS from VMEM instead of pinning 48 vregs across the unrolled loop.
            gh = jnp.dot(h_prev, whh_ref[l],
                         preferred_element_type=jnp.float32)          # (Bp, 3H), no bias
            rz = jax.nn.sigmoid(gi[:, :two_h] + gh[:, :two_h])
            r = rz[:, :H]
            z = rz[:, H:]
            n = jnp.tanh(gi[:, two_h:] + r * (gh[:, two_h:] + b_hn))
            h_new = (1.0 - z) * n + z * h_prev
            seq_ref[t] = h_new          # becomes the next layer's input at time t
            return h_new

        # T is small and static: full unroll lets the LLO scheduler overlap the next
        # step's MXU push with the current step's EUP/VPU tail.
        return lax.fori_loop(1, T, step, h_start, unroll=True)

    # Layer 0 reads the (time-major, padded) input directly; later layers read the
    # previous layer's outputs from the carried VMEM scratch.
    h = gru_layer(0, x_ref)
    for l in range(1, L):
        h = gru_layer(l, seq_ref)

    # fc on the final hidden state (== out[:, -1, :]); (H -> 1) done as a VPU
    # multiply + lane reduction instead of an N=1 MXU push.
    out_ref[...] = (jnp.sum(h * wfc_ref[...], axis=-1, keepdims=True)
                    + bfc_ref[...])


def gru_fc_forward(x, params):
    w_ih, w_hh, b_ih, b_hh, w_fc, b_fc = params
    L, threeH, H = w_ih.shape
    B, T, I = x.shape

    # Pad batch to a sublane multiple (8); padded rows are independent & discarded.
    Bp = ((B + 7) // 8) * 8

    # Time-major, feature-padded (I -> H, zero columns) input for the kernel.
    x_pad = jnp.zeros((T, Bp, H), jnp.float32)
    x_pad = x_pad.at[:, :B, :I].set(jnp.transpose(x, (1, 0, 2)).astype(jnp.float32))

    # Pre-transpose recurrent weights so the 3H axis is lane-dense in the kernel.
    w_ih_t = jnp.transpose(w_ih, (0, 2, 1))   # (L, H, 3H)
    w_hh_t = jnp.transpose(w_hh, (0, 2, 1))   # (L, H, 3H)

    # Fold b_ih and the r/z slice of b_hh into the hoisted projection's bias; only
    # the n-gate slice of b_hh (multiplied by r) must stay inside the time loop.
    b_gi = b_ih + jnp.concatenate(
        [b_hh[:, :, :2 * H], jnp.zeros((L, 1, H), jnp.float32)], axis=-1)  # (L, 1, 3H)
    b_hn = b_hh[:, :, 2 * H:]                                               # (L, 1, H)

    out = pl.pallas_call(
        gru_fc_kernel,
        out_shape=jax.ShapeDtypeStruct((Bp, 1), jnp.float32),
        grid=(1,),
        in_specs=[
            pl.BlockSpec((T, Bp, H), lambda i: (0, 0, 0)),        # x_pad
            pl.BlockSpec((L, H, threeH), lambda i: (0, 0, 0)),    # w_ih_t
            pl.BlockSpec((L, H, threeH), lambda i: (0, 0, 0)),    # w_hh_t
            pl.BlockSpec((L, 1, threeH), lambda i: (0, 0, 0)),    # b_gi (folded)
            pl.BlockSpec((L, 1, H), lambda i: (0, 0, 0)),         # b_hn
            pl.BlockSpec((1, H), lambda i: (0, 0)),               # w_fc
            pl.BlockSpec((1, 1), lambda i: (0, 0)),               # b_fc
        ],
        out_specs=pl.BlockSpec((Bp, 1), lambda i: (0, 0)),
        scratch_shapes=[
            pltpu.VMEM((T, Bp, H), jnp.float32),        # carried layer sequence
            pltpu.VMEM((T, Bp, threeH), jnp.float32),   # hoisted gi projection
        ],
        compiler_params=pltpu.CompilerParams(
            dimension_semantics=("arbitrary",)),
    )(x_pad, w_ih_t, w_hh_t, b_gi, b_hn, w_fc, b_fc)

    return out[:B]


def gru_fc_reference(x, params):
    """Pure-JAX reference matching torch.nn.GRU + Linear semantics."""
    w_ih, w_hh, b_ih, b_hh, w_fc, b_fc = params
    L, _, H = w_ih.shape
    B, T, I = x.shape
    seq = jnp.zeros((B, T, H), jnp.float32).at[:, :, :I].set(x)
    for l in range(L):
        h = jnp.zeros((B, H), jnp.float32)
        outs = []
        for t in range(T):
            gi = seq[:, t, :] @ w_ih[l].T + b_ih[l, 0]
            gh = h @ w_hh[l].T + b_hh[l, 0]
            r = jax.nn.sigmoid(gi[:, :H] + gh[:, :H])
            z = jax.nn.sigmoid(gi[:, H:2 * H] + gh[:, H:2 * H])
            n = jnp.tanh(gi[:, 2 * H:] + r * gh[:, 2 * H:])
            h = (1.0 - z) * n + z * h
            outs.append(h)
        seq = jnp.stack(outs, axis=1)
    return seq[:, -1, :] @ w_fc.T + b_fc[0]


def init_params(key, input_size, hidden_size, num_layers):
    """Deterministic init mirroring PyTorch GRU/Linear U(-1/sqrt(H), 1/sqrt(H))."""
    H = hidden_size
    bound = 1.0 / math.sqrt(H)
    keys = jax.random.split(key, 4 * num_layers + 2)
    w_ih_l, w_hh_l, b_ih_l, b_hh_l = [], [], [], []
    for l in range(num_layers):
        in_dim = input_size if l == 0 else H
        kwi, kwh, kbi, kbh = keys[4 * l:4 * l + 4]
        w_i = jax.random.uniform(kwi, (3 * H, in_dim), jnp.float32, -bound, bound)
        # zero-pad layer-0 input weights up to H columns (exact semantics)
        w_ih_l.append(jnp.zeros((3 * H, H), jnp.float32).at[:, :in_dim].set(w_i))
        w_hh_l.append(jax.random.uniform(kwh, (3 * H, H), jnp.float32, -bound, bound))
        b_ih_l.append(jax.random.uniform(kbi, (1, 3 * H), jnp.float32, -bound, bound))
        b_hh_l.append(jax.random.uniform(kbh, (1, 3 * H), jnp.float32, -bound, bound))
    w_fc = jax.random.uniform(keys[-2], (1, H), jnp.float32, -bound, bound)
    b_fc = jax.random.uniform(keys[-1], (1, 1), jnp.float32, -bound, bound)
    return (jnp.stack(w_ih_l), jnp.stack(w_hh_l),
            jnp.stack(b_ih_l), jnp.stack(b_hh_l), w_fc, b_fc)


if __name__ == "__main__":
    B, T, I, H, L = 2, 8, 1, 128, 4     # input_size=1, hidden_size=128, num_layers=4
    pkey, xkey = jax.random.split(jax.random.PRNGKey(0))
    params = init_params(pkey, I, H, L)
    x = jax.random.normal(xkey, (B, T, I), jnp.float32)

    out = jax.block_until_ready(gru_fc_forward(x, params))
    ref = gru_fc_reference(x, params)

    assert out.shape == (B, 1)
    assert jnp.allclose(out, ref, atol=1e-4, rtol=1e-4), (out, ref)
    print("KERNEL_OK")
</pallas_src>

<mosaic_0001>
module attributes {stable_mosaic.version = 11 : i64} {
  func.func @gru_fc_kernel(%arg0: i32, %arg1: memref<8x8x128xf32, #tpu.memory_space<vmem>>, %arg2: memref<4x128x384xf32, #tpu.memory_space<vmem>>, %arg3: memref<4x128x384xf32, #tpu.memory_space<vmem>>, %arg4: memref<4x1x384xf32, #tpu.memory_space<vmem>>, %arg5: memref<4x1x128xf32, #tpu.memory_space<vmem>>, %arg6: memref<1x128xf32, #tpu.memory_space<vmem>>, %arg7: memref<1x1xf32, #tpu.memory_space<vmem>>, %arg8: memref<8x1xf32, #tpu.memory_space<vmem>>, %arg9: memref<8x8x128xf32, #tpu.memory_space<vmem>>, %arg10: memref<8x8x384xf32, #tpu.memory_space<vmem>>) attributes {dimension_semantics = [#tpu.dimension_semantics<arbitrary>], iteration_bounds = array<i64: 1>, scalar_prefetch = 0 : i64, scratch_operands = 2 : i64, tpu.core_type = #tpu.core_type<tc>, window_params = [{pipeline_mode = #tpu.pipeline_mode<synchronous>, transform_indices = @transform_0, window_bounds = array<i64: 8, 8, 128>}, {pipeline_mode = #tpu.pipeline_mode<synchronous>, transform_indices = @transform_1, window_bounds = array<i64: 4, 128, 384>}, {pipeline_mode = #tpu.pipeline_mode<synchronous>, transform_indices = @transform_2, window_bounds = array<i64: 4, 128, 384>}, {pipeline_mode = #tpu.pipeline_mode<synchronous>, transform_indices = @transform_3, window_bounds = array<i64: 4, 1, 384>}, {pipeline_mode = #tpu.pipeline_mode<synchronous>, transform_indices = @transform_4, window_bounds = array<i64: 4, 1, 128>}, {pipeline_mode = #tpu.pipeline_mode<synchronous>, transform_indices = @transform_5, window_bounds = array<i64: 1, 128>}, {pipeline_mode = #tpu.pipeline_mode<synchronous>, transform_indices = @transform_6, window_bounds = array<i64: 1, 1>}, {pipeline_mode = #tpu.pipeline_mode<synchronous>, transform_indices = @transform_7, window_bounds = array<i64: 8, 1>}]} {
    %c0 = arith.constant 0 : index
    %c0_0 = arith.constant 0 : index
    %c0_1 = arith.constant 0 : index
    %0 = vector.load %arg1[%c0, %c0_0, %c0_1] : memref<8x8x128xf32, #tpu.memory_space<vmem>>, vector<8x8x128xf32>
    %1 = vector.shape_cast %0 : vector<8x8x128xf32> to vector<64x128xf32>
    %c0_2 = arith.constant 0 : index
    %c0_3 = arith.constant 0 : index
    %c0_4 = arith.constant 0 : index
    %2 = vector.load %arg2[%c0_2, %c0_3, %c0_4] : memref<4x128x384xf32, #tpu.memory_space<vmem>>, vector<1x128x384xf32>
    %3 = vector.shape_cast %2 : vector<1x128x384xf32> to vector<128x384xf32>
    %cst = arith.constant dense<0.000000e+00> : vector<64x384xf32>
    %4 = tpu.matmul %1, %3, %cst {dimension_numbers = #tpu.dot_dimension_numbers<[1], [0], [0], [1], [0, 0, 1, 1], [], []>} : vector<64x128xf32>, vector<128x384xf32>, vector<64x384xf32> -> vector<64x384xf32>
    %c0_5 = arith.constant 0 : index
    %c0_6 = arith.constant 0 : index
    %c0_7 = arith.constant 0 : index
    %5 = vector.load %arg4[%c0_5, %c0_6, %c0_7] : memref<4x1x384xf32, #tpu.memory_space<vmem>>, vector<1x1x384xf32>
    %6 = vector.shape_cast %5 : vector<1x1x384xf32> to vector<1x384xf32>
    %7 = vector.broadcast %6 : vector<1x384xf32> to vector<64x384xf32>
    %8 = arith.addf %4, %7 : vector<64x384xf32>
    %9 = vector.shape_cast %8 : vector<64x384xf32> to vector<8x8x384xf32>
    %c0_8 = arith.constant 0 : index
    %c0_9 = arith.constant 0 : index
    %c0_10 = arith.constant 0 : index
    %10 = vector.load %arg10[%c0_8, %c0_9, %c0_10] : memref<8x8x384xf32, #tpu.memory_space<vmem>>, vector<8x8x384xf32>
    tpu.vector_store %arg10[%c0_8, %c0_9, %c0_10], %9 {strides = array<i32>} : memref<8x8x384xf32, #tpu.memory_space<vmem>>, vector<8x8x384xf32>,
    %c0_11 = arith.constant 0 : index
    %c0_12 = arith.constant 0 : index
    %c0_13 = arith.constant 0 : index
    %11 = vector.load %arg5[%c0_11, %c0_12, %c0_13] : memref<4x1x128xf32, #tpu.memory_space<vmem>>, vector<1x1x128xf32>
    %12 = vector.shape_cast %11 : vector<1x1x128xf32> to vector<1x128xf32>
    %13 = vector.shape_cast %12 : vector<1x128xf32> to vector<1x128xf32>
    %14 = vector.broadcast %13 : vector<1x128xf32> to vector<8x128xf32>
    %c0_14 = arith.constant 0 : index
    %c0_15 = arith.constant 0 : index
    %c0_16 = arith.constant 0 : index
    %15 = vector.load %arg10[%c0_14, %c0_15, %c0_16] : memref<8x8x384xf32, #tpu.memory_space<vmem>>, vector<1x8x384xf32>
    %16 = vector.shape_cast %15 : vector<1x8x384xf32> to vector<8x384xf32>
    %17 = vector.extract_strided_slice %16 {offsets = [0, 0], sizes = [8, 256], strides = [1, 1]} : vector<8x384xf32> to vector<8x256xf32>
    %18 = arith.negf %17 : vector<8x256xf32>
    %19 = math.exp %18 : vector<8x256xf32>
    %cst_17 = arith.constant 1.000000e+00 : f32
    %20 = vector.broadcast %cst_17 : f32 to vector<8x256xf32>
    %21 = arith.addf %20, %19 : vector<8x256xf32>
    %22 = arith.divf %20, %21 : vector<8x256xf32>
    %23 = vector.extract_strided_slice %16 {offsets = [0, 256], sizes = [8, 128], strides = [1, 1]} : vector<8x384xf32> to vector<8x128xf32>
    %24 = vector.extract_strided_slice %22 {offsets = [0, 0], sizes = [8, 128], strides = [1, 1]} : vector<8x256xf32> to vector<8x128xf32>
    %25 = arith.mulf %24, %14 : vector<8x128xf32>
    %26 = arith.addf %23, %25 : vector<8x128xf32>
    %27 = math.tanh %26 : vector<8x128xf32>
    %28 = vector.extract_strided_slice %22 {offsets = [0, 128], sizes = [8, 128], strides = [1, 1]} : vector<8x256xf32> to vector<8x128xf32>
    %cst_18 = arith.constant 1.000000e+00 : f32
    %29 = vector.broadcast %cst_18 : f32 to vector<8x128xf32>
    %30 = arith.subf %29, %28 : vector<8x128xf32>
    %31 = arith.mulf %30, %27 : vector<8x128xf32>
    %c0_19 = arith.constant 0 : index
    %c0_20 = arith.constant 0 : index
    %c0_21 = arith.constant 0 : index
    %32 = vector.load %arg9[%c0_19, %c0_20, %c0_21] : memref<8x8x128xf32, #tpu.memory_space<vmem>>, vector<1x8x128xf32>
    %33 = vector.shape_cast %32 : vector<1x8x128xf32> to vector<8x128xf32>
    %34 = vector.shape_cast %31 : vector<8x128xf32> to vector<1x8x128xf32>
    tpu.vector_store %arg9[%c0_19, %c0_20, %c0_21], %34 {strides = array<i32>} : memref<8x8x128xf32, #tpu.memory_space<vmem>>, vector<1x8x128xf32>,
    %c1_i32 = arith.constant 1 : i32
    %35 = arith.index_cast %c1_i32 : i32 to index
    %c0_22 = arith.constant 0 : index
    %c0_23 = arith.constant 0 : index
    %36 = vector.load %arg10[%35, %c0_22, %c0_23] : memref<8x8x384xf32, #tpu.memory_space<vmem>>, vector<1x8x384xf32>
    %37 = vector.shape_cast %36 : vector<1x8x384xf32> to vector<8x384xf32>
    %c0_24 = arith.constant 0 : index
    %c0_25 = arith.constant 0 : index
    %c0_26 = arith.constant 0 : index
    %38 = vector.load %arg3[%c0_24, %c0_25, %c0_26] : memref<4x128x384xf32, #tpu.memory_space<vmem>>, vector<1x128x384xf32>
    %39 = vector.shape_cast %38 : vector<1x128x384xf32> to vector<128x384xf32>
    %cst_27 = arith.constant dense<0.000000e+00> : vector<8x384xf32>
    %40 = tpu.matmul %31, %39, %cst_27 {dimension_numbers = #tpu.dot_dimension_numbers<[1], [0], [0], [1], [0, 0, 1, 1], [], []>} : vector<8x128xf32>, vector<128x384xf32>, vector<8x384xf32> -> vector<8x384xf32>
    %41 = vector.extract_strided_slice %37 {offsets = [0, 0], sizes = [8, 256], strides = [1, 1]} : vector<8x384xf32> to vector<8x256xf32>
    %42 = vector.extract_strided_slice %40 {offsets = [0, 0], sizes = [8, 256], strides = [1, 1]} : vector<8x384xf32> to vector<8x256xf32>
    %43 = arith.addf %41, %42 : vector<8x256xf32>
    %44 = arith.negf %43 : vector<8x256xf32>
    %45 = math.exp %44 : vector<8x256xf32>
    %cst_28 = arith.constant 1.000000e+00 : f32
    %46 = vector.broadcast %cst_28 : f32 to vector<8x256xf32>
    %47 = arith.addf %46, %45 : vector<8x256xf32>
    %48 = arith.divf %46, %47 : vector<8x256xf32>
    %49 = vector.extract_strided_slice %48 {offsets = [0, 0], sizes = [8, 128], strides = [1, 1]} : vector<8x256xf32> to vector<8x128xf32>
    %50 = vector.extract_strided_slice %48 {offsets = [0, 128], sizes = [8, 128], strides = [1, 1]} : vector<8x256xf32> to vector<8x128xf32>
    %51 = vector.extract_strided_slice %37 {offsets = [0, 256], sizes = [8, 128], strides = [1, 1]} : vector<8x384xf32> to vector<8x128xf32>
    %52 = vector.extract_strided_slice %40 {offsets = [0, 256], sizes = [8, 128], strides = [1, 1]} : vector<8x384xf32> to vector<8x128xf32>
    %53 = arith.addf %52, %14 : vector<8x128xf32>
    %54 = arith.mulf %49, %53 : vector<8x128xf32>
    %55 = arith.addf %51, %54 : vector<8x128xf32>
    %56 = math.tanh %55 : vector<8x128xf32>
    %cst_29 = arith.constant 1.000000e+00 : f32
    %57 = vector.broadcast %cst_29 : f32 to vector<8x128xf32>
    %58 = arith.subf %57, %50 : vector<8x128xf32>
    %59 = arith.mulf %58, %56 : vector<8x128xf32>
    %60 = arith.mulf %50, %31 : vector<8x128xf32>
    %61 = arith.addf %59, %60 : vector<8x128xf32>
    %62 = arith.index_cast %c1_i32 : i32 to index
    %c0_30 = arith.constant 0 : index
    %c0_31 = arith.constant 0 : index
    %63 = vector.load %arg9[%62, %c0_30, %c0_31] : memref<8x8x128xf32, #tpu.memory_space<vmem>>, vector<1x8x128xf32>
    %64 = vector.shape_cast %63 : vector<1x8x128xf32> to vector<8x128xf32>
    %65 = vector.shape_cast %61 : vector<8x128xf32> to vector<1x8x128xf32>
    tpu.vector_store %arg9[%62, %c0_30, %c0_31], %65 {strides = array<i32>} : memref<8x8x128xf32, #tpu.memory_space<vmem>>, vector<1x8x128xf32>,
    %c2_i32 = arith.constant 2 : i32
    %66 = arith.index_cast %c2_i32 : i32 to index
    %c0_32 = arith.constant 0 : index
    %c0_33 = arith.constant 0 : index
    %67 = vector.load %arg10[%66, %c0_32, %c0_33] : memref<8x8x384xf32, #tpu.memory_space<vmem>>, vector<1x8x384xf32>
    %68 = vector.shape_cast %67 : vector<1x8x384xf32> to vector<8x384xf32>
    %c0_34 = arith.constant 0 : index
    %c0_35 = arith.constant 0 : index
    %c0_36 = arith.constant 0 : index
    %69 = vector.load %arg3[%c0_34, %c0_35, %c0_36] : memref<4x128x384xf32, #tpu.memory_space<vmem>>, vector<1x128x384xf32>
    %70 = vector.shape_cast %69 : vector<1x128x384xf32> to vector<128x384xf32>
    %cst_37 = arith.constant dense<0.000000e+00> : vector<8x384xf32>
    %71 = tpu.matmul %61, %70, %cst_37 {dimension_numbers = #tpu.dot_dimension_numbers<[1], [0], [0], [1], [0, 0, 1, 1], [], []>} : vector<8x128xf32>, vector<128x384xf32>, vector<8x384xf32> -> vector<8x384xf32>
    %72 = vector.extract_strided_slice %68 {offsets = [0, 0], sizes = [8, 256], strides = [1, 1]} : vector<8x384xf32> to vector<8x256xf32>
    %73 = vector.extract_strided_slice %71 {offsets = [0, 0], sizes = [8, 256], strides = [1, 1]} : vector<8x384xf32> to vector<8x256xf32>
    %74 = arith.addf %72, %73 : vector<8x256xf32>
    %75 = arith.negf %74 : vector<8x256xf32>
    %76 = math.exp %75 : vector<8x256xf32>
    %cst_38 = arith.constant 1.000000e+00 : f32
    %77 = vector.broadcast %cst_38 : f32 to vector<8x256xf32>
    %78 = arith.addf %77, %76 : vector<8x256xf32>
    %79 = arith.divf %77, %78 : vector<8x256xf32>
    %80 = vector.extract_strided_slice %79 {offsets = [0, 0], sizes = [8, 128], strides = [1, 1]} : vector<8x256xf32> to vector<8x128xf32>
    %81 = vector.extract_strided_slice %79 {offsets = [0, 128], sizes = [8, 128], strides = [1, 1]} : vector<8x256xf32> to vector<8x128xf32>
    %82 = vector.extract_strided_slice %68 {offsets = [0, 256], sizes = [8, 128], strides = [1, 1]} : vector<8x384xf32> to vector<8x128xf32>
    %83 = vector.extract_strided_slice %71 {offsets = [0, 256], sizes = [8, 128], strides = [1, 1]} : vector<8x384xf32> to vector<8x128xf32>
    %84 = arith.addf %83, %14 : vector<8x128xf32>
    %85 = arith.mulf %80, %84 : vector<8x128xf32>
    %86 = arith.addf %82, %85 : vector<8x128xf32>
    %87 = math.tanh %86 : vector<8x128xf32>
    %cst_39 = arith.constant 1.000000e+00 : f32
    %88 = vector.broadcast %cst_39 : f32 to vector<8x128xf32>
    %89 = arith.subf %88, %81 : vector<8x128xf32>
    %90 = arith.mulf %89, %87 : vector<8x128xf32>
    %91 = arith.mulf %81, %61 : vector<8x128xf32>
    %92 = arith.addf %90, %91 : vector<8x128xf32>
    %93 = arith.index_cast %c2_i32 : i32 to index
    %c0_40 = arith.constant 0 : index
    %c0_41 = arith.constant 0 : index
    %94 = vector.load %arg9[%93, %c0_40, %c0_41] : memref<8x8x128xf32, #tpu.memory_space<vmem>>, vector<1x8x128xf32>
    %95 = vector.shape_cast %94 : vector<1x8x128xf32> to vector<8x128xf32>
    %96 = vector.shape_cast %92 : vector<8x128xf32> to vector<1x8x128xf32>
    tpu.vector_store %arg9[%93, %c0_40, %c0_41], %96 {strides = array<i32>} : memref<8x8x128xf32, #tpu.memory_space<vmem>>, vector<1x8x128xf32>,
    %c3_i32 = arith.constant 3 : i32
    %97 = arith.index_cast %c3_i32 : i32 to index
    %c0_42 = arith.constant 0 : index
    %c0_43 = arith.constant 0 : index
    %98 = vector.load %arg10[%97, %c0_42, %c0_43] : memref<8x8x384xf32, #tpu.memory_space<vmem>>, vector<1x8x384xf32>
    %99 = vector.shape_cast %98 : vector<1x8x384xf32> to vector<8x384xf32>
    %c0_44 = arith.constant 0 : index
    %c0_45 = arith.constant 0 : index
    %c0_46 = arith.constant 0 : index
    %100 = vector.load %arg3[%c0_44, %c0_45, %c0_46] : memref<4x128x384xf32, #tpu.memory_space<vmem>>, vector<1x128x384xf32>
    %101 = vector.shape_cast %100 : vector<1x128x384xf32> to vector<128x384xf32>
    %cst_47 = arith.constant dense<0.000000e+00> : vector<8x384xf32>
    %102 = tpu.matmul %92, %101, %cst_47 {dimension_numbers = #tpu.dot_dimension_numbers<[1], [0], [0], [1], [0, 0, 1, 1], [], []>} : vector<8x128xf32>, vector<128x384xf32>, vector<8x384xf32> -> vector<8x384xf32>
    %103 = vector.extract_strided_slice %99 {offsets = [0, 0], sizes = [8, 256], strides = [1, 1]} : vector<8x384xf32> to vector<8x256xf32>
    %104 = vector.extract_strided_slice %102 {offsets = [0, 0], sizes = [8, 256], strides = [1, 1]} : vector<8x384xf32> to vector<8x256xf32>
    %105 = arith.addf %103, %104 : vector<8x256xf32>
    %106 = arith.negf %105 : vector<8x256xf32>
    %107 = math.exp %106 : vector<8x256xf32>
    %cst_48 = arith.constant 1.000000e+00 : f32
    %108 = vector.broadcast %cst_48 : f32 to vector<8x256xf32>
    %109 = arith.addf %108, %107 : vector<8x256xf32>
    %110 = arith.divf %108, %109 : vector<8x256xf32>
    %111 = vector.extract_strided_slice %110 {offsets = [0, 0], sizes = [8, 128], strides = [1, 1]} : vector<8x256xf32> to vector<8x128xf32>
    %112 = vector.extract_strided_slice %110 {offsets = [0, 128], sizes = [8, 128], strides = [1, 1]} : vector<8x256xf32> to vector<8x128xf32>
    %113 = vector.extract_strided_slice %99 {offsets = [0, 256], sizes = [8, 128], strides = [1, 1]} : vector<8x384xf32> to vector<8x128xf32>
    %114 = vector.extract_strided_slice %102 {offsets = [0, 256], sizes = [8, 128], strides = [1, 1]} : vector<8x384xf32> to vector<8x128xf32>
    %115 = arith.addf %114, %14 : vector<8x128xf32>
    %116 = arith.mulf %111, %115 : vector<8x128xf32>
    %117 = arith.addf %113, %116 : vector<8x128xf32>
    %118 = math.tanh %117 : vector<8x128xf32>
    %cst_49 = arith.constant 1.000000e+00 : f32
    %119 = vector.broadcast %cst_49 : f32 to vector<8x128xf32>
    %120 = arith.subf %119, %112 : vector<8x128xf32>
    %121 = arith.mulf %120, %118 : vector<8x128xf32>
    %122 = arith.mulf %112, %92 : vector<8x128xf32>
    %123 = arith.addf %121, %122 : vector<8x128xf32>
    %124 = arith.index_cast %c3_i32 : i32 to index
    %c0_50 = arith.constant 0 : index
    %c0_51 = arith.constant 0 : index
    %125 = vector.load %arg9[%124, %c0_50, %c0_51] : memref<8x8x128xf32, #tpu.memory_space<vmem>>, vector<1x8x128xf32>
    %126 = vector.shape_cast %125 : vector<1x8x128xf32> to vector<8x128xf32>
    %127 = vector.shape_cast %123 : vector<8x128xf32> to vector<1x8x128xf32>
    tpu.vector_store %arg9[%124, %c0_50, %c0_51], %127 {strides = array<i32>} : memref<8x8x128xf32, #tpu.memory_space<vmem>>, vector<1x8x128xf32>,
    %c4_i32 = arith.constant 4 : i32
    %128 = arith.index_cast %c4_i32 : i32 to index
    %c0_52 = arith.constant 0 : index
    %c0_53 = arith.constant 0 : index
    %129 = vector.load %arg10[%128, %c0_52, %c0_53] : memref<8x8x384xf32, #tpu.memory_space<vmem>>, vector<1x8x384xf32>
    %130 = vector.shape_cast %129 : vector<1x8x384xf32> to vector<8x384xf32>
    %c0_54 = arith.constant 0 : index
    %c0_55 = arith.constant 0 : index
    %c0_56 = arith.constant 0 : index
    %131 = vector.load %arg3[%c0_54, %c0_55, %c0_56] : memref<4x128x384xf32, #tpu.memory_space<vmem>>, vector<1x128x384xf32>
    %132 = vector.shape_cast %131 : vector<1x128x384xf32> to vector<128x384xf32>
    %cst_57 = arith.constant dense<0.000000e+00> : vector<8x384xf32>
    %133 = tpu.matmul %123, %132, %cst_57 {dimension_numbers = #tpu.dot_dimension_numbers<[1], [0], [0], [1], [0, 0, 1, 1], [], []>} : vector<8x128xf32>, vector<128x384xf32>, vector<8x384xf32> -> vector<8x384xf32>
    %134 = vector.extract_strided_slice %130 {offsets = [0, 0], sizes = [8, 256], strides = [1, 1]} : vector<8x384xf32> to vector<8x256xf32>
    %135 = vector.extract_strided_slice %133 {offsets = [0, 0], sizes = [8, 256], strides = [1, 1]} : vector<8x384xf32> to vector<8x256xf32>
    %136 = arith.addf %134, %135 : vector<8x256xf32>
    %137 = arith.negf %136 : vector<8x256xf32>
    %138 = math.exp %137 : vector<8x256xf32>
    %cst_58 = arith.constant 1.000000e+00 : f32
    %139 = vector.broadcast %cst_58 : f32 to vector<8x256xf32>
    %140 = arith.addf %139, %138 : vector<8x256xf32>
    %141 = arith.divf %139, %140 : vector<8x256xf32>
    %142 = vector.extract_strided_slice %141 {offsets = [0, 0], sizes = [8, 128], strides = [1, 1]} : vector<8x256xf32> to vector<8x128xf32>
    %143 = vector.extract_strided_slice %141 {offsets = [0, 128], sizes = [8, 128], strides = [1, 1]} : vector<8x256xf32> to vector<8x128xf32>
    %144 = vector.extract_strided_slice %130 {offsets = [0, 256], sizes = [8, 128], strides = [1, 1]} : vector<8x384xf32> to vector<8x128xf32>
    %145 = vector.extract_strided_slice %133 {offsets = [0, 256], sizes = [8, 128], strides = [1, 1]} : vector<8x384xf32> to vector<8x128xf32>
    %146 = arith.addf %145, %14 : vector<8x128xf32>
    %147 = arith.mulf %142, %146 : vector<8x128xf32>
    %148 = arith.addf %144, %147 : vector<8x128xf32>
    %149 = math.tanh %148 : vector<8x128xf32>
    %cst_59 = arith.constant 1.000000e+00 : f32
    %150 = vector.broadcast %cst_59 : f32 to vector<8x128xf32>
    %151 = arith.subf %150, %143 : vector<8x128xf32>
    %152 = arith.mulf %151, %149 : vector<8x128xf32>
    %153 = arith.mulf %143, %123 : vector<8x128xf32>
    %154 = arith.addf %152, %153 : vector<8x128xf32>
    %155 = arith.index_cast %c4_i32 : i32 to index
    %c0_60 = arith.constant 0 : index
    %c0_61 = arith.constant 0 : index
    %156 = vector.load %arg9[%155, %c0_60, %c0_61] : memref<8x8x128xf32, #tpu.memory_space<vmem>>, vector<1x8x128xf32>
    %157 = vector.shape_cast %156 : vector<1x8x128xf32> to vector<8x128xf32>
    %158 = vector.shape_cast %154 : vector<8x128xf32> to vector<1x8x128xf32>
    tpu.vector_store %arg9[%155, %c0_60, %c0_61], %158 {strides = array<i32>} : memref<8x8x128xf32, #tpu.memory_space<vmem>>, vector<1x8x128xf32>,
    %c5_i32 = arith.constant 5 : i32
    %159 = arith.index_cast %c5_i32 : i32 to index
    %c0_62 = arith.constant 0 : index
    %c0_63 = arith.constant 0 : index
    %160 = vector.load %arg10[%159, %c0_62, %c0_63] : memref<8x8x384xf32, #tpu.memory_space<vmem>>, vector<1x8x384xf32>
    %161 = vector.shape_cast %160 : vector<1x8x384xf32> to vector<8x384xf32>
    %c0_64 = arith.constant 0 : index
    %c0_65 = arith.constant 0 : index
    %c0_66 = arith.constant 0 : index
    %162 = vector.load %arg3[%c0_64, %c0_65, %c0_66] : memref<4x128x384xf32, #tpu.memory_space<vmem>>, vector<1x128x384xf32>
    %163 = vector.shape_cast %162 : vector<1x128x384xf32> to vector<128x384xf32>
    %cst_67 = arith.constant dense<0.000000e+00> : vector<8x384xf32>
    %164 = tpu.matmul %154, %163, %cst_67 {dimension_numbers = #tpu.dot_dimension_numbers<[1], [0], [0], [1], [0, 0, 1, 1], [], []>} : vector<8x128xf32>, vector<128x384xf32>, vector<8x384xf32> -> vector<8x384xf32>
    %165 = vector.extract_strided_slice %161 {offsets = [0, 0], sizes = [8, 256], strides = [1, 1]} : vector<8x384xf32> to vector<8x256xf32>
    %166 = vector.extract_strided_slice %164 {offsets = [0, 0], sizes = [8, 256], strides = [1, 1]} : vector<8x384xf32> to vector<8x256xf32>
    %167 = arith.addf %165, %166 : vector<8x256xf32>
    %168 = arith.negf %167 : vector<8x256xf32>
    %169 = math.exp %168 : vector<8x256xf32>
    %cst_68 = arith.constant 1.000000e+00 : f32
    %170 = vector.broadcast %cst_68 : f32 to vector<8x256xf32>
    %171 = arith.addf %170, %169 : vector<8x256xf32>
    %172 = arith.divf %170, %171 : vector<8x256xf32>
    %173 = vector.extract_strided_slice %172 {offsets = [0, 0], sizes = [8, 128], strides = [1, 1]} : vector<8x256xf32> to vector<8x128xf32>
    %174 = vector.extract_strided_slice %172 {offsets = [0, 128], sizes = [8, 128], strides = [1, 1]} : vector<8x256xf32> to vector<8x128xf32>
    %175 = vector.extract_strided_slice %161 {offsets = [0, 256], sizes = [8, 128], strides = [1, 1]} : vector<8x384xf32> to vector<8x128xf32>
    %176 = vector.extract_strided_slice %164 {offsets = [0, 256], sizes = [8, 128], strides = [1, 1]} : vector<8x384xf32> to vector<8x128xf32>
    %177 = arith.addf %176, %14 : vector<8x128xf32>
    %178 = arith.mulf %173, %177 : vector<8x128xf32>
    %179 = arith.addf %175, %178 : vector<8x128xf32>
    %180 = math.tanh %179 : vector<8x128xf32>
    %cst_69 = arith.constant 1.000000e+00 : f32
    %181 = vector.broadcast %cst_69 : f32 to vector<8x128xf32>
    %182 = arith.subf %181, %174 : vector<8x128xf32>
    %183 = arith.mulf %182, %180 : vector<8x128xf32>
    %184 = arith.mulf %174, %154 : vector<8x128xf32>
    %185 = arith.addf %183, %184 : vector<8x128xf32>
    %186 = arith.index_cast %c5_i32 : i32 to index
    %c0_70 = arith.constant 0 : index
    %c0_71 = arith.constant 0 : index
    %187 = vector.load %arg9[%186, %c0_70, %c0_71] : memref<8x8x128xf32, #tpu.memory_space<vmem>>, vector<1x8x128xf32>
    %188 = vector.shape_cast %187 : vector<1x8x128xf32> to vector<8x128xf32>
    %189 = vector.shape_cast %185 : vector<8x128xf32> to vector<1x8x128xf32>
    tpu.vector_store %arg9[%186, %c0_70, %c0_71], %189 {strides = array<i32>} : memref<8x8x128xf32, #tpu.memory_space<vmem>>, vector<1x8x128xf32>,
    %c6_i32 = arith.constant 6 : i32
    %190 = arith.index_cast %c6_i32 : i32 to index
    %c0_72 = arith.constant 0 : index
    %c0_73 = arith.constant 0 : index
    %191 = vector.load %arg10[%190, %c0_72, %c0_73] : memref<8x8x384xf32, #tpu.memory_space<vmem>>, vector<1x8x384xf32>
    %192 = vector.shape_cast %191 : vector<1x8x384xf32> to vector<8x384xf32>
    %c0_74 = arith.constant 0 : index
    %c0_75 = arith.constant 0 : index
    %c0_76 = arith.constant 0 : index
    %193 = vector.load %arg3[%c0_74, %c0_75, %c0_76] : memref<4x128x384xf32, #tpu.memory_space<vmem>>, vector<1x128x384xf32>
    %194 = vector.shape_cast %193 : vector<1x128x384xf32> to vector<128x384xf32>
    %cst_77 = arith.constant dense<0.000000e+00> : vector<8x384xf32>
    %195 = tpu.matmul %185, %194, %cst_77 {dimension_numbers = #tpu.dot_dimension_numbers<[1], [0], [0], [1], [0, 0, 1, 1], [], []>} : vector<8x128xf32>, vector<128x384xf32>, vector<8x384xf32> -> vector<8x384xf32>
    %196 = vector.extract_strided_slice %192 {offsets = [0, 0], sizes = [8, 256], strides = [1, 1]} : vector<8x384xf32> to vector<8x256xf32>
    %197 = vector.extract_strided_slice %195 {offsets = [0, 0], sizes = [8, 256], strides = [1, 1]} : vector<8x384xf32> to vector<8x256xf32>
    %198 = arith.addf %196, %197 : vector<8x256xf32>
    %199 = arith.negf %198 : vector<8x256xf32>
    %200 = math.exp %199 : vector<8x256xf32>
    %cst_78 = arith.constant 1.000000e+00 : f32
    %201 = vector.broadcast %cst_78 : f32 to vector<8x256xf32>
    %202 = arith.addf %201, %200 : vector<8x256xf32>
    %203 = arith.divf %201, %202 : vector<8x256xf32>
    %204 = vector.extract_strided_slice %203 {offsets = [0, 0], sizes = [8, 128], strides = [1, 1]} : vector<8x256xf32> to vector<8x128xf32>
    %205 = vector.extract_strided_slice %203 {offsets = [0, 128], sizes = [8, 128], strides = [1, 1]} : vector<8x256xf32> to vector<8x128xf32>
    %206 = vector.extract_strided_slice %192 {offsets = [0, 256], sizes = [8, 128], strides = [1, 1]} : vector<8x384xf32> to vector<8x128xf32>
    %207 = vector.extract_strided_slice %195 {offsets = [0, 256], sizes = [8, 128], strides = [1, 1]} : vector<8x384xf32> to vector<8x128xf32>
    %208 = arith.addf %207, %14 : vector<8x128xf32>
    %209 = arith.mulf %204, %208 : vector<8x128xf32>
    %210 = arith.addf %206, %209 : vector<8x128xf32>
    %211 = math.tanh %210 : vector<8x128xf32>
    %cst_79 = arith.constant 1.000000e+00 : f32
    %212 = vector.broadcast %cst_79 : f32 to vector<8x128xf32>
    %213 = arith.subf %212, %205 : vector<8x128xf32>
    %214 = arith.mulf %213, %211 : vector<8x128xf32>
    %215 = arith.mulf %205, %185 : vector<8x128xf32>
    %216 = arith.addf %214, %215 : vector<8x128xf32>
    %217 = arith.index_cast %c6_i32 : i32 to index
    %c0_80 = arith.constant 0 : index
    %c0_81 = arith.constant 0 : index
    %218 = vector.load %arg9[%217, %c0_80, %c0_81] : memref<8x8x128xf32, #tpu.memory_space<vmem>>, vector<1x8x128xf32>
    %219 = vector.shape_cast %218 : vector<1x8x128xf32> to vector<8x128xf32>
    %220 = vector.shape_cast %216 : vector<8x128xf32> to vector<1x8x128xf32>
    tpu.vector_store %arg9[%217, %c0_80, %c0_81], %220 {strides = array<i32>} : memref<8x8x128xf32, #tpu.memory_space<vmem>>, vector<1x8x128xf32>,
    %c7_i32 = arith.constant 7 : i32
    %221 = arith.index_cast %c7_i32 : i32 to index
    %c0_82 = arith.constant 0 : index
    %c0_83 = arith.constant 0 : index
    %222 = vector.load %arg10[%221, %c0_82, %c0_83] : memref<8x8x384xf32, #tpu.memory_space<vmem>>, vector<1x8x384xf32>
    %223 = vector.shape_cast %222 : vector<1x8x384xf32> to vector<8x384xf32>
    %c0_84 = arith.constant 0 : index
    %c0_85 = arith.constant 0 : index
    %c0_86 = arith.constant 0 : index
    %224 = vector.load %arg3[%c0_84, %c0_85, %c0_86] : memref<4x128x384xf32, #tpu.memory_space<vmem>>, vector<1x128x384xf32>
    %225 = vector.shape_cast %224 : vector<1x128x384xf32> to vector<128x384xf32>
    %cst_87 = arith.constant dense<0.000000e+00> : vector<8x384xf32>
    %226 = tpu.matmul %216, %225, %cst_87 {dimension_numbers = #tpu.dot_dimension_numbers<[1], [0], [0], [1], [0, 0, 1, 1], [], []>} : vector<8x128xf32>, vector<128x384xf32>, vector<8x384xf32> -> vector<8x384xf32>
    %227 = vector.extract_strided_slice %223 {offsets = [0, 0], sizes = [8, 256], strides = [1, 1]} : vector<8x384xf32> to vector<8x256xf32>
    %228 = vector.extract_strided_slice %226 {offsets = [0, 0], sizes = [8, 256], strides = [1, 1]} : vector<8x384xf32> to vector<8x256xf32>
    %229 = arith.addf %227, %228 : vector<8x256xf32>
    %230 = arith.negf %229 : vector<8x256xf32>
    %231 = math.exp %230 : vector<8x256xf32>
    %cst_88 = arith.constant 1.000000e+00 : f32
    %232 = vector.broadcast %cst_88 : f32 to vector<8x256xf32>
    %233 = arith.addf %232, %231 : vector<8x256xf32>
    %234 = arith.divf %232, %233 : vector<8x256xf32>
    %235 = vector.extract_strided_slice %234 {offsets = [0, 0], sizes = [8, 128], strides = [1, 1]} : vector<8x256xf32> to vector<8x128xf32>
    %236 = vector.extract_strided_slice %234 {offsets = [0, 128], sizes = [8, 128], strides = [1, 1]} : vector<8x256xf32> to vector<8x128xf32>
    %237 = vector.extract_strided_slice %223 {offsets = [0, 256], sizes = [8, 128], strides = [1, 1]} : vector<8x384xf32> to vector<8x128xf32>
    %238 = vector.extract_strided_slice %226 {offsets = [0, 256], sizes = [8, 128], strides = [1, 1]} : vector<8x384xf32> to vector<8x128xf32>
    %239 = arith.addf %238, %14 : vector<8x128xf32>
    %240 = arith.mulf %235, %239 : vector<8x128xf32>
    %241 = arith.addf %237, %240 : vector<8x128xf32>
    %242 = math.tanh %241 : vector<8x128xf32>
    %cst_89 = arith.constant 1.000000e+00 : f32
    %243 = vector.broadcast %cst_89 : f32 to vector<8x128xf32>
    %244 = arith.subf %243, %236 : vector<8x128xf32>
    %245 = arith.mulf %244, %242 : vector<8x128xf32>
    %246 = arith.mulf %236, %216 : vector<8x128xf32>
    %247 = arith.addf %245, %246 : vector<8x128xf32>
    %248 = arith.index_cast %c7_i32 : i32 to index
    %c0_90 = arith.constant 0 : index
    %c0_91 = arith.constant 0 : index
    %249 = vector.load %arg9[%248, %c0_90, %c0_91] : memref<8x8x128xf32, #tpu.memory_space<vmem>>, vector<1x8x128xf32>
    %250 = vector.shape_cast %249 : vector<1x8x128xf32> to vector<8x128xf32>
    %251 = vector.shape_cast %247 : vector<8x128xf32> to vector<1x8x128xf32>
    tpu.vector_store %arg9[%248, %c0_90, %c0_91], %251 {strides = array<i32>} : memref<8x8x128xf32, #tpu.memory_space<vmem>>, vector<1x8x128xf32>,
    %c7_i32_92 = arith.constant 7 : i32
    %c0_93 = arith.constant 0 : index
    %c0_94 = arith.constant 0 : index
    %c0_95 = arith.constant 0 : index
    %252 = vector.load %arg9[%c0_93, %c0_94, %c0_95] : memref<8x8x128xf32, #tpu.memory_space<vmem>>, vector<8x8x128xf32>
    %253 = vector.shape_cast %252 : vector<8x8x128xf32> to vector<64x128xf32>
    %c1 = arith.constant 1 : index
    %c0_96 = arith.constant 0 : index
    %c0_97 = arith.constant 0 : index
    %254 = vector.load %arg2[%c1, %c0_96, %c0_97] : memref<4x128x384xf32, #tpu.memory_space<vmem>>, vector<1x128x384xf32>
    %255 = vector.shape_cast %254 : vector<1x128x384xf32> to vector<128x384xf32>
    %cst_98 = arith.constant dense<0.000000e+00> : vector<64x384xf32>
    %256 = tpu.matmul %253, %255, %cst_98 {dimension_numbers = #tpu.dot_dimension_numbers<[1], [0], [0], [1], [0, 0, 1, 1], [], []>} : vector<64x128xf32>, vector<128x384xf32>, vector<64x384xf32> -> vector<64x384xf32>
    %c1_99 = arith.constant 1 : index
    %c0_100 = arith.constant 0 : index
    %c0_101 = arith.constant 0 : index
    %257 = vector.load %arg4[%c1_99, %c0_100, %c0_101] : memref<4x1x384xf32, #tpu.memory_space<vmem>>, vector<1x1x384xf32>
    %258 = vector.shape_cast %257 : vector<1x1x384xf32> to vector<1x384xf32>
    %259 = vector.broadcast %258 : vector<1x384xf32> to vector<64x384xf32>
    %260 = arith.addf %256, %259 : vector<64x384xf32>
    %261 = vector.shape_cast %260 : vector<64x384xf32> to vector<8x8x384xf32>
    %c0_102 = arith.constant 0 : index
    %c0_103 = arith.constant 0 : index
    %c0_104 = arith.constant 0 : index
    %262 = vector.load %arg10[%c0_102, %c0_103, %c0_104] : memref<8x8x384xf32, #tpu.memory_space<vmem>>, vector<8x8x384xf32>
    tpu.vector_store %arg10[%c0_102, %c0_103, %c0_104], %261 {strides = array<i32>} : memref<8x8x384xf32, #tpu.memory_space<vmem>>, vector<8x8x384xf32>,
    %c1_105 = arith.constant 1 : index
    %c0_106 = arith.constant 0 : index
    %c0_107 = arith.constant 0 : index
    %263 = vector.load %arg5[%c1_105, %c0_106, %c0_107] : memref<4x1x128xf32, #tpu.memory_space<vmem>>, vector<1x1x128xf32>
    %264 = vector.shape_cast %263 : vector<1x1x128xf32> to vector<1x128xf32>
    %265 = vector.shape_cast %264 : vector<1x128xf32> to vector<1x128xf32>
    %266 = vector.broadcast %265 : vector<1x128xf32> to vector<8x128xf32>
    %c0_108 = arith.constant 0 : index
    %c0_109 = arith.constant 0 : index
    %c0_110 = arith.constant 0 : index
    %267 = vector.load %arg10[%c0_108, %c0_109, %c0_110] : memref<8x8x384xf32, #tpu.memory_space<vmem>>, vector<1x8x384xf32>
    %268 = vector.shape_cast %267 : vector<1x8x384xf32> to vector<8x384xf32>
    %269 = vector.extract_strided_slice %268 {offsets = [0, 0], sizes = [8, 256], strides = [1, 1]} : vector<8x384xf32> to vector<8x256xf32>
    %270 = arith.negf %269 : vector<8x256xf32>
    %271 = math.exp %270 : vector<8x256xf32>
    %cst_111 = arith.constant 1.000000e+00 : f32
    %272 = vector.broadcast %cst_111 : f32 to vector<8x256xf32>
    %273 = arith.addf %272, %271 : vector<8x256xf32>
    %274 = arith.divf %272, %273 : vector<8x256xf32>
    %275 = vector.extract_strided_slice %268 {offsets = [0, 256], sizes = [8, 128], strides = [1, 1]} : vector<8x384xf32> to vector<8x128xf32>
    %276 = vector.extract_strided_slice %274 {offsets = [0, 0], sizes = [8, 128], strides = [1, 1]} : vector<8x256xf32> to vector<8x128xf32>
    %277 = arith.mulf %276, %266 : vector<8x128xf32>
    %278 = arith.addf %275, %277 : vector<8x128xf32>
    %279 = math.tanh %278 : vector<8x128xf32>
    %280 = vector.extract_strided_slice %274 {offsets = [0, 128], sizes = [8, 128], strides = [1, 1]} : vector<8x256xf32> to vector<8x128xf32>
    %cst_112 = arith.constant 1.000000e+00 : f32
    %281 = vector.broadcast %cst_112 : f32 to vector<8x128xf32>
    %282 = arith.subf %281, %280 : vector<8x128xf32>
    %283 = arith.mulf %282, %279 : vector<8x128xf32>
    %c0_113 = arith.constant 0 : index
    %c0_114 = arith.constant 0 : index
    %c0_115 = arith.constant 0 : index
    %284 = vector.load %arg9[%c0_113, %c0_114, %c0_115] : memref<8x8x128xf32, #tpu.memory_space<vmem>>, vector<1x8x128xf32>
    %285 = vector.shape_cast %284 : vector<1x8x128xf32> to vector<8x128xf32>
    %286 = vector.shape_cast %283 : vector<8x128xf32> to vector<1x8x128xf32>
    tpu.vector_store %arg9[%c0_113, %c0_114, %c0_115], %286 {strides = array<i32>} : memref<8x8x128xf32, #tpu.memory_space<vmem>>, vector<1x8x128xf32>,
    %c1_i32_116 = arith.constant 1 : i32
    %287 = arith.index_cast %c1_i32_116 : i32 to index
    %c0_117 = arith.constant 0 : index
    %c0_118 = arith.constant 0 : index
    %288 = vector.load %arg10[%287, %c0_117, %c0_118] : memref<8x8x384xf32, #tpu.memory_space<vmem>>, vector<1x8x384xf32>
    %289 = vector.shape_cast %288 : vector<1x8x384xf32> to vector<8x384xf32>
    %c1_119 = arith.constant 1 : index
    %c0_120 = arith.constant 0 : index
    %c0_121 = arith.constant 0 : index
    %290 = vector.load %arg3[%c1_119, %c0_120, %c0_121] : memref<4x128x384xf32, #tpu.memory_space<vmem>>, vector<1x128x384xf32>
    %291 = vector.shape_cast %290 : vector<1x128x384xf32> to vector<128x384xf32>
    %cst_122 = arith.constant dense<0.000000e+00> : vector<8x384xf32>
    %292 = tpu.matmul %283, %291, %cst_122 {dimension_numbers = #tpu.dot_dimension_numbers<[1], [0], [0], [1], [0, 0, 1, 1], [], []>} : vector<8x128xf32>, vector<128x384xf32>, vector<8x384xf32> -> vector<8x384xf32>
    %293 = vector.extract_strided_slice %289 {offsets = [0, 0], sizes = [8, 256], strides = [1, 1]} : vector<8x384xf32> to vector<8x256xf32>
    %294 = vector.extract_strided_slice %292 {offsets = [0, 0], sizes = [8, 256], strides = [1, 1]} : vector<8x384xf32> to vector<8x256xf32>
    %295 = arith.addf %293, %294 : vector<8x256xf32>
    %296 = arith.negf %295 : vector<8x256xf32>
    %297 = math.exp %296 : vector<8x256xf32>
    %cst_123 = arith.constant 1.000000e+00 : f32
    %298 = vector.broadcast %cst_123 : f32 to vector<8x256xf32>
    %299 = arith.addf %298, %297 : vector<8x256xf32>
    %300 = arith.divf %298, %299 : vector<8x256xf32>
    %301 = vector.extract_strided_slice %300 {offsets = [0, 0], sizes = [8, 128], strides = [1, 1]} : vector<8x256xf32> to vector<8x128xf32>
    %302 = vector.extract_strided_slice %300 {offsets = [0, 128], sizes = [8, 128], strides = [1, 1]} : vector<8x256xf32> to vector<8x128xf32>
    %303 = vector.extract_strided_slice %289 {offsets = [0, 256], sizes = [8, 128], strides = [1, 1]} : vector<8x384xf32> to vector<8x128xf32>
    %304 = vector.extract_strided_slice %292 {offsets = [0, 256], sizes = [8, 128], strides = [1, 1]} : vector<8x384xf32> to vector<8x128xf32>
    %305 = arith.addf %304, %266 : vector<8x128xf32>
    %306 = arith.mulf %301, %305 : vector<8x128xf32>
    %307 = arith.addf %303, %306 : vector<8x128xf32>
    %308 = math.tanh %307 : vector<8x128xf32>
    %cst_124 = arith.constant 1.000000e+00 : f32
    %309 = vector.broadcast %cst_124 : f32 to vector<8x128xf32>
    %310 = arith.subf %309, %302 : vector<8x128xf32>
    %311 = arith.mulf %310, %308 : vector<8x128xf32>
    %312 = arith.mulf %302, %283 : vector<8x128xf32>
    %313 = arith.addf %311, %312 : vector<8x128xf32>
    %314 = arith.index_cast %c1_i32_116 : i32 to index
    %c0_125 = arith.constant 0 : index
    %c0_126 = arith.constant 0 : index
    %315 = vector.load %arg9[%314, %c0_125, %c0_126] : memref<8x8x128xf32, #tpu.memory_space<vmem>>, vector<1x8x128xf32>
    %316 = vector.shape_cast %315 : vector<1x8x128xf32> to vector<8x128xf32>
    %317 = vector.shape_cast %313 : vector<8x128xf32> to vector<1x8x128xf32>
    tpu.vector_store %arg9[%314, %c0_125, %c0_126], %317 {strides = array<i32>} : memref<8x8x128xf32, #tpu.memory_space<vmem>>, vector<1x8x128xf32>,
    %c2_i32_127 = arith.constant 2 : i32
    %318 = arith.index_cast %c2_i32_127 : i32 to index
    %c0_128 = arith.constant 0 : index
    %c0_129 = arith.constant 0 : index
    %319 = vector.load %arg10[%318, %c0_128, %c0_129] : memref<8x8x384xf32, #tpu.memory_space<vmem>>, vector<1x8x384xf32>
    %320 = vector.shape_cast %319 : vector<1x8x384xf32> to vector<8x384xf32>
    %c1_130 = arith.constant 1 : index
    %c0_131 = arith.constant 0 : index
    %c0_132 = arith.constant 0 : index
    %321 = vector.load %arg3[%c1_130, %c0_131, %c0_132] : memref<4x128x384xf32, #tpu.memory_space<vmem>>, vector<1x128x384xf32>
    %322 = vector.shape_cast %321 : vector<1x128x384xf32> to vector<128x384xf32>
    %cst_133 = arith.constant dense<0.000000e+00> : vector<8x384xf32>
    %323 = tpu.matmul %313, %322, %cst_133 {dimension_numbers = #tpu.dot_dimension_numbers<[1], [0], [0], [1], [0, 0, 1, 1], [], []>} : vector<8x128xf32>, vector<128x384xf32>, vector<8x384xf32> -> vector<8x384xf32>
    %324 = vector.extract_strided_slice %320 {offsets = [0, 0], sizes = [8, 256], strides = [1, 1]} : vector<8x384xf32> to vector<8x256xf32>
    %325 = vector.extract_strided_slice %323 {offsets = [0, 0], sizes = [8, 256], strides = [1, 1]} : vector<8x384xf32> to vector<8x256xf32>
    %326 = arith.addf %324, %325 : vector<8x256xf32>
    %327 = arith.negf %326 : vector<8x256xf32>
    %328 = math.exp %327 : vector<8x256xf32>
    %cst_134 = arith.constant 1.000000e+00 : f32
    %329 = vector.broadcast %cst_134 : f32 to vector<8x256xf32>
    %330 = arith.addf %329, %328 : vector<8x256xf32>
    %331 = arith.divf %329, %330 : vector<8x256xf32>
    %332 = vector.extract_strided_slice %331 {offsets = [0, 0], sizes = [8, 128], strides = [1, 1]} : vector<8x256xf32> to vector<8x128xf32>
    %333 = vector.extract_strided_slice %331 {offsets = [0, 128], sizes = [8, 128], strides = [1, 1]} : vector<8x256xf32> to vector<8x128xf32>
    %334 = vector.extract_strided_slice %320 {offsets = [0, 256], sizes = [8, 128], strides = [1, 1]} : vector<8x384xf32> to vector<8x128xf32>
    %335 = vector.extract_strided_slice %323 {offsets = [0, 256], sizes = [8, 128], strides = [1, 1]} : vector<8x384xf32> to vector<8x128xf32>
    %336 = arith.addf %335, %266 : vector<8x128xf32>
    %337 = arith.mulf %332, %336 : vector<8x128xf32>
    %338 = arith.addf %334, %337 : vector<8x128xf32>
    %339 = math.tanh %338 : vector<8x128xf32>
    %cst_135 = arith.constant 1.000000e+00 : f32
    %340 = vector.broadcast %cst_135 : f32 to vector<8x128xf32>
    %341 = arith.subf %340, %333 : vector<8x128xf32>
    %342 = arith.mulf %341, %339 : vector<8x128xf32>
    %343 = arith.mulf %333, %313 : vector<8x128xf32>
    %344 = arith.addf %342, %343 : vector<8x128xf32>
    %345 = arith.index_cast %c2_i32_127 : i32 to index
    %c0_136 = arith.constant 0 : index
    %c0_137 = arith.constant 0 : index
    %346 = vector.load %arg9[%345, %c0_136, %c0_137] : memref<8x8x128xf32, #tpu.memory_space<vmem>>, vector<1x8x128xf32>
    %347 = vector.shape_cast %346 : vector<1x8x128xf32> to vector<8x128xf32>
    %348 = vector.shape_cast %344 : vector<8x128xf32> to vector<1x8x128xf32>
    tpu.vector_store %arg9[%345, %c0_136, %c0_137], %348 {strides = array<i32>} : memref<8x8x128xf32, #tpu.memory_space<vmem>>, vector<1x8x128xf32>,
    %c3_i32_138 = arith.constant 3 : i32
    %349 = arith.index_cast %c3_i32_138 : i32 to index
    %c0_139 = arith.constant 0 : index
    %c0_140 = arith.constant 0 : index
    %350 = vector.load %arg10[%349, %c0_139, %c0_140] : memref<8x8x384xf32, #tpu.memory_space<vmem>>, vector<1x8x384xf32>
    %351 = vector.shape_cast %350 : vector<1x8x384xf32> to vector<8x384xf32>
    %c1_141 = arith.constant 1 : index
    %c0_142 = arith.constant 0 : index
    %c0_143 = arith.constant 0 : index
    %352 = vector.load %arg3[%c1_141, %c0_142, %c0_143] : memref<4x128x384xf32, #tpu.memory_space<vmem>>, vector<1x128x384xf32>
    %353 = vector.shape_cast %352 : vector<1x128x384xf32> to vector<128x384xf32>
    %cst_144 = arith.constant dense<0.000000e+00> : vector<8x384xf32>
    %354 = tpu.matmul %344, %353, %cst_144 {dimension_numbers = #tpu.dot_dimension_numbers<[1], [0], [0], [1], [0, 0, 1, 1], [], []>} : vector<8x128xf32>, vector<128x384xf32>, vector<8x384xf32> -> vector<8x384xf32>
    %355 = vector.extract_strided_slice %351 {offsets = [0, 0], sizes = [8, 256], strides = [1, 1]} : vector<8x384xf32> to vector<8x256xf32>
    %356 = vector.extract_strided_slice %354 {offsets = [0, 0], sizes = [8, 256], strides = [1, 1]} : vector<8x384xf32> to vector<8x256xf32>
    %357 = arith.addf %355, %356 : vector<8x256xf32>
    %358 = arith.negf %357 : vector<8x256xf32>
    %359 = math.exp %358 : vector<8x256xf32>
    %cst_145 = arith.constant 1.000000e+00 : f32
    %360 = vector.broadcast %cst_145 : f32 to vector<8x256xf32>
    %361 = arith.addf %360, %359 : vector<8x256xf32>
    %362 = arith.divf %360, %361 : vector<8x256xf32>
    %363 = vector.extract_strided_slice %362 {offsets = [0, 0], sizes = [8, 128], strides = [1, 1]} : vector<8x256xf32> to vector<8x128xf32>
    %364 = vector.extract_strided_slice %362 {offsets = [0, 128], sizes = [8, 128], strides = [1, 1]} : vector<8x256xf32> to vector<8x128xf32>
    %365 = vector.extract_strided_slice %351 {offsets = [0, 256], sizes = [8, 128], strides = [1, 1]} : vector<8x384xf32> to vector<8x128xf32>
    %366 = vector.extract_strided_slice %354 {offsets = [0, 256], sizes = [8, 128], strides = [1, 1]} : vector<8x384xf32> to vector<8x128xf32>
    %367 = arith.addf %366, %266 : vector<8x128xf32>
    %368 = arith.mulf %363, %367 : vector<8x128xf32>
    %369 = arith.addf %365, %368 : vector<8x128xf32>
    %370 = math.tanh %369 : vector<8x128xf32>
    %cst_146 = arith.constant 1.000000e+00 : f32
    %371 = vector.broadcast %cst_146 : f32 to vector<8x128xf32>
    %372 = arith.subf %371, %364 : vector<8x128xf32>
    %373 = arith.mulf %372, %370 : vector<8x128xf32>
    %374 = arith.mulf %364, %344 : vector<8x128xf32>
    %375 = arith.addf %373, %374 : vector<8x128xf32>
    %376 = arith.index_cast %c3_i32_138 : i32 to index
    %c0_147 = arith.constant 0 : index
    %c0_148 = arith.constant 0 : index
    %377 = vector.load %arg9[%376, %c0_147, %c0_148] : memref<8x8x128xf32, #tpu.memory_space<vmem>>, vector<1x8x128xf32>
    %378 = vector.shape_cast %377 : vector<1x8x128xf32> to vector<8x128xf32>
    %379 = vector.shape_cast %375 : vector<8x128xf32> to vector<1x8x128xf32>
    tpu.vector_store %arg9[%376, %c0_147, %c0_148], %379 {strides = array<i32>} : memref<8x8x128xf32, #tpu.memory_space<vmem>>, vector<1x8x128xf32>,
    %c4_i32_149 = arith.constant 4 : i32
    %380 = arith.index_cast %c4_i32_149 : i32 to index
    %c0_150 = arith.constant 0 : index
    %c0_151 = arith.constant 0 : index
    %381 = vector.load %arg10[%380, %c0_150, %c0_151] : memref<8x8x384xf32, #tpu.memory_space<vmem>>, vector<1x8x384xf32>
    %382 = vector.shape_cast %381 : vector<1x8x384xf32> to vector<8x384xf32>
    %c1_152 = arith.constant 1 : index
    %c0_153 = arith.constant 0 : index
    %c0_154 = arith.constant 0 : index
    %383 = vector.load %arg3[%c1_152, %c0_153, %c0_154] : memref<4x128x384xf32, #tpu.memory_space<vmem>>, vector<1x128x384xf32>
    %384 = vector.shape_cast %383 : vector<1x128x384xf32> to vector<128x384xf32>
    %cst_155 = arith.constant dense<0.000000e+00> : vector<8x384xf32>
    %385 = tpu.matmul %375, %384, %cst_155 {dimension_numbers = #tpu.dot_dimension_numbers<[1], [0], [0], [1], [0, 0, 1, 1], [], []>} : vector<8x128xf32>, vector<128x384xf32>, vector<8x384xf32> -> vector<8x384xf32>
    %386 = vector.extract_strided_slice %382 {offsets = [0, 0], sizes = [8, 256], strides = [1, 1]} : vector<8x384xf32> to vector<8x256xf32>
    %387 = vector.extract_strided_slice %385 {offsets = [0, 0], sizes = [8, 256], strides = [1, 1]} : vector<8x384xf32> to vector<8x256xf32>
    %388 = arith.addf %386, %387 : vector<8x256xf32>
    %389 = arith.negf %388 : vector<8x256xf32>
    %390 = math.exp %389 : vector<8x256xf32>
    %cst_156 = arith.constant 1.000000e+00 : f32
    %391 = vector.broadcast %cst_156 : f32 to vector<8x256xf32>
    %392 = arith.addf %391, %390 : vector<8x256xf32>
    %393 = arith.divf %391, %392 : vector<8x256xf32>
    %394 = vector.extract_strided_slice %393 {offsets = [0, 0], sizes = [8, 128], strides = [1, 1]} : vector<8x256xf32> to vector<8x128xf32>
    %395 = vector.extract_strided_slice %393 {offsets = [0, 128], sizes = [8, 128], strides = [1, 1]} : vector<8x256xf32> to vector<8x128xf32>
    %396 = vector.extract_strided_slice %382 {offsets = [0, 256], sizes = [8, 128], strides = [1, 1]} : vector<8x384xf32> to vector<8x128xf32>
    %397 = vector.extract_strided_slice %385 {offsets = [0, 256], sizes = [8, 128], strides = [1, 1]} : vector<8x384xf32> to vector<8x128xf32>
    %398 = arith.addf %397, %266 : vector<8x128xf32>
    %399 = arith.mulf %394, %398 : vector<8x128xf32>
    %400 = arith.addf %396, %399 : vector<8x128xf32>
    %401 = math.tanh %400 : vector<8x128xf32>
    %cst_157 = arith.constant 1.000000e+00 : f32
    %402 = vector.broadcast %cst_157 : f32 to vector<8x128xf32>
    %403 = arith.subf %402, %395 : vector<8x128xf32>
    %404 = arith.mulf %403, %401 : vector<8x128xf32>
    %405 = arith.mulf %395, %375 : vector<8x128xf32>
    %406 = arith.addf %404, %405 : vector<8x128xf32>
    %407 = arith.index_cast %c4_i32_149 : i32 to index
    %c0_158 = arith.constant 0 : index
    %c0_159 = arith.constant 0 : index
    %408 = vector.load %arg9[%407, %c0_158, %c0_159] : memref<8x8x128xf32, #tpu.memory_space<vmem>>, vector<1x8x128xf32>
    %409 = vector.shape_cast %408 : vector<1x8x128xf32> to vector<8x128xf32>
    %410 = vector.shape_cast %406 : vector<8x128xf32> to vector<1x8x128xf32>
    tpu.vector_store %arg9[%407, %c0_158, %c0_159], %410 {strides = array<i32>} : memref<8x8x128xf32, #tpu.memory_space<vmem>>, vector<1x8x128xf32>,
    %c5_i32_160 = arith.constant 5 : i32
    %411 = arith.index_cast %c5_i32_160 : i32 to index
    %c0_161 = arith.constant 0 : index
    %c0_162 = arith.constant 0 : index
    %412 = vector.load %arg10[%411, %c0_161, %c0_162] : memref<8x8x384xf32, #tpu.memory_space<vmem>>, vector<1x8x384xf32>
    %413 = vector.shape_cast %412 : vector<1x8x384xf32> to vector<8x384xf32>
    %c1_163 = arith.constant 1 : index
    %c0_164 = arith.constant 0 : index
    %c0_165 = arith.constant 0 : index
    %414 = vector.load %arg3[%c1_163, %c0_164, %c0_165] : memref<4x128x384xf32, #tpu.memory_space<vmem>>, vector<1x128x384xf32>
    %415 = vector.shape_cast %414 : vector<1x128x384xf32> to vector<128x384xf32>
    %cst_166 = arith.constant dense<0.000000e+00> : vector<8x384xf32>
    %416 = tpu.matmul %406, %415, %cst_166 {dimension_numbers = #tpu.dot_dimension_numbers<[1], [0], [0], [1], [0, 0, 1, 1], [], []>} : vector<8x128xf32>, vector<128x384xf32>, vector<8x384xf32> -> vector<8x384xf32>
    %417 = vector.extract_strided_slice %413 {offsets = [0, 0], sizes = [8, 256], strides = [1, 1]} : vector<8x384xf32> to vector<8x256xf32>
    %418 = vector.extract_strided_slice %416 {offsets = [0, 0], sizes = [8, 256], strides = [1, 1]} : vector<8x384xf32> to vector<8x256xf32>
    %419 = arith.addf %417, %418 : vector<8x256xf32>
    %420 = arith.negf %419 : vector<8x256xf32>
    %421 = math.exp %420 : vector<8x256xf32>
    %cst_167 = arith.constant 1.000000e+00 : f32
    %422 = vector.broadcast %cst_167 : f32 to vector<8x256xf32>
    %423 = arith.addf %422, %421 : vector<8x256xf32>
    %424 = arith.divf %422, %423 : vector<8x256xf32>
    %425 = vector.extract_strided_slice %424 {offsets = [0, 0], sizes = [8, 128], strides = [1, 1]} : vector<8x256xf32> to vector<8x128xf32>
    %426 = vector.extract_strided_slice %424 {offsets = [0, 128], sizes = [8, 128], strides = [1, 1]} : vector<8x256xf32> to vector<8x128xf32>
    %427 = vector.extract_strided_slice %413 {offsets = [0, 256], sizes = [8, 128], strides = [1, 1]} : vector<8x384xf32> to vector<8x128xf32>
    %428 = vector.extract_strided_slice %416 {offsets = [0, 256], sizes = [8, 128], strides = [1, 1]} : vector<8x384xf32> to vector<8x128xf32>
    %429 = arith.addf %428, %266 : vector<8x128xf32>
    %430 = arith.mulf %425, %429 : vector<8x128xf32>
    %431 = arith.addf %427, %430 : vector<8x128xf32>
    %432 = math.tanh %431 : vector<8x128xf32>
    %cst_168 = arith.constant 1.000000e+00 : f32
    %433 = vector.broadcast %cst_168 : f32 to vector<8x128xf32>
    %434 = arith.subf %433, %426 : vector<8x128xf32>
    %435 = arith.mulf %434, %432 : vector<8x128xf32>
    %436 = arith.mulf %426, %406 : vector<8x128xf32>
    %437 = arith.addf %435, %436 : vector<8x128xf32>
    %438 = arith.index_cast %c5_i32_160 : i32 to index
    %c0_169 = arith.constant 0 : index
    %c0_170 = arith.constant 0 : index
    %439 = vector.load %arg9[%438, %c0_169, %c0_170] : memref<8x8x128xf32, #tpu.memory_space<vmem>>, vector<1x8x128xf32>
    %440 = vector.shape_cast %439 : vector<1x8x128xf32> to vector<8x128xf32>
    %441 = vector.shape_cast %437 : vector<8x128xf32> to vector<1x8x128xf32>
    tpu.vector_store %arg9[%438, %c0_169, %c0_170], %441 {strides = array<i32>} : memref<8x8x128xf32, #tpu.memory_space<vmem>>, vector<1x8x128xf32>,
    %c6_i32_171 = arith.constant 6 : i32
    %442 = arith.index_cast %c6_i32_171 : i32 to index
    %c0_172 = arith.constant 0 : index
    %c0_173 = arith.constant 0 : index
    %443 = vector.load %arg10[%442, %c0_172, %c0_173] : memref<8x8x384xf32, #tpu.memory_space<vmem>>, vector<1x8x384xf32>
    %444 = vector.shape_cast %443 : vector<1x8x384xf32> to vector<8x384xf32>
    %c1_174 = arith.constant 1 : index
    %c0_175 = arith.constant 0 : index
    %c0_176 = arith.constant 0 : index
    %445 = vector.load %arg3[%c1_174, %c0_175, %c0_176] : memref<4x128x384xf32, #tpu.memory_space<vmem>>, vector<1x128x384xf32>
    %446 = vector.shape_cast %445 : vector<1x128x384xf32> to vector<128x384xf32>
    %cst_177 = arith.constant dense<0.000000e+00> : vector<8x384xf32>
    %447 = tpu.matmul %437, %446, %cst_177 {dimension_numbers = #tpu.dot_dimension_numbers<[1], [0], [0], [1], [0, 0, 1, 1], [], []>} : vector<8x128xf32>, vector<128x384xf32>, vector<8x384xf32> -> vector<8x384xf32>
    %448 = vector.extract_strided_slice %444 {offsets = [0, 0], sizes = [8, 256], strides = [1, 1]} : vector<8x384xf32> to vector<8x256xf32>
    %449 = vector.extract_strided_slice %447 {offsets = [0, 0], sizes = [8, 256], strides = [1, 1]} : vector<8x384xf32> to vector<8x256xf32>
    %450 = arith.addf %448, %449 : vector<8x256xf32>
    %451 = arith.negf %450 : vector<8x256xf32>
    %452 = math.exp %451 : vector<8x256xf32>
    %cst_178 = arith.constant 1.000000e+00 : f32
    %453 = vector.broadcast %cst_178 : f32 to vector<8x256xf32>
    %454 = arith.addf %453, %452 : vector<8x256xf32>
    %455 = arith.divf %453, %454 : vector<8x256xf32>
    %456 = vector.extract_strided_slice %455 {offsets = [0, 0], sizes = [8, 128], strides = [1, 1]} : vector<8x256xf32> to vector<8x128xf32>
    %457 = vector.extract_strided_slice %455 {offsets = [0, 128], sizes = [8, 128], strides = [1, 1]} : vector<8x256xf32> to vector<8x128xf32>
    %458 = vector.extract_strided_slice %444 {offsets = [0, 256], sizes = [8, 128], strides = [1, 1]} : vector<8x384xf32> to vector<8x128xf32>
    %459 = vector.extract_strided_slice %447 {offsets = [0, 256], sizes = [8, 128], strides = [1, 1]} : vector<8x384xf32> to vector<8x128xf32>
    %460 = arith.addf %459, %266 : vector<8x128xf32>
    %461 = arith.mulf %456, %460 : vector<8x128xf32>
    %462 = arith.addf %458, %461 : vector<8x128xf32>
    %463 = math.tanh %462 : vector<8x128xf32>
    %cst_179 = arith.constant 1.000000e+00 : f32
    %464 = vector.broadcast %cst_179 : f32 to vector<8x128xf32>
    %465 = arith.subf %464, %457 : vector<8x128xf32>
    %466 = arith.mulf %465, %463 : vector<8x128xf32>
    %467 = arith.mulf %457, %437 : vector<8x128xf32>
    %468 = arith.addf %466, %467 : vector<8x128xf32>
    %469 = arith.index_cast %c6_i32_171 : i32 to index
    %c0_180 = arith.constant 0 : index
    %c0_181 = arith.constant 0 : index
    %470 = vector.load %arg9[%469, %c0_180, %c0_181] : memref<8x8x128xf32, #tpu.memory_space<vmem>>, vector<1x8x128xf32>
    %471 = vector.shape_cast %470 : vector<1x8x128xf32> to vector<8x128xf32>
    %472 = vector.shape_cast %468 : vector<8x128xf32> to vector<1x8x128xf32>
    tpu.vector_store %arg9[%469, %c0_180, %c0_181], %472 {strides = array<i32>} : memref<8x8x128xf32, #tpu.memory_space<vmem>>, vector<1x8x128xf32>,
    %c7_i32_182 = arith.constant 7 : i32
    %473 = arith.index_cast %c7_i32_182 : i32 to index
    %c0_183 = arith.constant 0 : index
    %c0_184 = arith.constant 0 : index
    %474 = vector.load %arg10[%473, %c0_183, %c0_184] : memref<8x8x384xf32, #tpu.memory_space<vmem>>, vector<1x8x384xf32>
    %475 = vector.shape_cast %474 : vector<1x8x384xf32> to vector<8x384xf32>
    %c1_185 = arith.constant 1 : index
    %c0_186 = arith.constant 0 : index
    %c0_187 = arith.constant 0 : index
    %476 = vector.load %arg3[%c1_185, %c0_186, %c0_187] : memref<4x128x384xf32, #tpu.memory_space<vmem>>, vector<1x128x384xf32>
    %477 = vector.shape_cast %476 : vector<1x128x384xf32> to vector<128x384xf32>
    %cst_188 = arith.constant dense<0.000000e+00> : vector<8x384xf32>
    %478 = tpu.matmul %468, %477, %cst_188 {dimension_numbers = #tpu.dot_dimension_numbers<[1], [0], [0], [1], [0, 0, 1, 1], [], []>} : vector<8x128xf32>, vector<128x384xf32>, vector<8x384xf32> -> vector<8x384xf32>
    %479 = vector.extract_strided_slice %475 {offsets = [0, 0], sizes = [8, 256], strides = [1, 1]} : vector<8x384xf32> to vector<8x256xf32>
    %480 = vector.extract_strided_slice %478 {offsets = [0, 0], sizes = [8, 256], strides = [1, 1]} : vector<8x384xf32> to vector<8x256xf32>
    %481 = arith.addf %479, %480 : vector<8x256xf32>
    %482 = arith.negf %481 : vector<8x256xf32>
    %483 = math.exp %482 : vector<8x256xf32>
    %cst_189 = arith.constant 1.000000e+00 : f32
    %484 = vector.broadcast %cst_189 : f32 to vector<8x256xf32>
    %485 = arith.addf %484, %483 : vector<8x256xf32>
    %486 = arith.divf %484, %485 : vector<8x256xf32>
    %487 = vector.extract_strided_slice %486 {offsets = [0, 0], sizes = [8, 128], strides = [1, 1]} : vector<8x256xf32> to vector<8x128xf32>
    %488 = vector.extract_strided_slice %486 {offsets = [0, 128], sizes = [8, 128], strides = [1, 1]} : vector<8x256xf32> to vector<8x128xf32>
    %489 = vector.extract_strided_slice %475 {offsets = [0, 256], sizes = [8, 128], strides = [1, 1]} : vector<8x384xf32> to vector<8x128xf32>
    %490 = vector.extract_strided_slice %478 {offsets = [0, 256], sizes = [8, 128], strides = [1, 1]} : vector<8x384xf32> to vector<8x128xf32>
    %491 = arith.addf %490, %266 : vector<8x128xf32>
    %492 = arith.mulf %487, %491 : vector<8x128xf32>
    %493 = arith.addf %489, %492 : vector<8x128xf32>
    %494 = math.tanh %493 : vector<8x128xf32>
    %cst_190 = arith.constant 1.000000e+00 : f32
    %495 = vector.broadcast %cst_190 : f32 to vector<8x128xf32>
    %496 = arith.subf %495, %488 : vector<8x128xf32>
    %497 = arith.mulf %496, %494 : vector<8x128xf32>
    %498 = arith.mulf %488, %468 : vector<8x128xf32>
    %499 = arith.addf %497, %498 : vector<8x128xf32>
    %500 = arith.index_cast %c7_i32_182 : i32 to index
    %c0_191 = arith.constant 0 : index
    %c0_192 = arith.constant 0 : index
    %501 = vector.load %arg9[%500, %c0_191, %c0_192] : memref<8x8x128xf32, #tpu.memory_space<vmem>>, vector<1x8x128xf32>
    %502 = vector.shape_cast %501 : vector<1x8x128xf32> to vector<8x128xf32>
    %503 = vector.shape_cast %499 : vector<8x128xf32> to vector<1x8x128xf32>
    tpu.vector_store %arg9[%500, %c0_191, %c0_192], %503 {strides = array<i32>} : memref<8x8x128xf32, #tpu.memory_space<vmem>>, vector<1x8x128xf32>,
    %c7_i32_193 = arith.constant 7 : i32
    %c0_194 = arith.constant 0 : index
    %c0_195 = arith.constant 0 : index
    %c0_196 = arith.constant 0 : index
    %504 = vector.load %arg9[%c0_194, %c0_195, %c0_196] : memref<8x8x128xf32, #tpu.memory_space<vmem>>, vector<8x8x128xf32>
    %505 = vector.shape_cast %504 : vector<8x8x128xf32> to vector<64x128xf32>
    %c2 = arith.constant 2 : index
    %c0_197 = arith.constant 0 : index
    %c0_198 = arith.constant 0 : index
    %506 = vector.load %arg2[%c2, %c0_197, %c0_198] : memref<4x128x384xf32, #tpu.memory_space<vmem>>, vector<1x128x384xf32>
    %507 = vector.shape_cast %506 : vector<1x128x384xf32> to vector<128x384xf32>
    %cst_199 = arith.constant dense<0.000000e+00> : vector<64x384xf32>
    %508 = tpu.matmul %505, %507, %cst_199 {dimension_numbers = #tpu.dot_dimension_numbers<[1], [0], [0], [1], [0, 0, 1, 1], [], []>} : vector<64x128xf32>, vector<128x384xf32>, vector<64x384xf32> -> vector<64x384xf32>
    %c2_200 = arith.constant 2 : index
    %c0_201 = arith.constant 0 : index
    %c0_202 = arith.constant 0 : index
    %509 = vector.load %arg4[%c2_200, %c0_201, %c0_202] : memref<4x1x384xf32, #tpu.memory_space<vmem>>, vector<1x1x384xf32>
    %510 = vector.shape_cast %509 : vector<1x1x384xf32> to vector<1x384xf32>
    %511 = vector.broadcast %510 : vector<1x384xf32> to vector<64x384xf32>
    %512 = arith.addf %508, %511 : vector<64x384xf32>
    %513 = vector.shape_cast %512 : vector<64x384xf32> to vector<8x8x384xf32>
    %c0_203 = arith.constant 0 : index
    %c0_204 = arith.constant 0 : index
    %c0_205 = arith.constant 0 : index
    %514 = vector.load %arg10[%c0_203, %c0_204, %c0_205] : memref<8x8x384xf32, #tpu.memory_space<vmem>>, vector<8x8x384xf32>
    tpu.vector_store %arg10[%c0_203, %c0_204, %c0_205], %513 {strides = array<i32>} : memref<8x8x384xf32, #tpu.memory_space<vmem>>, vector<8x8x384xf32>,
    %c2_206 = arith.constant 2 : index
    %c0_207 = arith.constant 0 : index
    %c0_208 = arith.constant 0 : index
    %515 = vector.load %arg5[%c2_206, %c0_207, %c0_208] : memref<4x1x128xf32, #tpu.memory_space<vmem>>, vector<1x1x128xf32>
    %516 = vector.shape_cast %515 : vector<1x1x128xf32> to vector<1x128xf32>
    %517 = vector.shape_cast %516 : vector<1x128xf32> to vector<1x128xf32>
    %518 = vector.broadcast %517 : vector<1x128xf32> to vector<8x128xf32>
    %c0_209 = arith.constant 0 : index
    %c0_210 = arith.constant 0 : index
    %c0_211 = arith.constant 0 : index
    %519 = vector.load %arg10[%c0_209, %c0_210, %c0_211] : memref<8x8x384xf32, #tpu.memory_space<vmem>>, vector<1x8x384xf32>
    %520 = vector.shape_cast %519 : vector<1x8x384xf32> to vector<8x384xf32>
    %521 = vector.extract_strided_slice %520 {offsets = [0, 0], sizes = [8, 256], strides = [1, 1]} : vector<8x384xf32> to vector<8x256xf32>
    %522 = arith.negf %521 : vector<8x256xf32>
    %523 = math.exp %522 : vector<8x256xf32>
    %cst_212 = arith.constant 1.000000e+00 : f32
    %524 = vector.broadcast %cst_212 : f32 to vector<8x256xf32>
    %525 = arith.addf %524, %523 : vector<8x256xf32>
    %526 = arith.divf %524, %525 : vector<8x256xf32>
    %527 = vector.extract_strided_slice %520 {offsets = [0, 256], sizes = [8, 128], strides = [1, 1]} : vector<8x384xf32> to vector<8x128xf32>
    %528 = vector.extract_strided_slice %526 {offsets = [0, 0], sizes = [8, 128], strides = [1, 1]} : vector<8x256xf32> to vector<8x128xf32>
    %529 = arith.mulf %528, %518 : vector<8x128xf32>
    %530 = arith.addf %527, %529 : vector<8x128xf32>
    %531 = math.tanh %530 : vector<8x128xf32>
    %532 = vector.extract_strided_slice %526 {offsets = [0, 128], sizes = [8, 128], strides = [1, 1]} : vector<8x256xf32> to vector<8x128xf32>
    %cst_213 = arith.constant 1.000000e+00 : f32
    %533 = vector.broadcast %cst_213 : f32 to vector<8x128xf32>
    %534 = arith.subf %533, %532 : vector<8x128xf32>
    %535 = arith.mulf %534, %531 : vector<8x128xf32>
    %c0_214 = arith.constant 0 : index
    %c0_215 = arith.constant 0 : index
    %c0_216 = arith.constant 0 : index
    %536 = vector.load %arg9[%c0_214, %c0_215, %c0_216] : memref<8x8x128xf32, #tpu.memory_space<vmem>>, vector<1x8x128xf32>
    %537 = vector.shape_cast %536 : vector<1x8x128xf32> to vector<8x128xf32>
    %538 = vector.shape_cast %535 : vector<8x128xf32> to vector<1x8x128xf32>
    tpu.vector_store %arg9[%c0_214, %c0_215, %c0_216], %538 {strides = array<i32>} : memref<8x8x128xf32, #tpu.memory_space<vmem>>, vector<1x8x128xf32>,
    %c1_i32_217 = arith.constant 1 : i32
    %539 = arith.index_cast %c1_i32_217 : i32 to index
    %c0_218 = arith.constant 0 : index
    %c0_219 = arith.constant 0 : index
    %540 = vector.load %arg10[%539, %c0_218, %c0_219] : memref<8x8x384xf32, #tpu.memory_space<vmem>>, vector<1x8x384xf32>
    %541 = vector.shape_cast %540 : vector<1x8x384xf32> to vector<8x384xf32>
    %c2_220 = arith.constant 2 : index
    %c0_221 = arith.constant 0 : index
    %c0_222 = arith.constant 0 : index
    %542 = vector.load %arg3[%c2_220, %c0_221, %c0_222] : memref<4x128x384xf32, #tpu.memory_space<vmem>>, vector<1x128x384xf32>
    %543 = vector.shape_cast %542 : vector<1x128x384xf32> to vector<128x384xf32>
    %cst_223 = arith.constant dense<0.000000e+00> : vector<8x384xf32>
    %544 = tpu.matmul %535, %543, %cst_223 {dimension_numbers = #tpu.dot_dimension_numbers<[1], [0], [0], [1], [0, 0, 1, 1], [], []>} : vector<8x128xf32>, vector<128x384xf32>, vector<8x384xf32> -> vector<8x384xf32>
    %545 = vector.extract_strided_slice %541 {offsets = [0, 0], sizes = [8, 256], strides = [1, 1]} : vector<8x384xf32> to vector<8x256xf32>
    %546 = vector.extract_strided_slice %544 {offsets = [0, 0], sizes = [8, 256], strides = [1, 1]} : vector<8x384xf32> to vector<8x256xf32>
    %547 = arith.addf %545, %546 : vector<8x256xf32>
    %548 = arith.negf %547 : vector<8x256xf32>
    %549 = math.exp %548 : vector<8x256xf32>
    %cst_224 = arith.constant 1.000000e+00 : f32
    %550 = vector.broadcast %cst_224 : f32 to vector<8x256xf32>
    %551 = arith.addf %550, %549 : vector<8x256xf32>
    %552 = arith.divf %550, %551 : vector<8x256xf32>
    %553 = vector.extract_strided_slice %552 {offsets = [0, 0], sizes = [8, 128], strides = [1, 1]} : vector<8x256xf32> to vector<8x128xf32>
    %554 = vector.extract_strided_slice %552 {offsets = [0, 128], sizes = [8, 128], strides = [1, 1]} : vector<8x256xf32> to vector<8x128xf32>
    %555 = vector.extract_strided_slice %541 {offsets = [0, 256], sizes = [8, 128], strides = [1, 1]} : vector<8x384xf32> to vector<8x128xf32>
    %556 = vector.extract_strided_slice %544 {offsets = [0, 256], sizes = [8, 128], strides = [1, 1]} : vector<8x384xf32> to vector<8x128xf32>
    %557 = arith.addf %556, %518 : vector<8x128xf32>
    %558 = arith.mulf %553, %557 : vector<8x128xf32>
    %559 = arith.addf %555, %558 : vector<8x128xf32>
    %560 = math.tanh %559 : vector<8x128xf32>
    %cst_225 = arith.constant 1.000000e+00 : f32
    %561 = vector.broadcast %cst_225 : f32 to vector<8x128xf32>
    %562 = arith.subf %561, %554 : vector<8x128xf32>
    %563 = arith.mulf %562, %560 : vector<8x128xf32>
    %564 = arith.mulf %554, %535 : vector<8x128xf32>
    %565 = arith.addf %563, %564 : vector<8x128xf32>
    %566 = arith.index_cast %c1_i32_217 : i32 to index
    %c0_226 = arith.constant 0 : index
    %c0_227 = arith.constant 0 : index
    %567 = vector.load %arg9[%566, %c0_226, %c0_227] : memref<8x8x128xf32, #tpu.memory_space<vmem>>, vector<1x8x128xf32>
    %568 = vector.shape_cast %567 : vector<1x8x128xf32> to vector<8x128xf32>
    %569 = vector.shape_cast %565 : vector<8x128xf32> to vector<1x8x128xf32>
    tpu.vector_store %arg9[%566, %c0_226, %c0_227], %569 {strides = array<i32>} : memref<8x8x128xf32, #tpu.memory_space<vmem>>, vector<1x8x128xf32>,
    %c2_i32_228 = arith.constant 2 : i32
    %570 = arith.index_cast %c2_i32_228 : i32 to index
    %c0_229 = arith.constant 0 : index
    %c0_230 = arith.constant 0 : index
    %571 = vector.load %arg10[%570, %c0_229, %c0_230] : memref<8x8x384xf32, #tpu.memory_space<vmem>>, vector<1x8x384xf32>
    %572 = vector.shape_cast %571 : vector<1x8x384xf32> to vector<8x384xf32>
    %c2_231 = arith.constant 2 : index
    %c0_232 = arith.constant 0 : index
    %c0_233 = arith.constant 0 : index
    %573 = vector.load %arg3[%c2_231, %c0_232, %c0_233] : memref<4x128x384xf32, #tpu.memory_space<vmem>>, vector<1x128x384xf32>
    %574 = vector.shape_cast %573 : vector<1x128x384xf32> to vector<128x384xf32>
    %cst_234 = arith.constant dense<0.000000e+00> : vector<8x384xf32>
    %575 = tpu.matmul %565, %574, %cst_234 {dimension_numbers = #tpu.dot_dimension_numbers<[1], [0], [0], [1], [0, 0, 1, 1], [], []>} : vector<8x128xf32>, vector<128x384xf32>, vector<8x384xf32> -> vector<8x384xf32>
    %576 = vector.extract_strided_slice %572 {offsets = [0, 0], sizes = [8, 256], strides = [1, 1]} : vector<8x384xf32> to vector<8x256xf32>
    %577 = vector.extract_strided_slice %575 {offsets = [0, 0], sizes = [8, 256], strides = [1, 1]} : vector<8x384xf32> to vector<8x256xf32>
    %578 = arith.addf %576, %577 : vector<8x256xf32>
    %579 = arith.negf %578 : vector<8x256xf32>
    %580 = math.exp %579 : vector<8x256xf32>
    %cst_235 = arith.constant 1.000000e+00 : f32
    %581 = vector.broadcast %cst_235 : f32 to vector<8x256xf32>
    %582 = arith.addf %581, %580 : vector<8x256xf32>
    %583 = arith.divf %581, %582 : vector<8x256xf32>
    %584 = vector.extract_strided_slice %583 {offsets = [0, 0], sizes = [8, 128], strides = [1, 1]} : vector<8x256xf32> to vector<8x128xf32>
    %585 = vector.extract_strided_slice %583 {offsets = [0, 128], sizes = [8, 128], strides = [1, 1]} : vector<8x256xf32> to vector<8x128xf32>
    %586 = vector.extract_strided_slice %572 {offsets = [0, 256], sizes = [8, 128], strides = [1, 1]} : vector<8x384xf32> to vector<8x128xf32>
    %587 = vector.extract_strided_slice %575 {offsets = [0, 256], sizes = [8, 128], strides = [1, 1]} : vector<8x384xf32> to vector<8x128xf32>
    %588 = arith.addf %587, %518 : vector<8x128xf32>
    %589 = arith.mulf %584, %588 : vector<8x128xf32>
    %590 = arith.addf %586, %589 : vector<8x128xf32>
    %591 = math.tanh %590 : vector<8x128xf32>
    %cst_236 = arith.constant 1.000000e+00 : f32
    %592 = vector.broadcast %cst_236 : f32 to vector<8x128xf32>
    %593 = arith.subf %592, %585 : vector<8x128xf32>
    %594 = arith.mulf %593, %591 : vector<8x128xf32>
    %595 = arith.mulf %585, %565 : vector<8x128xf32>
    %596 = arith.addf %594, %595 : vector<8x128xf32>
    %597 = arith.index_cast %c2_i32_228 : i32 to index
    %c0_237 = arith.constant 0 : index
    %c0_238 = arith.constant 0 : index
    %598 = vector.load %arg9[%597, %c0_237, %c0_238] : memref<8x8x128xf32, #tpu.memory_space<vmem>>, vector<1x8x128xf32>
    %599 = vector.shape_cast %598 : vector<1x8x128xf32> to vector<8x128xf32>
    %600 = vector.shape_cast %596 : vector<8x128xf32> to vector<1x8x128xf32>
    tpu.vector_store %arg9[%597, %c0_237, %c0_238], %600 {strides = array<i32>} : memref<8x8x128xf32, #tpu.memory_space<vmem>>, vector<1x8x128xf32>,
    %c3_i32_239 = arith.constant 3 : i32
    %601 = arith.index_cast %c3_i32_239 : i32 to index
    %c0_240 = arith.constant 0 : index
    %c0_241 = arith.constant 0 : index
    %602 = vector.load %arg10[%601, %c0_240, %c0_241] : memref<8x8x384xf32, #tpu.memory_space<vmem>>, vector<1x8x384xf32>
    %603 = vector.shape_cast %602 : vector<1x8x384xf32> to vector<8x384xf32>
    %c2_242 = arith.constant 2 : index
    %c0_243 = arith.constant 0 : index
    %c0_244 = arith.constant 0 : index
    %604 = vector.load %arg3[%c2_242, %c0_243, %c0_244] : memref<4x128x384xf32, #tpu.memory_space<vmem>>, vector<1x128x384xf32>
    %605 = vector.shape_cast %604 : vector<1x128x384xf32> to vector<128x384xf32>
    %cst_245 = arith.constant dense<0.000000e+00> : vector<8x384xf32>
    %606 = tpu.matmul %596, %605, %cst_245 {dimension_numbers = #tpu.dot_dimension_numbers<[1], [0], [0], [1], [0, 0, 1, 1], [], []>} : vector<8x128xf32>, vector<128x384xf32>, vector<8x384xf32> -> vector<8x384xf32>
    %607 = vector.extract_strided_slice %603 {offsets = [0, 0], sizes = [8, 256], strides = [1, 1]} : vector<8x384xf32> to vector<8x256xf32>
    %608 = vector.extract_strided_slice %606 {offsets = [0, 0], sizes = [8, 256], strides = [1, 1]} : vector<8x384xf32> to vector<8x256xf32>
    %609 = arith.addf %607, %608 : vector<8x256xf32>
    %610 = arith.negf %609 : vector<8x256xf32>
    %611 = math.exp %610 : vector<8x256xf32>
    %cst_246 = arith.constant 1.000000e+00 : f32
    %612 = vector.broadcast %cst_246 : f32 to vector<8x256xf32>
    %613 = arith.addf %612, %611 : vector<8x256xf32>
    %614 = arith.divf %612, %613 : vector<8x256xf32>
    %615 = vector.extract_strided_slice %614 {offsets = [0, 0], sizes = [8, 128], strides = [1, 1]} : vector<8x256xf32> to vector<8x128xf32>
    %616 = vector.extract_strided_slice %614 {offsets = [0, 128], sizes = [8, 128], strides = [1, 1]} : vector<8x256xf32> to vector<8x128xf32>
    %617 = vector.extract_strided_slice %603 {offsets = [0, 256], sizes = [8, 128], strides = [1, 1]} : vector<8x384xf32> to vector<8x128xf32>
    %618 = vector.extract_strided_slice %606 {offsets = [0, 256], sizes = [8, 128], strides = [1, 1]} : vector<8x384xf32> to vector<8x128xf32>
    %619 = arith.addf %618, %518 : vector<8x128xf32>
    %620 = arith.mulf %615, %619 : vector<8x128xf32>
    %621 = arith.addf %617, %620 : vector<8x128xf32>
    %622 = math.tanh %621 : vector<8x128xf32>
    %cst_247 = arith.constant 1.000000e+00 : f32
    %623 = vector.broadcast %cst_247 : f32 to vector<8x128xf32>
    %624 = arith.subf %623, %616 : vector<8x128xf32>
    %625 = arith.mulf %624, %622 : vector<8x128xf32>
    %626 = arith.mulf %616, %596 : vector<8x128xf32>
    %627 = arith.addf %625, %626 : vector<8x128xf32>
    %628 = arith.index_cast %c3_i32_239 : i32 to index
    %c0_248 = arith.constant 0 : index
    %c0_249 = arith.constant 0 : index
    %629 = vector.load %arg9[%628, %c0_248, %c0_249] : memref<8x8x128xf32, #tpu.memory_space<vmem>>, vector<1x8x128xf32>
    %630 = vector.shape_cast %629 : vector<1x8x128xf32> to vector<8x128xf32>
    %631 = vector.shape_cast %627 : vector<8x128xf32> to vector<1x8x128xf32>
    tpu.vector_store %arg9[%628, %c0_248, %c0_249], %631 {strides = array<i32>} : memref<8x8x128xf32, #tpu.memory_space<vmem>>, vector<1x8x128xf32>,
    %c4_i32_250 = arith.constant 4 : i32
    %632 = arith.index_cast %c4_i32_250 : i32 to index
    %c0_251 = arith.constant 0 : index
    %c0_252 = arith.constant 0 : index
    %633 = vector.load %arg10[%632, %c0_251, %c0_252] : memref<8x8x384xf32, #tpu.memory_space<vmem>>, vector<1x8x384xf32>
    %634 = vector.shape_cast %633 : vector<1x8x384xf32> to vector<8x384xf32>
    %c2_253 = arith.constant 2 : index
    %c0_254 = arith.constant 0 : index
    %c0_255 = arith.constant 0 : index
    %635 = vector.load %arg3[%c2_253, %c0_254, %c0_255] : memref<4x128x384xf32, #tpu.memory_space<vmem>>, vector<1x128x384xf32>
    %636 = vector.shape_cast %635 : vector<1x128x384xf32> to vector<128x384xf32>
    %cst_256 = arith.constant dense<0.000000e+00> : vector<8x384xf32>
    %637 = tpu.matmul %627, %636, %cst_256 {dimension_numbers = #tpu.dot_dimension_numbers<[1], [0], [0], [1], [0, 0, 1, 1], [], []>} : vector<8x128xf32>, vector<128x384xf32>, vector<8x384xf32> -> vector<8x384xf32>
    %638 = vector.extract_strided_slice %634 {offsets = [0, 0], sizes = [8, 256], strides = [1, 1]} : vector<8x384xf32> to vector<8x256xf32>
    %639 = vector.extract_strided_slice %637 {offsets = [0, 0], sizes = [8, 256], strides = [1, 1]} : vector<8x384xf32> to vector<8x256xf32>
    %640 = arith.addf %638, %639 : vector<8x256xf32>
    %641 = arith.negf %640 : vector<8x256xf32>
    %642 = math.exp %641 : vector<8x256xf32>
    %cst_257 = arith.constant 1.000000e+00 : f32
    %643 = vector.broadcast %cst_257 : f32 to vector<8x256xf32>
    %644 = arith.addf %643, %642 : vector<8x256xf32>
    %645 = arith.divf %643, %644 : vector<8x256xf32>
    %646 = vector.extract_strided_slice %645 {offsets = [0, 0], sizes = [8, 128], strides = [1, 1]} : vector<8x256xf32> to vector<8x128xf32>
    %647 = vector.extract_strided_slice %645 {offsets = [0, 128], sizes = [8, 128], strides = [1, 1]} : vector<8x256xf32> to vector<8x128xf32>
    %648 = vector.extract_strided_slice %634 {offsets = [0, 256], sizes = [8, 128], strides = [1, 1]} : vector<8x384xf32> to vector<8x128xf32>
    %649 = vector.extract_strided_slice %637 {offsets = [0, 256], sizes = [8, 128], strides = [1, 1]} : vector<8x384xf32> to vector<8x128xf32>
    %650 = arith.addf %649, %518 : vector<8x128xf32>
    %651 = arith.mulf %646, %650 : vector<8x128xf32>
    %652 = arith.addf %648, %651 : vector<8x128xf32>
    %653 = math.tanh %652 : vector<8x128xf32>
    %cst_258 = arith.constant 1.000000e+00 : f32
    %654 = vector.broadcast %cst_258 : f32 to vector<8x128xf32>
    %655 = arith.subf %654, %647 : vector<8x128xf32>
    %656 = arith.mulf %655, %653 : vector<8x128xf32>
    %657 = arith.mulf %647, %627 : vector<8x128xf32>
    %658 = arith.addf %656, %657 : vector<8x128xf32>
    %659 = arith.index_cast %c4_i32_250 : i32 to index
    %c0_259 = arith.constant 0 : index
    %c0_260 = arith.constant 0 : index
    %660 = vector.load %arg9[%659, %c0_259, %c0_260] : memref<8x8x128xf32, #tpu.memory_space<vmem>>, vector<1x8x128xf32>
    %661 = vector.shape_cast %660 : vector<1x8x128xf32> to vector<8x128xf32>
    %662 = vector.shape_cast %658 : vector<8x128xf32> to vector<1x8x128xf32>
    tpu.vector_store %arg9[%659, %c0_259, %c0_260], %662 {strides = array<i32>} : memref<8x8x128xf32, #tpu.memory_space<vmem>>, vector<1x8x128xf32>,
    %c5_i32_261 = arith.constant 5 : i32
    %663 = arith.index_cast %c5_i32_261 : i32 to index
    %c0_262 = arith.constant 0 : index
    %c0_263 = arith.constant 0 : index
    %664 = vector.load %arg10[%663, %c0_262, %c0_263] : memref<8x8x384xf32, #tpu.memory_space<vmem>>, vector<1x8x384xf32>
    %665 = vector.shape_cast %664 : vector<1x8x384xf32> to vector<8x384xf32>
    %c2_264 = arith.constant 2 : index
    %c0_265 = arith.constant 0 : index
    %c0_266 = arith.constant 0 : index
    %666 = vector.load %arg3[%c2_264, %c0_265, %c0_266] : memref<4x128x384xf32, #tpu.memory_space<vmem>>, vector<1x128x384xf32>
    %667 = vector.shape_cast %666 : vector<1x128x384xf32> to vector<128x384xf32>
    %cst_267 = arith.constant dense<0.000000e+00> : vector<8x384xf32>
    %668 = tpu.matmul %658, %667, %cst_267 {dimension_numbers = #tpu.dot_dimension_numbers<[1], [0], [0], [1], [0, 0, 1, 1], [], []>} : vector<8x128xf32>, vector<128x384xf32>, vector<8x384xf32> -> vector<8x384xf32>
    %669 = vector.extract_strided_slice %665 {offsets = [0, 0], sizes = [8, 256], strides = [1, 1]} : vector<8x384xf32> to vector<8x256xf32>
    %670 = vector.extract_strided_slice %668 {offsets = [0, 0], sizes = [8, 256], strides = [1, 1]} : vector<8x384xf32> to vector<8x256xf32>
    %671 = arith.addf %669, %670 : vector<8x256xf32>
    %672 = arith.negf %671 : vector<8x256xf32>
    %673 = math.exp %672 : vector<8x256xf32>
    %cst_268 = arith.constant 1.000000e+00 : f32
    %674 = vector.broadcast %cst_268 : f32 to vector<8x256xf32>
    %675 = arith.addf %674, %673 : vector<8x256xf32>
    %676 = arith.divf %674, %675 : vector<8x256xf32>
    %677 = vector.extract_strided_slice %676 {offsets = [0, 0], sizes = [8, 128], strides = [1, 1]} : vector<8x256xf32> to vector<8x128xf32>
    %678 = vector.extract_strided_slice %676 {offsets = [0, 128], sizes = [8, 128], strides = [1, 1]} : vector<8x256xf32> to vector<8x128xf32>
    %679 = vector.extract_strided_slice %665 {offsets = [0, 256], sizes = [8, 128], strides = [1, 1]} : vector<8x384xf32> to vector<8x128xf32>
    %680 = vector.extract_strided_slice %668 {offsets = [0, 256], sizes = [8, 128], strides = [1, 1]} : vector<8x384xf32> to vector<8x128xf32>
    %681 = arith.addf %680, %518 : vector<8x128xf32>
    %682 = arith.mulf %677, %681 : vector<8x128xf32>
    %683 = arith.addf %679, %682 : vector<8x128xf32>
    %684 = math.tanh %683 : vector<8x128xf32>
    %cst_269 = arith.constant 1.000000e+00 : f32
    %685 = vector.broadcast %cst_269 : f32 to vector<8x128xf32>
    %686 = arith.subf %685, %678 : vector<8x128xf32>
    %687 = arith.mulf %686, %684 : vector<8x128xf32>
    %688 = arith.mulf %678, %658 : vector<8x128xf32>
    %689 = arith.addf %687, %688 : vector<8x128xf32>
    %690 = arith.index_cast %c5_i32_261 : i32 to index
    %c0_270 = arith.constant 0 : index
    %c0_271 = arith.constant 0 : index
    %691 = vector.load %arg9[%690, %c0_270, %c0_271] : memref<8x8x128xf32, #tpu.memory_space<vmem>>, vector<1x8x128xf32>
    %692 = vector.shape_cast %691 : vector<1x8x128xf32> to vector<8x128xf32>
    %693 = vector.shape_cast %689 : vector<8x128xf32> to vector<1x8x128xf32>
    tpu.vector_store %arg9[%690, %c0_270, %c0_271], %693 {strides = array<i32>} : memref<8x8x128xf32, #tpu.memory_space<vmem>>, vector<1x8x128xf32>,
    %c6_i32_272 = arith.constant 6 : i32
    %694 = arith.index_cast %c6_i32_272 : i32 to index
    %c0_273 = arith.constant 0 : index
    %c0_274 = arith.constant 0 : index
    %695 = vector.load %arg10[%694, %c0_273, %c0_274] : memref<8x8x384xf32, #tpu.memory_space<vmem>>, vector<1x8x384xf32>
    %696 = vector.shape_cast %695 : vector<1x8x384xf32> to vector<8x384xf32>
    %c2_275 = arith.constant 2 : index
    %c0_276 = arith.constant 0 : index
    %c0_277 = arith.constant 0 : index
    %697 = vector.load %arg3[%c2_275, %c0_276, %c0_277] : memref<4x128x384xf32, #tpu.memory_space<vmem>>, vector<1x128x384xf32>
    %698 = vector.shape_cast %697 : vector<1x128x384xf32> to vector<128x384xf32>
    %cst_278 = arith.constant dense<0.000000e+00> : vector<8x384xf32>
    %699 = tpu.matmul %689, %698, %cst_278 {dimension_numbers = #tpu.dot_dimension_numbers<[1], [0], [0], [1], [0, 0, 1, 1], [], []>} : vector<8x128xf32>, vector<128x384xf32>, vector<8x384xf32> -> vector<8x384xf32>
    %700 = vector.extract_strided_slice %696 {offsets = [0, 0], sizes = [8, 256], strides = [1, 1]} : vector<8x384xf32> to vector<8x256xf32>
    %701 = vector.extract_strided_slice %699 {offsets = [0, 0], sizes = [8, 256], strides = [1, 1]} : vector<8x384xf32> to vector<8x256xf32>
    %702 = arith.addf %700, %701 : vector<8x256xf32>
    %703 = arith.negf %702 : vector<8x256xf32>
    %704 = math.exp %703 : vector<8x256xf32>
    %cst_279 = arith.constant 1.000000e+00 : f32
    %705 = vector.broadcast %cst_279 : f32 to vector<8x256xf32>
    %706 = arith.addf %705, %704 : vector<8x256xf32>
    %707 = arith.divf %705, %706 : vector<8x256xf32>
    %708 = vector.extract_strided_slice %707 {offsets = [0, 0], sizes = [8, 128], strides = [1, 1]} : vector<8x256xf32> to vector<8x128xf32>
    %709 = vector.extract_strided_slice %707 {offsets = [0, 128], sizes = [8, 128], strides = [1, 1]} : vector<8x256xf32> to vector<8x128xf32>
    %710 = vector.extract_strided_slice %696 {offsets = [0, 256], sizes = [8, 128], strides = [1, 1]} : vector<8x384xf32> to vector<8x128xf32>
    %711 = vector.extract_strided_slice %699 {offsets = [0, 256], sizes = [8, 128], strides = [1, 1]} : vector<8x384xf32> to vector<8x128xf32>
    %712 = arith.addf %711, %518 : vector<8x128xf32>
    %713 = arith.mulf %708, %712 : vector<8x128xf32>
    %714 = arith.addf %710, %713 : vector<8x128xf32>
    %715 = math.tanh %714 : vector<8x128xf32>
    %cst_280 = arith.constant 1.000000e+00 : f32
    %716 = vector.broadcast %cst_280 : f32 to vector<8x128xf32>
    %717 = arith.subf %716, %709 : vector<8x128xf32>
    %718 = arith.mulf %717, %715 : vector<8x128xf32>
    %719 = arith.mulf %709, %689 : vector<8x128xf32>
    %720 = arith.addf %718, %719 : vector<8x128xf32>
    %721 = arith.index_cast %c6_i32_272 : i32 to index
    %c0_281 = arith.constant 0 : index
    %c0_282 = arith.constant 0 : index
    %722 = vector.load %arg9[%721, %c0_281, %c0_282] : memref<8x8x128xf32, #tpu.memory_space<vmem>>, vector<1x8x128xf32>
    %723 = vector.shape_cast %722 : vector<1x8x128xf32> to vector<8x128xf32>
    %724 = vector.shape_cast %720 : vector<8x128xf32> to vector<1x8x128xf32>
    tpu.vector_store %arg9[%721, %c0_281, %c0_282], %724 {strides = array<i32>} : memref<8x8x128xf32, #tpu.memory_space<vmem>>, vector<1x8x128xf32>,
    %c7_i32_283 = arith.constant 7 : i32
    %725 = arith.index_cast %c7_i32_283 : i32 to index
    %c0_284 = arith.constant 0 : index
    %c0_285 = arith.constant 0 : index
    %726 = vector.load %arg10[%725, %c0_284, %c0_285] : memref<8x8x384xf32, #tpu.memory_space<vmem>>, vector<1x8x384xf32>
    %727 = vector.shape_cast %726 : vector<1x8x384xf32> to vector<8x384xf32>
    %c2_286 = arith.constant 2 : index
    %c0_287 = arith.constant 0 : index
    %c0_288 = arith.constant 0 : index
    %728 = vector.load %arg3[%c2_286, %c0_287, %c0_288] : memref<4x128x384xf32, #tpu.memory_space<vmem>>, vector<1x128x384xf32>
    %729 = vector.shape_cast %728 : vector<1x128x384xf32> to vector<128x384xf32>
    %cst_289 = arith.constant dense<0.000000e+00> : vector<8x384xf32>
    %730 = tpu.matmul %720, %729, %cst_289 {dimension_numbers = #tpu.dot_dimension_numbers<[1], [0], [0], [1], [0, 0, 1, 1], [], []>} : vector<8x128xf32>, vector<128x384xf32>, vector<8x384xf32> -> vector<8x384xf32>
    %731 = vector.extract_strided_slice %727 {offsets = [0, 0], sizes = [8, 256], strides = [1, 1]} : vector<8x384xf32> to vector<8x256xf32>
    %732 = vector.extract_strided_slice %730 {offsets = [0, 0], sizes = [8, 256], strides = [1, 1]} : vector<8x384xf32> to vector<8x256xf32>
    %733 = arith.addf %731, %732 : vector<8x256xf32>
    %734 = arith.negf %733 : vector<8x256xf32>
    %735 = math.exp %734 : vector<8x256xf32>
    %cst_290 = arith.constant 1.000000e+00 : f32
    %736 = vector.broadcast %cst_290 : f32 to vector<8x256xf32>
    %737 = arith.addf %736, %735 : vector<8x256xf32>
    %738 = arith.divf %736, %737 : vector<8x256xf32>
    %739 = vector.extract_strided_slice %738 {offsets = [0, 0], sizes = [8, 128], strides = [1, 1]} : vector<8x256xf32> to vector<8x128xf32>
    %740 = vector.extract_strided_slice %738 {offsets = [0, 128], sizes = [8, 128], strides = [1, 1]} : vector<8x256xf32> to vector<8x128xf32>
    %741 = vector.extract_strided_slice %727 {offsets = [0, 256], sizes = [8, 128], strides = [1, 1]} : vector<8x384xf32> to vector<8x128xf32>
    %742 = vector.extract_strided_slice %730 {offsets = [0, 256], sizes = [8, 128], strides = [1, 1]} : vector<8x384xf32> to vector<8x128xf32>
    %743 = arith.addf %742, %518 : vector<8x128xf32>
    %744 = arith.mulf %739, %743 : vector<8x128xf32>
    %745 = arith.addf %741, %744 : vector<8x128xf32>
    %746 = math.tanh %745 : vector<8x128xf32>
    %cst_291 = arith.constant 1.000000e+00 : f32
    %747 = vector.broadcast %cst_291 : f32 to vector<8x128xf32>
    %748 = arith.subf %747, %740 : vector<8x128xf32>
    %749 = arith.mulf %748, %746 : vector<8x128xf32>
    %750 = arith.mulf %740, %720 : vector<8x128xf32>
    %751 = arith.addf %749, %750 : vector<8x128xf32>
    %752 = arith.index_cast %c7_i32_283 : i32 to index
    %c0_292 = arith.constant 0 : index
    %c0_293 = arith.constant 0 : index
    %753 = vector.load %arg9[%752, %c0_292, %c0_293] : memref<8x8x128xf32, #tpu.memory_space<vmem>>, vector<1x8x128xf32>
    %754 = vector.shape_cast %753 : vector<1x8x128xf32> to vector<8x128xf32>
    %755 = vector.shape_cast %751 : vector<8x128xf32> to vector<1x8x128xf32>
    tpu.vector_store %arg9[%752, %c0_292, %c0_293], %755 {strides = array<i32>} : memref<8x8x128xf32, #tpu.memory_space<vmem>>, vector<1x8x128xf32>,
    %c7_i32_294 = arith.constant 7 : i32
    %c0_295 = arith.constant 0 : index
    %c0_296 = arith.constant 0 : index
    %c0_297 = arith.constant 0 : index
    %756 = vector.load %arg9[%c0_295, %c0_296, %c0_297] : memref<8x8x128xf32, #tpu.memory_space<vmem>>, vector<8x8x128xf32>
    %757 = vector.shape_cast %756 : vector<8x8x128xf32> to vector<64x128xf32>
    %c3 = arith.constant 3 : index
    %c0_298 = arith.constant 0 : index
    %c0_299 = arith.constant 0 : index
    %758 = vector.load %arg2[%c3, %c0_298, %c0_299] : memref<4x128x384xf32, #tpu.memory_space<vmem>>, vector<1x128x384xf32>
    %759 = vector.shape_cast %758 : vector<1x128x384xf32> to vector<128x384xf32>
    %cst_300 = arith.constant dense<0.000000e+00> : vector<64x384xf32>
    %760 = tpu.matmul %757, %759, %cst_300 {dimension_numbers = #tpu.dot_dimension_numbers<[1], [0], [0], [1], [0, 0, 1, 1], [], []>} : vector<64x128xf32>, vector<128x384xf32>, vector<64x384xf32> -> vector<64x384xf32>
    %c3_301 = arith.constant 3 : index
    %c0_302 = arith.constant 0 : index
    %c0_303 = arith.constant 0 : index
    %761 = vector.load %arg4[%c3_301, %c0_302, %c0_303] : memref<4x1x384xf32, #tpu.memory_space<vmem>>, vector<1x1x384xf32>
    %762 = vector.shape_cast %761 : vector<1x1x384xf32> to vector<1x384xf32>
    %763 = vector.broadcast %762 : vector<1x384xf32> to vector<64x384xf32>
    %764 = arith.addf %760, %763 : vector<64x384xf32>
    %765 = vector.shape_cast %764 : vector<64x384xf32> to vector<8x8x384xf32>
    %c0_304 = arith.constant 0 : index
    %c0_305 = arith.constant 0 : index
    %c0_306 = arith.constant 0 : index
    %766 = vector.load %arg10[%c0_304, %c0_305, %c0_306] : memref<8x8x384xf32, #tpu.memory_space<vmem>>, vector<8x8x384xf32>
    tpu.vector_store %arg10[%c0_304, %c0_305, %c0_306], %765 {strides = array<i32>} : memref<8x8x384xf32, #tpu.memory_space<vmem>>, vector<8x8x384xf32>,
    %c3_307 = arith.constant 3 : index
    %c0_308 = arith.constant 0 : index
    %c0_309 = arith.constant 0 : index
    %767 = vector.load %arg5[%c3_307, %c0_308, %c0_309] : memref<4x1x128xf32, #tpu.memory_space<vmem>>, vector<1x1x128xf32>
    %768 = vector.shape_cast %767 : vector<1x1x128xf32> to vector<1x128xf32>
    %769 = vector.shape_cast %768 : vector<1x128xf32> to vector<1x128xf32>
    %770 = vector.broadcast %769 : vector<1x128xf32> to vector<8x128xf32>
    %c0_310 = arith.constant 0 : index
    %c0_311 = arith.constant 0 : index
    %c0_312 = arith.constant 0 : index
    %771 = vector.load %arg10[%c0_310, %c0_311, %c0_312] : memref<8x8x384xf32, #tpu.memory_space<vmem>>, vector<1x8x384xf32>
    %772 = vector.shape_cast %771 : vector<1x8x384xf32> to vector<8x384xf32>
    %773 = vector.extract_strided_slice %772 {offsets = [0, 0], sizes = [8, 256], strides = [1, 1]} : vector<8x384xf32> to vector<8x256xf32>
    %774 = arith.negf %773 : vector<8x256xf32>
    %775 = math.exp %774 : vector<8x256xf32>
    %cst_313 = arith.constant 1.000000e+00 : f32
    %776 = vector.broadcast %cst_313 : f32 to vector<8x256xf32>
    %777 = arith.addf %776, %775 : vector<8x256xf32>
    %778 = arith.divf %776, %777 : vector<8x256xf32>
    %779 = vector.extract_strided_slice %772 {offsets = [0, 256], sizes = [8, 128], strides = [1, 1]} : vector<8x384xf32> to vector<8x128xf32>
    %780 = vector.extract_strided_slice %778 {offsets = [0, 0], sizes = [8, 128], strides = [1, 1]} : vector<8x256xf32> to vector<8x128xf32>
    %781 = arith.mulf %780, %770 : vector<8x128xf32>
    %782 = arith.addf %779, %781 : vector<8x128xf32>
    %783 = math.tanh %782 : vector<8x128xf32>
    %784 = vector.extract_strided_slice %778 {offsets = [0, 128], sizes = [8, 128], strides = [1, 1]} : vector<8x256xf32> to vector<8x128xf32>
    %cst_314 = arith.constant 1.000000e+00 : f32
    %785 = vector.broadcast %cst_314 : f32 to vector<8x128xf32>
    %786 = arith.subf %785, %784 : vector<8x128xf32>
    %787 = arith.mulf %786, %783 : vector<8x128xf32>
    %c0_315 = arith.constant 0 : index
    %c0_316 = arith.constant 0 : index
    %c0_317 = arith.constant 0 : index
    %788 = vector.load %arg9[%c0_315, %c0_316, %c0_317] : memref<8x8x128xf32, #tpu.memory_space<vmem>>, vector<1x8x128xf32>
    %789 = vector.shape_cast %788 : vector<1x8x128xf32> to vector<8x128xf32>
    %790 = vector.shape_cast %787 : vector<8x128xf32> to vector<1x8x128xf32>
    tpu.vector_store %arg9[%c0_315, %c0_316, %c0_317], %790 {strides = array<i32>} : memref<8x8x128xf32, #tpu.memory_space<vmem>>, vector<1x8x128xf32>,
    %c1_i32_318 = arith.constant 1 : i32
    %791 = arith.index_cast %c1_i32_318 : i32 to index
    %c0_319 = arith.constant 0 : index
    %c0_320 = arith.constant 0 : index
    %792 = vector.load %arg10[%791, %c0_319, %c0_320] : memref<8x8x384xf32, #tpu.memory_space<vmem>>, vector<1x8x384xf32>
    %793 = vector.shape_cast %792 : vector<1x8x384xf32> to vector<8x384xf32>
    %c3_321 = arith.constant 3 : index
    %c0_322 = arith.constant 0 : index
    %c0_323 = arith.constant 0 : index
    %794 = vector.load %arg3[%c3_321, %c0_322, %c0_323] : memref<4x128x384xf32, #tpu.memory_space<vmem>>, vector<1x128x384xf32>
    %795 = vector.shape_cast %794 : vector<1x128x384xf32> to vector<128x384xf32>
    %cst_324 = arith.constant dense<0.000000e+00> : vector<8x384xf32>
    %796 = tpu.matmul %787, %795, %cst_324 {dimension_numbers = #tpu.dot_dimension_numbers<[1], [0], [0], [1], [0, 0, 1, 1], [], []>} : vector<8x128xf32>, vector<128x384xf32>, vector<8x384xf32> -> vector<8x384xf32>
    %797 = vector.extract_strided_slice %793 {offsets = [0, 0], sizes = [8, 256], strides = [1, 1]} : vector<8x384xf32> to vector<8x256xf32>
    %798 = vector.extract_strided_slice %796 {offsets = [0, 0], sizes = [8, 256], strides = [1, 1]} : vector<8x384xf32> to vector<8x256xf32>
    %799 = arith.addf %797, %798 : vector<8x256xf32>
    %800 = arith.negf %799 : vector<8x256xf32>
    %801 = math.exp %800 : vector<8x256xf32>
    %cst_325 = arith.constant 1.000000e+00 : f32
    %802 = vector.broadcast %cst_325 : f32 to vector<8x256xf32>
    %803 = arith.addf %802, %801 : vector<8x256xf32>
    %804 = arith.divf %802, %803 : vector<8x256xf32>
    %805 = vector.extract_strided_slice %804 {offsets = [0, 0], sizes = [8, 128], strides = [1, 1]} : vector<8x256xf32> to vector<8x128xf32>
    %806 = vector.extract_strided_slice %804 {offsets = [0, 128], sizes = [8, 128], strides = [1, 1]} : vector<8x256xf32> to vector<8x128xf32>
    %807 = vector.extract_strided_slice %793 {offsets = [0, 256], sizes = [8, 128], strides = [1, 1]} : vector<8x384xf32> to vector<8x128xf32>
    %808 = vector.extract_strided_slice %796 {offsets = [0, 256], sizes = [8, 128], strides = [1, 1]} : vector<8x384xf32> to vector<8x128xf32>
    %809 = arith.addf %808, %770 : vector<8x128xf32>
    %810 = arith.mulf %805, %809 : vector<8x128xf32>
    %811 = arith.addf %807, %810 : vector<8x128xf32>
    %812 = math.tanh %811 : vector<8x128xf32>
    %cst_326 = arith.constant 1.000000e+00 : f32
    %813 = vector.broadcast %cst_326 : f32 to vector<8x128xf32>
    %814 = arith.subf %813, %806 : vector<8x128xf32>
    %815 = arith.mulf %814, %812 : vector<8x128xf32>
    %816 = arith.mulf %806, %787 : vector<8x128xf32>
    %817 = arith.addf %815, %816 : vector<8x128xf32>
    %818 = arith.index_cast %c1_i32_318 : i32 to index
    %c0_327 = arith.constant 0 : index
    %c0_328 = arith.constant 0 : index
    %819 = vector.load %arg9[%818, %c0_327, %c0_328] : memref<8x8x128xf32, #tpu.memory_space<vmem>>, vector<1x8x128xf32>
    %820 = vector.shape_cast %819 : vector<1x8x128xf32> to vector<8x128xf32>
    %821 = vector.shape_cast %817 : vector<8x128xf32> to vector<1x8x128xf32>
    tpu.vector_store %arg9[%818, %c0_327, %c0_328], %821 {strides = array<i32>} : memref<8x8x128xf32, #tpu.memory_space<vmem>>, vector<1x8x128xf32>,
    %c2_i32_329 = arith.constant 2 : i32
    %822 = arith.index_cast %c2_i32_329 : i32 to index
    %c0_330 = arith.constant 0 : index
    %c0_331 = arith.constant 0 : index
    %823 = vector.load %arg10[%822, %c0_330, %c0_331] : memref<8x8x384xf32, #tpu.memory_space<vmem>>, vector<1x8x384xf32>
    %824 = vector.shape_cast %823 : vector<1x8x384xf32> to vector<8x384xf32>
    %c3_332 = arith.constant 3 : index
    %c0_333 = arith.constant 0 : index
    %c0_334 = arith.constant 0 : index
    %825 = vector.load %arg3[%c3_332, %c0_333, %c0_334] : memref<4x128x384xf32, #tpu.memory_space<vmem>>, vector<1x128x384xf32>
    %826 = vector.shape_cast %825 : vector<1x128x384xf32> to vector<128x384xf32>
    %cst_335 = arith.constant dense<0.000000e+00> : vector<8x384xf32>
    %827 = tpu.matmul %817, %826, %cst_335 {dimension_numbers = #tpu.dot_dimension_numbers<[1], [0], [0], [1], [0, 0, 1, 1], [], []>} : vector<8x128xf32>, vector<128x384xf32>, vector<8x384xf32> -> vector<8x384xf32>
    %828 = vector.extract_strided_slice %824 {offsets = [0, 0], sizes = [8, 256], strides = [1, 1]} : vector<8x384xf32> to vector<8x256xf32>
    %829 = vector.extract_strided_slice %827 {offsets = [0, 0], sizes = [8, 256], strides = [1, 1]} : vector<8x384xf32> to vector<8x256xf32>
    %830 = arith.addf %828, %829 : vector<8x256xf32>
    %831 = arith.negf %830 : vector<8x256xf32>
    %832 = math.exp %831 : vector<8x256xf32>
    %cst_336 = arith.constant 1.000000e+00 : f32
    %833 = vector.broadcast %cst_336 : f32 to vector<8x256xf32>
    %834 = arith.addf %833, %832 : vector<8x256xf32>
    %835 = arith.divf %833, %834 : vector<8x256xf32>
    %836 = vector.extract_strided_slice %835 {offsets = [0, 0], sizes = [8, 128], strides = [1, 1]} : vector<8x256xf32> to vector<8x128xf32>
    %837 = vector.extract_strided_slice %835 {offsets = [0, 128], sizes = [8, 128], strides = [1, 1]} : vector<8x256xf32> to vector<8x128xf32>
    %838 = vector.extract_strided_slice %824 {offsets = [0, 256], sizes = [8, 128], strides = [1, 1]} : vector<8x384xf32> to vector<8x128xf32>
    %839 = vector.extract_strided_slice %827 {offsets = [0, 256], sizes = [8, 128], strides = [1, 1]} : vector<8x384xf32> to vector<8x128xf32>
    %840 = arith.addf %839, %770 : vector<8x128xf32>
    %841 = arith.mulf %836, %840 : vector<8x128xf32>
    %842 = arith.addf %838, %841 : vector<8x128xf32>
    %843 = math.tanh %842 : vector<8x128xf32>
    %cst_337 = arith.constant 1.000000e+00 : f32
    %844 = vector.broadcast %cst_337 : f32 to vector<8x128xf32>
    %845 = arith.subf %844, %837 : vector<8x128xf32>
    %846 = arith.mulf %845, %843 : vector<8x128xf32>
    %847 = arith.mulf %837, %817 : vector<8x128xf32>
    %848 = arith.addf %846, %847 : vector<8x128xf32>
    %849 = arith.index_cast %c2_i32_329 : i32 to index
    %c0_338 = arith.constant 0 : index
    %c0_339 = arith.constant 0 : index
    %850 = vector.load %arg9[%849, %c0_338, %c0_339] : memref<8x8x128xf32, #tpu.memory_space<vmem>>, vector<1x8x128xf32>
    %851 = vector.shape_cast %850 : vector<1x8x128xf32> to vector<8x128xf32>
    %852 = vector.shape_cast %848 : vector<8x128xf32> to vector<1x8x128xf32>
    tpu.vector_store %arg9[%849, %c0_338, %c0_339], %852 {strides = array<i32>} : memref<8x8x128xf32, #tpu.memory_space<vmem>>, vector<1x8x128xf32>,
    %c3_i32_340 = arith.constant 3 : i32
    %853 = arith.index_cast %c3_i32_340 : i32 to index
    %c0_341 = arith.constant 0 : index
    %c0_342 = arith.constant 0 : index
    %854 = vector.load %arg10[%853, %c0_341, %c0_342] : memref<8x8x384xf32, #tpu.memory_space<vmem>>, vector<1x8x384xf32>
    %855 = vector.shape_cast %854 : vector<1x8x384xf32> to vector<8x384xf32>
    %c3_343 = arith.constant 3 : index
    %c0_344 = arith.constant 0 : index
    %c0_345 = arith.constant 0 : index
    %856 = vector.load %arg3[%c3_343, %c0_344, %c0_345] : memref<4x128x384xf32, #tpu.memory_space<vmem>>, vector<1x128x384xf32>
    %857 = vector.shape_cast %856 : vector<1x128x384xf32> to vector<128x384xf32>
    %cst_346 = arith.constant dense<0.000000e+00> : vector<8x384xf32>
    %858 = tpu.matmul %848, %857, %cst_346 {dimension_numbers = #tpu.dot_dimension_numbers<[1], [0], [0], [1], [0, 0, 1, 1], [], []>} : vector<8x128xf32>, vector<128x384xf32>, vector<8x384xf32> -> vector<8x384xf32>
    %859 = vector.extract_strided_slice %855 {offsets = [0, 0], sizes = [8, 256], strides = [1, 1]} : vector<8x384xf32> to vector<8x256xf32>
    %860 = vector.extract_strided_slice %858 {offsets = [0, 0], sizes = [8, 256], strides = [1, 1]} : vector<8x384xf32> to vector<8x256xf32>
    %861 = arith.addf %859, %860 : vector<8x256xf32>
    %862 = arith.negf %861 : vector<8x256xf32>
    %863 = math.exp %862 : vector<8x256xf32>
    %cst_347 = arith.constant 1.000000e+00 : f32
    %864 = vector.broadcast %cst_347 : f32 to vector<8x256xf32>
    %865 = arith.addf %864, %863 : vector<8x256xf32>
    %866 = arith.divf %864, %865 : vector<8x256xf32>
    %867 = vector.extract_strided_slice %866 {offsets = [0, 0], sizes = [8, 128], strides = [1, 1]} : vector<8x256xf32> to vector<8x128xf32>
    %868 = vector.extract_strided_slice %866 {offsets = [0, 128], sizes = [8, 128], strides = [1, 1]} : vector<8x256xf32> to vector<8x128xf32>
    %869 = vector.extract_strided_slice %855 {offsets = [0, 256], sizes = [8, 128], strides = [1, 1]} : vector<8x384xf32> to vector<8x128xf32>
    %870 = vector.extract_strided_slice %858 {offsets = [0, 256], sizes = [8, 128], strides = [1, 1]} : vector<8x384xf32> to vector<8x128xf32>
    %871 = arith.addf %870, %770 : vector<8x128xf32>
    %872 = arith.mulf %867, %871 : vector<8x128xf32>
    %873 = arith.addf %869, %872 : vector<8x128xf32>
    %874 = math.tanh %873 : vector<8x128xf32>
    %cst_348 = arith.constant 1.000000e+00 : f32
    %875 = vector.broadcast %cst_348 : f32 to vector<8x128xf32>
    %876 = arith.subf %875, %868 : vector<8x128xf32>
    %877 = arith.mulf %876, %874 : vector<8x128xf32>
    %878 = arith.mulf %868, %848 : vector<8x128xf32>
    %879 = arith.addf %877, %878 : vector<8x128xf32>
    %880 = arith.index_cast %c3_i32_340 : i32 to index
    %c0_349 = arith.constant 0 : index
    %c0_350 = arith.constant 0 : index
    %881 = vector.load %arg9[%880, %c0_349, %c0_350] : memref<8x8x128xf32, #tpu.memory_space<vmem>>, vector<1x8x128xf32>
    %882 = vector.shape_cast %881 : vector<1x8x128xf32> to vector<8x128xf32>
    %883 = vector.shape_cast %879 : vector<8x128xf32> to vector<1x8x128xf32>
    tpu.vector_store %arg9[%880, %c0_349, %c0_350], %883 {strides = array<i32>} : memref<8x8x128xf32, #tpu.memory_space<vmem>>, vector<1x8x128xf32>,
    %c4_i32_351 = arith.constant 4 : i32
    %884 = arith.index_cast %c4_i32_351 : i32 to index
    %c0_352 = arith.constant 0 : index
    %c0_353 = arith.constant 0 : index
    %885 = vector.load %arg10[%884, %c0_352, %c0_353] : memref<8x8x384xf32, #tpu.memory_space<vmem>>, vector<1x8x384xf32>
    %886 = vector.shape_cast %885 : vector<1x8x384xf32> to vector<8x384xf32>
    %c3_354 = arith.constant 3 : index
    %c0_355 = arith.constant 0 : index
    %c0_356 = arith.constant 0 : index
    %887 = vector.load %arg3[%c3_354, %c0_355, %c0_356] : memref<4x128x384xf32, #tpu.memory_space<vmem>>, vector<1x128x384xf32>
    %888 = vector.shape_cast %887 : vector<1x128x384xf32> to vector<128x384xf32>
    %cst_357 = arith.constant dense<0.000000e+00> : vector<8x384xf32>
    %889 = tpu.matmul %879, %888, %cst_357 {dimension_numbers = #tpu.dot_dimension_numbers<[1], [0], [0], [1], [0, 0, 1, 1], [], []>} : vector<8x128xf32>, vector<128x384xf32>, vector<8x384xf32> -> vector<8x384xf32>
    %890 = vector.extract_strided_slice %886 {offsets = [0, 0], sizes = [8, 256], strides = [1, 1]} : vector<8x384xf32> to vector<8x256xf32>
    %891 = vector.extract_strided_slice %889 {offsets = [0, 0], sizes = [8, 256], strides = [1, 1]} : vector<8x384xf32> to vector<8x256xf32>
    %892 = arith.addf %890, %891 : vector<8x256xf32>
    %893 = arith.negf %892 : vector<8x256xf32>
    %894 = math.exp %893 : vector<8x256xf32>
    %cst_358 = arith.constant 1.000000e+00 : f32
    %895 = vector.broadcast %cst_358 : f32 to vector<8x256xf32>
    %896 = arith.addf %895, %894 : vector<8x256xf32>
    %897 = arith.divf %895, %896 : vector<8x256xf32>
    %898 = vector.extract_strided_slice %897 {offsets = [0, 0], sizes = [8, 128], strides = [1, 1]} : vector<8x256xf32> to vector<8x128xf32>
    %899 = vector.extract_strided_slice %897 {offsets = [0, 128], sizes = [8, 128], strides = [1, 1]} : vector<8x256xf32> to vector<8x128xf32>
    %900 = vector.extract_strided_slice %886 {offsets = [0, 256], sizes = [8, 128], strides = [1, 1]} : vector<8x384xf32> to vector<8x128xf32>
    %901 = vector.extract_strided_slice %889 {offsets = [0, 256], sizes = [8, 128], strides = [1, 1]} : vector<8x384xf32> to vector<8x128xf32>
    %902 = arith.addf %901, %770 : vector<8x128xf32>
    %903 = arith.mulf %898, %902 : vector<8x128xf32>
    %904 = arith.addf %900, %903 : vector<8x128xf32>
    %905 = math.tanh %904 : vector<8x128xf32>
    %cst_359 = arith.constant 1.000000e+00 : f32
    %906 = vector.broadcast %cst_359 : f32 to vector<8x128xf32>
    %907 = arith.subf %906, %899 : vector<8x128xf32>
    %908 = arith.mulf %907, %905 : vector<8x128xf32>
    %909 = arith.mulf %899, %879 : vector<8x128xf32>
    %910 = arith.addf %908, %909 : vector<8x128xf32>
    %911 = arith.index_cast %c4_i32_351 : i32 to index
    %c0_360 = arith.constant 0 : index
    %c0_361 = arith.constant 0 : index
    %912 = vector.load %arg9[%911, %c0_360, %c0_361] : memref<8x8x128xf32, #tpu.memory_space<vmem>>, vector<1x8x128xf32>
    %913 = vector.shape_cast %912 : vector<1x8x128xf32> to vector<8x128xf32>
    %914 = vector.shape_cast %910 : vector<8x128xf32> to vector<1x8x128xf32>
    tpu.vector_store %arg9[%911, %c0_360, %c0_361], %914 {strides = array<i32>} : memref<8x8x128xf32, #tpu.memory_space<vmem>>, vector<1x8x128xf32>,
    %c5_i32_362 = arith.constant 5 : i32
    %915 = arith.index_cast %c5_i32_362 : i32 to index
    %c0_363 = arith.constant 0 : index
    %c0_364 = arith.constant 0 : index
    %916 = vector.load %arg10[%915, %c0_363, %c0_364] : memref<8x8x384xf32, #tpu.memory_space<vmem>>, vector<1x8x384xf32>
    %917 = vector.shape_cast %916 : vector<1x8x384xf32> to vector<8x384xf32>
    %c3_365 = arith.constant 3 : index
    %c0_366 = arith.constant 0 : index
    %c0_367 = arith.constant 0 : index
    %918 = vector.load %arg3[%c3_365, %c0_366, %c0_367] : memref<4x128x384xf32, #tpu.memory_space<vmem>>, vector<1x128x384xf32>
    %919 = vector.shape_cast %918 : vector<1x128x384xf32> to vector<128x384xf32>
    %cst_368 = arith.constant dense<0.000000e+00> : vector<8x384xf32>
    %920 = tpu.matmul %910, %919, %cst_368 {dimension_numbers = #tpu.dot_dimension_numbers<[1], [0], [0], [1], [0, 0, 1, 1], [], []>} : vector<8x128xf32>, vector<128x384xf32>, vector<8x384xf32> -> vector<8x384xf32>
    %921 = vector.extract_strided_slice %917 {offsets = [0, 0], sizes = [8, 256], strides = [1, 1]} : vector<8x384xf32> to vector<8x256xf32>
    %922 = vector.extract_strided_slice %920 {offsets = [0, 0], sizes = [8, 256], strides = [1, 1]} : vector<8x384xf32> to vector<8x256xf32>
    %923 = arith.addf %921, %922 : vector<8x256xf32>
    %924 = arith.negf %923 : vector<8x256xf32>
    %925 = math.exp %924 : vector<8x256xf32>
    %cst_369 = arith.constant 1.000000e+00 : f32
    %926 = vector.broadcast %cst_369 : f32 to vector<8x256xf32>
    %927 = arith.addf %926, %925 : vector<8x256xf32>
    %928 = arith.divf %926, %927 : vector<8x256xf32>
    %929 = vector.extract_strided_slice %928 {offsets = [0, 0], sizes = [8, 128], strides = [1, 1]} : vector<8x256xf32> to vector<8x128xf32>
    %930 = vector.extract_strided_slice %928 {offsets = [0, 128], sizes = [8, 128], strides = [1, 1]} : vector<8x256xf32> to vector<8x128xf32>
    %931 = vector.extract_strided_slice %917 {offsets = [0, 256], sizes = [8, 128], strides = [1, 1]} : vector<8x384xf32> to vector<8x128xf32>
    %932 = vector.extract_strided_slice %920 {offsets = [0, 256], sizes = [8, 128], strides = [1, 1]} : vector<8x384xf32> to vector<8x128xf32>
    %933 = arith.addf %932, %770 : vector<8x128xf32>
    %934 = arith.mulf %929, %933 : vector<8x128xf32>
    %935 = arith.addf %931, %934 : vector<8x128xf32>
    %936 = math.tanh %935 : vector<8x128xf32>
    %cst_370 = arith.constant 1.000000e+00 : f32
    %937 = vector.broadcast %cst_370 : f32 to vector<8x128xf32>
    %938 = arith.subf %937, %930 : vector<8x128xf32>
    %939 = arith.mulf %938, %936 : vector<8x128xf32>
    %940 = arith.mulf %930, %910 : vector<8x128xf32>
    %941 = arith.addf %939, %940 : vector<8x128xf32>
    %942 = arith.index_cast %c5_i32_362 : i32 to index
    %c0_371 = arith.constant 0 : index
    %c0_372 = arith.constant 0 : index
    %943 = vector.load %arg9[%942, %c0_371, %c0_372] : memref<8x8x128xf32, #tpu.memory_space<vmem>>, vector<1x8x128xf32>
    %944 = vector.shape_cast %943 : vector<1x8x128xf32> to vector<8x128xf32>
    %945 = vector.shape_cast %941 : vector<8x128xf32> to vector<1x8x128xf32>
    tpu.vector_store %arg9[%942, %c0_371, %c0_372], %945 {strides = array<i32>} : memref<8x8x128xf32, #tpu.memory_space<vmem>>, vector<1x8x128xf32>,
    %c6_i32_373 = arith.constant 6 : i32
    %946 = arith.index_cast %c6_i32_373 : i32 to index
    %c0_374 = arith.constant 0 : index
    %c0_375 = arith.constant 0 : index
    %947 = vector.load %arg10[%946, %c0_374, %c0_375] : memref<8x8x384xf32, #tpu.memory_space<vmem>>, vector<1x8x384xf32>
    %948 = vector.shape_cast %947 : vector<1x8x384xf32> to vector<8x384xf32>
    %c3_376 = arith.constant 3 : index
    %c0_377 = arith.constant 0 : index
    %c0_378 = arith.constant 0 : index
    %949 = vector.load %arg3[%c3_376, %c0_377, %c0_378] : memref<4x128x384xf32, #tpu.memory_space<vmem>>, vector<1x128x384xf32>
    %950 = vector.shape_cast %949 : vector<1x128x384xf32> to vector<128x384xf32>
    %cst_379 = arith.constant dense<0.000000e+00> : vector<8x384xf32>
    %951 = tpu.matmul %941, %950, %cst_379 {dimension_numbers = #tpu.dot_dimension_numbers<[1], [0], [0], [1], [0, 0, 1, 1], [], []>} : vector<8x128xf32>, vector<128x384xf32>, vector<8x384xf32> -> vector<8x384xf32>
    %952 = vector.extract_strided_slice %948 {offsets = [0, 0], sizes = [8, 256], strides = [1, 1]} : vector<8x384xf32> to vector<8x256xf32>
    %953 = vector.extract_strided_slice %951 {offsets = [0, 0], sizes = [8, 256], strides = [1, 1]} : vector<8x384xf32> to vector<8x256xf32>
    %954 = arith.addf %952, %953 : vector<8x256xf32>
    %955 = arith.negf %954 : vector<8x256xf32>
    %956 = math.exp %955 : vector<8x256xf32>
    %cst_380 = arith.constant 1.000000e+00 : f32
    %957 = vector.broadcast %cst_380 : f32 to vector<8x256xf32>
    %958 = arith.addf %957, %956 : vector<8x256xf32>
    %959 = arith.divf %957, %958 : vector<8x256xf32>
    %960 = vector.extract_strided_slice %959 {offsets = [0, 0], sizes = [8, 128], strides = [1, 1]} : vector<8x256xf32> to vector<8x128xf32>
    %961 = vector.extract_strided_slice %959 {offsets = [0, 128], sizes = [8, 128], strides = [1, 1]} : vector<8x256xf32> to vector<8x128xf32>
    %962 = vector.extract_strided_slice %948 {offsets = [0, 256], sizes = [8, 128], strides = [1, 1]} : vector<8x384xf32> to vector<8x128xf32>
    %963 = vector.extract_strided_slice %951 {offsets = [0, 256], sizes = [8, 128], strides = [1, 1]} : vector<8x384xf32> to vector<8x128xf32>
    %964 = arith.addf %963, %770 : vector<8x128xf32>
    %965 = arith.mulf %960, %964 : vector<8x128xf32>
    %966 = arith.addf %962, %965 : vector<8x128xf32>
    %967 = math.tanh %966 : vector<8x128xf32>
    %cst_381 = arith.constant 1.000000e+00 : f32
    %968 = vector.broadcast %cst_381 : f32 to vector<8x128xf32>
    %969 = arith.subf %968, %961 : vector<8x128xf32>
    %970 = arith.mulf %969, %967 : vector<8x128xf32>
    %971 = arith.mulf %961, %941 : vector<8x128xf32>
    %972 = arith.addf %970, %971 : vector<8x128xf32>
    %973 = arith.index_cast %c6_i32_373 : i32 to index
    %c0_382 = arith.constant 0 : index
    %c0_383 = arith.constant 0 : index
    %974 = vector.load %arg9[%973, %c0_382, %c0_383] : memref<8x8x128xf32, #tpu.memory_space<vmem>>, vector<1x8x128xf32>
    %975 = vector.shape_cast %974 : vector<1x8x128xf32> to vector<8x128xf32>
    %976 = vector.shape_cast %972 : vector<8x128xf32> to vector<1x8x128xf32>
    tpu.vector_store %arg9[%973, %c0_382, %c0_383], %976 {strides = array<i32>} : memref<8x8x128xf32, #tpu.memory_space<vmem>>, vector<1x8x128xf32>,
    %c7_i32_384 = arith.constant 7 : i32
    %977 = arith.index_cast %c7_i32_384 : i32 to index
    %c0_385 = arith.constant 0 : index
    %c0_386 = arith.constant 0 : index
    %978 = vector.load %arg10[%977, %c0_385, %c0_386] : memref<8x8x384xf32, #tpu.memory_space<vmem>>, vector<1x8x384xf32>
    %979 = vector.shape_cast %978 : vector<1x8x384xf32> to vector<8x384xf32>
    %c3_387 = arith.constant 3 : index
    %c0_388 = arith.constant 0 : index
    %c0_389 = arith.constant 0 : index
    %980 = vector.load %arg3[%c3_387, %c0_388, %c0_389] : memref<4x128x384xf32, #tpu.memory_space<vmem>>, vector<1x128x384xf32>
    %981 = vector.shape_cast %980 : vector<1x128x384xf32> to vector<128x384xf32>
    %cst_390 = arith.constant dense<0.000000e+00> : vector<8x384xf32>
    %982 = tpu.matmul %972, %981, %cst_390 {dimension_numbers = #tpu.dot_dimension_numbers<[1], [0], [0], [1], [0, 0, 1, 1], [], []>} : vector<8x128xf32>, vector<128x384xf32>, vector<8x384xf32> -> vector<8x384xf32>
    %983 = vector.extract_strided_slice %979 {offsets = [0, 0], sizes = [8, 256], strides = [1, 1]} : vector<8x384xf32> to vector<8x256xf32>
    %984 = vector.extract_strided_slice %982 {offsets = [0, 0], sizes = [8, 256], strides = [1, 1]} : vector<8x384xf32> to vector<8x256xf32>
    %985 = arith.addf %983, %984 : vector<8x256xf32>
    %986 = arith.negf %985 : vector<8x256xf32>
    %987 = math.exp %986 : vector<8x256xf32>
    %cst_391 = arith.constant 1.000000e+00 : f32
    %988 = vector.broadcast %cst_391 : f32 to vector<8x256xf32>
    %989 = arith.addf %988, %987 : vector<8x256xf32>
    %990 = arith.divf %988, %989 : vector<8x256xf32>
    %991 = vector.extract_strided_slice %990 {offsets = [0, 0], sizes = [8, 128], strides = [1, 1]} : vector<8x256xf32> to vector<8x128xf32>
    %992 = vector.extract_strided_slice %990 {offsets = [0, 128], sizes = [8, 128], strides = [1, 1]} : vector<8x256xf32> to vector<8x128xf32>
    %993 = vector.extract_strided_slice %979 {offsets = [0, 256], sizes = [8, 128], strides = [1, 1]} : vector<8x384xf32> to vector<8x128xf32>
    %994 = vector.extract_strided_slice %982 {offsets = [0, 256], sizes = [8, 128], strides = [1, 1]} : vector<8x384xf32> to vector<8x128xf32>
    %995 = arith.addf %994, %770 : vector<8x128xf32>
    %996 = arith.mulf %991, %995 : vector<8x128xf32>
    %997 = arith.addf %993, %996 : vector<8x128xf32>
    %998 = math.tanh %997 : vector<8x128xf32>
    %cst_392 = arith.constant 1.000000e+00 : f32
    %999 = vector.broadcast %cst_392 : f32 to vector<8x128xf32>
    %1000 = arith.subf %999, %992 : vector<8x128xf32>
    %1001 = arith.mulf %1000, %998 : vector<8x128xf32>
    %1002 = arith.mulf %992, %972 : vector<8x128xf32>
    %1003 = arith.addf %1001, %1002 : vector<8x128xf32>
    %1004 = arith.index_cast %c7_i32_384 : i32 to index
    %c0_393 = arith.constant 0 : index
    %c0_394 = arith.constant 0 : index
    %1005 = vector.load %arg9[%1004, %c0_393, %c0_394] : memref<8x8x128xf32, #tpu.memory_space<vmem>>, vector<1x8x128xf32>
    %1006 = vector.shape_cast %1005 : vector<1x8x128xf32> to vector<8x128xf32>
    %1007 = vector.shape_cast %1003 : vector<8x128xf32> to vector<1x8x128xf32>
    tpu.vector_store %arg9[%1004, %c0_393, %c0_394], %1007 {strides = array<i32>} : memref<8x8x128xf32, #tpu.memory_space<vmem>>, vector<1x8x128xf32>,
    %c7_i32_395 = arith.constant 7 : i32
    %c0_396 = arith.constant 0 : index
    %c0_397 = arith.constant 0 : index
    %1008 = vector.load %arg6[%c0_396, %c0_397] : memref<1x128xf32, #tpu.memory_space<vmem>>, vector<1x128xf32>
    %1009 = vector.broadcast %1008 : vector<1x128xf32> to vector<8x128xf32>
    %1010 = arith.mulf %1003, %1009 : vector<8x128xf32>
    %cst_398 = arith.constant dense<0.000000e+00> : vector<8xf32>
    %1011 = vector.multi_reduction <add>, %1010, %cst_398 [1] : vector<8x128xf32> to vector<8xf32>
    %1012 = vector.shape_cast %1011 : vector<8xf32> to vector<8x1xf32>
    %c0_399 = arith.constant 0 : index
    %c0_400 = arith.constant 0 : index
    %1013 = vector.load %arg7[%c0_399, %c0_400] : memref<1x1xf32, #tpu.memory_space<vmem>>, vector<1x1xf32>
    %1014 = vector.broadcast %1013 : vector<1x1xf32> to vector<8x1xf32>
    %1015 = arith.addf %1012, %1014 : vector<8x1xf32>
    %c0_401 = arith.constant 0 : index
    %c0_402 = arith.constant 0 : index
    %1016 = vector.load %arg8[%c0_401, %c0_402] : memref<8x1xf32, #tpu.memory_space<vmem>>, vector<8x1xf32>
    tpu.vector_store %arg8[%c0_401, %c0_402], %1015 {strides = array<i32>} : memref<8x1xf32, #tpu.memory_space<vmem>>, vector<8x1xf32>,
    return
  }
  func.func @transform_0(%arg0: i32) -> (i32, i32, i32) {
    %c0_i32 = arith.constant 0 : i32
    %c0_i32_0 = arith.constant 0 : i32
    %c0_i32_1 = arith.constant 0 : i32
    %c0_i32_2 = arith.constant 0 : i32
    return %c0_i32, %c0_i32_0, %c0_i32_1 : i32, i32, i32
  }
  func.func @transform_1(%arg0: i32) -> (i32, i32, i32) {
    %c0_i32 = arith.constant 0 : i32
    %c0_i32_0 = arith.constant 0 : i32
    %c0_i32_1 = arith.constant 0 : i32
    %c0_i32_2 = arith.constant 0 : i32
    return %c0_i32, %c0_i32_0, %c0_i32_1 : i32, i32, i32
  }
  func.func @transform_2(%arg0: i32) -> (i32, i32, i32) {
    %c0_i32 = arith.constant 0 : i32
    %c0_i32_0 = arith.constant 0 : i32
    %c0_i32_1 = arith.constant 0 : i32
    %c0_i32_2 = arith.constant 0 : i32
    return %c0_i32, %c0_i32_0, %c0_i32_1 : i32, i32, i32
  }
  func.func @transform_3(%arg0: i32) -> (i32, i32, i32) {
    %c0_i32 = arith.constant 0 : i32
    %c0_i32_0 = arith.constant 0 : i32
    %c0_i32_1 = arith.constant 0 : i32
    %c0_i32_2 = arith.constant 0 : i32
    return %c0_i32, %c0_i32_0, %c0_i32_1 : i32, i32, i32
  }
  func.func @transform_4(%arg0: i32) -> (i32, i32, i32) {
    %c0_i32 = arith.constant 0 : i32
    %c0_i32_0 = arith.constant 0 : i32
    %c0_i32_1 = arith.constant 0 : i32
    %c0_i32_2 = arith.constant 0 : i32
    return %c0_i32, %c0_i32_0, %c0_i32_1 : i32, i32, i32
  }
  func.func @transform_5(%arg0: i32) -> (i32, i32) {
    %c0_i32 = arith.constant 0 : i32
    %c0_i32_0 = arith.constant 0 : i32
    %c0_i32_1 = arith.constant 0 : i32
    return %c0_i32, %c0_i32_0 : i32, i32
  }
  func.func @transform_6(%arg0: i32) -> (i32, i32) {
    %c0_i32 = arith.constant 0 : i32
    %c0_i32_0 = arith.constant 0 : i32
    %c0_i32_1 = arith.constant 0 : i32
    return %c0_i32, %c0_i32_0 : i32, i32
  }
  func.func @transform_7(%arg0: i32) -> (i32, i32) {
    %c0_i32 = arith.constant 0 : i32
    %c0_i32_0 = arith.constant 0 : i32
    %c0_i32_1 = arith.constant 0 : i32
    return %c0_i32, %c0_i32_0 : i32, i32
  }
}

</mosaic_0001>

<llo_original>
// kernel: tpu_custom_call.1
$region0: #{tpu_custom_call.1}
  #allocation0 [shape = 'u32[]', space=smem, size = 0x4, offset = 0x4, fixed_abs, tag = 'smem constant byte address 0x4 - core index']
  #allocation1 [shape = 'u32[72,128]{1,0:T(1,128)}', space=vmem, size = 0x9000, scoped, tag = 'internal scratch']
  #allocation2 [shape = 'f32[8,8,128]{2,1,0:T(8,128)}', space=vmem, size = 0x8000, scoped, tag = 'scratch operand']
  #allocation3 [shape = 'f32[8,8,384]{2,1,0:T(8,128)}', space=vmem, size = 0x18000, scoped, tag = 'scratch operand']
  #allocation4 [shape = 'f32[1,1]{1,0:T(1,128)S(1)}', space=vmem, size = 0x200, scoped, tag = 'scoped memory for tpu_custom_call.1']
  %s0 = inlined_call_operand.hbm [shape: f32[8,8,128], index: 0, kind: input, shape index: {}]
  %s1 = inlined_call_operand.hbm [shape: f32[4,128,384], index: 1, kind: input, shape index: {}]
  %s2 = inlined_call_operand.hbm [shape: f32[4,128,384], index: 2, kind: input, shape index: {}]
  %s3 = inlined_call_operand.hbm [shape: f32[4,1,384], index: 3, kind: input, shape index: {}]
  %s4 = inlined_call_operand.vmem [shape: f32[4,1,128], index: 4, kind: input, shape index: {}]
  %s5 = inlined_call_operand.vmem [shape: f32[1,128], index: 5, kind: input, shape index: {}]
  %s6 = inlined_call_operand.<no memory space> [shape: f32[1,1], index: 6, kind: input, shape index: {}]
  %s7 = inlined_call_operand.vmem [shape: f32[8,1], index: 7, kind: output, shape index: {}]
  %s8 = sld [smem:[#allocation0]]
  $region54: #{tpu_custom_call.1} parent=0
    _
  %s10 = ssub.s32 1, %s8
  %s11 = scalar_select 0, %s10, %s8
  %v12 = vstv %s6
  %13 = vst [vmem:[#allocation4] sm:$0x1] %v12
  $region1: #{tpu_custom_call.1} parent=0
    #allocation5 [shape = 'u8[32768]{0}', space=vmem, size = 0x8000, scoped, tag = 'input window, operand 0, single buffered']
    #allocation6 [shape = 's32[1]{0}', space=sflag, size = 0x4, scoped, tag = 'scoped memory for tpu_custom_call.1']
    #allocation7 [shape = 'u8[786432]{0}', space=vmem, size = 0xc0000, scoped, tag = 'input window, operand 1, single buffered']
    #allocation8 [shape = 's32[1]{0}', space=sflag, size = 0x4, scoped, tag = 'scoped memory for tpu_custom_call.1']
    #allocation9 [shape = 'u8[786432]{0}', space=vmem, size = 0xc0000, scoped, tag = 'input window, operand 2, single buffered']
    #allocation10 [shape = 'u8[6144]{0}', space=vmem, size = 0x1800, scoped, tag = 'input window, operand 3, single buffered']
    #allocation11 [shape = 's32[1]{0}', space=sflag, size = 0x4, scoped, tag = 'scoped memory for tpu_custom_call.1']
    %14 = vsyncpa [#allocation6], 0
    %15 = vsyncpa [#allocation8], 0
    %16 = vsyncpa [#allocation11], 0
    // Predicated region
    $region2: #{tpu_custom_call.1} parent=1 // pred_check
      _
    $region3: #{tpu_custom_call.1} parent=1 // pred_check_branch
      %18 = sbr.rel (0) target = $region5
    $region4: #{tpu_custom_call.1} parent=1 // pred_region
      %20 = vsyncadd [#allocation6], 0
      %s21 = sshll.u32 %s0, 4
      %s22 = int_to_ptr.hbm [resolvable:$true] %s21
      %s23 = sshll.u32 [#allocation5], 4
      %s24 = int_to_ptr.vmem [resolvable:$true] %s23
      %29 = dma.hbm_to_vmem [thread:$0]  %s22, 1024, %s24, [#allocation6], 128, 128, 8
    $region5: #{tpu_custom_call.1} parent=1 // pred_fallthru
      _
    // Predicated region
    $region6: #{tpu_custom_call.1} parent=1 // pred_check
      _
    $region7: #{tpu_custom_call.1} parent=1 // pred_check_branch
      %31 = sbr.rel (0) target = $region9
    $region8: #{tpu_custom_call.1} parent=1 // pred_region
      %33 = vsyncadd [#allocation8], 0
      %s34 = sshll.u32 %s1, 4
      %s35 = int_to_ptr.hbm [resolvable:$true] %s34
      %s36 = sshll.u32 [#allocation7], 4
      %s37 = int_to_ptr.vmem [resolvable:$true] %s36
      %42 = dma.hbm_to_vmem [thread:$0]  %s35, 24576, %s37, [#allocation8], 384, 384, 24
    $region9: #{tpu_custom_call.1} parent=1 // pred_fallthru
      _
    // Predicated region
    $region10: #{tpu_custom_call.1} parent=1 // pred_check
      _
    $region11: #{tpu_custom_call.1} parent=1 // pred_check_branch
      %44 = sbr.rel (0) target = $region13
    $region12: #{tpu_custom_call.1} parent=1 // pred_region
      %46 = vsyncadd [#allocation8], 0
      %s47 = sshll.u32 %s2, 4
      %s48 = int_to_ptr.hbm [resolvable:$true] %s47
      %s49 = sshll.u32 [#allocation9], 4
      %s50 = int_to_ptr.vmem [resolvable:$true] %s49
      %55 = dma.hbm_to_vmem [thread:$0]  %s48, 24576, %s50, [#allocation8], 384, 384, 24
    $region13: #{tpu_custom_call.1} parent=1 // pred_fallthru
      _
    // Predicated region
    $region14: #{tpu_custom_call.1} parent=1 // pred_check
      _
    $region15: #{tpu_custom_call.1} parent=1 // pred_check_branch
      %57 = sbr.rel (0) target = $region17
    $region16: #{tpu_custom_call.1} parent=1 // pred_region
      %59 = vsyncadd [#allocation11], 0
      %s60 = sshll.u32 %s3, 4
      %s61 = int_to_ptr.hbm [resolvable:$true] %s60
      %s62 = sshll.u32 [#allocation10], 4
      %s63 = int_to_ptr.vmem [resolvable:$true] %s62
      %68 = dma.hbm_to_vmem [thread:$0]  %s61, 192, %s63, [#allocation11], 48, 48, 3
    $region17: #{tpu_custom_call.1} parent=1 // pred_fallthru
      _
    // Predicated region
    $region18: #{tpu_custom_call.1} parent=1 // pred_check
      _
    $region19: #{tpu_custom_call.1} parent=1 // pred_check_branch
      %70 = sbr.rel (0) target = $region21
    $region20: #{tpu_custom_call.1} parent=1 // pred_region
      _
    $region21: #{tpu_custom_call.1} parent=1 // pred_fallthru
      _
    // Predicated region
    $region22: #{tpu_custom_call.1} parent=1 // pred_check
      _
    $region23: #{tpu_custom_call.1} parent=1 // pred_check_branch
      %72 = sbr.rel (0) target = $region25
    $region24: #{tpu_custom_call.1} parent=1 // pred_region
      _
    $region25: #{tpu_custom_call.1} parent=1 // pred_fallthru
      _
    // Predicated region
    $region26: #{tpu_custom_call.1} parent=1 // pred_check
      _
    $region27: #{tpu_custom_call.1} parent=1 // pred_check_branch
      %74 = sbr.rel (0) target = $region29
    $region28: #{tpu_custom_call.1} parent=1 // pred_region
      _
    $region29: #{tpu_custom_call.1} parent=1 // pred_fallthru
      _
    // Predicated region
    $region30: #{tpu_custom_call.1} parent=1 // pred_check
      _
    $region31: #{tpu_custom_call.1} parent=1 // pred_check_branch
      %76 = sbr.rel (0) target = $region33
    $region32: #{tpu_custom_call.1} parent=1 // pred_region
      %78 = dma.done [#allocation6], 1024
    $region33: #{tpu_custom_call.1} parent=1 // pred_fallthru
      _
    // Predicated region
    $region34: #{tpu_custom_call.1} parent=1 // pred_check
      _
    $region35: #{tpu_custom_call.1} parent=1 // pred_check_branch
      %80 = sbr.rel (0) target = $region37
    $region36: #{tpu_custom_call.1} parent=1 // pred_region
      %82 = dma.done [#allocation8], 24576
    $region37: #{tpu_custom_call.1} parent=1 // pred_fallthru
      _
    // Predicated region
    $region38: #{tpu_custom_call.1} parent=1 // pred_check
      _
    $region39: #{tpu_custom_call.1} parent=1 // pred_check_branch
      %84 = sbr.rel (0) target = $region41
    $region40: #{tpu_custom_call.1} parent=1 // pred_region
      %86 = dma.done [#allocation8], 24576
    $region41: #{tpu_custom_call.1} parent=1 // pred_fallthru
      _
    // Predicated region
    $region42: #{tpu_custom_call.1} parent=1 // pred_check
      _
    $region43: #{tpu_custom_call.1} parent=1 // pred_check_branch
      %88 = sbr.rel (0) target = $region45
    $region44: #{tpu_custom_call.1} parent=1 // pred_region
      %90 = dma.done [#allocation11], 192
    $region45: #{tpu_custom_call.1} parent=1 // pred_fallthru
      _
    %v91 = vld [vmem:[#allocation5] sm:$0xff]
    %v92 = vld [vmem:[#allocation5 + $0x8] sm:$0xff]
    %v93 = vld [vmem:[#allocation5 + $0x10] sm:$0xff]
    %v94 = vld [vmem:[#allocation5 + $0x18] sm:$0xff]
    %v95 = vld [vmem:[#allocation5 + $0x20] sm:$0xff]
    %v96 = vld [vmem:[#allocation5 + $0x28] sm:$0xff]
    %v97 = vld [vmem:[#allocation5 + $0x30] sm:$0xff]
    %v98 = vld [vmem:[#allocation5 + $0x38] sm:$0xff]
    %v99 = vld [vmem:[#allocation7] sm:$0xff]
    %v100 = vld [vmem:[#allocation7 + $0x8] sm:$0xff]
    %v101 = vld [vmem:[#allocation7 + $0x10] sm:$0xff]
    %v102 = vld [vmem:[#allocation7 + $0x18] sm:$0xff]
    %v103 = vld [vmem:[#allocation7 + $0x20] sm:$0xff]
    %v104 = vld [vmem:[#allocation7 + $0x28] sm:$0xff]
    %v105 = vld [vmem:[#allocation7 + $0x30] sm:$0xff]
    %v106 = vld [vmem:[#allocation7 + $0x38] sm:$0xff]
    %v107 = vld [vmem:[#allocation7 + $0x40] sm:$0xff]
    %v108 = vld [vmem:[#allocation7 + $0x48] sm:$0xff]
    %v109 = vld [vmem:[#allocation7 + $0x50] sm:$0xff]
    %v110 = vld [vmem:[#allocation7 + $0x58] sm:$0xff]
    %v111 = vld [vmem:[#allocation7 + $0x60] sm:$0xff]
    %v112 = vld [vmem:[#allocation7 + $0x68] sm:$0xff]
    %v113 = vld [vmem:[#allocation7 + $0x70] sm:$0xff]
    %v114 = vld [vmem:[#allocation7 + $0x78] sm:$0xff]
    %v115 = vld [vmem:[#allocation7 + $0x80] sm:$0xff]
    %v116 = vld [vmem:[#allocation7 + $0x88] sm:$0xff]
    %v117 = vld [vmem:[#allocation7 + $0x90] sm:$0xff]
    %v118 = vld [vmem:[#allocation7 + $0x98] sm:$0xff]
    %v119 = vld [vmem:[#allocation7 + $0xa0] sm:$0xff]
    %v120 = vld [vmem:[#allocation7 + $0xa8] sm:$0xff]
    %v121 = vld [vmem:[#allocation7 + $0xb0] sm:$0xff]
    %v122 = vld [vmem:[#allocation7 + $0xb8] sm:$0xff]
    %v123 = vld [vmem:[#allocation7 + $0xc0] sm:$0xff]
    %v124 = vld [vmem:[#allocation7 + $0xc8] sm:$0xff]
    %v125 = vld [vmem:[#allocation7 + $0xd0] sm:$0xff]
    %v126 = vld [vmem:[#allocation7 + $0xd8] sm:$0xff]
    %v127 = vld [vmem:[#allocation7 + $0xe0] sm:$0xff]
    %v128 = vld [vmem:[#allocation7 + $0xe8] sm:$0xff]
    %v129 = vld [vmem:[#allocation7 + $0xf0] sm:$0xff]
    %v130 = vld [vmem:[#allocation7 + $0xf8] sm:$0xff]
    %v131 = vld [vmem:[#allocation7 + $0x100] sm:$0xff]
    %v132 = vld [vmem:[#allocation7 + $0x108] sm:$0xff]
    %v133 = vld [vmem:[#allocation7 + $0x110] sm:$0xff]
    %v134 = vld [vmem:[#allocation7 + $0x118] sm:$0xff]
    %v135 = vld [vmem:[#allocation7 + $0x120] sm:$0xff]
    %v136 = vld [vmem:[#allocation7 + $0x128] sm:$0xff]
    %v137 = vld [vmem:[#allocation7 + $0x130] sm:$0xff]
    %v138 = vld [vmem:[#allocation7 + $0x138] sm:$0xff]
    %v139 = vld [vmem:[#allocation7 + $0x140] sm:$0xff]
    %v140 = vld [vmem:[#allocation7 + $0x148] sm:$0xff]
    %v141 = vld [vmem:[#allocation7 + $0x150] sm:$0xff]
    %v142 = vld [vmem:[#allocation7 + $0x158] sm:$0xff]
    %v143 = vld [vmem:[#allocation7 + $0x160] sm:$0xff]
    %v144 = vld [vmem:[#allocation7 + $0x168] sm:$0xff]
    %v145 = vld [vmem:[#allocation7 + $0x170] sm:$0xff]
    %v146 = vld [vmem:[#allocation7 + $0x178] sm:$0xff]
    %v147 = vld [vmem:[#allocation10] sm:$0x7]
    %v149 = vperm.slane %v147, 0
    %v150 = vperm.slane %v147, 1
    %v151 = vperm.slane %v147, 2
    %155 = vmatpush.msra.mxu0 %v144
    %156 = vmatpush.msra.mxu0 %v141
    %157 = vmatpush.msra.mxu0 %v138
    %158 = vmatpush.msra.mxu0 %v135
    %159 = vmatpush.msra.mxu0 %v132
    %160 = vmatpush.msra.mxu0 %v129
    %161 = vmatpush.msra.mxu0 %v126
    %162 = vmatpush.msra.mxu0 %v123
    %163 = vmatpush.msra.mxu0 %v120
    %164 = vmatpush.msra.mxu0 %v117
    %165 = vmatpush.msra.mxu0 %v114
    %166 = vmatpush.msra.mxu0 %v111
    %167 = vmatpush.msra.mxu0 %v108
    %168 = vmatpush.msra.mxu0 %v105
    %169 = vmatpush.msra.mxu0 %v102
    %170 = vmatpush.msra.mxu0 %v99
    %171 = vmatmul.f32.gmra.mxu0 %v91
    %v172 = vpop.f32.mrf.mxu0
    %v173 = vadd.f32 %v149, %v172
    %174 = vmatmul.f32.gmra.mxu0 %v92
    %v175 = vpop.f32.mrf.mxu0
    %v176 = vadd.f32 %v149, %v175
    %177 = vmatmul.f32.gmra.mxu0 %v93
    %v178 = vpop.f32.mrf.mxu0
    %v179 = vadd.f32 %v149, %v178
    %180 = vmatmul.f32.gmra.mxu0 %v94
    %v181 = vpop.f32.mrf.mxu0
    %v182 = vadd.f32 %v149, %v181
    %183 = vmatmul.f32.gmra.mxu0 %v95
    %v184 = vpop.f32.mrf.mxu0
    %v185 = vadd.f32 %v149, %v184
    %186 = vmatmul.f32.gmra.mxu0 %v96
    %v187 = vpop.f32.mrf.mxu0
    %v188 = vadd.f32 %v149, %v187
    %189 = vmatmul.f32.gmra.mxu0 %v97
    %v190 = vpop.f32.mrf.mxu0
    %v191 = vadd.f32 %v149, %v190
    %192 = vmatmul.f32.gmra.mxu0 %v98
    %v193 = vpop.f32.mrf.mxu0
    %v194 = vadd.f32 %v149, %v193
    %195 = vdwg.mxu0
    %196 = vmatpush.msra.mxu0 %v145
    %197 = vmatpush.msra.mxu0 %v142
    %198 = vmatpush.msra.mxu0 %v139
    %199 = vmatpush.msra.mxu0 %v136
    %200 = vmatpush.msra.mxu0 %v133
    %201 = vmatpush.msra.mxu0 %v130
    %202 = vmatpush.msra.mxu0 %v127
    %203 = vmatpush.msra.mxu0 %v124
    %204 = vmatpush.msra.mxu0 %v121
    %205 = vmatpush.msra.mxu0 %v118
    %206 = vmatpush.msra.mxu0 %v115
    %207 = vmatpush.msra.mxu0 %v112
    %208 = vmatpush.msra.mxu0 %v109
    %209 = vmatpush.msra.mxu0 %v106
    %210 = vmatpush.msra.mxu0 %v103
    %211 = vmatpush.msra.mxu0 %v100
    %212 = vmatmul.f32.gmra.mxu0 %v91
    %v213 = vpop.f32.mrf.mxu0
    %v214 = vadd.f32 %v150, %v213
    %215 = vmatmul.f32.gmra.mxu0 %v92
    %v216 = vpop.f32.mrf.mxu0
    %v217 = vadd.f32 %v150, %v216
    %218 = vmatmul.f32.gmra.mxu0 %v93
    %v219 = vpop.f32.mrf.mxu0
    %v220 = vadd.f32 %v150, %v219
    %221 = vmatmul.f32.gmra.mxu0 %v94
    %v222 = vpop.f32.mrf.mxu0
    %v223 = vadd.f32 %v150, %v222
    %224 = vmatmul.f32.gmra.mxu0 %v95
    %v225 = vpop.f32.mrf.mxu0
    %v226 = vadd.f32 %v150, %v225
    %227 = vmatmul.f32.gmra.mxu0 %v96
    %v228 = vpop.f32.mrf.mxu0
    %v229 = vadd.f32 %v150, %v228
    %230 = vmatmul.f32.gmra.mxu0 %v97
    %v231 = vpop.f32.mrf.mxu0
    %v232 = vadd.f32 %v150, %v231
    %233 = vmatmul.f32.gmra.mxu0 %v98
    %v234 = vpop.f32.mrf.mxu0
    %v235 = vadd.f32 %v150, %v234
    %236 = vdwg.mxu0
    %237 = vmatpush.msra.mxu0 %v146
    %238 = vmatpush.msra.mxu0 %v143
    %239 = vmatpush.msra.mxu0 %v140
    %240 = vmatpush.msra.mxu0 %v137
    %241 = vmatpush.msra.mxu0 %v134
    %242 = vmatpush.msra.mxu0 %v131
    %243 = vmatpush.msra.mxu0 %v128
    %244 = vmatpush.msra.mxu0 %v125
    %245 = vmatpush.msra.mxu0 %v122
    %246 = vmatpush.msra.mxu0 %v119
    %247 = vmatpush.msra.mxu0 %v116
    %248 = vmatpush.msra.mxu0 %v113
    %249 = vmatpush.msra.mxu0 %v110
    %250 = vmatpush.msra.mxu0 %v107
    %251 = vmatpush.msra.mxu0 %v104
    %252 = vmatpush.msra.mxu0 %v101
    %253 = vmatmul.f32.gmra.mxu0 %v91
    %v254 = vpop.f32.mrf.mxu0
    %v255 = vadd.f32 %v151, %v254
    %256 = vmatmul.f32.gmra.mxu0 %v92
    %v257 = vpop.f32.mrf.mxu0
    %v258 = vadd.f32 %v151, %v257
    %259 = vmatmul.f32.gmra.mxu0 %v93
    %v260 = vpop.f32.mrf.mxu0
    %v261 = vadd.f32 %v151, %v260
    %262 = vmatmul.f32.gmra.mxu0 %v94
    %v263 = vpop.f32.mrf.mxu0
    %v264 = vadd.f32 %v151, %v263
    %265 = vmatmul.f32.gmra.mxu0 %v95
    %v266 = vpop.f32.mrf.mxu0
    %v267 = vadd.f32 %v151, %v266
    %268 = vmatmul.f32.gmra.mxu0 %v96
    %v269 = vpop.f32.mrf.mxu0
    %v270 = vadd.f32 %v151, %v269
    %271 = vmatmul.f32.gmra.mxu0 %v97
    %v272 = vpop.f32.mrf.mxu0
    %v273 = vadd.f32 %v151, %v272
    %274 = vmatmul.f32.gmra.mxu0 %v98
    %v275 = vpop.f32.mrf.mxu0
    %v276 = vadd.f32 %v151, %v275
    %277 = vdwg.mxu0
    %278 = vst [vmem:[#allocation3] sm:$0xff] %v173
    %279 = vst [vmem:[#allocation3 + $0x8] sm:$0xff] %v214
    %280 = vst [vmem:[#allocation3 + $0x10] sm:$0xff] %v255
    %281 = vst [vmem:[#allocation3 + $0x18] sm:$0xff] %v176
    %282 = vst [vmem:[#allocation3 + $0x20] sm:$0xff] %v217
    %283 = vst [vmem:[#allocation3 + $0x28] sm:$0xff] %v258
    %284 = vst [vmem:[#allocation3 + $0x30] sm:$0xff] %v179
    %285 = vst [vmem:[#allocation3 + $0x38] sm:$0xff] %v220
    %286 = vst [vmem:[#allocation3 + $0x40] sm:$0xff] %v261
    %287 = vst [vmem:[#allocation3 + $0x48] sm:$0xff] %v182
    %288 = vst [vmem:[#allocation3 + $0x50] sm:$0xff] %v223
    %289 = vst [vmem:[#allocation3 + $0x58] sm:$0xff] %v264
    %290 = vst [vmem:[#allocation3 + $0x60] sm:$0xff] %v185
    %291 = vst [vmem:[#allocation3 + $0x68] sm:$0xff] %v226
    %292 = vst [vmem:[#allocation3 + $0x70] sm:$0xff] %v267
    %293 = vst [vmem:[#allocation3 + $0x78] sm:$0xff] %v188
    %294 = vst [vmem:[#allocation3 + $0x80] sm:$0xff] %v229
    %295 = vst [vmem:[#allocation3 + $0x88] sm:$0xff] %v270
    %296 = vst [vmem:[#allocation3 + $0x90] sm:$0xff] %v191
    %297 = vst [vmem:[#allocation3 + $0x98] sm:$0xff] %v232
    %298 = vst [vmem:[#allocation3 + $0xa0] sm:$0xff] %v273
    %299 = vst [vmem:[#allocation3 + $0xa8] sm:$0xff] %v194
    %300 = vst [vmem:[#allocation3 + $0xb0] sm:$0xff] %v235
    %301 = vst [vmem:[#allocation3 + $0xb8] sm:$0xff] %v276
    %v302 = vld [vmem:[%s4] sm:$0x1]
    %v304 = vperm.slane %v302, 0
    %v306 = vld [vmem:[#allocation3] sm:$0xff]
    %v307 = vld [vmem:[#allocation3 + $0x8] sm:$0xff]
    %v308 = vld [vmem:[#allocation3 + $0x10] sm:$0xff]
    %v309 = vxor.u32 %v306, 2147483648
    %v310 = vxor.u32 %v307, 2147483648
    %v311 = vmul.f32 %v309, 1.442695
    %v312 = vpow.pop %v311
    %v313 = vmul.f32 %v310, 1.442695
    %v314 = vpow.pop %v313
    %v315 = vadd.f32 %v312, 1.0
    %v316 = vadd.f32 %v314, 1.0
    %v317 = vrcp.pop %v315
    %v318 = vmul.f32 %v315, %v317
    %v319 = vsub.f32 1.0, %v318
    %v320 = vmul.f32 %v317, %v319
    %v321 = vadd.f32 %v317, %v320
    %vm322 = vweird.f32 %v315
    %vm323 = vweird.f32 %v317
    %vm324 = vmor %vm322, %vm323
    %v325 = vsel %vm324, %v317, %v321
    %v326 = vand.u32 2147483647, %v315
    %vm327 = vcmp.eq.f32.partialorder %v326, 8.507059e+37
    %v328 = vand.u32 %v315, 2147483648
    %v329 = vor.u32 1.1754944e-38, %v328
    %v330 = vsel %vm327, %v329, %v325
    %v331 = vmul.f32 1.0, %v330
    %v332 = vrcp.pop %v316
    %v333 = vmul.f32 %v316, %v332
    %v334 = vsub.f32 1.0, %v333
    %v335 = vmul.f32 %v332, %v334
    %v336 = vadd.f32 %v332, %v335
    %vm337 = vweird.f32 %v316
    %vm338 = vweird.f32 %v332
    %vm339 = vmor %vm337, %vm338
    %v340 = vsel %vm339, %v332, %v336
    %v341 = vand.u32 2147483647, %v316
    %vm342 = vcmp.eq.f32.partialorder %v341, 8.507059e+37
    %v343 = vand.u32 %v316, 2147483648
    %v344 = vor.u32 1.1754944e-38, %v343
    %v345 = vsel %vm342, %v344, %v340
    %v346 = vmul.f32 1.0, %v345
    %v347 = vmul.f32 %v331, %v304
    %v348 = vadd.f32 %v308, %v347
    %v349 = vtanh.pop %v348
    %v350 = vsub.f32 1.0, %v346
    %v351 = vmul.f32 %v350, %v349
    %352 = vst [vmem:[#allocation2] sm:$0xff] %v351
    %s353 = scalar_lea.vmem [#allocation3], 24
    %v354 = vld [vmem:[%s353] sm:$0xff]
    %v355 = vld [vmem:[%s353 + $0x8] sm:$0xff]
    %v356 = vld [vmem:[%s353 + $0x10] sm:$0xff]
    %v357 = vld [vmem:[#allocation9] sm:$0xff]
    %v358 = vld [vmem:[#allocation9 + $0x8] sm:$0xff]
    %v359 = vld [vmem:[#allocation9 + $0x10] sm:$0xff]
    %v360 = vld [vmem:[#allocation9 + $0x18] sm:$0xff]
    %v361 = vld [vmem:[#allocation9 + $0x20] sm:$0xff]
    %v362 = vld [vmem:[#allocation9 + $0x28] sm:$0xff]
    %v363 = vld [vmem:[#allocation9 + $0x30] sm:$0xff]
    %v364 = vld [vmem:[#allocation9 + $0x38] sm:$0xff]
    %v365 = vld [vmem:[#allocation9 + $0x40] sm:$0xff]
    %v366 = vld [vmem:[#allocation9 + $0x48] sm:$0xff]
    %v367 = vld [vmem:[#allocation9 + $0x50] sm:$0xff]
    %v368 = vld [vmem:[#allocation9 + $0x58] sm:$0xff]
    %v369 = vld [vmem:[#allocation9 + $0x60] sm:$0xff]
    %v370 = vld [vmem:[#allocation9 + $0x68] sm:$0xff]
    %v371 = vld [vmem:[#allocation9 + $0x70] sm:$0xff]
    %v372 = vld [vmem:[#allocation9 + $0x78] sm:$0xff]
    %v373 = vld [vmem:[#allocation9 + $0x80] sm:$0xff]
    %v374 = vld [vmem:[#allocation9 + $0x88] sm:$0xff]
    %v375 = vld [vmem:[#allocation9 + $0x90] sm:$0xff]
    %v376 = vld [vmem:[#allocation9 + $0x98] sm:$0xff]
    %v377 = vld [vmem:[#allocation9 + $0xa0] sm:$0xff]
    %v378 = vld [vmem:[#allocation9 + $0xa8] sm:$0xff]
    %v379 = vld [vmem:[#allocation9 + $0xb0] sm:$0xff]
    %v380 = vld [vmem:[#allocation9 + $0xb8] sm:$0xff]
    %v381 = vld [vmem:[#allocation9 + $0xc0] sm:$0xff]
    %v382 = vld [vmem:[#allocation9 + $0xc8] sm:$0xff]
    %v383 = vld [vmem:[#allocation9 + $0xd0] sm:$0xff]
    %v384 = vld [vmem:[#allocation9 + $0xd8] sm:$0xff]
    %v385 = vld [vmem:[#allocation9 + $0xe0] sm:$0xff]
    %v386 = vld [vmem:[#allocation9 + $0xe8] sm:$0xff]
    %v387 = vld [vmem:[#allocation9 + $0xf0] sm:$0xff]
    %v388 = vld [vmem:[#allocation9 + $0xf8] sm:$0xff]
    %v389 = vld [vmem:[#allocation9 + $0x100] sm:$0xff]
    %v390 = vld [vmem:[#allocation9 + $0x108] sm:$0xff]
    %v391 = vld [vmem:[#allocation9 + $0x110] sm:$0xff]
    %v392 = vld [vmem:[#allocation9 + $0x118] sm:$0xff]
    %v393 = vld [vmem:[#allocation9 + $0x120] sm:$0xff]
    %v394 = vld [vmem:[#allocation9 + $0x128] sm:$0xff]
    %v395 = vld [vmem:[#allocation9 + $0x130] sm:$0xff]
    %v396 = vld [vmem:[#allocation9 + $0x138] sm:$0xff]
    %v397 = vld [vmem:[#allocation9 + $0x140] sm:$0xff]
    %v398 = vld [vmem:[#allocation9 + $0x148] sm:$0xff]
    %v399 = vld [vmem:[#allocation9 + $0x150] sm:$0xff]
    %v400 = vld [vmem:[#allocation9 + $0x158] sm:$0xff]
    %v401 = vld [vmem:[#allocation9 + $0x160] sm:$0xff]
    %v402 = vld [vmem:[#allocation9 + $0x168] sm:$0xff]
    %v403 = vld [vmem:[#allocation9 + $0x170] sm:$0xff]
    %v404 = vld [vmem:[#allocation9 + $0x178] sm:$0xff]
    %405 = vmatpush.msra.mxu0 %v402
    %406 = vmatpush.msra.mxu0 %v399
    %407 = vmatpush.msra.mxu0 %v396
    %408 = vmatpush.msra.mxu0 %v393
    %409 = vmatpush.msra.mxu0 %v390
    %410 = vmatpush.msra.mxu0 %v387
    %411 = vmatpush.msra.mxu0 %v384
    %412 = vmatpush.msra.mxu0 %v381
    %413 = vmatpush.msra.mxu0 %v378
    %414 = vmatpush.msra.mxu0 %v375
    %415 = vmatpush.msra.mxu0 %v372
    %416 = vmatpush.msra.mxu0 %v369
    %417 = vmatpush.msra.mxu0 %v366
    %418 = vmatpush.msra.mxu0 %v363
    %419 = vmatpush.msra.mxu0 %v360
    %420 = vmatpush.msra.mxu0 %v357
    %421 = vmatmul.f32.gmra.mxu0 %v351
    %v422 = vpop.f32.mrf.mxu0
    %v423 = vadd.f32 0.0, %v422
    %424 = vdwg.mxu0
    %425 = vmatpush.msra.mxu0 %v403
    %426 = vmatpush.msra.mxu0 %v400
    %427 = vmatpush.msra.mxu0 %v397
    %428 = vmatpush.msra.mxu0 %v394
    %429 = vmatpush.msra.mxu0 %v391
    %430 = vmatpush.msra.mxu0 %v388
    %431 = vmatpush.msra.mxu0 %v385
    %432 = vmatpush.msra.mxu0 %v382
    %433 = vmatpush.msra.mxu0 %v379
    %434 = vmatpush.msra.mxu0 %v376
    %435 = vmatpush.msra.mxu0 %v373
    %436 = vmatpush.msra.mxu0 %v370
    %437 = vmatpush.msra.mxu0 %v367
    %438 = vmatpush.msra.mxu0 %v364
    %439 = vmatpush.msra.mxu0 %v361
    %440 = vmatpush.msra.mxu0 %v358
    %441 = vmatmul.f32.gmra.mxu0 %v351
    %v442 = vpop.f32.mrf.mxu0
    %v443 = vadd.f32 0.0, %v442
    %444 = vdwg.mxu0
    %445 = vmatpush.msra.mxu0 %v404
    %446 = vmatpush.msra.mxu0 %v401
    %447 = vmatpush.msra.mxu0 %v398
    %448 = vmatpush.msra.mxu0 %v395
    %449 = vmatpush.msra.mxu0 %v392
    %450 = vmatpush.msra.mxu0 %v389
    %451 = vmatpush.msra.mxu0 %v386
    %452 = vmatpush.msra.mxu0 %v383
    %453 = vmatpush.msra.mxu0 %v380
    %454 = vmatpush.msra.mxu0 %v377
    %455 = vmatpush.msra.mxu0 %v374
    %456 = vmatpush.msra.mxu0 %v371
    %457 = vmatpush.msra.mxu0 %v368
    %458 = vmatpush.msra.mxu0 %v365
    %459 = vmatpush.msra.mxu0 %v362
    %460 = vmatpush.msra.mxu0 %v359
    %461 = vmatmul.f32.gmra.mxu0 %v351
    %v462 = vpop.f32.mrf.mxu0
    %v463 = vadd.f32 0.0, %v462
    %464 = vdwg.mxu0
    %v465 = vadd.f32 %v354, %v423
    %v466 = vadd.f32 %v355, %v443
    %v467 = vxor.u32 %v465, 2147483648
    %v468 = vxor.u32 %v466, 2147483648
    %v469 = vmul.f32 %v467, 1.442695
    %v470 = vpow.pop %v469
    %v471 = vmul.f32 %v468, 1.442695
    %v472 = vpow.pop %v471
    %v473 = vadd.f32 %v470, 1.0
    %v474 = vadd.f32 %v472, 1.0
    %v475 = vrcp.pop %v473
    %v476 = vmul.f32 %v473, %v475
    %v477 = vsub.f32 1.0, %v476
    %v478 = vmul.f32 %v475, %v477
    %v479 = vadd.f32 %v475, %v478
    %vm480 = vweird.f32 %v473
    %vm481 = vweird.f32 %v475
    %vm482 = vmor %vm480, %vm481
    %v483 = vsel %vm482, %v475, %v479
    %v484 = vand.u32 2147483647, %v473
    %vm485 = vcmp.eq.f32.partialorder %v484, 8.507059e+37
    %v486 = vand.u32 %v473, 2147483648
    %v487 = vor.u32 1.1754944e-38, %v486
    %v488 = vsel %vm485, %v487, %v483
    %v489 = vmul.f32 1.0, %v488
    %v490 = vrcp.pop %v474
    %v491 = vmul.f32 %v474, %v490
    %v492 = vsub.f32 1.0, %v491
    %v493 = vmul.f32 %v490, %v492
    %v494 = vadd.f32 %v490, %v493
    %vm495 = vweird.f32 %v474
    %vm496 = vweird.f32 %v490
    %vm497 = vmor %vm495, %vm496
    %v498 = vsel %vm497, %v490, %v494
    %v499 = vand.u32 2147483647, %v474
    %vm500 = vcmp.eq.f32.partialorder %v499, 8.507059e+37
    %v501 = vand.u32 %v474, 2147483648
    %v502 = vor.u32 1.1754944e-38, %v501
    %v503 = vsel %vm500, %v502, %v498
    %v504 = vmul.f32 1.0, %v503
    %v505 = vadd.f32 %v463, %v304
    %v506 = vmul.f32 %v489, %v505
    %v507 = vadd.f32 %v356, %v506
    %v508 = vtanh.pop %v507
    %v509 = vsub.f32 1.0, %v504
    %v510 = vmul.f32 %v509, %v508
    %v511 = vmul.f32 %v504, %v351
    %v512 = vadd.f32 %v510, %v511
    %s513 = scalar_lea.vmem [#allocation2], 8
    %514 = vst [vmem:[%s513] sm:$0xff] %v512
    %s515 = scalar_lea.vmem [#allocation3], 48
    %v516 = vld [vmem:[%s515] sm:$0xff]
    %v517 = vld [vmem:[%s515 + $0x8] sm:$0xff]
    %v518 = vld [vmem:[%s515 + $0x10] sm:$0xff]
    %v519 = vld [vmem:[#allocation9] sm:$0xff]
    %v520 = vld [vmem:[#allocation9 + $0x8] sm:$0xff]
    %v521 = vld [vmem:[#allocation9 + $0x10] sm:$0xff]
    %v522 = vld [vmem:[#allocation9 + $0x18] sm:$0xff]
    %v523 = vld [vmem:[#allocation9 + $0x20] sm:$0xff]
    %v524 = vld [vmem:[#allocation9 + $0x28] sm:$0xff]
    %v525 = vld [vmem:[#allocation9 + $0x30] sm:$0xff]
    %v526 = vld [vmem:[#allocation9 + $0x38] sm:$0xff]
    %v527 = vld [vmem:[#allocation9 + $0x40] sm:$0xff]
    %v528 = vld [vmem:[#allocation9 + $0x48] sm:$0xff]
    %v529 = vld [vmem:[#allocation9 + $0x50] sm:$0xff]
    %v530 = vld [vmem:[#allocation9 + $0x58] sm:$0xff]
    %v531 = vld [vmem:[#allocation9 + $0x60] sm:$0xff]
    %v532 = vld [vmem:[#allocation9 + $0x68] sm:$0xff]
    %v533 = vld [vmem:[#allocation9 + $0x70] sm:$0xff]
    %v534 = vld [vmem:[#allocation9 + $0x78] sm:$0xff]
    %v535 = vld [vmem:[#allocation9 + $0x80] sm:$0xff]
    %v536 = vld [vmem:[#allocation9 + $0x88] sm:$0xff]
    %v537 = vld [vmem:[#allocation9 + $0x90] sm:$0xff]
    %v538 = vld [vmem:[#allocation9 + $0x98] sm:$0xff]
    %v539 = vld [vmem:[#allocation9 + $0xa0] sm:$0xff]
    %v540 = vld [vmem:[#allocation9 + $0xa8] sm:$0xff]
    %v541 = vld [vmem:[#allocation9 + $0xb0] sm:$0xff]
    %v542 = vld [vmem:[#allocation9 + $0xb8] sm:$0xff]
    %v543 = vld [vmem:[#allocation9 + $0xc0] sm:$0xff]
    %v544 = vld [vmem:[#allocation9 + $0xc8] sm:$0xff]
    %v545 = vld [vmem:[#allocation9 + $0xd0] sm:$0xff]
    %v546 = vld [vmem:[#allocation9 + $0xd8] sm:$0xff]
    %v547 = vld [vmem:[#allocation9 + $0xe0] sm:$0xff]
    %v548 = vld [vmem:[#allocation9 + $0xe8] sm:$0xff]
    %v549 = vld [vmem:[#allocation9 + $0xf0] sm:$0xff]
    %v550 = vld [vmem:[#allocation9 + $0xf8] sm:$0xff]
    %v551 = vld [vmem:[#allocation9 + $0x100] sm:$0xff]
    %v552 = vld [vmem:[#allocation9 + $0x108] sm:$0xff]
    %v553 = vld [vmem:[#allocation9 + $0x110] sm:$0xff]
    %v554 = vld [vmem:[#allocation9 + $0x118] sm:$0xff]
    %v555 = vld [vmem:[#allocation9 + $0x120] sm:$0xff]
    %v556 = vld [vmem:[#allocation9 + $0x128] sm:$0xff]
    %v557 = vld [vmem:[#allocation9 + $0x130] sm:$0xff]
    %v558 = vld [vmem:[#allocation9 + $0x138] sm:$0xff]
    %v559 = vld [vmem:[#allocation9 + $0x140] sm:$0xff]
    %v560 = vld [vmem:[#allocation9 + $0x148] sm:$0xff]
    %v561 = vld [vmem:[#allocation9 + $0x150] sm:$0xff]
    %v562 = vld [vmem:[#allocation9 + $0x158] sm:$0xff]
    %v563 = vld [vmem:[#allocation9 + $0x160] sm:$0xff]
    %v564 = vld [vmem:[#allocation9 + $0x168] sm:$0xff]
    %v565 = vld [vmem:[#allocation9 + $0x170] sm:$0xff]
    %v566 = vld [vmem:[#allocation9 + $0x178] sm:$0xff]
    %567 = vmatpush.msra.mxu0 %v564
    %568 = vmatpush.msra.mxu0 %v561
    %569 = vmatpush.msra.mxu0 %v558
    %570 = vmatpush.msra.mxu0 %v555
    %571 = vmatpush.msra.mxu0 %v552
    %572 = vmatpush.msra.mxu0 %v549
    %573 = vmatpush.msra.mxu0 %v546
    %574 = vmatpush.msra.mxu0 %v543
    %575 = vmatpush.msra.mxu0 %v540
    %576 = vmatpush.msra.mxu0 %v537
    %577 = vmatpush.msra.mxu0 %v534
    %578 = vmatpush.msra.mxu0 %v531
    %579 = vmatpush.msra.mxu0 %v528
    %580 = vmatpush.msra.mxu0 %v525
    %581 = vmatpush.msra.mxu0 %v522
    %582 = vmatpush.msra.mxu0 %v519
    %583 = vmatmul.f32.gmra.mxu0 %v512
    %v584 = vpop.f32.mrf.mxu0
    %v585 = vadd.f32 0.0, %v584
    %586 = vdwg.mxu0
    %587 = vmatpush.msra.mxu0 %v565
    %588 = vmatpush.msra.mxu0 %v562
    %589 = vmatpush.msra.mxu0 %v559
    %590 = vmatpush.msra.mxu0 %v556
    %591 = vmatpush.msra.mxu0 %v553
    %592 = vmatpush.msra.mxu0 %v550
    %593 = vmatpush.msra.mxu0 %v547
    %594 = vmatpush.msra.mxu0 %v544
    %595 = vmatpush.msra.mxu0 %v541
    %596 = vmatpush.msra.mxu0 %v538
    %597 = vmatpush.msra.mxu0 %v535
    %598 = vmatpush.msra.mxu0 %v532
    %599 = vmatpush.msra.mxu0 %v529
    %600 = vmatpush.msra.mxu0 %v526
    %601 = vmatpush.msra.mxu0 %v523
    %602 = vmatpush.msra.mxu0 %v520
    %603 = vmatmul.f32.gmra.mxu0 %v512
    %v604 = vpop.f32.mrf.mxu0
    %v605 = vadd.f32 0.0, %v604
    %606 = vdwg.mxu0
    %607 = vmatpush.msra.mxu0 %v566
    %608 = vmatpush.msra.mxu0 %v563
    %609 = vmatpush.msra.mxu0 %v560
    %610 = vmatpush.msra.mxu0 %v557
    %611 = vmatpush.msra.mxu0 %v554
    %612 = vmatpush.msra.mxu0 %v551
    %613 = vmatpush.msra.mxu0 %v548
    %614 = vmatpush.msra.mxu0 %v545
    %615 = vmatpush.msra.mxu0 %v542
    %616 = vmatpush.msra.mxu0 %v539
    %617 = vmatpush.msra.mxu0 %v536
    %618 = vmatpush.msra.mxu0 %v533
    %619 = vmatpush.msra.mxu0 %v530
    %620 = vmatpush.msra.mxu0 %v527
    %621 = vmatpush.msra.mxu0 %v524
    %622 = vmatpush.msra.mxu0 %v521
    %623 = vmatmul.f32.gmra.mxu0 %v512
    %v624 = vpop.f32.mrf.mxu0
    %v625 = vadd.f32 0.0, %v624
    %626 = vdwg.mxu0
    %v627 = vadd.f32 %v516, %v585
    %v628 = vadd.f32 %v517, %v605
    %v629 = vxor.u32 %v627, 2147483648
    %v630 = vxor.u32 %v628, 2147483648
    %v631 = vmul.f32 %v629, 1.442695
    %v632 = vpow.pop %v631
    %v633 = vmul.f32 %v630, 1.442695
    %v634 = vpow.pop %v633
    %v635 = vadd.f32 %v632, 1.0
    %v636 = vadd.f32 %v634, 1.0
    %v637 = vrcp.pop %v635
    %v638 = vmul.f32 %v635, %v637
    %v639 = vsub.f32 1.0, %v638
    %v640 = vmul.f32 %v637, %v639
    %v641 = vadd.f32 %v637, %v640
    %vm642 = vweird.f32 %v635
    %vm643 = vweird.f32 %v637
    %vm644 = vmor %vm642, %vm643
    %v645 = vsel %vm644, %v637, %v641
    %v646 = vand.u32 2147483647, %v635
    %vm647 = vcmp.eq.f32.partialorder %v646, 8.507059e+37
    %v648 = vand.u32 %v635, 2147483648
    %v649 = vor.u32 1.1754944e-38, %v648
    %v650 = vsel %vm647, %v649, %v645
    %v651 = vmul.f32 1.0, %v650
    %v652 = vrcp.pop %v636
    %v653 = vmul.f32 %v636, %v652
    %v654 = vsub.f32 1.0, %v653
    %v655 = vmul.f32 %v652, %v654
    %v656 = vadd.f32 %v652, %v655
    %vm657 = vweird.f32 %v636
    %vm658 = vweird.f32 %v652
    %vm659 = vmor %vm657, %vm658
    %v660 = vsel %vm659, %v652, %v656
    %v661 = vand.u32 2147483647, %v636
    %vm662 = vcmp.eq.f32.partialorder %v661, 8.507059e+37
    %v663 = vand.u32 %v636, 2147483648
    %v664 = vor.u32 1.1754944e-38, %v663
    %v665 = vsel %vm662, %v664, %v660
    %v666 = vmul.f32 1.0, %v665
    %v667 = vadd.f32 %v625, %v304
    %v668 = vmul.f32 %v651, %v667
    %v669 = vadd.f32 %v518, %v668
    %v670 = vtanh.pop %v669
    %v671 = vsub.f32 1.0, %v666
    %v672 = vmul.f32 %v671, %v670
    %v673 = vmul.f32 %v666, %v512
    %v674 = vadd.f32 %v672, %v673
    %s675 = scalar_lea.vmem [#allocation2], 16
    %676 = vst [vmem:[%s675] sm:$0xff] %v674
    %s677 = scalar_lea.vmem [#allocation3], 72
    %v678 = vld [vmem:[%s677] sm:$0xff]
    %v679 = vld [vmem:[%s677 + $0x8] sm:$0xff]
    %v680 = vld [vmem:[%s677 + $0x10] sm:$0xff]
    %v681 = vld [vmem:[#allocation9] sm:$0xff]
    %v682 = vld [vmem:[#allocation9 + $0x8] sm:$0xff]
    %v683 = vld [vmem:[#allocation9 + $0x10] sm:$0xff]
    %v684 = vld [vmem:[#allocation9 + $0x18] sm:$0xff]
    %v685 = vld [vmem:[#allocation9 + $0x20] sm:$0xff]
    %v686 = vld [vmem:[#allocation9 + $0x28] sm:$0xff]
    %v687 = vld [vmem:[#allocation9 + $0x30] sm:$0xff]
    %v688 = vld [vmem:[#allocation9 + $0x38] sm:$0xff]
    %v689 = vld [vmem:[#allocation9 + $0x40] sm:$0xff]
    %v690 = vld [vmem:[#allocation9 + $0x48] sm:$0xff]
    %v691 = vld [vmem:[#allocation9 + $0x50] sm:$0xff]
    %v692 = vld [vmem:[#allocation9 + $0x58] sm:$0xff]
    %v693 = vld [vmem:[#allocation9 + $0x60] sm:$0xff]
    %v694 = vld [vmem:[#allocation9 + $0x68] sm:$0xff]
    %v695 = vld [vmem:[#allocation9 + $0x70] sm:$0xff]
    %v696 = vld [vmem:[#allocation9 + $0x78] sm:$0xff]
    %v697 = vld [vmem:[#allocation9 + $0x80] sm:$0xff]
    %v698 = vld [vmem:[#allocation9 + $0x88] sm:$0xff]
    %v699 = vld [vmem:[#allocation9 + $0x90] sm:$0xff]
    %v700 = vld [vmem:[#allocation9 + $0x98] sm:$0xff]
    %v701 = vld [vmem:[#allocation9 + $0xa0] sm:$0xff]
    %v702 = vld [vmem:[#allocation9 + $0xa8] sm:$0xff]
    %v703 = vld [vmem:[#allocation9 + $0xb0] sm:$0xff]
    %v704 = vld [vmem:[#allocation9 + $0xb8] sm:$0xff]
    %v705 = vld [vmem:[#allocation9 + $0xc0] sm:$0xff]
    %v706 = vld [vmem:[#allocation9 + $0xc8] sm:$0xff]
    %v707 = vld [vmem:[#allocation9 + $0xd0] sm:$0xff]
    %v708 = vld [vmem:[#allocation9 + $0xd8] sm:$0xff]
    %v709 = vld [vmem:[#allocation9 + $0xe0] sm:$0xff]
    %v710 = vld [vmem:[#allocation9 + $0xe8] sm:$0xff]
    %v711 = vld [vmem:[#allocation9 + $0xf0] sm:$0xff]
    %v712 = vld [vmem:[#allocation9 + $0xf8] sm:$0xff]
    %v713 = vld [vmem:[#allocation9 + $0x100] sm:$0xff]
    %v714 = vld [vmem:[#allocation9 + $0x108] sm:$0xff]
    %v715 = vld [vmem:[#allocation9 + $0x110] sm:$0xff]
    %v716 = vld [vmem:[#allocation9 + $0x118] sm:$0xff]
    %v717 = vld [vmem:[#allocation9 + $0x120] sm:$0xff]
    %v718 = vld [vmem:[#allocation9 + $0x128] sm:$0xff]
    %v719 = vld [vmem:[#allocation9 + $0x130] sm:$0xff]
    %v720 = vld [vmem:[#allocation9 + $0x138] sm:$0xff]
    %v721 = vld [vmem:[#allocation9 + $0x140] sm:$0xff]
    %v722 = vld [vmem:[#allocation9 + $0x148] sm:$0xff]
    %v723 = vld [vmem:[#allocation9 + $0x150] sm:$0xff]
    %v724 = vld [vmem:[#allocation9 + $0x158] sm:$0xff]
    %v725 = vld [vmem:[#allocation9 + $0x160] sm:$0xff]
    %v726 = vld [vmem:[#allocation9 + $0x168] sm:$0xff]
    %v727 = vld [vmem:[#allocation9 + $0x170] sm:$0xff]
    %v728 = vld [vmem:[#allocation9 + $0x178] sm:$0xff]
    %729 = vmatpush.msra.mxu0 %v726
    %730 = vmatpush.msra.mxu0 %v723
    %731 = vmatpush.msra.mxu0 %v720
    %732 = vmatpush.msra.mxu0 %v717
    %733 = vmatpush.msra.mxu0 %v714
    %734 = vmatpush.msra.mxu0 %v711
    %735 = vmatpush.msra.mxu0 %v708
    %736 = vmatpush.msra.mxu0 %v705
    %737 = vmatpush.msra.mxu0 %v702
    %738 = vmatpush.msra.mxu0 %v699
    %739 = vmatpush.msra.mxu0 %v696
    %740 = vmatpush.msra.mxu0 %v693
    %741 = vmatpush.msra.mxu0 %v690
    %742 = vmatpush.msra.mxu0 %v687
    %743 = vmatpush.msra.mxu0 %v684
    %744 = vmatpush.msra.mxu0 %v681
    %745 = vmatmul.f32.gmra.mxu0 %v674
    %v746 = vpop.f32.mrf.mxu0
    %v747 = vadd.f32 0.0, %v746
    %748 = vdwg.mxu0
    %749 = vmatpush.msra.mxu0 %v727
    %750 = vmatpush.msra.mxu0 %v724
    %751 = vmatpush.msra.mxu0 %v721
    %752 = vmatpush.msra.mxu0 %v718
    %753 = vmatpush.msra.mxu0 %v715
    %754 = vmatpush.msra.mxu0 %v712
    %755 = vmatpush.msra.mxu0 %v709
    %756 = vmatpush.msra.mxu0 %v706
    %757 = vmatpush.msra.mxu0 %v703
    %758 = vmatpush.msra.mxu0 %v700
    %759 = vmatpush.msra.mxu0 %v697
    %760 = vmatpush.msra.mxu0 %v694
    %761 = vmatpush.msra.mxu0 %v691
    %762 = vmatpush.msra.mxu0 %v688
    %763 = vmatpush.msra.mxu0 %v685
    %764 = vmatpush.msra.mxu0 %v682
    %765 = vmatmul.f32.gmra.mxu0 %v674
    %v766 = vpop.f32.mrf.mxu0
    %v767 = vadd.f32 0.0, %v766
    %768 = vdwg.mxu0
    %769 = vmatpush.msra.mxu0 %v728
    %770 = vmatpush.msra.mxu0 %v725
    %771 = vmatpush.msra.mxu0 %v722
    %772 = vmatpush.msra.mxu0 %v719
    %773 = vmatpush.msra.mxu0 %v716
    %774 = vmatpush.msra.mxu0 %v713
    %775 = vmatpush.msra.mxu0 %v710
    %776 = vmatpush.msra.mxu0 %v707
    %777 = vmatpush.msra.mxu0 %v704
    %778 = vmatpush.msra.mxu0 %v701
    %779 = vmatpush.msra.mxu0 %v698
    %780 = vmatpush.msra.mxu0 %v695
    %781 = vmatpush.msra.mxu0 %v692
    %782 = vmatpush.msra.mxu0 %v689
    %783 = vmatpush.msra.mxu0 %v686
    %784 = vmatpush.msra.mxu0 %v683
    %785 = vmatmul.f32.gmra.mxu0 %v674
    %v786 = vpop.f32.mrf.mxu0
    %v787 = vadd.f32 0.0, %v786
    %788 = vdwg.mxu0
    %v789 = vadd.f32 %v678, %v747
    %v790 = vadd.f32 %v679, %v767
    %v791 = vxor.u32 %v789, 2147483648
    %v792 = vxor.u32 %v790, 2147483648
    %v793 = vmul.f32 %v791, 1.442695
    %v794 = vpow.pop %v793
    %v795 = vmul.f32 %v792, 1.442695
    %v796 = vpow.pop %v795
    %v797 = vadd.f32 %v794, 1.0
    %v798 = vadd.f32 %v796, 1.0
    %v799 = vrcp.pop %v797
    %v800 = vmul.f32 %v797, %v799
    %v801 = vsub.f32 1.0, %v800
    %v802 = vmul.f32 %v799, %v801
    %v803 = vadd.f32 %v799, %v802
    %vm804 = vweird.f32 %v797
    %vm805 = vweird.f32 %v799
    %vm806 = vmor %vm804, %vm805
    %v807 = vsel %vm806, %v799, %v803
    %v808 = vand.u32 2147483647, %v797
    %vm809 = vcmp.eq.f32.partialorder %v808, 8.507059e+37
    %v810 = vand.u32 %v797, 2147483648
    %v811 = vor.u32 1.1754944e-38, %v810
    %v812 = vsel %vm809, %v811, %v807
    %v813 = vmul.f32 1.0, %v812
    %v814 = vrcp.pop %v798
    %v815 = vmul.f32 %v798, %v814
    %v816 = vsub.f32 1.0, %v815
    %v817 = vmul.f32 %v814, %v816
    %v818 = vadd.f32 %v814, %v817
    %vm819 = vweird.f32 %v798
    %vm820 = vweird.f32 %v814
    %vm821 = vmor %vm819, %vm820
    %v822 = vsel %vm821, %v814, %v818
    %v823 = vand.u32 2147483647, %v798
    %vm824 = vcmp.eq.f32.partialorder %v823, 8.507059e+37
    %v825 = vand.u32 %v798, 2147483648
    %v826 = vor.u32 1.1754944e-38, %v825
    %v827 = vsel %vm824, %v826, %v822
    %v828 = vmul.f32 1.0, %v827
    %v829 = vadd.f32 %v787, %v304
    %v830 = vmul.f32 %v813, %v829
    %v831 = vadd.f32 %v680, %v830
    %v832 = vtanh.pop %v831
    %v833 = vsub.f32 1.0, %v828
    %v834 = vmul.f32 %v833, %v832
    %v835 = vmul.f32 %v828, %v674
    %v836 = vadd.f32 %v834, %v835
    %s837 = scalar_lea.vmem [#allocation2], 24
    %838 = vst [vmem:[%s837] sm:$0xff] %v836
    %s839 = scalar_lea.vmem [#allocation3], 96
    %v840 = vld [vmem:[%s839] sm:$0xff]
    %v841 = vld [vmem:[%s839 + $0x8] sm:$0xff]
    %v842 = vld [vmem:[%s839 + $0x10] sm:$0xff]
    %v843 = vld [vmem:[#allocation9] sm:$0xff]
    %v844 = vld [vmem:[#allocation9 + $0x8] sm:$0xff]
    %v845 = vld [vmem:[#allocation9 + $0x10] sm:$0xff]
    %v846 = vld [vmem:[#allocation9 + $0x18] sm:$0xff]
    %v847 = vld [vmem:[#allocation9 + $0x20] sm:$0xff]
    %v848 = vld [vmem:[#allocation9 + $0x28] sm:$0xff]
    %v849 = vld [vmem:[#allocation9 + $0x30] sm:$0xff]
    %v850 = vld [vmem:[#allocation9 + $0x38] sm:$0xff]
    %v851 = vld [vmem:[#allocation9 + $0x40] sm:$0xff]
    %v852 = vld [vmem:[#allocation9 + $0x48] sm:$0xff]
    %v853 = vld [vmem:[#allocation9 + $0x50] sm:$0xff]
    %v854 = vld [vmem:[#allocation9 + $0x58] sm:$0xff]
    %v855 = vld [vmem:[#allocation9 + $0x60] sm:$0xff]
    %v856 = vld [vmem:[#allocation9 + $0x68] sm:$0xff]
    %v857 = vld [vmem:[#allocation9 + $0x70] sm:$0xff]
    %v858 = vld [vmem:[#allocation9 + $0x78] sm:$0xff]
    %v859 = vld [vmem:[#allocation9 + $0x80] sm:$0xff]
    %v860 = vld [vmem:[#allocation9 + $0x88] sm:$0xff]
    %v861 = vld [vmem:[#allocation9 + $0x90] sm:$0xff]
    %v862 = vld [vmem:[#allocation9 + $0x98] sm:$0xff]
    %v863 = vld [vmem:[#allocation9 + $0xa0] sm:$0xff]
    %v864 = vld [vmem:[#allocation9 + $0xa8] sm:$0xff]
    %v865 = vld [vmem:[#allocation9 + $0xb0] sm:$0xff]
    %v866 = vld [vmem:[#allocation9 + $0xb8] sm:$0xff]
    %v867 = vld [vmem:[#allocation9 + $0xc0] sm:$0xff]
    %v868 = vld [vmem:[#allocation9 + $0xc8] sm:$0xff]
    %v869 = vld [vmem:[#allocation9 + $0xd0] sm:$0xff]
    %v870 = vld [vmem:[#allocation9 + $0xd8] sm:$0xff]
    %v871 = vld [vmem:[#allocation9 + $0xe0] sm:$0xff]
    %v872 = vld [vmem:[#allocation9 + $0xe8] sm:$0xff]
    %v873 = vld [vmem:[#allocation9 + $0xf0] sm:$0xff]
    %v874 = vld [vmem:[#allocation9 + $0xf8] sm:$0xff]
    %v875 = vld [vmem:[#allocation9 + $0x100] sm:$0xff]
    %v876 = vld [vmem:[#allocation9 + $0x108] sm:$0xff]
    %v877 = vld [vmem:[#allocation9 + $0x110] sm:$0xff]
    %v878 = vld [vmem:[#allocation9 + $0x118] sm:$0xff]
    %v879 = vld [vmem:[#allocation9 + $0x120] sm:$0xff]
    %v880 = vld [vmem:[#allocation9 + $0x128] sm:$0xff]
    %v881 = vld [vmem:[#allocation9 + $0x130] sm:$0xff]
    %v882 = vld [vmem:[#allocation9 + $0x138] sm:$0xff]
    %v883 = vld [vmem:[#allocation9 + $0x140] sm:$0xff]
    %v884 = vld [vmem:[#allocation9 + $0x148] sm:$0xff]
    %v885 = vld [vmem:[#allocation9 + $0x150] sm:$0xff]
    %v886 = vld [vmem:[#allocation9 + $0x158] sm:$0xff]
    %v887 = vld [vmem:[#allocation9 + $0x160] sm:$0xff]
    %v888 = vld [vmem:[#allocation9 + $0x168] sm:$0xff]
    %v889 = vld [vmem:[#allocation9 + $0x170] sm:$0xff]
    %v890 = vld [vmem:[#allocation9 + $0x178] sm:$0xff]
    %891 = vmatpush.msra.mxu0 %v888
    %892 = vmatpush.msra.mxu0 %v885
    %893 = vmatpush.msra.mxu0 %v882
    %894 = vmatpush.msra.mxu0 %v879
    %895 = vmatpush.msra.mxu0 %v876
    %896 = vmatpush.msra.mxu0 %v873
    %897 = vmatpush.msra.mxu0 %v870
    %898 = vmatpush.msra.mxu0 %v867
    %899 = vmatpush.msra.mxu0 %v864
    %900 = vmatpush.msra.mxu0 %v861
    %901 = vmatpush.msra.mxu0 %v858
    %902 = vmatpush.msra.mxu0 %v855
    %903 = vmatpush.msra.mxu0 %v852
    %904 = vmatpush.msra.mxu0 %v849
    %905 = vmatpush.msra.mxu0 %v846
    %906 = vmatpush.msra.mxu0 %v843
    %907 = vmatmul.f32.gmra.mxu0 %v836
    %v908 = vpop.f32.mrf.mxu0
    %v909 = vadd.f32 0.0, %v908
    %910 = vdwg.mxu0
    %911 = vmatpush.msra.mxu0 %v889
    %912 = vmatpush.msra.mxu0 %v886
    %913 = vmatpush.msra.mxu0 %v883
    %914 = vmatpush.msra.mxu0 %v880
    %915 = vmatpush.msra.mxu0 %v877
    %916 = vmatpush.msra.mxu0 %v874
    %917 = vmatpush.msra.mxu0 %v871
    %918 = vmatpush.msra.mxu0 %v868
    %919 = vmatpush.msra.mxu0 %v865
    %920 = vmatpush.msra.mxu0 %v862
    %921 = vmatpush.msra.mxu0 %v859
    %922 = vmatpush.msra.mxu0 %v856
    %923 = vmatpush.msra.mxu0 %v853
    %924 = vmatpush.msra.mxu0 %v850
    %925 = vmatpush.msra.mxu0 %v847
    %926 = vmatpush.msra.mxu0 %v844
    %927 = vmatmul.f32.gmra.mxu0 %v836
    %v928 = vpop.f32.mrf.mxu0
    %v929 = vadd.f32 0.0, %v928
    %930 = vdwg.mxu0
    %931 = vmatpush.msra.mxu0 %v890
    %932 = vmatpush.msra.mxu0 %v887
    %933 = vmatpush.msra.mxu0 %v884
    %934 = vmatpush.msra.mxu0 %v881
    %935 = vmatpush.msra.mxu0 %v878
    %936 = vmatpush.msra.mxu0 %v875
    %937 = vmatpush.msra.mxu0 %v872
    %938 = vmatpush.msra.mxu0 %v869
    %939 = vmatpush.msra.mxu0 %v866
    %940 = vmatpush.msra.mxu0 %v863
    %941 = vmatpush.msra.mxu0 %v860
    %942 = vmatpush.msra.mxu0 %v857
    %943 = vmatpush.msra.mxu0 %v854
    %944 = vmatpush.msra.mxu0 %v851
    %945 = vmatpush.msra.mxu0 %v848
    %946 = vmatpush.msra.mxu0 %v845
    %947 = vmatmul.f32.gmra.mxu0 %v836
    %v948 = vpop.f32.mrf.mxu0
    %v949 = vadd.f32 0.0, %v948
    %950 = vdwg.mxu0
    %v951 = vadd.f32 %v840, %v909
    %v952 = vadd.f32 %v841, %v929
    %v953 = vxor.u32 %v951, 2147483648
    %v954 = vxor.u32 %v952, 2147483648
    %v955 = vmul.f32 %v953, 1.442695
    %v956 = vpow.pop %v955
    %v957 = vmul.f32 %v954, 1.442695
    %v958 = vpow.pop %v957
    %v959 = vadd.f32 %v956, 1.0
    %v960 = vadd.f32 %v958, 1.0
    %v961 = vrcp.pop %v959
    %v962 = vmul.f32 %v959, %v961
    %v963 = vsub.f32 1.0, %v962
    %v964 = vmul.f32 %v961, %v963
    %v965 = vadd.f32 %v961, %v964
    %vm966 = vweird.f32 %v959
    %vm967 = vweird.f32 %v961
    %vm968 = vmor %vm966, %vm967
    %v969 = vsel %vm968, %v961, %v965
    %v970 = vand.u32 2147483647, %v959
    %vm971 = vcmp.eq.f32.partialorder %v970, 8.507059e+37
    %v972 = vand.u32 %v959, 2147483648
    %v973 = vor.u32 1.1754944e-38, %v972
    %v974 = vsel %vm971, %v973, %v969
    %v975 = vmul.f32 1.0, %v974
    %v976 = vrcp.pop %v960
    %v977 = vmul.f32 %v960, %v976
    %v978 = vsub.f32 1.0, %v977
    %v979 = vmul.f32 %v976, %v978
    %v980 = vadd.f32 %v976, %v979
    %vm981 = vweird.f32 %v960
    %vm982 = vweird.f32 %v976
    %vm983 = vmor %vm981, %vm982
    %v984 = vsel %vm983, %v976, %v980
    %v985 = vand.u32 2147483647, %v960
    %vm986 = vcmp.eq.f32.partialorder %v985, 8.507059e+37
    %v987 = vand.u32 %v960, 2147483648
    %v988 = vor.u32 1.1754944e-38, %v987
    %v989 = vsel %vm986, %v988, %v984
    %v990 = vmul.f32 1.0, %v989
    %v991 = vadd.f32 %v949, %v304
    %v992 = vmul.f32 %v975, %v991
    %v993 = vadd.f32 %v842, %v992
    %v994 = vtanh.pop %v993
    %v995 = vsub.f32 1.0, %v990
    %v996 = vmul.f32 %v995, %v994
    %v997 = vmul.f32 %v990, %v836
    %v998 = vadd.f32 %v996, %v997
    %s999 = scalar_lea.vmem [#allocation2], 32
    %1000 = vst [vmem:[%s999] sm:$0xff] %v998
    %s1001 = scalar_lea.vmem [#allocation3], 120
    %v1002 = vld [vmem:[%s1001] sm:$0xff]
    %v1003 = vld [vmem:[%s1001 + $0x8] sm:$0xff]
    %v1004 = vld [vmem:[%s1001 + $0x10] sm:$0xff]
    %v1005 = vld [vmem:[#allocation9] sm:$0xff]
    %v1006 = vld [vmem:[#allocation9 + $0x8] sm:$0xff]
    %v1007 = vld [vmem:[#allocation9 + $0x10] sm:$0xff]
    %v1008 = vld [vmem:[#allocation9 + $0x18] sm:$0xff]
    %v1009 = vld [vmem:[#allocation9 + $0x20] sm:$0xff]
    %v1010 = vld [vmem:[#allocation9 + $0x28] sm:$0xff]
    %v1011 = vld [vmem:[#allocation9 + $0x30] sm:$0xff]
    %v1012 = vld [vmem:[#allocation9 + $0x38] sm:$0xff]
    %v1013 = vld [vmem:[#allocation9 + $0x40] sm:$0xff]
    %v1014 = vld [vmem:[#allocation9 + $0x48] sm:$0xff]
    %v1015 = vld [vmem:[#allocation9 + $0x50] sm:$0xff]
    %v1016 = vld [vmem:[#allocation9 + $0x58] sm:$0xff]
    %v1017 = vld [vmem:[#allocation9 + $0x60] sm:$0xff]
    %v1018 = vld [vmem:[#allocation9 + $0x68] sm:$0xff]
    %v1019 = vld [vmem:[#allocation9 + $0x70] sm:$0xff]
    %v1020 = vld [vmem:[#allocation9 + $0x78] sm:$0xff]
    %v1021 = vld [vmem:[#allocation9 + $0x80] sm:$0xff]
    %v1022 = vld [vmem:[#allocation9 + $0x88] sm:$0xff]
    %v1023 = vld [vmem:[#allocation9 + $0x90] sm:$0xff]
    %v1024 = vld [vmem:[#allocation9 + $0x98] sm:$0xff]
    %v1025 = vld [vmem:[#allocation9 + $0xa0] sm:$0xff]
    %v1026 = vld [vmem:[#allocation9 + $0xa8] sm:$0xff]
    %v1027 = vld [vmem:[#allocation9 + $0xb0] sm:$0xff]
    %v1028 = vld [vmem:[#allocation9 + $0xb8] sm:$0xff]
    %v1029 = vld [vmem:[#allocation9 + $0xc0] sm:$0xff]
    %v1030 = vld [vmem:[#allocation9 + $0xc8] sm:$0xff]
    %v1031 = vld [vmem:[#allocation9 + $0xd0] sm:$0xff]
    %v1032 = vld [vmem:[#allocation9 + $0xd8] sm:$0xff]
    %v1033 = vld [vmem:[#allocation9 + $0xe0] sm:$0xff]
    %v1034 = vld [vmem:[#allocation9 + $0xe8] sm:$0xff]
    %v1035 = vld [vmem:[#allocation9 + $0xf0] sm:$0xff]
    %v1036 = vld [vmem:[#allocation9 + $0xf8] sm:$0xff]
    %v1037 = vld [vmem:[#allocation9 + $0x100] sm:$0xff]
    %v1038 = vld [vmem:[#allocation9 + $0x108] sm:$0xff]
    %v1039 = vld [vmem:[#allocation9 + $0x110] sm:$0xff]
    %v1040 = vld [vmem:[#allocation9 + $0x118] sm:$0xff]
    %v1041 = vld [vmem:[#allocation9 + $0x120] sm:$0xff]
    %v1042 = vld [vmem:[#allocation9 + $0x128] sm:$0xff]
    %v1043 = vld [vmem:[#allocation9 + $0x130] sm:$0xff]
    %v1044 = vld [vmem:[#allocation9 + $0x138] sm:$0xff]
    %v1045 = vld [vmem:[#allocation9 + $0x140] sm:$0xff]
    %v1046 = vld [vmem:[#allocation9 + $0x148] sm:$0xff]
    %v1047 = vld [vmem:[#allocation9 + $0x150] sm:$0xff]
    %v1048 = vld [vmem:[#allocation9 + $0x158] sm:$0xff]
    %v1049 = vld [vmem:[#allocation9 + $0x160] sm:$0xff]
    %v1050 = vld [vmem:[#allocation9 + $0x168] sm:$0xff]
    %v1051 = vld [vmem:[#allocation9 + $0x170] sm:$0xff]
    %v1052 = vld [vmem:[#allocation9 + $0x178] sm:$0xff]
    %1053 = vmatpush.msra.mxu0 %v1050
    %1054 = vmatpush.msra.mxu0 %v1047
    %1055 = vmatpush.msra.mxu0 %v1044
    %1056 = vmatpush.msra.mxu0 %v1041
    %1057 = vmatpush.msra.mxu0 %v1038
    %1058 = vmatpush.msra.mxu0 %v1035
    %1059 = vmatpush.msra.mxu0 %v1032
    %1060 = vmatpush.msra.mxu0 %v1029
    %1061 = vmatpush.msra.mxu0 %v1026
    %1062 = vmatpush.msra.mxu0 %v1023
    %1063 = vmatpush.msra.mxu0 %v1020
    %1064 = vmatpush.msra.mxu0 %v1017
    %1065 = vmatpush.msra.mxu0 %v1014
    %1066 = vmatpush.msra.mxu0 %v1011
    %1067 = vmatpush.msra.mxu0 %v1008
    %1068 = vmatpush.msra.mxu0 %v1005
    %1069 = vmatmul.f32.gmra.mxu0 %v998
    %v1070 = vpop.f32.mrf.mxu0
    %v1071 = vadd.f32 0.0, %v1070
    %1072 = vdwg.mxu0
    %1073 = vmatpush.msra.mxu0 %v1051
    %1074 = vmatpush.msra.mxu0 %v1048
    %1075 = vmatpush.msra.mxu0 %v1045
    %1076 = vmatpush.msra.mxu0 %v1042
    %1077 = vmatpush.msra.mxu0 %v1039
    %1078 = vmatpush.msra.mxu0 %v1036
    %1079 = vmatpush.msra.mxu0 %v1033
    %1080 = vmatpush.msra.mxu0 %v1030
    %1081 = vmatpush.msra.mxu0 %v1027
    %1082 = vmatpush.msra.mxu0 %v1024
    %1083 = vmatpush.msra.mxu0 %v1021
    %1084 = vmatpush.msra.mxu0 %v1018
    %1085 = vmatpush.msra.mxu0 %v1015
    %1086 = vmatpush.msra.mxu0 %v1012
    %1087 = vmatpush.msra.mxu0 %v1009
    %1088 = vmatpush.msra.mxu0 %v1006
    %1089 = vmatmul.f32.gmra.mxu0 %v998
    %v1090 = vpop.f32.mrf.mxu0
    %v1091 = vadd.f32 0.0, %v1090
    %1092 = vdwg.mxu0
    %1093 = vmatpush.msra.mxu0 %v1052
    %1094 = vmatpush.msra.mxu0 %v1049
    %1095 = vmatpush.msra.mxu0 %v1046
    %1096 = vmatpush.msra.mxu0 %v1043
    %1097 = vmatpush.msra.mxu0 %v1040
    %1098 = vmatpush.msra.mxu0 %v1037
    %1099 = vmatpush.msra.mxu0 %v1034
    %1100 = vmatpush.msra.mxu0 %v1031
    %1101 = vmatpush.msra.mxu0 %v1028
    %1102 = vmatpush.msra.mxu0 %v1025
    %1103 = vmatpush.msra.mxu0 %v1022
    %1104 = vmatpush.msra.mxu0 %v1019
    %1105 = vmatpush.msra.mxu0 %v1016
    %1106 = vmatpush.msra.mxu0 %v1013
    %1107 = vmatpush.msra.mxu0 %v1010
    %1108 = vmatpush.msra.mxu0 %v1007
    %1109 = vmatmul.f32.gmra.mxu0 %v998
    %v1110 = vpop.f32.mrf.mxu0
    %v1111 = vadd.f32 0.0, %v1110
    %1112 = vdwg.mxu0
    %v1113 = vadd.f32 %v1002, %v1071
    %v1114 = vadd.f32 %v1003, %v1091
    %v1115 = vxor.u32 %v1113, 2147483648
    %v1116 = vxor.u32 %v1114, 2147483648
    %v1117 = vmul.f32 %v1115, 1.442695
    %v1118 = vpow.pop %v1117
    %v1119 = vmul.f32 %v1116, 1.442695
    %v1120 = vpow.pop %v1119
    %v1121 = vadd.f32 %v1118, 1.0
    %v1122 = vadd.f32 %v1120, 1.0
    %v1123 = vrcp.pop %v1121
    %v1124 = vmul.f32 %v1121, %v1123
    %v1125 = vsub.f32 1.0, %v1124
    %v1126 = vmul.f32 %v1123, %v1125
    %v1127 = vadd.f32 %v1123, %v1126
    %vm1128 = vweird.f32 %v1121
    %vm1129 = vweird.f32 %v1123
    %vm1130 = vmor %vm1128, %vm1129
    %v1131 = vsel %vm1130, %v1123, %v1127
    %v1132 = vand.u32 2147483647, %v1121
    %vm1133 = vcmp.eq.f32.partialorder %v1132, 8.507059e+37
    %v1134 = vand.u32 %v1121, 2147483648
    %v1135 = vor.u32 1.1754944e-38, %v1134
    %v1136 = vsel %vm1133, %v1135, %v1131
    %v1137 = vmul.f32 1.0, %v1136
    %v1138 = vrcp.pop %v1122
    %v1139 = vmul.f32 %v1122, %v1138
    %v1140 = vsub.f32 1.0, %v1139
    %v1141 = vmul.f32 %v1138, %v1140
    %v1142 = vadd.f32 %v1138, %v1141
    %vm1143 = vweird.f32 %v1122
    %vm1144 = vweird.f32 %v1138
    %vm1145 = vmor %vm1143, %vm1144
    %v1146 = vsel %vm1145, %v1138, %v1142
    %v1147 = vand.u32 2147483647, %v1122
    %vm1148 = vcmp.eq.f32.partialorder %v1147, 8.507059e+37
    %v1149 = vand.u32 %v1122, 2147483648
    %v1150 = vor.u32 1.1754944e-38, %v1149
    %v1151 = vsel %vm1148, %v1150, %v1146
    %v1152 = vmul.f32 1.0, %v1151
    %v1153 = vadd.f32 %v1111, %v304
    %v1154 = vmul.f32 %v1137, %v1153
    %v1155 = vadd.f32 %v1004, %v1154
    %v1156 = vtanh.pop %v1155
    %v1157 = vsub.f32 1.0, %v1152
    %v1158 = vmul.f32 %v1157, %v1156
    %v1159 = vmul.f32 %v1152, %v998
    %v1160 = vadd.f32 %v1158, %v1159
    %s1161 = scalar_lea.vmem [#allocation2], 40
    %1162 = vst [vmem:[%s1161] sm:$0xff] %v1160
    %s1163 = scalar_lea.vmem [#allocation3], 144
    %v1164 = vld [vmem:[%s1163] sm:$0xff]
    %v1165 = vld [vmem:[%s1163 + $0x8] sm:$0xff]
    %v1166 = vld [vmem:[%s1163 + $0x10] sm:$0xff]
    %v1167 = vld [vmem:[#allocation9] sm:$0xff]
    %v1168 = vld [vmem:[#allocation9 + $0x8] sm:$0xff]
    %v1169 = vld [vmem:[#allocation9 + $0x10] sm:$0xff]
    %v1170 = vld [vmem:[#allocation9 + $0x18] sm:$0xff]
    %v1171 = vld [vmem:[#allocation9 + $0x20] sm:$0xff]
    %v1172 = vld [vmem:[#allocation9 + $0x28] sm:$0xff]
    %v1173 = vld [vmem:[#allocation9 + $0x30] sm:$0xff]
    %v1174 = vld [vmem:[#allocation9 + $0x38] sm:$0xff]
    %v1175 = vld [vmem:[#allocation9 + $0x40] sm:$0xff]
    %v1176 = vld [vmem:[#allocation9 + $0x48] sm:$0xff]
    %v1177 = vld [vmem:[#allocation9 + $0x50] sm:$0xff]
    %v1178 = vld [vmem:[#allocation9 + $0x58] sm:$0xff]
    %v1179 = vld [vmem:[#allocation9 + $0x60] sm:$0xff]
    %v1180 = vld [vmem:[#allocation9 + $0x68] sm:$0xff]
    %v1181 = vld [vmem:[#allocation9 + $0x70] sm:$0xff]
    %v1182 = vld [vmem:[#allocation9 + $0x78] sm:$0xff]
    %v1183 = vld [vmem:[#allocation9 + $0x80] sm:$0xff]
    %v1184 = vld [vmem:[#allocation9 + $0x88] sm:$0xff]
    %v1185 = vld [vmem:[#allocation9 + $0x90] sm:$0xff]
    %v1186 = vld [vmem:[#allocation9 + $0x98] sm:$0xff]
    %v1187 = vld [vmem:[#allocation9 + $0xa0] sm:$0xff]
    %v1188 = vld [vmem:[#allocation9 + $0xa8] sm:$0xff]
    %v1189 = vld [vmem:[#allocation9 + $0xb0] sm:$0xff]
    %v1190 = vld [vmem:[#allocation9 + $0xb8] sm:$0xff]
    %v1191 = vld [vmem:[#allocation9 + $0xc0] sm:$0xff]
    %v1192 = vld [vmem:[#allocation9 + $0xc8] sm:$0xff]
    %v1193 = vld [vmem:[#allocation9 + $0xd0] sm:$0xff]
    %v1194 = vld [vmem:[#allocation9 + $0xd8] sm:$0xff]
    %v1195 = vld [vmem:[#allocation9 + $0xe0] sm:$0xff]
    %v1196 = vld [vmem:[#allocation9 + $0xe8] sm:$0xff]
    %v1197 = vld [vmem:[#allocation9 + $0xf0] sm:$0xff]
    %v1198 = vld [vmem:[#allocation9 + $0xf8] sm:$0xff]
    %v1199 = vld [vmem:[#allocation9 + $0x100] sm:$0xff]
    %v1200 = vld [vmem:[#allocation9 + $0x108] sm:$0xff]
    %v1201 = vld [vmem:[#allocation9 + $0x110] sm:$0xff]
    %v1202 = vld [vmem:[#allocation9 + $0x118] sm:$0xff]
    %v1203 = vld [vmem:[#allocation9 + $0x120] sm:$0xff]
    %v1204 = vld [vmem:[#allocation9 + $0x128] sm:$0xff]
    %v1205 = vld [vmem:[#allocation9 + $0x130] sm:$0xff]
    %v1206 = vld [vmem:[#allocation9 + $0x138] sm:$0xff]
    %v1207 = vld [vmem:[#allocation9 + $0x140] sm:$0xff]
    %v1208 = vld [vmem:[#allocation9 + $0x148] sm:$0xff]
    %v1209 = vld [vmem:[#allocation9 + $0x150] sm:$0xff]
    %v1210 = vld [vmem:[#allocation9 + $0x158] sm:$0xff]
    %v1211 = vld [vmem:[#allocation9 + $0x160] sm:$0xff]
    %v1212 = vld [vmem:[#allocation9 + $0x168] sm:$0xff]
    %v1213 = vld [vmem:[#allocation9 + $0x170] sm:$0xff]
    %v1214 = vld [vmem:[#allocation9 + $0x178] sm:$0xff]
    %1215 = vmatpush.msra.mxu0 %v1212
    %1216 = vmatpush.msra.mxu0 %v1209
    %1217 = vmatpush.msra.mxu0 %v1206
    %1218 = vmatpush.msra.mxu0 %v1203
    %1219 = vmatpush.msra.mxu0 %v1200
    %1220 = vmatpush.msra.mxu0 %v1197
    %1221 = vmatpush.msra.mxu0 %v1194
    %1222 = vmatpush.msra.mxu0 %v1191
    %1223 = vmatpush.msra.mxu0 %v1188
    %1224 = vmatpush.msra.mxu0 %v1185
    %1225 = vmatpush.msra.mxu0 %v1182
    %1226 = vmatpush.msra.mxu0 %v1179
    %1227 = vmatpush.msra.mxu0 %v1176
    %1228 = vmatpush.msra.mxu0 %v1173
    %1229 = vmatpush.msra.mxu0 %v1170
    %1230 = vmatpush.msra.mxu0 %v1167
    %1231 = vmatmul.f32.gmra.mxu0 %v1160
    %v1232 = vpop.f32.mrf.mxu0
    %v1233 = vadd.f32 0.0, %v1232
    %1234 = vdwg.mxu0
    %1235 = vmatpush.msra.mxu0 %v1213
    %1236 = vmatpush.msra.mxu0 %v1210
    %1237 = vmatpush.msra.mxu0 %v1207
    %1238 = vmatpush.msra.mxu0 %v1204
    %1239 = vmatpush.msra.mxu0 %v1201
    %1240 = vmatpush.msra.mxu0 %v1198
    %1241 = vmatpush.msra.mxu0 %v1195
    %1242 = vmatpush.msra.mxu0 %v1192
    %1243 = vmatpush.msra.mxu0 %v1189
    %1244 = vmatpush.msra.mxu0 %v1186
    %1245 = vmatpush.msra.mxu0 %v1183
    %1246 = vmatpush.msra.mxu0 %v1180
    %1247 = vmatpush.msra.mxu0 %v1177
    %1248 = vmatpush.msra.mxu0 %v1174
    %1249 = vmatpush.msra.mxu0 %v1171
    %1250 = vmatpush.msra.mxu0 %v1168
    %1251 = vmatmul.f32.gmra.mxu0 %v1160
    %v1252 = vpop.f32.mrf.mxu0
    %v1253 = vadd.f32 0.0, %v1252
    %1254 = vdwg.mxu0
    %1255 = vmatpush.msra.mxu0 %v1214
    %1256 = vmatpush.msra.mxu0 %v1211
    %1257 = vmatpush.msra.mxu0 %v1208
    %1258 = vmatpush.msra.mxu0 %v1205
    %1259 = vmatpush.msra.mxu0 %v1202
    %1260 = vmatpush.msra.mxu0 %v1199
    %1261 = vmatpush.msra.mxu0 %v1196
    %1262 = vmatpush.msra.mxu0 %v1193
    %1263 = vmatpush.msra.mxu0 %v1190
    %1264 = vmatpush.msra.mxu0 %v1187
    %1265 = vmatpush.msra.mxu0 %v1184
    %1266 = vmatpush.msra.mxu0 %v1181
    %1267 = vmatpush.msra.mxu0 %v1178
    %1268 = vmatpush.msra.mxu0 %v1175
    %1269 = vmatpush.msra.mxu0 %v1172
    %1270 = vmatpush.msra.mxu0 %v1169
    %1271 = vmatmul.f32.gmra.mxu0 %v1160
    %v1272 = vpop.f32.mrf.mxu0
    %v1273 = vadd.f32 0.0, %v1272
    %1274 = vdwg.mxu0
    %v1275 = vadd.f32 %v1164, %v1233
    %v1276 = vadd.f32 %v1165, %v1253
    %v1277 = vxor.u32 %v1275, 2147483648
    %v1278 = vxor.u32 %v1276, 2147483648
    %v1279 = vmul.f32 %v1277, 1.442695
    %v1280 = vpow.pop %v1279
    %v1281 = vmul.f32 %v1278, 1.442695
    %v1282 = vpow.pop %v1281
    %v1283 = vadd.f32 %v1280, 1.0
    %v1284 = vadd.f32 %v1282, 1.0
    %v1285 = vrcp.pop %v1283
    %v1286 = vmul.f32 %v1283, %v1285
    %v1287 = vsub.f32 1.0, %v1286
    %v1288 = vmul.f32 %v1285, %v1287
    %v1289 = vadd.f32 %v1285, %v1288
    %vm1290 = vweird.f32 %v1283
    %vm1291 = vweird.f32 %v1285
    %vm1292 = vmor %vm1290, %vm1291
    %v1293 = vsel %vm1292, %v1285, %v1289
    %v1294 = vand.u32 2147483647, %v1283
    %vm1295 = vcmp.eq.f32.partialorder %v1294, 8.507059e+37
    %v1296 = vand.u32 %v1283, 2147483648
    %v1297 = vor.u32 1.1754944e-38, %v1296
    %v1298 = vsel %vm1295, %v1297, %v1293
    %v1299 = vmul.f32 1.0, %v1298
    %v1300 = vrcp.pop %v1284
    %v1301 = vmul.f32 %v1284, %v1300
    %v1302 = vsub.f32 1.0, %v1301
    %v1303 = vmul.f32 %v1300, %v1302
    %v1304 = vadd.f32 %v1300, %v1303
    %vm1305 = vweird.f32 %v1284
    %vm1306 = vweird.f32 %v1300
    %vm1307 = vmor %vm1305, %vm1306
    %v1308 = vsel %vm1307, %v1300, %v1304
    %v1309 = vand.u32 2147483647, %v1284
    %vm1310 = vcmp.eq.f32.partialorder %v1309, 8.507059e+37
    %v1311 = vand.u32 %v1284, 2147483648
    %v1312 = vor.u32 1.1754944e-38, %v1311
    %v1313 = vsel %vm1310, %v1312, %v1308
    %v1314 = vmul.f32 1.0, %v1313
    %v1315 = vadd.f32 %v1273, %v304
    %v1316 = vmul.f32 %v1299, %v1315
    %v1317 = vadd.f32 %v1166, %v1316
    %v1318 = vtanh.pop %v1317
    %v1319 = vsub.f32 1.0, %v1314
    %v1320 = vmul.f32 %v1319, %v1318
    %v1321 = vmul.f32 %v1314, %v1160
    %v1322 = vadd.f32 %v1320, %v1321
    %s1323 = scalar_lea.vmem [#allocation2], 48
    %1324 = vst [vmem:[%s1323] sm:$0xff] %v1322
    %s1325 = scalar_lea.vmem [#allocation3], 168
    %v1326 = vld [vmem:[%s1325] sm:$0xff]
    %v1327 = vld [vmem:[%s1325 + $0x8] sm:$0xff]
    %v1328 = vld [vmem:[%s1325 + $0x10] sm:$0xff]
    %v1329 = vld [vmem:[#allocation9] sm:$0xff]
    %v1330 = vld [vmem:[#allocation9 + $0x8] sm:$0xff]
    %v1331 = vld [vmem:[#allocation9 + $0x10] sm:$0xff]
    %v1332 = vld [vmem:[#allocation9 + $0x18] sm:$0xff]
    %v1333 = vld [vmem:[#allocation9 + $0x20] sm:$0xff]
    %v1334 = vld [vmem:[#allocation9 + $0x28] sm:$0xff]
    %v1335 = vld [vmem:[#allocation9 + $0x30] sm:$0xff]
    %v1336 = vld [vmem:[#allocation9 + $0x38] sm:$0xff]
    %v1337 = vld [vmem:[#allocation9 + $0x40] sm:$0xff]
    %v1338 = vld [vmem:[#allocation9 + $0x48] sm:$0xff]
    %v1339 = vld [vmem:[#allocation9 + $0x50] sm:$0xff]
    %v1340 = vld [vmem:[#allocation9 + $0x58] sm:$0xff]
    %v1341 = vld [vmem:[#allocation9 + $0x60] sm:$0xff]
    %v1342 = vld [vmem:[#allocation9 + $0x68] sm:$0xff]
    %v1343 = vld [vmem:[#allocation9 + $0x70] sm:$0xff]
    %v1344 = vld [vmem:[#allocation9 + $0x78] sm:$0xff]
    %v1345 = vld [vmem:[#allocation9 + $0x80] sm:$0xff]
    %v1346 = vld [vmem:[#allocation9 + $0x88] sm:$0xff]
    %v1347 = vld [vmem:[#allocation9 + $0x90] sm:$0xff]
    %v1348 = vld [vmem:[#allocation9 + $0x98] sm:$0xff]
    %v1349 = vld [vmem:[#allocation9 + $0xa0] sm:$0xff]
    %v1350 = vld [vmem:[#allocation9 + $0xa8] sm:$0xff]
    %v1351 = vld [vmem:[#allocation9 + $0xb0] sm:$0xff]
    %v1352 = vld [vmem:[#allocation9 + $0xb8] sm:$0xff]
    %v1353 = vld [vmem:[#allocation9 + $0xc0] sm:$0xff]
    %v1354 = vld [vmem:[#allocation9 + $0xc8] sm:$0xff]
    %v1355 = vld [vmem:[#allocation9 + $0xd0] sm:$0xff]
    %v1356 = vld [vmem:[#allocation9 + $0xd8] sm:$0xff]
    %v1357 = vld [vmem:[#allocation9 + $0xe0] sm:$0xff]
    %v1358 = vld [vmem:[#allocation9 + $0xe8] sm:$0xff]
    %v1359 = vld [vmem:[#allocation9 + $0xf0] sm:$0xff]
    %v1360 = vld [vmem:[#allocation9 + $0xf8] sm:$0xff]
    %v1361 = vld [vmem:[#allocation9 + $0x100] sm:$0xff]
    %v1362 = vld [vmem:[#allocation9 + $0x108] sm:$0xff]
    %v1363 = vld [vmem:[#allocation9 + $0x110] sm:$0xff]
    %v1364 = vld [vmem:[#allocation9 + $0x118] sm:$0xff]
    %v1365 = vld [vmem:[#allocation9 + $0x120] sm:$0xff]
    %v1366 = vld [vmem:[#allocation9 + $0x128] sm:$0xff]
    %v1367 = vld [vmem:[#allocation9 + $0x130] sm:$0xff]
    %v1368 = vld [vmem:[#allocation9 + $0x138] sm:$0xff]
    %v1369 = vld [vmem:[#allocation9 + $0x140] sm:$0xff]
    %v1370 = vld [vmem:[#allocation9 + $0x148] sm:$0xff]
    %v1371 = vld [vmem:[#allocation9 + $0x150] sm:$0xff]
    %v1372 = vld [vmem:[#allocation9 + $0x158] sm:$0xff]
    %v1373 = vld [vmem:[#allocation9 + $0x160] sm:$0xff]
    %v1374 = vld [vmem:[#allocation9 + $0x168] sm:$0xff]
    %v1375 = vld [vmem:[#allocation9 + $0x170] sm:$0xff]
    %v1376 = vld [vmem:[#allocation9 + $0x178] sm:$0xff]
    %1377 = vmatpush.msra.mxu0 %v1374
    %1378 = vmatpush.msra.mxu0 %v1371
    %1379 = vmatpush.msra.mxu0 %v1368
    %1380 = vmatpush.msra.mxu0 %v1365
    %1381 = vmatpush.msra.mxu0 %v1362
    %1382 = vmatpush.msra.mxu0 %v1359
    %1383 = vmatpush.msra.mxu0 %v1356
    %1384 = vmatpush.msra.mxu0 %v1353
    %1385 = vmatpush.msra.mxu0 %v1350
    %1386 = vmatpush.msra.mxu0 %v1347
    %1387 = vmatpush.msra.mxu0 %v1344
    %1388 = vmatpush.msra.mxu0 %v1341
    %1389 = vmatpush.msra.mxu0 %v1338
    %1390 = vmatpush.msra.mxu0 %v1335
    %1391 = vmatpush.msra.mxu0 %v1332
    %1392 = vmatpush.msra.mxu0 %v1329
    %1393 = vmatmul.f32.gmra.mxu0 %v1322
    %v1394 = vpop.f32.mrf.mxu0
    %v1395 = vadd.f32 0.0, %v1394
    %1396 = vdwg.mxu0
    %1397 = vmatpush.msra.mxu0 %v1375
    %1398 = vmatpush.msra.mxu0 %v1372
    %1399 = vmatpush.msra.mxu0 %v1369
    %1400 = vmatpush.msra.mxu0 %v1366
    %1401 = vmatpush.msra.mxu0 %v1363
    %1402 = vmatpush.msra.mxu0 %v1360
    %1403 = vmatpush.msra.mxu0 %v1357
    %1404 = vmatpush.msra.mxu0 %v1354
    %1405 = vmatpush.msra.mxu0 %v1351
    %1406 = vmatpush.msra.mxu0 %v1348
    %1407 = vmatpush.msra.mxu0 %v1345
    %1408 = vmatpush.msra.mxu0 %v1342
    %1409 = vmatpush.msra.mxu0 %v1339
    %1410 = vmatpush.msra.mxu0 %v1336
    %1411 = vmatpush.msra.mxu0 %v1333
    %1412 = vmatpush.msra.mxu0 %v1330
    %1413 = vmatmul.f32.gmra.mxu0 %v1322
    %v1414 = vpop.f32.mrf.mxu0
    %v1415 = vadd.f32 0.0, %v1414
    %1416 = vdwg.mxu0
    %1417 = vmatpush.msra.mxu0 %v1376
    %1418 = vmatpush.msra.mxu0 %v1373
    %1419 = vmatpush.msra.mxu0 %v1370
    %1420 = vmatpush.msra.mxu0 %v1367
    %1421 = vmatpush.msra.mxu0 %v1364
    %1422 = vmatpush.msra.mxu0 %v1361
    %1423 = vmatpush.msra.mxu0 %v1358
    %1424 = vmatpush.msra.mxu0 %v1355
    %1425 = vmatpush.msra.mxu0 %v1352
    %1426 = vmatpush.msra.mxu0 %v1349
    %1427 = vmatpush.msra.mxu0 %v1346
    %1428 = vmatpush.msra.mxu0 %v1343
    %1429 = vmatpush.msra.mxu0 %v1340
    %1430 = vmatpush.msra.mxu0 %v1337
    %1431 = vmatpush.msra.mxu0 %v1334
    %1432 = vmatpush.msra.mxu0 %v1331
    %1433 = vmatmul.f32.gmra.mxu0 %v1322
    %v1434 = vpop.f32.mrf.mxu0
    %v1435 = vadd.f32 0.0, %v1434
    %1436 = vdwg.mxu0
    %v1437 = vadd.f32 %v1326, %v1395
    %v1438 = vadd.f32 %v1327, %v1415
    %v1439 = vxor.u32 %v1437, 2147483648
    %v1440 = vxor.u32 %v1438, 2147483648
    %v1441 = vmul.f32 %v1439, 1.442695
    %v1442 = vpow.pop %v1441
    %v1443 = vmul.f32 %v1440, 1.442695
    %v1444 = vpow.pop %v1443
    %v1445 = vadd.f32 %v1442, 1.0
    %v1446 = vadd.f32 %v1444, 1.0
    %v1447 = vrcp.pop %v1445
    %v1448 = vmul.f32 %v1445, %v1447
    %v1449 = vsub.f32 1.0, %v1448
    %v1450 = vmul.f32 %v1447, %v1449
    %v1451 = vadd.f32 %v1447, %v1450
    %vm1452 = vweird.f32 %v1445
    %vm1453 = vweird.f32 %v1447
    %vm1454 = vmor %vm1452, %vm1453
    %v1455 = vsel %vm1454, %v1447, %v1451
    %v1456 = vand.u32 2147483647, %v1445
    %vm1457 = vcmp.eq.f32.partialorder %v1456, 8.507059e+37
    %v1458 = vand.u32 %v1445, 2147483648
    %v1459 = vor.u32 1.1754944e-38, %v1458
    %v1460 = vsel %vm1457, %v1459, %v1455
    %v1461 = vmul.f32 1.0, %v1460
    %v1462 = vrcp.pop %v1446
    %v1463 = vmul.f32 %v1446, %v1462
    %v1464 = vsub.f32 1.0, %v1463
    %v1465 = vmul.f32 %v1462, %v1464
    %v1466 = vadd.f32 %v1462, %v1465
    %vm1467 = vweird.f32 %v1446
    %vm1468 = vweird.f32 %v1462
    %vm1469 = vmor %vm1467, %vm1468
    %v1470 = vsel %vm1469, %v1462, %v1466
    %v1471 = vand.u32 2147483647, %v1446
    %vm1472 = vcmp.eq.f32.partialorder %v1471, 8.507059e+37
    %v1473 = vand.u32 %v1446, 2147483648
    %v1474 = vor.u32 1.1754944e-38, %v1473
    %v1475 = vsel %vm1472, %v1474, %v1470
    %v1476 = vmul.f32 1.0, %v1475
    %v1477 = vadd.f32 %v1435, %v304
    %v1478 = vmul.f32 %v1461, %v1477
    %v1479 = vadd.f32 %v1328, %v1478
    %v1480 = vtanh.pop %v1479
    %v1481 = vsub.f32 1.0, %v1476
    %v1482 = vmul.f32 %v1481, %v1480
    %v1483 = vmul.f32 %v1476, %v1322
    %v1484 = vadd.f32 %v1482, %v1483
    %s1485 = scalar_lea.vmem [#allocation2], 56
    %1486 = vst [vmem:[%s1485] sm:$0xff] %v1484
    %v1487 = vld [vmem:[#allocation2] sm:$0xff]
    %v1488 = vld [vmem:[#allocation2 + $0x8] sm:$0xff]
    %v1489 = vld [vmem:[#allocation2 + $0x10] sm:$0xff]
    %v1490 = vld [vmem:[#allocation2 + $0x18] sm:$0xff]
    %v1491 = vld [vmem:[#allocation2 + $0x20] sm:$0xff]
    %v1492 = vld [vmem:[#allocation2 + $0x28] sm:$0xff]
    %v1493 = vld [vmem:[#allocation2 + $0x30] sm:$0xff]
    %v1494 = vld [vmem:[#allocation2 + $0x38] sm:$0xff]
    %s1495 = scalar_lea.vmem [#allocation7], 384
    %v1496 = vld [vmem:[%s1495] sm:$0xff]
    %v1497 = vld [vmem:[%s1495 + $0x8] sm:$0xff]
    %v1498 = vld [vmem:[%s1495 + $0x10] sm:$0xff]
    %v1499 = vld [vmem:[%s1495 + $0x18] sm:$0xff]
    %v1500 = vld [vmem:[%s1495 + $0x20] sm:$0xff]
    %v1501 = vld [vmem:[%s1495 + $0x28] sm:$0xff]
    %v1502 = vld [vmem:[%s1495 + $0x30] sm:$0xff]
    %v1503 = vld [vmem:[%s1495 + $0x38] sm:$0xff]
    %v1504 = vld [vmem:[%s1495 + $0x40] sm:$0xff]
    %v1505 = vld [vmem:[%s1495 + $0x48] sm:$0xff]
    %v1506 = vld [vmem:[%s1495 + $0x50] sm:$0xff]
    %v1507 = vld [vmem:[%s1495 + $0x58] sm:$0xff]
    %v1508 = vld [vmem:[%s1495 + $0x60] sm:$0xff]
    %v1509 = vld [vmem:[%s1495 + $0x68] sm:$0xff]
    %v1510 = vld [vmem:[%s1495 + $0x70] sm:$0xff]
    %v1511 = vld [vmem:[%s1495 + $0x78] sm:$0xff]
    %v1512 = vld [vmem:[%s1495 + $0x80] sm:$0xff]
    %v1513 = vld [vmem:[%s1495 + $0x88] sm:$0xff]
    %v1514 = vld [vmem:[%s1495 + $0x90] sm:$0xff]
    %v1515 = vld [vmem:[%s1495 + $0x98] sm:$0xff]
    %v1516 = vld [vmem:[%s1495 + $0xa0] sm:$0xff]
    %v1517 = vld [vmem:[%s1495 + $0xa8] sm:$0xff]
    %v1518 = vld [vmem:[%s1495 + $0xb0] sm:$0xff]
    %v1519 = vld [vmem:[%s1495 + $0xb8] sm:$0xff]
    %v1520 = vld [vmem:[%s1495 + $0xc0] sm:$0xff]
    %v1521 = vld [vmem:[%s1495 + $0xc8] sm:$0xff]
    %v1522 = vld [vmem:[%s1495 + $0xd0] sm:$0xff]
    %v1523 = vld [vmem:[%s1495 + $0xd8] sm:$0xff]
    %v1524 = vld [vmem:[%s1495 + $0xe0] sm:$0xff]
    %v1525 = vld [vmem:[%s1495 + $0xe8] sm:$0xff]
    %v1526 = vld [vmem:[%s1495 + $0xf0] sm:$0xff]
    %v1527 = vld [vmem:[%s1495 + $0xf8] sm:$0xff]
    %v1528 = vld [vmem:[%s1495 + $0x100] sm:$0xff]
    %v1529 = vld [vmem:[%s1495 + $0x108] sm:$0xff]
    %v1530 = vld [vmem:[%s1495 + $0x110] sm:$0xff]
    %v1531 = vld [vmem:[%s1495 + $0x118] sm:$0xff]
    %v1532 = vld [vmem:[%s1495 + $0x120] sm:$0xff]
    %v1533 = vld [vmem:[%s1495 + $0x128] sm:$0xff]
    %v1534 = vld [vmem:[%s1495 + $0x130] sm:$0xff]
    %v1535 = vld [vmem:[%s1495 + $0x138] sm:$0xff]
    %v1536 = vld [vmem:[%s1495 + $0x140] sm:$0xff]
    %v1537 = vld [vmem:[%s1495 + $0x148] sm:$0xff]
    %v1538 = vld [vmem:[%s1495 + $0x150] sm:$0xff]
    %v1539 = vld [vmem:[%s1495 + $0x158] sm:$0xff]
    %v1540 = vld [vmem:[%s1495 + $0x160] sm:$0xff]
    %v1541 = vld [vmem:[%s1495 + $0x168] sm:$0xff]
    %v1542 = vld [vmem:[%s1495 + $0x170] sm:$0xff]
    %v1543 = vld [vmem:[%s1495 + $0x178] sm:$0xff]
    %s1544 = scalar_lea.vmem [#allocation10], 3
    %v1545 = vld [vmem:[%s1544] sm:$0x7]
    %v1547 = vperm.slane %v1545, 0
    %v1548 = vperm.slane %v1545, 1
    %v1549 = vperm.slane %v1545, 2
    %1553 = vmatpush.msra.mxu0 %v1541
    %1554 = vmatpush.msra.mxu0 %v1538
    %1555 = vmatpush.msra.mxu0 %v1535
    %1556 = vmatpush.msra.mxu0 %v1532
    %1557 = vmatpush.msra.mxu0 %v1529
    %1558 = vmatpush.msra.mxu0 %v1526
    %1559 = vmatpush.msra.mxu0 %v1523
    %1560 = vmatpush.msra.mxu0 %v1520
    %1561 = vmatpush.msra.mxu0 %v1517
    %1562 = vmatpush.msra.mxu0 %v1514
    %1563 = vmatpush.msra.mxu0 %v1511
    %1564 = vmatpush.msra.mxu0 %v1508
    %1565 = vmatpush.msra.mxu0 %v1505
    %1566 = vmatpush.msra.mxu0 %v1502
    %1567 = vmatpush.msra.mxu0 %v1499
    %1568 = vmatpush.msra.mxu0 %v1496
    %1569 = vmatmul.f32.gmra.mxu0 %v1487
    %v1570 = vpop.f32.mrf.mxu0
    %v1571 = vadd.f32 %v1547, %v1570
    %1572 = vmatmul.f32.gmra.mxu0 %v1488
    %v1573 = vpop.f32.mrf.mxu0
    %v1574 = vadd.f32 %v1547, %v1573
    %1575 = vmatmul.f32.gmra.mxu0 %v1489
    %v1576 = vpop.f32.mrf.mxu0
    %v1577 = vadd.f32 %v1547, %v1576
    %1578 = vmatmul.f32.gmra.mxu0 %v1490
    %v1579 = vpop.f32.mrf.mxu0
    %v1580 = vadd.f32 %v1547, %v1579
    %1581 = vmatmul.f32.gmra.mxu0 %v1491
    %v1582 = vpop.f32.mrf.mxu0
    %v1583 = vadd.f32 %v1547, %v1582
    %1584 = vmatmul.f32.gmra.mxu0 %v1492
    %v1585 = vpop.f32.mrf.mxu0
    %v1586 = vadd.f32 %v1547, %v1585
    %1587 = vmatmul.f32.gmra.mxu0 %v1493
    %v1588 = vpop.f32.mrf.mxu0
    %v1589 = vadd.f32 %v1547, %v1588
    %1590 = vmatmul.f32.gmra.mxu0 %v1494
    %v1591 = vpop.f32.mrf.mxu0
    %v1592 = vadd.f32 %v1547, %v1591
    %1593 = vdwg.mxu0
    %1594 = vmatpush.msra.mxu0 %v1542
    %1595 = vmatpush.msra.mxu0 %v1539
    %1596 = vmatpush.msra.mxu0 %v1536
    %1597 = vmatpush.msra.mxu0 %v1533
    %1598 = vmatpush.msra.mxu0 %v1530
    %1599 = vmatpush.msra.mxu0 %v1527
    %1600 = vmatpush.msra.mxu0 %v1524
    %1601 = vmatpush.msra.mxu0 %v1521
    %1602 = vmatpush.msra.mxu0 %v1518
    %1603 = vmatpush.msra.mxu0 %v1515
    %1604 = vmatpush.msra.mxu0 %v1512
    %1605 = vmatpush.msra.mxu0 %v1509
    %1606 = vmatpush.msra.mxu0 %v1506
    %1607 = vmatpush.msra.mxu0 %v1503
    %1608 = vmatpush.msra.mxu0 %v1500
    %1609 = vmatpush.msra.mxu0 %v1497
    %1610 = vmatmul.f32.gmra.mxu0 %v1487
    %v1611 = vpop.f32.mrf.mxu0
    %v1612 = vadd.f32 %v1548, %v1611
    %1613 = vmatmul.f32.gmra.mxu0 %v1488
    %v1614 = vpop.f32.mrf.mxu0
    %v1615 = vadd.f32 %v1548, %v1614
    %1616 = vmatmul.f32.gmra.mxu0 %v1489
    %v1617 = vpop.f32.mrf.mxu0
    %v1618 = vadd.f32 %v1548, %v1617
    %1619 = vmatmul.f32.gmra.mxu0 %v1490
    %v1620 = vpop.f32.mrf.mxu0
    %v1621 = vadd.f32 %v1548, %v1620
    %1622 = vmatmul.f32.gmra.mxu0 %v1491
    %v1623 = vpop.f32.mrf.mxu0
    %v1624 = vadd.f32 %v1548, %v1623
    %1625 = vmatmul.f32.gmra.mxu0 %v1492
    %v1626 = vpop.f32.mrf.mxu0
    %v1627 = vadd.f32 %v1548, %v1626
    %1628 = vmatmul.f32.gmra.mxu0 %v1493
    %v1629 = vpop.f32.mrf.mxu0
    %v1630 = vadd.f32 %v1548, %v1629
    %1631 = vmatmul.f32.gmra.mxu0 %v1494
    %v1632 = vpop.f32.mrf.mxu0
    %v1633 = vadd.f32 %v1548, %v1632
    %1634 = vdwg.mxu0
    %1635 = vmatpush.msra.mxu0 %v1543
    %1636 = vmatpush.msra.mxu0 %v1540
    %1637 = vmatpush.msra.mxu0 %v1537
    %1638 = vmatpush.msra.mxu0 %v1534
    %1639 = vmatpush.msra.mxu0 %v1531
    %1640 = vmatpush.msra.mxu0 %v1528
    %1641 = vmatpush.msra.mxu0 %v1525
    %1642 = vmatpush.msra.mxu0 %v1522
    %1643 = vmatpush.msra.mxu0 %v1519
    %1644 = vmatpush.msra.mxu0 %v1516
    %1645 = vmatpush.msra.mxu0 %v1513
    %1646 = vmatpush.msra.mxu0 %v1510
    %1647 = vmatpush.msra.mxu0 %v1507
    %1648 = vmatpush.msra.mxu0 %v1504
    %1649 = vmatpush.msra.mxu0 %v1501
    %1650 = vmatpush.msra.mxu0 %v1498
    %1651 = vmatmul.f32.gmra.mxu0 %v1487
    %v1652 = vpop.f32.mrf.mxu0
    %v1653 = vadd.f32 %v1549, %v1652
    %1654 = vmatmul.f32.gmra.mxu0 %v1488
    %v1655 = vpop.f32.mrf.mxu0
    %v1656 = vadd.f32 %v1549, %v1655
    %1657 = vmatmul.f32.gmra.mxu0 %v1489
    %v1658 = vpop.f32.mrf.mxu0
    %v1659 = vadd.f32 %v1549, %v1658
    %1660 = vmatmul.f32.gmra.mxu0 %v1490
    %v1661 = vpop.f32.mrf.mxu0
    %v1662 = vadd.f32 %v1549, %v1661
    %1663 = vmatmul.f32.gmra.mxu0 %v1491
    %v1664 = vpop.f32.mrf.mxu0
    %v1665 = vadd.f32 %v1549, %v1664
    %1666 = vmatmul.f32.gmra.mxu0 %v1492
    %v1667 = vpop.f32.mrf.mxu0
    %v1668 = vadd.f32 %v1549, %v1667
    %1669 = vmatmul.f32.gmra.mxu0 %v1493
    %v1670 = vpop.f32.mrf.mxu0
    %v1671 = vadd.f32 %v1549, %v1670
    %1672 = vmatmul.f32.gmra.mxu0 %v1494
    %v1673 = vpop.f32.mrf.mxu0
    %v1674 = vadd.f32 %v1549, %v1673
    %1675 = vdwg.mxu0
    %1676 = vst [vmem:[#allocation3] sm:$0xff] %v1571
    %1677 = vst [vmem:[#allocation3 + $0x8] sm:$0xff] %v1612
    %1678 = vst [vmem:[#allocation3 + $0x10] sm:$0xff] %v1653
    %1679 = vst [vmem:[#allocation3 + $0x18] sm:$0xff] %v1574
    %1680 = vst [vmem:[#allocation3 + $0x20] sm:$0xff] %v1615
    %1681 = vst [vmem:[#allocation3 + $0x28] sm:$0xff] %v1656
    %1682 = vst [vmem:[#allocation3 + $0x30] sm:$0xff] %v1577
    %1683 = vst [vmem:[#allocation3 + $0x38] sm:$0xff] %v1618
    %1684 = vst [vmem:[#allocation3 + $0x40] sm:$0xff] %v1659
    %1685 = vst [vmem:[#allocation3 + $0x48] sm:$0xff] %v1580
    %1686 = vst [vmem:[#allocation3 + $0x50] sm:$0xff] %v1621
    %1687 = vst [vmem:[#allocation3 + $0x58] sm:$0xff] %v1662
    %1688 = vst [vmem:[#allocation3 + $0x60] sm:$0xff] %v1583
    %1689 = vst [vmem:[#allocation3 + $0x68] sm:$0xff] %v1624
    %1690 = vst [vmem:[#allocation3 + $0x70] sm:$0xff] %v1665
    %1691 = vst [vmem:[#allocation3 + $0x78] sm:$0xff] %v1586
    %1692 = vst [vmem:[#allocation3 + $0x80] sm:$0xff] %v1627
    %1693 = vst [vmem:[#allocation3 + $0x88] sm:$0xff] %v1668
    %1694 = vst [vmem:[#allocation3 + $0x90] sm:$0xff] %v1589
    %1695 = vst [vmem:[#allocation3 + $0x98] sm:$0xff] %v1630
    %1696 = vst [vmem:[#allocation3 + $0xa0] sm:$0xff] %v1671
    %1697 = vst [vmem:[#allocation3 + $0xa8] sm:$0xff] %v1592
    %1698 = vst [vmem:[#allocation3 + $0xb0] sm:$0xff] %v1633
    %1699 = vst [vmem:[#allocation3 + $0xb8] sm:$0xff] %v1674
    %s1700 = scalar_lea.vmem %s4, 1
    %v1701 = vld [vmem:[%s1700] sm:$0x1]
    %v1703 = vperm.slane %v1701, 0
    %v1705 = vld [vmem:[#allocation3] sm:$0xff]
    %v1706 = vld [vmem:[#allocation3 + $0x8] sm:$0xff]
    %v1707 = vld [vmem:[#allocation3 + $0x10] sm:$0xff]
    %v1708 = vxor.u32 %v1705, 2147483648
    %v1709 = vxor.u32 %v1706, 2147483648
    %v1710 = vmul.f32 %v1708, 1.442695
    %v1711 = vpow.pop %v1710
    %v1712 = vmul.f32 %v1709, 1.442695
    %v1713 = vpow.pop %v1712
    %v1714 = vadd.f32 %v1711, 1.0
    %v1715 = vadd.f32 %v1713, 1.0
    %v1716 = vrcp.pop %v1714
    %v1717 = vmul.f32 %v1714, %v1716
    %v1718 = vsub.f32 1.0, %v1717
    %v1719 = vmul.f32 %v1716, %v1718
    %v1720 = vadd.f32 %v1716, %v1719
    %vm1721 = vweird.f32 %v1714
    %vm1722 = vweird.f32 %v1716
    %vm1723 = vmor %vm1721, %vm1722
    %v1724 = vsel %vm1723, %v1716, %v1720
    %v1725 = vand.u32 2147483647, %v1714
    %vm1726 = vcmp.eq.f32.partialorder %v1725, 8.507059e+37
    %v1727 = vand.u32 %v1714, 2147483648
    %v1728 = vor.u32 1.1754944e-38, %v1727
    %v1729 = vsel %vm1726, %v1728, %v1724
    %v1730 = vmul.f32 1.0, %v1729
    %v1731 = vrcp.pop %v1715
    %v1732 = vmul.f32 %v1715, %v1731
    %v1733 = vsub.f32 1.0, %v1732
    %v1734 = vmul.f32 %v1731, %v1733
    %v1735 = vadd.f32 %v1731, %v1734
    %vm1736 = vweird.f32 %v1715
    %vm1737 = vweird.f32 %v1731
    %vm1738 = vmor %vm1736, %vm1737
    %v1739 = vsel %vm1738, %v1731, %v1735
    %v1740 = vand.u32 2147483647, %v1715
    %vm1741 = vcmp.eq.f32.partialorder %v1740, 8.507059e+37
    %v1742 = vand.u32 %v1715, 2147483648
    %v1743 = vor.u32 1.1754944e-38, %v1742
    %v1744 = vsel %vm1741, %v1743, %v1739
    %v1745 = vmul.f32 1.0, %v1744
    %v1746 = vmul.f32 %v1730, %v1703
    %v1747 = vadd.f32 %v1707, %v1746
    %v1748 = vtanh.pop %v1747
    %v1749 = vsub.f32 1.0, %v1745
    %v1750 = vmul.f32 %v1749, %v1748
    %1751 = vst [vmem:[#allocation2] sm:$0xff] %v1750
    %v1752 = vld [vmem:[%s353] sm:$0xff]
    %v1753 = vld [vmem:[%s353 + $0x8] sm:$0xff]
    %v1754 = vld [vmem:[%s353 + $0x10] sm:$0xff]
    %s1755 = scalar_lea.vmem [#allocation9], 384
    %v1756 = vld [vmem:[%s1755] sm:$0xff]
    %v1757 = vld [vmem:[%s1755 + $0x8] sm:$0xff]
    %v1758 = vld [vmem:[%s1755 + $0x10] sm:$0xff]
    %v1759 = vld [vmem:[%s1755 + $0x18] sm:$0xff]
    %v1760 = vld [vmem:[%s1755 + $0x20] sm:$0xff]
    %v1761 = vld [vmem:[%s1755 + $0x28] sm:$0xff]
    %v1762 = vld [vmem:[%s1755 + $0x30] sm:$0xff]
    %v1763 = vld [vmem:[%s1755 + $0x38] sm:$0xff]
    %v1764 = vld [vmem:[%s1755 + $0x40] sm:$0xff]
    %v1765 = vld [vmem:[%s1755 + $0x48] sm:$0xff]
    %v1766 = vld [vmem:[%s1755 + $0x50] sm:$0xff]
    %v1767 = vld [vmem:[%s1755 + $0x58] sm:$0xff]
    %v1768 = vld [vmem:[%s1755 + $0x60] sm:$0xff]
    %v1769 = vld [vmem:[%s1755 + $0x68] sm:$0xff]
    %v1770 = vld [vmem:[%s1755 + $0x70] sm:$0xff]
    %v1771 = vld [vmem:[%s1755 + $0x78] sm:$0xff]
    %v1772 = vld [vmem:[%s1755 + $0x80] sm:$0xff]
    %v1773 = vld [vmem:[%s1755 + $0x88] sm:$0xff]
    %v1774 = vld [vmem:[%s1755 + $0x90] sm:$0xff]
    %v1775 = vld [vmem:[%s1755 + $0x98] sm:$0xff]
    %v1776 = vld [vmem:[%s1755 + $0xa0] sm:$0xff]
    %v1777 = vld [vmem:[%s1755 + $0xa8] sm:$0xff]
    %v1778 = vld [vmem:[%s1755 + $0xb0] sm:$0xff]
    %v1779 = vld [vmem:[%s1755 + $0xb8] sm:$0xff]
    %v1780 = vld [vmem:[%s1755 + $0xc0] sm:$0xff]
    %v1781 = vld [vmem:[%s1755 + $0xc8] sm:$0xff]
    %v1782 = vld [vmem:[%s1755 + $0xd0] sm:$0xff]
    %v1783 = vld [vmem:[%s1755 + $0xd8] sm:$0xff]
    %v1784 = vld [vmem:[%s1755 + $0xe0] sm:$0xff]
    %v1785 = vld [vmem:[%s1755 + $0xe8] sm:$0xff]
    %v1786 = vld [vmem:[%s1755 + $0xf0] sm:$0xff]
    %v1787 = vld [vmem:[%s1755 + $0xf8] sm:$0xff]
    %v1788 = vld [vmem:[%s1755 + $0x100] sm:$0xff]
    %v1789 = vld [vmem:[%s1755 + $0x108] sm:$0xff]
    %v1790 = vld [vmem:[%s1755 + $0x110] sm:$0xff]
    %v1791 = vld [vmem:[%s1755 + $0x118] sm:$0xff]
    %v1792 = vld [vmem:[%s1755 + $0x120] sm:$0xff]
    %v1793 = vld [vmem:[%s1755 + $0x128] sm:$0xff]
    %v1794 = vld [vmem:[%s1755 + $0x130] sm:$0xff]
    %v1795 = vld [vmem:[%s1755 + $0x138] sm:$0xff]
    %v1796 = vld [vmem:[%s1755 + $0x140] sm:$0xff]
    %v1797 = vld [vmem:[%s1755 + $0x148] sm:$0xff]
    %v1798 = vld [vmem:[%s1755 + $0x150] sm:$0xff]
    %v1799 = vld [vmem:[%s1755 + $0x158] sm:$0xff]
    %v1800 = vld [vmem:[%s1755 + $0x160] sm:$0xff]
    %v1801 = vld [vmem:[%s1755 + $0x168] sm:$0xff]
    %v1802 = vld [vmem:[%s1755 + $0x170] sm:$0xff]
    %v1803 = vld [vmem:[%s1755 + $0x178] sm:$0xff]
    %1804 = vmatpush.msra.mxu0 %v1801
    %1805 = vmatpush.msra.mxu0 %v1798
    %1806 = vmatpush.msra.mxu0 %v1795
    %1807 = vmatpush.msra.mxu0 %v1792
    %1808 = vmatpush.msra.mxu0 %v1789
    %1809 = vmatpush.msra.mxu0 %v1786
    %1810 = vmatpush.msra.mxu0 %v1783
    %1811 = vmatpush.msra.mxu0 %v1780
    %1812 = vmatpush.msra.mxu0 %v1777
    %1813 = vmatpush.msra.mxu0 %v1774
    %1814 = vmatpush.msra.mxu0 %v1771
    %1815 = vmatpush.msra.mxu0 %v1768
    %1816 = vmatpush.msra.mxu0 %v1765
    %1817 = vmatpush.msra.mxu0 %v1762
    %1818 = vmatpush.msra.mxu0 %v1759
    %1819 = vmatpush.msra.mxu0 %v1756
    %1820 = vmatmul.f32.gmra.mxu0 %v1750
    %v1821 = vpop.f32.mrf.mxu0
    %v1822 = vadd.f32 0.0, %v1821
    %1823 = vdwg.mxu0
    %1824 = vmatpush.msra.mxu0 %v1802
    %1825 = vmatpush.msra.mxu0 %v1799
    %1826 = vmatpush.msra.mxu0 %v1796
    %1827 = vmatpush.msra.mxu0 %v1793
    %1828 = vmatpush.msra.mxu0 %v1790
    %1829 = vmatpush.msra.mxu0 %v1787
    %1830 = vmatpush.msra.mxu0 %v1784
    %1831 = vmatpush.msra.mxu0 %v1781
    %1832 = vmatpush.msra.mxu0 %v1778
    %1833 = vmatpush.msra.mxu0 %v1775
    %1834 = vmatpush.msra.mxu0 %v1772
    %1835 = vmatpush.msra.mxu0 %v1769
    %1836 = vmatpush.msra.mxu0 %v1766
    %1837 = vmatpush.msra.mxu0 %v1763
    %1838 = vmatpush.msra.mxu0 %v1760
    %1839 = vmatpush.msra.mxu0 %v1757
    %1840 = vmatmul.f32.gmra.mxu0 %v1750
    %v1841 = vpop.f32.mrf.mxu0
    %v1842 = vadd.f32 0.0, %v1841
    %1843 = vdwg.mxu0
    %1844 = vmatpush.msra.mxu0 %v1803
    %1845 = vmatpush.msra.mxu0 %v1800
    %1846 = vmatpush.msra.mxu0 %v1797
    %1847 = vmatpush.msra.mxu0 %v1794
    %1848 = vmatpush.msra.mxu0 %v1791
    %1849 = vmatpush.msra.mxu0 %v1788
    %1850 = vmatpush.msra.mxu0 %v1785
    %1851 = vmatpush.msra.mxu0 %v1782
    %1852 = vmatpush.msra.mxu0 %v1779
    %1853 = vmatpush.msra.mxu0 %v1776
    %1854 = vmatpush.msra.mxu0 %v1773
    %1855 = vmatpush.msra.mxu0 %v1770
    %1856 = vmatpush.msra.mxu0 %v1767
    %1857 = vmatpush.msra.mxu0 %v1764
    %1858 = vmatpush.msra.mxu0 %v1761
    %1859 = vmatpush.msra.mxu0 %v1758
    %1860 = vmatmul.f32.gmra.mxu0 %v1750
    %v1861 = vpop.f32.mrf.mxu0
    %v1862 = vadd.f32 0.0, %v1861
    %1863 = vdwg.mxu0
    %v1864 = vadd.f32 %v1752, %v1822
    %v1865 = vadd.f32 %v1753, %v1842
    %v1866 = vxor.u32 %v1864, 2147483648
    %v1867 = vxor.u32 %v1865, 2147483648
    %v1868 = vmul.f32 %v1866, 1.442695
    %v1869 = vpow.pop %v1868
    %v1870 = vmul.f32 %v1867, 1.442695
    %v1871 = vpow.pop %v1870
    %v1872 = vadd.f32 %v1869, 1.0
    %v1873 = vadd.f32 %v1871, 1.0
    %v1874 = vrcp.pop %v1872
    %v1875 = vmul.f32 %v1872, %v1874
    %v1876 = vsub.f32 1.0, %v1875
    %v1877 = vmul.f32 %v1874, %v1876
    %v1878 = vadd.f32 %v1874, %v1877
    %vm1879 = vweird.f32 %v1872
    %vm1880 = vweird.f32 %v1874
    %vm1881 = vmor %vm1879, %vm1880
    %v1882 = vsel %vm1881, %v1874, %v1878
    %v1883 = vand.u32 2147483647, %v1872
    %vm1884 = vcmp.eq.f32.partialorder %v1883, 8.507059e+37
    %v1885 = vand.u32 %v1872, 2147483648
    %v1886 = vor.u32 1.1754944e-38, %v1885
    %v1887 = vsel %vm1884, %v1886, %v1882
    %v1888 = vmul.f32 1.0, %v1887
    %v1889 = vrcp.pop %v1873
    %v1890 = vmul.f32 %v1873, %v1889
    %v1891 = vsub.f32 1.0, %v1890
    %v1892 = vmul.f32 %v1889, %v1891
    %v1893 = vadd.f32 %v1889, %v1892
    %vm1894 = vweird.f32 %v1873
    %vm1895 = vweird.f32 %v1889
    %vm1896 = vmor %vm1894, %vm1895
    %v1897 = vsel %vm1896, %v1889, %v1893
    %v1898 = vand.u32 2147483647, %v1873
    %vm1899 = vcmp.eq.f32.partialorder %v1898, 8.507059e+37
    %v1900 = vand.u32 %v1873, 2147483648
    %v1901 = vor.u32 1.1754944e-38, %v1900
    %v1902 = vsel %vm1899, %v1901, %v1897
    %v1903 = vmul.f32 1.0, %v1902
    %v1904 = vadd.f32 %v1862, %v1703
    %v1905 = vmul.f32 %v1888, %v1904
    %v1906 = vadd.f32 %v1754, %v1905
    %v1907 = vtanh.pop %v1906
    %v1908 = vsub.f32 1.0, %v1903
    %v1909 = vmul.f32 %v1908, %v1907
    %v1910 = vmul.f32 %v1903, %v1750
    %v1911 = vadd.f32 %v1909, %v1910
    %1912 = vst [vmem:[%s513] sm:$0xff] %v1911
    %v1913 = vld [vmem:[%s515] sm:$0xff]
    %v1914 = vld [vmem:[%s515 + $0x8] sm:$0xff]
    %v1915 = vld [vmem:[%s515 + $0x10] sm:$0xff]
    %v1916 = vld [vmem:[%s1755] sm:$0xff]
    %v1917 = vld [vmem:[%s1755 + $0x8] sm:$0xff]
    %v1918 = vld [vmem:[%s1755 + $0x10] sm:$0xff]
    %v1919 = vld [vmem:[%s1755 + $0x18] sm:$0xff]
    %v1920 = vld [vmem:[%s1755 + $0x20] sm:$0xff]
    %v1921 = vld [vmem:[%s1755 + $0x28] sm:$0xff]
    %v1922 = vld [vmem:[%s1755 + $0x30] sm:$0xff]
    %v1923 = vld [vmem:[%s1755 + $0x38] sm:$0xff]
    %v1924 = vld [vmem:[%s1755 + $0x40] sm:$0xff]
    %v1925 = vld [vmem:[%s1755 + $0x48] sm:$0xff]
    %v1926 = vld [vmem:[%s1755 + $0x50] sm:$0xff]
    %v1927 = vld [vmem:[%s1755 + $0x58] sm:$0xff]
    %v1928 = vld [vmem:[%s1755 + $0x60] sm:$0xff]
    %v1929 = vld [vmem:[%s1755 + $0x68] sm:$0xff]
    %v1930 = vld [vmem:[%s1755 + $0x70] sm:$0xff]
    %v1931 = vld [vmem:[%s1755 + $0x78] sm:$0xff]
    %v1932 = vld [vmem:[%s1755 + $0x80] sm:$0xff]
    %v1933 = vld [vmem:[%s1755 + $0x88] sm:$0xff]
    %v1934 = vld [vmem:[%s1755 + $0x90] sm:$0xff]
    %v1935 = vld [vmem:[%s1755 + $0x98] sm:$0xff]
    %v1936 = vld [vmem:[%s1755 + $0xa0] sm:$0xff]
    %v1937 = vld [vmem:[%s1755 + $0xa8] sm:$0xff]
    %v1938 = vld [vmem:[%s1755 + $0xb0] sm:$0xff]
    %v1939 = vld [vmem:[%s1755 + $0xb8] sm:$0xff]
    %v1940 = vld [vmem:[%s1755 + $0xc0] sm:$0xff]
    %v1941 = vld [vmem:[%s1755 + $0xc8] sm:$0xff]
    %v1942 = vld [vmem:[%s1755 + $0xd0] sm:$0xff]
    %v1943 = vld [vmem:[%s1755 + $0xd8] sm:$0xff]
    %v1944 = vld [vmem:[%s1755 + $0xe0] sm:$0xff]
    %v1945 = vld [vmem:[%s1755 + $0xe8] sm:$0xff]
    %v1946 = vld [vmem:[%s1755 + $0xf0] sm:$0xff]
    %v1947 = vld [vmem:[%s1755 + $0xf8] sm:$0xff]
    %v1948 = vld [vmem:[%s1755 + $0x100] sm:$0xff]
    %v1949 = vld [vmem:[%s1755 + $0x108] sm:$0xff]
    %v1950 = vld [vmem:[%s1755 + $0x110] sm:$0xff]
    %v1951 = vld [vmem:[%s1755 + $0x118] sm:$0xff]
    %v1952 = vld [vmem:[%s1755 + $0x120] sm:$0xff]
    %v1953 = vld [vmem:[%s1755 + $0x128] sm:$0xff]
    %v1954 = vld [vmem:[%s1755 + $0x130] sm:$0xff]
    %v1955 = vld [vmem:[%s1755 + $0x138] sm:$0xff]
    %v1956 = vld [vmem:[%s1755 + $0x140] sm:$0xff]
    %v1957 = vld [vmem:[%s1755 + $0x148] sm:$0xff]
    %v1958 = vld [vmem:[%s1755 + $0x150] sm:$0xff]
    %v1959 = vld [vmem:[%s1755 + $0x158] sm:$0xff]
    %v1960 = vld [vmem:[%s1755 + $0x160] sm:$0xff]
    %v1961 = vld [vmem:[%s1755 + $0x168] sm:$0xff]
    %v1962 = vld [vmem:[%s1755 + $0x170] sm:$0xff]
    %v1963 = vld [vmem:[%s1755 + $0x178] sm:$0xff]
    %1964 = vmatpush.msra.mxu0 %v1961
    %1965 = vmatpush.msra.mxu0 %v1958
    %1966 = vmatpush.msra.mxu0 %v1955
    %1967 = vmatpush.msra.mxu0 %v1952
    %1968 = vmatpush.msra.mxu0 %v1949
    %1969 = vmatpush.msra.mxu0 %v1946
    %1970 = vmatpush.msra.mxu0 %v1943
    %1971 = vmatpush.msra.mxu0 %v1940
    %1972 = vmatpush.msra.mxu0 %v1937
    %1973 = vmatpush.msra.mxu0 %v1934
    %1974 = vmatpush.msra.mxu0 %v1931
    %1975 = vmatpush.msra.mxu0 %v1928
    %1976 = vmatpush.msra.mxu0 %v1925
    %1977 = vmatpush.msra.mxu0 %v1922
    %1978 = vmatpush.msra.mxu0 %v1919
    %1979 = vmatpush.msra.mxu0 %v1916
    %1980 = vmatmul.f32.gmra.mxu0 %v1911
    %v1981 = vpop.f32.mrf.mxu0
    %v1982 = vadd.f32 0.0, %v1981
    %1983 = vdwg.mxu0
    %1984 = vmatpush.msra.mxu0 %v1962
    %1985 = vmatpush.msra.mxu0 %v1959
    %1986 = vmatpush.msra.mxu0 %v1956
    %1987 = vmatpush.msra.mxu0 %v1953
    %1988 = vmatpush.msra.mxu0 %v1950
    %1989 = vmatpush.msra.mxu0 %v1947
    %1990 = vmatpush.msra.mxu0 %v1944
    %1991 = vmatpush.msra.mxu0 %v1941
    %1992 = vmatpush.msra.mxu0 %v1938
    %1993 = vmatpush.msra.mxu0 %v1935
    %1994 = vmatpush.msra.mxu0 %v1932
    %1995 = vmatpush.msra.mxu0 %v1929
    %1996 = vmatpush.msra.mxu0 %v1926
    %1997 = vmatpush.msra.mxu0 %v1923
    %1998 = vmatpush.msra.mxu0 %v1920
    %1999 = vmatpush.msra.mxu0 %v1917
    %2000 = vmatmul.f32.gmra.mxu0 %v1911
    %v2001 = vpop.f32.mrf.mxu0
    %v2002 = vadd.f32 0.0, %v2001
    %2003 = vdwg.mxu0
    %2004 = vmatpush.msra.mxu0 %v1963
    %2005 = vmatpush.msra.mxu0 %v1960
    %2006 = vmatpush.msra.mxu0 %v1957
    %2007 = vmatpush.msra.mxu0 %v1954
    %2008 = vmatpush.msra.mxu0 %v1951
    %2009 = vmatpush.msra.mxu0 %v1948
    %2010 = vmatpush.msra.mxu0 %v1945
    %2011 = vmatpush.msra.mxu0 %v1942
    %2012 = vmatpush.msra.mxu0 %v1939
    %2013 = vmatpush.msra.mxu0 %v1936
    %2014 = vmatpush.msra.mxu0 %v1933
    %2015 = vmatpush.msra.mxu0 %v1930
    %2016 = vmatpush.msra.mxu0 %v1927
    %2017 = vmatpush.msra.mxu0 %v1924
    %2018 = vmatpush.msra.mxu0 %v1921
    %2019 = vmatpush.msra.mxu0 %v1918
    %2020 = vmatmul.f32.gmra.mxu0 %v1911
    %v2021 = vpop.f32.mrf.mxu0
    %v2022 = vadd.f32 0.0, %v2021
    %2023 = vdwg.mxu0
    %v2024 = vadd.f32 %v1913, %v1982
    %v2025 = vadd.f32 %v1914, %v2002
    %v2026 = vxor.u32 %v2024, 2147483648
    %v2027 = vxor.u32 %v2025, 2147483648
    %v2028 = vmul.f32 %v2026, 1.442695
    %v2029 = vpow.pop %v2028
    %v2030 = vmul.f32 %v2027, 1.442695
    %v2031 = vpow.pop %v2030
    %v2032 = vadd.f32 %v2029, 1.0
    %v2033 = vadd.f32 %v2031, 1.0
    %v2034 = vrcp.pop %v2032
    %v2035 = vmul.f32 %v2032, %v2034
    %v2036 = vsub.f32 1.0, %v2035
    %v2037 = vmul.f32 %v2034, %v2036
    %v2038 = vadd.f32 %v2034, %v2037
    %vm2039 = vweird.f32 %v2032
    %vm2040 = vweird.f32 %v2034
    %vm2041 = vmor %vm2039, %vm2040
    %v2042 = vsel %vm2041, %v2034, %v2038
    %v2043 = vand.u32 2147483647, %v2032
    %vm2044 = vcmp.eq.f32.partialorder %v2043, 8.507059e+37
    %v2045 = vand.u32 %v2032, 2147483648
    %v2046 = vor.u32 1.1754944e-38, %v2045
    %v2047 = vsel %vm2044, %v2046, %v2042
    %v2048 = vmul.f32 1.0, %v2047
    %v2049 = vrcp.pop %v2033
    %v2050 = vmul.f32 %v2033, %v2049
    %v2051 = vsub.f32 1.0, %v2050
    %v2052 = vmul.f32 %v2049, %v2051
    %v2053 = vadd.f32 %v2049, %v2052
    %vm2054 = vweird.f32 %v2033
    %vm2055 = vweird.f32 %v2049
    %vm2056 = vmor %vm2054, %vm2055
    %v2057 = vsel %vm2056, %v2049, %v2053
    %v2058 = vand.u32 2147483647, %v2033
    %vm2059 = vcmp.eq.f32.partialorder %v2058, 8.507059e+37
    %v2060 = vand.u32 %v2033, 2147483648
    %v2061 = vor.u32 1.1754944e-38, %v2060
    %v2062 = vsel %vm2059, %v2061, %v2057
    %v2063 = vmul.f32 1.0, %v2062
    %v2064 = vadd.f32 %v2022, %v1703
    %v2065 = vmul.f32 %v2048, %v2064
    %v2066 = vadd.f32 %v1915, %v2065
    %v2067 = vtanh.pop %v2066
    %v2068 = vsub.f32 1.0, %v2063
    %v2069 = vmul.f32 %v2068, %v2067
    %v2070 = vmul.f32 %v2063, %v1911
    %v2071 = vadd.f32 %v2069, %v2070
    %2072 = vst [vmem:[%s675] sm:$0xff] %v2071
    %v2073 = vld [vmem:[%s677] sm:$0xff]
    %v2074 = vld [vmem:[%s677 + $0x8] sm:$0xff]
    %v2075 = vld [vmem:[%s677 + $0x10] sm:$0xff]
    %v2076 = vld [vmem:[%s1755] sm:$0xff]
    %v2077 = vld [vmem:[%s1755 + $0x8] sm:$0xff]
    %v2078 = vld [vmem:[%s1755 + $0x10] sm:$0xff]
    %v2079 = vld [vmem:[%s1755 + $0x18] sm:$0xff]
    %v2080 = vld [vmem:[%s1755 + $0x20] sm:$0xff]
    %v2081 = vld [vmem:[%s1755 + $0x28] sm:$0xff]
    %v2082 = vld [vmem:[%s1755 + $0x30] sm:$0xff]
    %v2083 = vld [vmem:[%s1755 + $0x38] sm:$0xff]
    %v2084 = vld [vmem:[%s1755 + $0x40] sm:$0xff]
    %v2085 = vld [vmem:[%s1755 + $0x48] sm:$0xff]
    %v2086 = vld [vmem:[%s1755 + $0x50] sm:$0xff]
    %v2087 = vld [vmem:[%s1755 + $0x58] sm:$0xff]
    %v2088 = vld [vmem:[%s1755 + $0x60] sm:$0xff]
    %v2089 = vld [vmem:[%s1755 + $0x68] sm:$0xff]
    %v2090 = vld [vmem:[%s1755 + $0x70] sm:$0xff]
    %v2091 = vld [vmem:[%s1755 + $0x78] sm:$0xff]
    %v2092 = vld [vmem:[%s1755 + $0x80] sm:$0xff]
    %v2093 = vld [vmem:[%s1755 + $0x88] sm:$0xff]
    %v2094 = vld [vmem:[%s1755 + $0x90] sm:$0xff]
    %v2095 = vld [vmem:[%s1755 + $0x98] sm:$0xff]
    %v2096 = vld [vmem:[%s1755 + $0xa0] sm:$0xff]
    %v2097 = vld [vmem:[%s1755 + $0xa8] sm:$0xff]
    %v2098 = vld [vmem:[%s1755 + $0xb0] sm:$0xff]
    %v2099 = vld [vmem:[%s1755 + $0xb8] sm:$0xff]
    %v2100 = vld [vmem:[%s1755 + $0xc0] sm:$0xff]
    %v2101 = vld [vmem:[%s1755 + $0xc8] sm:$0xff]
    %v2102 = vld [vmem:[%s1755 + $0xd0] sm:$0xff]
    %v2103 = vld [vmem:[%s1755 + $0xd8] sm:$0xff]
    %v2104 = vld [vmem:[%s1755 + $0xe0] sm:$0xff]
    %v2105 = vld [vmem:[%s1755 + $0xe8] sm:$0xff]
    %v2106 = vld [vmem:[%s1755 + $0xf0] sm:$0xff]
    %v2107 = vld [vmem:[%s1755 + $0xf8] sm:$0xff]
    %v2108 = vld [vmem:[%s1755 + $0x100] sm:$0xff]
    %v2109 = vld [vmem:[%s1755 + $0x108] sm:$0xff]
    %v2110 = vld [vmem:[%s1755 + $0x110] sm:$0xff]
    %v2111 = vld [vmem:[%s1755 + $0x118] sm:$0xff]
    %v2112 = vld [vmem:[%s1755 + $0x120] sm:$0xff]
    %v2113 = vld [vmem:[%s1755 + $0x128] sm:$0xff]
    %v2114 = vld [vmem:[%s1755 + $0x130] sm:$0xff]
    %v2115 = vld [vmem:[%s1755 + $0x138] sm:$0xff]
    %v2116 = vld [vmem:[%s1755 + $0x140] sm:$0xff]
    %v2117 = vld [vmem:[%s1755 + $0x148] sm:$0xff]
    %v2118 = vld [vmem:[%s1755 + $0x150] sm:$0xff]
    %v2119 = vld [vmem:[%s1755 + $0x158] sm:$0xff]
    %v2120 = vld [vmem:[%s1755 + $0x160] sm:$0xff]
    %v2121 = vld [vmem:[%s1755 + $0x168] sm:$0xff]
    %v2122 = vld [vmem:[%s1755 + $0x170] sm:$0xff]
    %v2123 = vld [vmem:[%s1755 + $0x178] sm:$0xff]
    %2124 = vmatpush.msra.mxu0 %v2121
    %2125 = vmatpush.msra.mxu0 %v2118
    %2126 = vmatpush.msra.mxu0 %v2115
    %2127 = vmatpush.msra.mxu0 %v2112
    %2128 = vmatpush.msra.mxu0 %v2109
    %2129 = vmatpush.msra.mxu0 %v2106
    %2130 = vmatpush.msra.mxu0 %v2103
    %2131 = vmatpush.msra.mxu0 %v2100
    %2132 = vmatpush.msra.mxu0 %v2097
    %2133 = vmatpush.msra.mxu0 %v2094
    %2134 = vmatpush.msra.mxu0 %v2091
    %2135 = vmatpush.msra.mxu0 %v2088
    %2136 = vmatpush.msra.mxu0 %v2085
    %2137 = vmatpush.msra.mxu0 %v2082
    %2138 = vmatpush.msra.mxu0 %v2079
    %2139 = vmatpush.msra.mxu0 %v2076
    %2140 = vmatmul.f32.gmra.mxu0 %v2071
    %v2141 = vpop.f32.mrf.mxu0
    %v2142 = vadd.f32 0.0, %v2141
    %2143 = vdwg.mxu0
    %2144 = vmatpush.msra.mxu0 %v2122
    %2145 = vmatpush.msra.mxu0 %v2119
    %2146 = vmatpush.msra.mxu0 %v2116
    %2147 = vmatpush.msra.mxu0 %v2113
    %2148 = vmatpush.msra.mxu0 %v2110
    %2149 = vmatpush.msra.mxu0 %v2107
    %2150 = vmatpush.msra.mxu0 %v2104
    %2151 = vmatpush.msra.mxu0 %v2101
    %2152 = vmatpush.msra.mxu0 %v2098
    %2153 = vmatpush.msra.mxu0 %v2095
    %2154 = vmatpush.msra.mxu0 %v2092
    %2155 = vmatpush.msra.mxu0 %v2089
    %2156 = vmatpush.msra.mxu0 %v2086
    %2157 = vmatpush.msra.mxu0 %v2083
    %2158 = vmatpush.msra.mxu0 %v2080
    %2159 = vmatpush.msra.mxu0 %v2077
    %2160 = vmatmul.f32.gmra.mxu0 %v2071
    %v2161 = vpop.f32.mrf.mxu0
    %v2162 = vadd.f32 0.0, %v2161
    %2163 = vdwg.mxu0
    %2164 = vmatpush.msra.mxu0 %v2123
    %2165 = vmatpush.msra.mxu0 %v2120
    %2166 = vmatpush.msra.mxu0 %v2117
    %2167 = vmatpush.msra.mxu0 %v2114
    %2168 = vmatpush.msra.mxu0 %v2111
    %2169 = vmatpush.msra.mxu0 %v2108
    %2170 = vmatpush.msra.mxu0 %v2105
    %2171 = vmatpush.msra.mxu0 %v2102
    %2172 = vmatpush.msra.mxu0 %v2099
    %2173 = vmatpush.msra.mxu0 %v2096
    %2174 = vmatpush.msra.mxu0 %v2093
    %2175 = vmatpush.msra.mxu0 %v2090
    %2176 = vmatpush.msra.mxu0 %v2087
    %2177 = vmatpush.msra.mxu0 %v2084
    %2178 = vmatpush.msra.mxu0 %v2081
    %2179 = vmatpush.msra.mxu0 %v2078
    %2180 = vmatmul.f32.gmra.mxu0 %v2071
    %v2181 = vpop.f32.mrf.mxu0
    %v2182 = vadd.f32 0.0, %v2181
    %2183 = vdwg.mxu0
    %v2184 = vadd.f32 %v2073, %v2142
    %v2185 = vadd.f32 %v2074, %v2162
    %v2186 = vxor.u32 %v2184, 2147483648
    %v2187 = vxor.u32 %v2185, 2147483648
    %v2188 = vmul.f32 %v2186, 1.442695
    %v2189 = vpow.pop %v2188
    %v2190 = vmul.f32 %v2187, 1.442695
    %v2191 = vpow.pop %v2190
    %v2192 = vadd.f32 %v2189, 1.0
    %v2193 = vadd.f32 %v2191, 1.0
    %v2194 = vrcp.pop %v2192
    %v2195 = vmul.f32 %v2192, %v2194
    %v2196 = vsub.f32 1.0, %v2195
    %v2197 = vmul.f32 %v2194, %v2196
    %v2198 = vadd.f32 %v2194, %v2197
    %vm2199 = vweird.f32 %v2192
    %vm2200 = vweird.f32 %v2194
    %vm2201 = vmor %vm2199, %vm2200
    %v2202 = vsel %vm2201, %v2194, %v2198
    %v2203 = vand.u32 2147483647, %v2192
    %vm2204 = vcmp.eq.f32.partialorder %v2203, 8.507059e+37
    %v2205 = vand.u32 %v2192, 2147483648
    %v2206 = vor.u32 1.1754944e-38, %v2205
    %v2207 = vsel %vm2204, %v2206, %v2202
    %v2208 = vmul.f32 1.0, %v2207
    %v2209 = vrcp.pop %v2193
    %v2210 = vmul.f32 %v2193, %v2209
    %v2211 = vsub.f32 1.0, %v2210
    %v2212 = vmul.f32 %v2209, %v2211
    %v2213 = vadd.f32 %v2209, %v2212
    %vm2214 = vweird.f32 %v2193
    %vm2215 = vweird.f32 %v2209
    %vm2216 = vmor %vm2214, %vm2215
    %v2217 = vsel %vm2216, %v2209, %v2213
    %v2218 = vand.u32 2147483647, %v2193
    %vm2219 = vcmp.eq.f32.partialorder %v2218, 8.507059e+37
    %v2220 = vand.u32 %v2193, 2147483648
    %v2221 = vor.u32 1.1754944e-38, %v2220
    %v2222 = vsel %vm2219, %v2221, %v2217
    %v2223 = vmul.f32 1.0, %v2222
    %v2224 = vadd.f32 %v2182, %v1703
    %v2225 = vmul.f32 %v2208, %v2224
    %v2226 = vadd.f32 %v2075, %v2225
    %v2227 = vtanh.pop %v2226
    %v2228 = vsub.f32 1.0, %v2223
    %v2229 = vmul.f32 %v2228, %v2227
    %v2230 = vmul.f32 %v2223, %v2071
    %v2231 = vadd.f32 %v2229, %v2230
    %2232 = vst [vmem:[%s837] sm:$0xff] %v2231
    %v2233 = vld [vmem:[%s839] sm:$0xff]
    %v2234 = vld [vmem:[%s839 + $0x8] sm:$0xff]
    %v2235 = vld [vmem:[%s839 + $0x10] sm:$0xff]
    %v2236 = vld [vmem:[%s1755] sm:$0xff]
    %v2237 = vld [vmem:[%s1755 + $0x8] sm:$0xff]
    %v2238 = vld [vmem:[%s1755 + $0x10] sm:$0xff]
    %v2239 = vld [vmem:[%s1755 + $0x18] sm:$0xff]
    %v2240 = vld [vmem:[%s1755 + $0x20] sm:$0xff]
    %v2241 = vld [vmem:[%s1755 + $0x28] sm:$0xff]
    %v2242 = vld [vmem:[%s1755 + $0x30] sm:$0xff]
    %v2243 = vld [vmem:[%s1755 + $0x38] sm:$0xff]
    %v2244 = vld [vmem:[%s1755 + $0x40] sm:$0xff]
    %v2245 = vld [vmem:[%s1755 + $0x48] sm:$0xff]
    %v2246 = vld [vmem:[%s1755 + $0x50] sm:$0xff]
    %v2247 = vld [vmem:[%s1755 + $0x58] sm:$0xff]
    %v2248 = vld [vmem:[%s1755 + $0x60] sm:$0xff]
    %v2249 = vld [vmem:[%s1755 + $0x68] sm:$0xff]
    %v2250 = vld [vmem:[%s1755 + $0x70] sm:$0xff]
    %v2251 = vld [vmem:[%s1755 + $0x78] sm:$0xff]
    %v2252 = vld [vmem:[%s1755 + $0x80] sm:$0xff]
    %v2253 = vld [vmem:[%s1755 + $0x88] sm:$0xff]
    %v2254 = vld [vmem:[%s1755 + $0x90] sm:$0xff]
    %v2255 = vld [vmem:[%s1755 + $0x98] sm:$0xff]
    %v2256 = vld [vmem:[%s1755 + $0xa0] sm:$0xff]
    %v2257 = vld [vmem:[%s1755 + $0xa8] sm:$0xff]
    %v2258 = vld [vmem:[%s1755 + $0xb0] sm:$0xff]
    %v2259 = vld [vmem:[%s1755 + $0xb8] sm:$0xff]
    %v2260 = vld [vmem:[%s1755 + $0xc0] sm:$0xff]
    %v2261 = vld [vmem:[%s1755 + $0xc8] sm:$0xff]
    %v2262 = vld [vmem:[%s1755 + $0xd0] sm:$0xff]
    %v2263 = vld [vmem:[%s1755 + $0xd8] sm:$0xff]
    %v2264 = vld [vmem:[%s1755 + $0xe0] sm:$0xff]
    %v2265 = vld [vmem:[%s1755 + $0xe8] sm:$0xff]
    %v2266 = vld [vmem:[%s1755 + $0xf0] sm:$0xff]
    %v2267 = vld [vmem:[%s1755 + $0xf8] sm:$0xff]
    %v2268 = vld [vmem:[%s1755 + $0x100] sm:$0xff]
    %v2269 = vld [vmem:[%s1755 + $0x108] sm:$0xff]
    %v2270 = vld [vmem:[%s1755 + $0x110] sm:$0xff]
    %v2271 = vld [vmem:[%s1755 + $0x118] sm:$0xff]
    %v2272 = vld [vmem:[%s1755 + $0x120] sm:$0xff]
    %v2273 = vld [vmem:[%s1755 + $0x128] sm:$0xff]
    %v2274 = vld [vmem:[%s1755 + $0x130] sm:$0xff]
    %v2275 = vld [vmem:[%s1755 + $0x138] sm:$0xff]
    %v2276 = vld [vmem:[%s1755 + $0x140] sm:$0xff]
    %v2277 = vld [vmem:[%s1755 + $0x148] sm:$0xff]
    %v2278 = vld [vmem:[%s1755 + $0x150] sm:$0xff]
    %v2279 = vld [vmem:[%s1755 + $0x158] sm:$0xff]
    %v2280 = vld [vmem:[%s1755 + $0x160] sm:$0xff]
    %v2281 = vld [vmem:[%s1755 + $0x168] sm:$0xff]
    %v2282 = vld [vmem:[%s1755 + $0x170] sm:$0xff]
    %v2283 = vld [vmem:[%s1755 + $0x178] sm:$0xff]
    %2284 = vmatpush.msra.mxu0 %v2281
    %2285 = vmatpush.msra.mxu0 %v2278
    %2286 = vmatpush.msra.mxu0 %v2275
    %2287 = vmatpush.msra.mxu0 %v2272
    %2288 = vmatpush.msra.mxu0 %v2269
    %2289 = vmatpush.msra.mxu0 %v2266
    %2290 = vmatpush.msra.mxu0 %v2263
    %2291 = vmatpush.msra.mxu0 %v2260
    %2292 = vmatpush.msra.mxu0 %v2257
    %2293 = vmatpush.msra.mxu0 %v2254
    %2294 = vmatpush.msra.mxu0 %v2251
    %2295 = vmatpush.msra.mxu0 %v2248
    %2296 = vmatpush.msra.mxu0 %v2245
    %2297 = vmatpush.msra.mxu0 %v2242
    %2298 = vmatpush.msra.mxu0 %v2239
    %2299 = vmatpush.msra.mxu0 %v2236
    %2300 = vmatmul.f32.gmra.mxu0 %v2231
    %v2301 = vpop.f32.mrf.mxu0
    %v2302 = vadd.f32 0.0, %v2301
    %2303 = vdwg.mxu0
    %2304 = vmatpush.msra.mxu0 %v2282
    %2305 = vmatpush.msra.mxu0 %v2279
    %2306 = vmatpush.msra.mxu0 %v2276
    %2307 = vmatpush.msra.mxu0 %v2273
    %2308 = vmatpush.msra.mxu0 %v2270
    %2309 = vmatpush.msra.mxu0 %v2267
    %2310 = vmatpush.msra.mxu0 %v2264
    %2311 = vmatpush.msra.mxu0 %v2261
    %2312 = vmatpush.msra.mxu0 %v2258
    %2313 = vmatpush.msra.mxu0 %v2255
    %2314 = vmatpush.msra.mxu0 %v2252
    %2315 = vmatpush.msra.mxu0 %v2249
    %2316 = vmatpush.msra.mxu0 %v2246
    %2317 = vmatpush.msra.mxu0 %v2243
    %2318 = vmatpush.msra.mxu0 %v2240
    %2319 = vmatpush.msra.mxu0 %v2237
    %2320 = vmatmul.f32.gmra.mxu0 %v2231
    %v2321 = vpop.f32.mrf.mxu0
    %v2322 = vadd.f32 0.0, %v2321
    %2323 = vdwg.mxu0
    %2324 = vmatpush.msra.mxu0 %v2283
    %2325 = vmatpush.msra.mxu0 %v2280
    %2326 = vmatpush.msra.mxu0 %v2277
    %2327 = vmatpush.msra.mxu0 %v2274
    %2328 = vmatpush.msra.mxu0 %v2271
    %2329 = vmatpush.msra.mxu0 %v2268
    %2330 = vmatpush.msra.mxu0 %v2265
    %2331 = vmatpush.msra.mxu0 %v2262
    %2332 = vmatpush.msra.mxu0 %v2259
    %2333 = vmatpush.msra.mxu0 %v2256
    %2334 = vmatpush.msra.mxu0 %v2253
    %2335 = vmatpush.msra.mxu0 %v2250
    %2336 = vmatpush.msra.mxu0 %v2247
    %2337 = vmatpush.msra.mxu0 %v2244
    %2338 = vmatpush.msra.mxu0 %v2241
    %2339 = vmatpush.msra.mxu0 %v2238
    %2340 = vmatmul.f32.gmra.mxu0 %v2231
    %v2341 = vpop.f32.mrf.mxu0
    %v2342 = vadd.f32 0.0, %v2341
    %2343 = vdwg.mxu0
    %v2344 = vadd.f32 %v2233, %v2302
    %v2345 = vadd.f32 %v2234, %v2322
    %v2346 = vxor.u32 %v2344, 2147483648
    %v2347 = vxor.u32 %v2345, 2147483648
    %v2348 = vmul.f32 %v2346, 1.442695
    %v2349 = vpow.pop %v2348
    %v2350 = vmul.f32 %v2347, 1.442695
    %v2351 = vpow.pop %v2350
    %v2352 = vadd.f32 %v2349, 1.0
    %v2353 = vadd.f32 %v2351, 1.0
    %v2354 = vrcp.pop %v2352
    %v2355 = vmul.f32 %v2352, %v2354
    %v2356 = vsub.f32 1.0, %v2355
    %v2357 = vmul.f32 %v2354, %v2356
    %v2358 = vadd.f32 %v2354, %v2357
    %vm2359 = vweird.f32 %v2352
    %vm2360 = vweird.f32 %v2354
    %vm2361 = vmor %vm2359, %vm2360
    %v2362 = vsel %vm2361, %v2354, %v2358
    %v2363 = vand.u32 2147483647, %v2352
    %vm2364 = vcmp.eq.f32.partialorder %v2363, 8.507059e+37
    %v2365 = vand.u32 %v2352, 2147483648
    %v2366 = vor.u32 1.1754944e-38, %v2365
    %v2367 = vsel %vm2364, %v2366, %v2362
    %v2368 = vmul.f32 1.0, %v2367
    %v2369 = vrcp.pop %v2353
    %v2370 = vmul.f32 %v2353, %v2369
    %v2371 = vsub.f32 1.0, %v2370
    %v2372 = vmul.f32 %v2369, %v2371
    %v2373 = vadd.f32 %v2369, %v2372
    %vm2374 = vweird.f32 %v2353
    %vm2375 = vweird.f32 %v2369
    %vm2376 = vmor %vm2374, %vm2375
    %v2377 = vsel %vm2376, %v2369, %v2373
    %v2378 = vand.u32 2147483647, %v2353
    %vm2379 = vcmp.eq.f32.partialorder %v2378, 8.507059e+37
    %v2380 = vand.u32 %v2353, 2147483648
    %v2381 = vor.u32 1.1754944e-38, %v2380
    %v2382 = vsel %vm2379, %v2381, %v2377
    %v2383 = vmul.f32 1.0, %v2382
    %v2384 = vadd.f32 %v2342, %v1703
    %v2385 = vmul.f32 %v2368, %v2384
    %v2386 = vadd.f32 %v2235, %v2385
    %v2387 = vtanh.pop %v2386
    %v2388 = vsub.f32 1.0, %v2383
    %v2389 = vmul.f32 %v2388, %v2387
    %v2390 = vmul.f32 %v2383, %v2231
    %v2391 = vadd.f32 %v2389, %v2390
    %2392 = vst [vmem:[%s999] sm:$0xff] %v2391
    %v2393 = vld [vmem:[%s1001] sm:$0xff]
    %v2394 = vld [vmem:[%s1001 + $0x8] sm:$0xff]
    %v2395 = vld [vmem:[%s1001 + $0x10] sm:$0xff]
    %v2396 = vld [vmem:[%s1755] sm:$0xff]
    %v2397 = vld [vmem:[%s1755 + $0x8] sm:$0xff]
    %v2398 = vld [vmem:[%s1755 + $0x10] sm:$0xff]
    %v2399 = vld [vmem:[%s1755 + $0x18] sm:$0xff]
    %v2400 = vld [vmem:[%s1755 + $0x20] sm:$0xff]
    %v2401 = vld [vmem:[%s1755 + $0x28] sm:$0xff]
    %v2402 = vld [vmem:[%s1755 + $0x30] sm:$0xff]
    %v2403 = vld [vmem:[%s1755 + $0x38] sm:$0xff]
    %v2404 = vld [vmem:[%s1755 + $0x40] sm:$0xff]
    %v2405 = vld [vmem:[%s1755 + $0x48] sm:$0xff]
    %v2406 = vld [vmem:[%s1755 + $0x50] sm:$0xff]
    %v2407 = vld [vmem:[%s1755 + $0x58] sm:$0xff]
    %v2408 = vld [vmem:[%s1755 + $0x60] sm:$0xff]
    %v2409 = vld [vmem:[%s1755 + $0x68] sm:$0xff]
    %v2410 = vld [vmem:[%s1755 + $0x70] sm:$0xff]
    %v2411 = vld [vmem:[%s1755 + $0x78] sm:$0xff]
    %v2412 = vld [vmem:[%s1755 + $0x80] sm:$0xff]
    %v2413 = vld [vmem:[%s1755 + $0x88] sm:$0xff]
    %v2414 = vld [vmem:[%s1755 + $0x90] sm:$0xff]
    %v2415 = vld [vmem:[%s1755 + $0x98] sm:$0xff]
    %v2416 = vld [vmem:[%s1755 + $0xa0] sm:$0xff]
    %v2417 = vld [vmem:[%s1755 + $0xa8] sm:$0xff]
    %v2418 = vld [vmem:[%s1755 + $0xb0] sm:$0xff]
    %v2419 = vld [vmem:[%s1755 + $0xb8] sm:$0xff]
    %v2420 = vld [vmem:[%s1755 + $0xc0] sm:$0xff]
    %v2421 = vld [vmem:[%s1755 + $0xc8] sm:$0xff]
    %v2422 = vld [vmem:[%s1755 + $0xd0] sm:$0xff]
    %v2423 = vld [vmem:[%s1755 + $0xd8] sm:$0xff]
    %v2424 = vld [vmem:[%s1755 + $0xe0] sm:$0xff]
    %v2425 = vld [vmem:[%s1755 + $0xe8] sm:$0xff]
    %v2426 = vld [vmem:[%s1755 + $0xf0] sm:$0xff]
    %v2427 = vld [vmem:[%s1755 + $0xf8] sm:$0xff]
    %v2428 = vld [vmem:[%s1755 + $0x100] sm:$0xff]
    %v2429 = vld [vmem:[%s1755 + $0x108] sm:$0xff]
    %v2430 = vld [vmem:[%s1755 + $0x110] sm:$0xff]
    %v2431 = vld [vmem:[%s1755 + $0x118] sm:$0xff]
    %v2432 = vld [vmem:[%s1755 + $0x120] sm:$0xff]
    %v2433 = vld [vmem:[%s1755 + $0x128] sm:$0xff]
    %v2434 = vld [vmem:[%s1755 + $0x130] sm:$0xff]
    %v2435 = vld [vmem:[%s1755 + $0x138] sm:$0xff]
    %v2436 = vld [vmem:[%s1755 + $0x140] sm:$0xff]
    %v2437 = vld [vmem:[%s1755 + $0x148] sm:$0xff]
    %v2438 = vld [vmem:[%s1755 + $0x150] sm:$0xff]
    %v2439 = vld [vmem:[%s1755 + $0x158] sm:$0xff]
    %v2440 = vld [vmem:[%s1755 + $0x160] sm:$0xff]
    %v2441 = vld [vmem:[%s1755 + $0x168] sm:$0xff]
    %v2442 = vld [vmem:[%s1755 + $0x170] sm:$0xff]
    %v2443 = vld [vmem:[%s1755 + $0x178] sm:$0xff]
    %2444 = vmatpush.msra.mxu0 %v2441
    %2445 = vmatpush.msra.mxu0 %v2438
    %2446 = vmatpush.msra.mxu0 %v2435
    %2447 = vmatpush.msra.mxu0 %v2432
    %2448 = vmatpush.msra.mxu0 %v2429
    %2449 = vmatpush.msra.mxu0 %v2426
    %2450 = vmatpush.msra.mxu0 %v2423
    %2451 = vmatpush.msra.mxu0 %v2420
    %2452 = vmatpush.msra.mxu0 %v2417
    %2453 = vmatpush.msra.mxu0 %v2414
    %2454 = vmatpush.msra.mxu0 %v2411
    %2455 = vmatpush.msra.mxu0 %v2408
    %2456 = vmatpush.msra.mxu0 %v2405
    %2457 = vmatpush.msra.mxu0 %v2402
    %2458 = vmatpush.msra.mxu0 %v2399
    %2459 = vmatpush.msra.mxu0 %v2396
    %2460 = vmatmul.f32.gmra.mxu0 %v2391
    %v2461 = vpop.f32.mrf.mxu0
    %v2462 = vadd.f32 0.0, %v2461
    %2463 = vdwg.mxu0
    %2464 = vmatpush.msra.mxu0 %v2442
    %2465 = vmatpush.msra.mxu0 %v2439
    %2466 = vmatpush.msra.mxu0 %v2436
    %2467 = vmatpush.msra.mxu0 %v2433
    %2468 = vmatpush.msra.mxu0 %v2430
    %2469 = vmatpush.msra.mxu0 %v2427
    %2470 = vmatpush.msra.mxu0 %v2424
    %2471 = vmatpush.msra.mxu0 %v2421
    %2472 = vmatpush.msra.mxu0 %v2418
    %2473 = vmatpush.msra.mxu0 %v2415
    %2474 = vmatpush.msra.mxu0 %v2412
    %2475 = vmatpush.msra.mxu0 %v2409
    %2476 = vmatpush.msra.mxu0 %v2406
    %2477 = vmatpush.msra.mxu0 %v2403
    %2478 = vmatpush.msra.mxu0 %v2400
    %2479 = vmatpush.msra.mxu0 %v2397
    %2480 = vmatmul.f32.gmra.mxu0 %v2391
    %v2481 = vpop.f32.mrf.mxu0
    %v2482 = vadd.f32 0.0, %v2481
    %2483 = vdwg.mxu0
    %2484 = vmatpush.msra.mxu0 %v2443
    %2485 = vmatpush.msra.mxu0 %v2440
    %2486 = vmatpush.msra.mxu0 %v2437
    %2487 = vmatpush.msra.mxu0 %v2434
    %2488 = vmatpush.msra.mxu0 %v2431
    %2489 = vmatpush.msra.mxu0 %v2428
    %2490 = vmatpush.msra.mxu0 %v2425
    %2491 = vmatpush.msra.mxu0 %v2422
    %2492 = vmatpush.msra.mxu0 %v2419
    %2493 = vmatpush.msra.mxu0 %v2416
    %2494 = vmatpush.msra.mxu0 %v2413
    %2495 = vmatpush.msra.mxu0 %v2410
    %2496 = vmatpush.msra.mxu0 %v2407
    %2497 = vmatpush.msra.mxu0 %v2404
    %2498 = vmatpush.msra.mxu0 %v2401
    %2499 = vmatpush.msra.mxu0 %v2398
    %2500 = vmatmul.f32.gmra.mxu0 %v2391
    %v2501 = vpop.f32.mrf.mxu0
    %v2502 = vadd.f32 0.0, %v2501
    %2503 = vdwg.mxu0
    %v2504 = vadd.f32 %v2393, %v2462
    %v2505 = vadd.f32 %v2394, %v2482
    %v2506 = vxor.u32 %v2504, 2147483648
    %v2507 = vxor.u32 %v2505, 2147483648
    %v2508 = vmul.f32 %v2506, 1.442695
    %v2509 = vpow.pop %v2508
    %v2510 = vmul.f32 %v2507, 1.442695
    %v2511 = vpow.pop %v2510
    %v2512 = vadd.f32 %v2509, 1.0
    %v2513 = vadd.f32 %v2511, 1.0
    %v2514 = vrcp.pop %v2512
    %v2515 = vmul.f32 %v2512, %v2514
    %v2516 = vsub.f32 1.0, %v2515
    %v2517 = vmul.f32 %v2514, %v2516
    %v2518 = vadd.f32 %v2514, %v2517
    %vm2519 = vweird.f32 %v2512
    %vm2520 = vweird.f32 %v2514
    %vm2521 = vmor %vm2519, %vm2520
    %v2522 = vsel %vm2521, %v2514, %v2518
    %v2523 = vand.u32 2147483647, %v2512
    %vm2524 = vcmp.eq.f32.partialorder %v2523, 8.507059e+37
    %v2525 = vand.u32 %v2512, 2147483648
    %v2526 = vor.u32 1.1754944e-38, %v2525
    %v2527 = vsel %vm2524, %v2526, %v2522
    %v2528 = vmul.f32 1.0, %v2527
    %v2529 = vrcp.pop %v2513
    %v2530 = vmul.f32 %v2513, %v2529
    %v2531 = vsub.f32 1.0, %v2530
    %v2532 = vmul.f32 %v2529, %v2531
    %v2533 = vadd.f32 %v2529, %v2532
    %vm2534 = vweird.f32 %v2513
    %vm2535 = vweird.f32 %v2529
    %vm2536 = vmor %vm2534, %vm2535
    %v2537 = vsel %vm2536, %v2529, %v2533
    %v2538 = vand.u32 2147483647, %v2513
    %vm2539 = vcmp.eq.f32.partialorder %v2538, 8.507059e+37
    %v2540 = vand.u32 %v2513, 2147483648
    %v2541 = vor.u32 1.1754944e-38, %v2540
    %v2542 = vsel %vm2539, %v2541, %v2537
    %v2543 = vmul.f32 1.0, %v2542
    %v2544 = vadd.f32 %v2502, %v1703
    %v2545 = vmul.f32 %v2528, %v2544
    %v2546 = vadd.f32 %v2395, %v2545
    %v2547 = vtanh.pop %v2546
    %v2548 = vsub.f32 1.0, %v2543
    %v2549 = vmul.f32 %v2548, %v2547
    %v2550 = vmul.f32 %v2543, %v2391
    %v2551 = vadd.f32 %v2549, %v2550
    %2552 = vst [vmem:[%s1161] sm:$0xff] %v2551
    %v2553 = vld [vmem:[%s1163] sm:$0xff]
    %v2554 = vld [vmem:[%s1163 + $0x8] sm:$0xff]
    %v2555 = vld [vmem:[%s1163 + $0x10] sm:$0xff]
    %v2556 = vld [vmem:[%s1755] sm:$0xff]
    %v2557 = vld [vmem:[%s1755 + $0x8] sm:$0xff]
    %v2558 = vld [vmem:[%s1755 + $0x10] sm:$0xff]
    %v2559 = vld [vmem:[%s1755 + $0x18] sm:$0xff]
    %v2560 = vld [vmem:[%s1755 + $0x20] sm:$0xff]
    %v2561 = vld [vmem:[%s1755 + $0x28] sm:$0xff]
    %v2562 = vld [vmem:[%s1755 + $0x30] sm:$0xff]
    %v2563 = vld [vmem:[%s1755 + $0x38] sm:$0xff]
    %v2564 = vld [vmem:[%s1755 + $0x40] sm:$0xff]
    %v2565 = vld [vmem:[%s1755 + $0x48] sm:$0xff]
    %v2566 = vld [vmem:[%s1755 + $0x50] sm:$0xff]
    %v2567 = vld [vmem:[%s1755 + $0x58] sm:$0xff]
    %v2568 = vld [vmem:[%s1755 + $0x60] sm:$0xff]
    %v2569 = vld [vmem:[%s1755 + $0x68] sm:$0xff]
    %v2570 = vld [vmem:[%s1755 + $0x70] sm:$0xff]
    %v2571 = vld [vmem:[%s1755 + $0x78] sm:$0xff]
    %v2572 = vld [vmem:[%s1755 + $0x80] sm:$0xff]
    %v2573 = vld [vmem:[%s1755 + $0x88] sm:$0xff]
    %v2574 = vld [vmem:[%s1755 + $0x90] sm:$0xff]
    %v2575 = vld [vmem:[%s1755 + $0x98] sm:$0xff]
    %v2576 = vld [vmem:[%s1755 + $0xa0] sm:$0xff]
    %v2577 = vld [vmem:[%s1755 + $0xa8] sm:$0xff]
    %v2578 = vld [vmem:[%s1755 + $0xb0] sm:$0xff]
    %v2579 = vld [vmem:[%s1755 + $0xb8] sm:$0xff]
    %v2580 = vld [vmem:[%s1755 + $0xc0] sm:$0xff]
    %v2581 = vld [vmem:[%s1755 + $0xc8] sm:$0xff]
    %v2582 = vld [vmem:[%s1755 + $0xd0] sm:$0xff]
    %v2583 = vld [vmem:[%s1755 + $0xd8] sm:$0xff]
    %v2584 = vld [vmem:[%s1755 + $0xe0] sm:$0xff]
    %v2585 = vld [vmem:[%s1755 + $0xe8] sm:$0xff]
    %v2586 = vld [vmem:[%s1755 + $0xf0] sm:$0xff]
    %v2587 = vld [vmem:[%s1755 + $0xf8] sm:$0xff]
    %v2588 = vld [vmem:[%s1755 + $0x100] sm:$0xff]
    %v2589 = vld [vmem:[%s1755 + $0x108] sm:$0xff]
    %v2590 = vld [vmem:[%s1755 + $0x110] sm:$0xff]
    %v2591 = vld [vmem:[%s1755 + $0x118] sm:$0xff]
    %v2592 = vld [vmem:[%s1755 + $0x120] sm:$0xff]
    %v2593 = vld [vmem:[%s1755 + $0x128] sm:$0xff]
    %v2594 = vld [vmem:[%s1755 + $0x130] sm:$0xff]
    %v2595 = vld [vmem:[%s1755 + $0x138] sm:$0xff]
    %v2596 = vld [vmem:[%s1755 + $0x140] sm:$0xff]
    %v2597 = vld [vmem:[%s1755 + $0x148] sm:$0xff]
    %v2598 = vld [vmem:[%s1755 + $0x150] sm:$0xff]
    %v2599 = vld [vmem:[%s1755 + $0x158] sm:$0xff]
    %v2600 = vld [vmem:[%s1755 + $0x160] sm:$0xff]
    %v2601 = vld [vmem:[%s1755 + $0x168] sm:$0xff]
    %v2602 = vld [vmem:[%s1755 + $0x170] sm:$0xff]
    %v2603 = vld [vmem:[%s1755 + $0x178] sm:$0xff]
    %2604 = vmatpush.msra.mxu0 %v2601
    %2605 = vmatpush.msra.mxu0 %v2598
    %2606 = vmatpush.msra.mxu0 %v2595
    %2607 = vmatpush.msra.mxu0 %v2592
    %2608 = vmatpush.msra.mxu0 %v2589
    %2609 = vmatpush.msra.mxu0 %v2586
    %2610 = vmatpush.msra.mxu0 %v2583
    %2611 = vmatpush.msra.mxu0 %v2580
    %2612 = vmatpush.msra.mxu0 %v2577
    %2613 = vmatpush.msra.mxu0 %v2574
    %2614 = vmatpush.msra.mxu0 %v2571
    %2615 = vmatpush.msra.mxu0 %v2568
    %2616 = vmatpush.msra.mxu0 %v2565
    %2617 = vmatpush.msra.mxu0 %v2562
    %2618 = vmatpush.msra.mxu0 %v2559
    %2619 = vmatpush.msra.mxu0 %v2556
    %2620 = vmatmul.f32.gmra.mxu0 %v2551
    %v2621 = vpop.f32.mrf.mxu0
    %v2622 = vadd.f32 0.0, %v2621
    %2623 = vdwg.mxu0
    %2624 = vmatpush.msra.mxu0 %v2602
    %2625 = vmatpush.msra.mxu0 %v2599
    %2626 = vmatpush.msra.mxu0 %v2596
    %2627 = vmatpush.msra.mxu0 %v2593
    %2628 = vmatpush.msra.mxu0 %v2590
    %2629 = vmatpush.msra.mxu0 %v2587
    %2630 = vmatpush.msra.mxu0 %v2584
    %2631 = vmatpush.msra.mxu0 %v2581
    %2632 = vmatpush.msra.mxu0 %v2578
    %2633 = vmatpush.msra.mxu0 %v2575
    %2634 = vmatpush.msra.mxu0 %v2572
    %2635 = vmatpush.msra.mxu0 %v2569
    %2636 = vmatpush.msra.mxu0 %v2566
    %2637 = vmatpush.msra.mxu0 %v2563
    %2638 = vmatpush.msra.mxu0 %v2560
    %2639 = vmatpush.msra.mxu0 %v2557
    %2640 = vmatmul.f32.gmra.mxu0 %v2551
    %v2641 = vpop.f32.mrf.mxu0
    %v2642 = vadd.f32 0.0, %v2641
    %2643 = vdwg.mxu0
    %2644 = vmatpush.msra.mxu0 %v2603
    %2645 = vmatpush.msra.mxu0 %v2600
    %2646 = vmatpush.msra.mxu0 %v2597
    %2647 = vmatpush.msra.mxu0 %v2594
    %2648 = vmatpush.msra.mxu0 %v2591
    %2649 = vmatpush.msra.mxu0 %v2588
    %2650 = vmatpush.msra.mxu0 %v2585
    %2651 = vmatpush.msra.mxu0 %v2582
    %2652 = vmatpush.msra.mxu0 %v2579
    %2653 = vmatpush.msra.mxu0 %v2576
    %2654 = vmatpush.msra.mxu0 %v2573
    %2655 = vmatpush.msra.mxu0 %v2570
    %2656 = vmatpush.msra.mxu0 %v2567
    %2657 = vmatpush.msra.mxu0 %v2564
    %2658 = vmatpush.msra.mxu0 %v2561
    %2659 = vmatpush.msra.mxu0 %v2558
    %2660 = vmatmul.f32.gmra.mxu0 %v2551
    %v2661 = vpop.f32.mrf.mxu0
    %v2662 = vadd.f32 0.0, %v2661
    %2663 = vdwg.mxu0
    %v2664 = vadd.f32 %v2553, %v2622
    %v2665 = vadd.f32 %v2554, %v2642
    %v2666 = vxor.u32 %v2664, 2147483648
    %v2667 = vxor.u32 %v2665, 2147483648
    %v2668 = vmul.f32 %v2666, 1.442695
    %v2669 = vpow.pop %v2668
    %v2670 = vmul.f32 %v2667, 1.442695
    %v2671 = vpow.pop %v2670
    %v2672 = vadd.f32 %v2669, 1.0
    %v2673 = vadd.f32 %v2671, 1.0
    %v2674 = vrcp.pop %v2672
    %v2675 = vmul.f32 %v2672, %v2674
    %v2676 = vsub.f32 1.0, %v2675
    %v2677 = vmul.f32 %v2674, %v2676
    %v2678 = vadd.f32 %v2674, %v2677
    %vm2679 = vweird.f32 %v2672
    %vm2680 = vweird.f32 %v2674
    %vm2681 = vmor %vm2679, %vm2680
    %v2682 = vsel %vm2681, %v2674, %v2678
    %v2683 = vand.u32 2147483647, %v2672
    %vm2684 = vcmp.eq.f32.partialorder %v2683, 8.507059e+37
    %v2685 = vand.u32 %v2672, 2147483648
    %v2686 = vor.u32 1.1754944e-38, %v2685
    %v2687 = vsel %vm2684, %v2686, %v2682
    %v2688 = vmul.f32 1.0, %v2687
    %v2689 = vrcp.pop %v2673
    %v2690 = vmul.f32 %v2673, %v2689
    %v2691 = vsub.f32 1.0, %v2690
    %v2692 = vmul.f32 %v2689, %v2691
    %v2693 = vadd.f32 %v2689, %v2692
    %vm2694 = vweird.f32 %v2673
    %vm2695 = vweird.f32 %v2689
    %vm2696 = vmor %vm2694, %vm2695
    %v2697 = vsel %vm2696, %v2689, %v2693
    %v2698 = vand.u32 2147483647, %v2673
    %vm2699 = vcmp.eq.f32.partialorder %v2698, 8.507059e+37
    %v2700 = vand.u32 %v2673, 2147483648
    %v2701 = vor.u32 1.1754944e-38, %v2700
    %v2702 = vsel %vm2699, %v2701, %v2697
    %v2703 = vmul.f32 1.0, %v2702
    %v2704 = vadd.f32 %v2662, %v1703
    %v2705 = vmul.f32 %v2688, %v2704
    %v2706 = vadd.f32 %v2555, %v2705
    %v2707 = vtanh.pop %v2706
    %v2708 = vsub.f32 1.0, %v2703
    %v2709 = vmul.f32 %v2708, %v2707
    %v2710 = vmul.f32 %v2703, %v2551
    %v2711 = vadd.f32 %v2709, %v2710
    %2712 = vst [vmem:[%s1323] sm:$0xff] %v2711
    %v2713 = vld [vmem:[%s1325] sm:$0xff]
    %v2714 = vld [vmem:[%s1325 + $0x8] sm:$0xff]
    %v2715 = vld [vmem:[%s1325 + $0x10] sm:$0xff]
    %v2716 = vld [vmem:[%s1755] sm:$0xff]
    %v2717 = vld [vmem:[%s1755 + $0x8] sm:$0xff]
    %v2718 = vld [vmem:[%s1755 + $0x10] sm:$0xff]
    %v2719 = vld [vmem:[%s1755 + $0x18] sm:$0xff]
    %v2720 = vld [vmem:[%s1755 + $0x20] sm:$0xff]
    %v2721 = vld [vmem:[%s1755 + $0x28] sm:$0xff]
    %v2722 = vld [vmem:[%s1755 + $0x30] sm:$0xff]
    %v2723 = vld [vmem:[%s1755 + $0x38] sm:$0xff]
    %v2724 = vld [vmem:[%s1755 + $0x40] sm:$0xff]
    %v2725 = vld [vmem:[%s1755 + $0x48] sm:$0xff]
    %v2726 = vld [vmem:[%s1755 + $0x50] sm:$0xff]
    %v2727 = vld [vmem:[%s1755 + $0x58] sm:$0xff]
    %v2728 = vld [vmem:[%s1755 + $0x60] sm:$0xff]
    %v2729 = vld [vmem:[%s1755 + $0x68] sm:$0xff]
    %v2730 = vld [vmem:[%s1755 + $0x70] sm:$0xff]
    %v2731 = vld [vmem:[%s1755 + $0x78] sm:$0xff]
    %v2732 = vld [vmem:[%s1755 + $0x80] sm:$0xff]
    %v2733 = vld [vmem:[%s1755 + $0x88] sm:$0xff]
    %v2734 = vld [vmem:[%s1755 + $0x90] sm:$0xff]
    %v2735 = vld [vmem:[%s1755 + $0x98] sm:$0xff]
    %v2736 = vld [vmem:[%s1755 + $0xa0] sm:$0xff]
    %v2737 = vld [vmem:[%s1755 + $0xa8] sm:$0xff]
    %v2738 = vld [vmem:[%s1755 + $0xb0] sm:$0xff]
    %v2739 = vld [vmem:[%s1755 + $0xb8] sm:$0xff]
    %v2740 = vld [vmem:[%s1755 + $0xc0] sm:$0xff]
    %v2741 = vld [vmem:[%s1755 + $0xc8] sm:$0xff]
    %v2742 = vld [vmem:[%s1755 + $0xd0] sm:$0xff]
    %v2743 = vld [vmem:[%s1755 + $0xd8] sm:$0xff]
    %v2744 = vld [vmem:[%s1755 + $0xe0] sm:$0xff]
    %v2745 = vld [vmem:[%s1755 + $0xe8] sm:$0xff]
    %v2746 = vld [vmem:[%s1755 + $0xf0] sm:$0xff]
    %v2747 = vld [vmem:[%s1755 + $0xf8] sm:$0xff]
    %v2748 = vld [vmem:[%s1755 + $0x100] sm:$0xff]
    %v2749 = vld [vmem:[%s1755 + $0x108] sm:$0xff]
    %v2750 = vld [vmem:[%s1755 + $0x110] sm:$0xff]
    %v2751 = vld [vmem:[%s1755 + $0x118] sm:$0xff]
    %v2752 = vld [vmem:[%s1755 + $0x120] sm:$0xff]
    %v2753 = vld [vmem:[%s1755 + $0x128] sm:$0xff]
    %v2754 = vld [vmem:[%s1755 + $0x130] sm:$0xff]
    %v2755 = vld [vmem:[%s1755 + $0x138] sm:$0xff]
    %v2756 = vld [vmem:[%s1755 + $0x140] sm:$0xff]
    %v2757 = vld [vmem:[%s1755 + $0x148] sm:$0xff]
    %v2758 = vld [vmem:[%s1755 + $0x150] sm:$0xff]
    %v2759 = vld [vmem:[%s1755 + $0x158] sm:$0xff]
    %v2760 = vld [vmem:[%s1755 + $0x160] sm:$0xff]
    %v2761 = vld [vmem:[%s1755 + $0x168] sm:$0xff]
    %v2762 = vld [vmem:[%s1755 + $0x170] sm:$0xff]
    %v2763 = vld [vmem:[%s1755 + $0x178] sm:$0xff]
    %2764 = vmatpush.msra.mxu0 %v2761
    %2765 = vmatpush.msra.mxu0 %v2758
    %2766 = vmatpush.msra.mxu0 %v2755
    %2767 = vmatpush.msra.mxu0 %v2752
    %2768 = vmatpush.msra.mxu0 %v2749
    %2769 = vmatpush.msra.mxu0 %v2746
    %2770 = vmatpush.msra.mxu0 %v2743
    %2771 = vmatpush.msra.mxu0 %v2740
    %2772 = vmatpush.msra.mxu0 %v2737
    %2773 = vmatpush.msra.mxu0 %v2734
    %2774 = vmatpush.msra.mxu0 %v2731
    %2775 = vmatpush.msra.mxu0 %v2728
    %2776 = vmatpush.msra.mxu0 %v2725
    %2777 = vmatpush.msra.mxu0 %v2722
    %2778 = vmatpush.msra.mxu0 %v2719
    %2779 = vmatpush.msra.mxu0 %v2716
    %2780 = vmatmul.f32.gmra.mxu0 %v2711
    %v2781 = vpop.f32.mrf.mxu0
    %v2782 = vadd.f32 0.0, %v2781
    %2783 = vdwg.mxu0
    %2784 = vmatpush.msra.mxu0 %v2762
    %2785 = vmatpush.msra.mxu0 %v2759
    %2786 = vmatpush.msra.mxu0 %v2756
    %2787 = vmatpush.msra.mxu0 %v2753
    %2788 = vmatpush.msra.mxu0 %v2750
    %2789 = vmatpush.msra.mxu0 %v2747
    %2790 = vmatpush.msra.mxu0 %v2744
    %2791 = vmatpush.msra.mxu0 %v2741
    %2792 = vmatpush.msra.mxu0 %v2738
    %2793 = vmatpush.msra.mxu0 %v2735
    %2794 = vmatpush.msra.mxu0 %v2732
    %2795 = vmatpush.msra.mxu0 %v2729
    %2796 = vmatpush.msra.mxu0 %v2726
    %2797 = vmatpush.msra.mxu0 %v2723
    %2798 = vmatpush.msra.mxu0 %v2720
    %2799 = vmatpush.msra.mxu0 %v2717
    %2800 = vmatmul.f32.gmra.mxu0 %v2711
    %v2801 = vpop.f32.mrf.mxu0
    %v2802 = vadd.f32 0.0, %v2801
    %2803 = vdwg.mxu0
    %2804 = vmatpush.msra.mxu0 %v2763
    %2805 = vmatpush.msra.mxu0 %v2760
    %2806 = vmatpush.msra.mxu0 %v2757
    %2807 = vmatpush.msra.mxu0 %v2754
    %2808 = vmatpush.msra.mxu0 %v2751
    %2809 = vmatpush.msra.mxu0 %v2748
    %2810 = vmatpush.msra.mxu0 %v2745
    %2811 = vmatpush.msra.mxu0 %v2742
    %2812 = vmatpush.msra.mxu0 %v2739
    %2813 = vmatpush.msra.mxu0 %v2736
    %2814 = vmatpush.msra.mxu0 %v2733
    %2815 = vmatpush.msra.mxu0 %v2730
    %2816 = vmatpush.msra.mxu0 %v2727
    %2817 = vmatpush.msra.mxu0 %v2724
    %2818 = vmatpush.msra.mxu0 %v2721
    %2819 = vmatpush.msra.mxu0 %v2718
    %2820 = vmatmul.f32.gmra.mxu0 %v2711
    %v2821 = vpop.f32.mrf.mxu0
    %v2822 = vadd.f32 0.0, %v2821
    %2823 = vdwg.mxu0
    %v2824 = vadd.f32 %v2713, %v2782
    %v2825 = vadd.f32 %v2714, %v2802
    %v2826 = vxor.u32 %v2824, 2147483648
    %v2827 = vxor.u32 %v2825, 2147483648
    %v2828 = vmul.f32 %v2826, 1.442695
    %v2829 = vpow.pop %v2828
    %v2830 = vmul.f32 %v2827, 1.442695
    %v2831 = vpow.pop %v2830
    %v2832 = vadd.f32 %v2829, 1.0
    %v2833 = vadd.f32 %v2831, 1.0
    %v2834 = vrcp.pop %v2832
    %v2835 = vmul.f32 %v2832, %v2834
    %v2836 = vsub.f32 1.0, %v2835
    %v2837 = vmul.f32 %v2834, %v2836
    %v2838 = vadd.f32 %v2834, %v2837
    %vm2839 = vweird.f32 %v2832
    %vm2840 = vweird.f32 %v2834
    %vm2841 = vmor %vm2839, %vm2840
    %v2842 = vsel %vm2841, %v2834, %v2838
    %v2843 = vand.u32 2147483647, %v2832
    %vm2844 = vcmp.eq.f32.partialorder %v2843, 8.507059e+37
    %v2845 = vand.u32 %v2832, 2147483648
    %v2846 = vor.u32 1.1754944e-38, %v2845
    %v2847 = vsel %vm2844, %v2846, %v2842
    %v2848 = vmul.f32 1.0, %v2847
    %v2849 = vrcp.pop %v2833
    %v2850 = vmul.f32 %v2833, %v2849
    %v2851 = vsub.f32 1.0, %v2850
    %v2852 = vmul.f32 %v2849, %v2851
    %v2853 = vadd.f32 %v2849, %v2852
    %vm2854 = vweird.f32 %v2833
    %vm2855 = vweird.f32 %v2849
    %vm2856 = vmor %vm2854, %vm2855
    %v2857 = vsel %vm2856, %v2849, %v2853
    %v2858 = vand.u32 2147483647, %v2833
    %vm2859 = vcmp.eq.f32.partialorder %v2858, 8.507059e+37
    %v2860 = vand.u32 %v2833, 2147483648
    %v2861 = vor.u32 1.1754944e-38, %v2860
    %v2862 = vsel %vm2859, %v2861, %v2857
    %v2863 = vmul.f32 1.0, %v2862
    %v2864 = vadd.f32 %v2822, %v1703
    %v2865 = vmul.f32 %v2848, %v2864
    %v2866 = vadd.f32 %v2715, %v2865
    %v2867 = vtanh.pop %v2866
    %v2868 = vsub.f32 1.0, %v2863
    %v2869 = vmul.f32 %v2868, %v2867
    %v2870 = vmul.f32 %v2863, %v2711
    %v2871 = vadd.f32 %v2869, %v2870
    %2872 = vst [vmem:[%s1485] sm:$0xff] %v2871
    %v2873 = vld [vmem:[#allocation2] sm:$0xff]
    %v2874 = vld [vmem:[#allocation2 + $0x8] sm:$0xff]
    %v2875 = vld [vmem:[#allocation2 + $0x10] sm:$0xff]
    %v2876 = vld [vmem:[#allocation2 + $0x18] sm:$0xff]
    %v2877 = vld [vmem:[#allocation2 + $0x20] sm:$0xff]
    %v2878 = vld [vmem:[#allocation2 + $0x28] sm:$0xff]
    %v2879 = vld [vmem:[#allocation2 + $0x30] sm:$0xff]
    %v2880 = vld [vmem:[#allocation2 + $0x38] sm:$0xff]
    %s2881 = scalar_lea.vmem [#allocation7], 768
    %v2882 = vld [vmem:[%s2881] sm:$0xff]
    %v2883 = vld [vmem:[%s2881 + $0x8] sm:$0xff]
    %v2884 = vld [vmem:[%s2881 + $0x10] sm:$0xff]
    %v2885 = vld [vmem:[%s2881 + $0x18] sm:$0xff]
    %v2886 = vld [vmem:[%s2881 + $0x20] sm:$0xff]
    %v2887 = vld [vmem:[%s2881 + $0x28] sm:$0xff]
    %v2888 = vld [vmem:[%s2881 + $0x30] sm:$0xff]
    %v2889 = vld [vmem:[%s2881 + $0x38] sm:$0xff]
    %v2890 = vld [vmem:[%s2881 + $0x40] sm:$0xff]
    %v2891 = vld [vmem:[%s2881 + $0x48] sm:$0xff]
    %v2892 = vld [vmem:[%s2881 + $0x50] sm:$0xff]
    %v2893 = vld [vmem:[%s2881 + $0x58] sm:$0xff]
    %v2894 = vld [vmem:[%s2881 + $0x60] sm:$0xff]
    %v2895 = vld [vmem:[%s2881 + $0x68] sm:$0xff]
    %v2896 = vld [vmem:[%s2881 + $0x70] sm:$0xff]
    %v2897 = vld [vmem:[%s2881 + $0x78] sm:$0xff]
    %v2898 = vld [vmem:[%s2881 + $0x80] sm:$0xff]
    %v2899 = vld [vmem:[%s2881 + $0x88] sm:$0xff]
    %v2900 = vld [vmem:[%s2881 + $0x90] sm:$0xff]
    %v2901 = vld [vmem:[%s2881 + $0x98] sm:$0xff]
    %v2902 = vld [vmem:[%s2881 + $0xa0] sm:$0xff]
    %v2903 = vld [vmem:[%s2881 + $0xa8] sm:$0xff]
    %v2904 = vld [vmem:[%s2881 + $0xb0] sm:$0xff]
    %v2905 = vld [vmem:[%s2881 + $0xb8] sm:$0xff]
    %v2906 = vld [vmem:[%s2881 + $0xc0] sm:$0xff]
    %v2907 = vld [vmem:[%s2881 + $0xc8] sm:$0xff]
    %v2908 = vld [vmem:[%s2881 + $0xd0] sm:$0xff]
    %v2909 = vld [vmem:[%s2881 + $0xd8] sm:$0xff]
    %v2910 = vld [vmem:[%s2881 + $0xe0] sm:$0xff]
    %v2911 = vld [vmem:[%s2881 + $0xe8] sm:$0xff]
    %v2912 = vld [vmem:[%s2881 + $0xf0] sm:$0xff]
    %v2913 = vld [vmem:[%s2881 + $0xf8] sm:$0xff]
    %v2914 = vld [vmem:[%s2881 + $0x100] sm:$0xff]
    %v2915 = vld [vmem:[%s2881 + $0x108] sm:$0xff]
    %v2916 = vld [vmem:[%s2881 + $0x110] sm:$0xff]
    %v2917 = vld [vmem:[%s2881 + $0x118] sm:$0xff]
    %v2918 = vld [vmem:[%s2881 + $0x120] sm:$0xff]
    %v2919 = vld [vmem:[%s2881 + $0x128] sm:$0xff]
    %v2920 = vld [vmem:[%s2881 + $0x130] sm:$0xff]
    %v2921 = vld [vmem:[%s2881 + $0x138] sm:$0xff]
    %v2922 = vld [vmem:[%s2881 + $0x140] sm:$0xff]
    %v2923 = vld [vmem:[%s2881 + $0x148] sm:$0xff]
    %v2924 = vld [vmem:[%s2881 + $0x150] sm:$0xff]
    %v2925 = vld [vmem:[%s2881 + $0x158] sm:$0xff]
    %v2926 = vld [vmem:[%s2881 + $0x160] sm:$0xff]
    %v2927 = vld [vmem:[%s2881 + $0x168] sm:$0xff]
    %v2928 = vld [vmem:[%s2881 + $0x170] sm:$0xff]
    %v2929 = vld [vmem:[%s2881 + $0x178] sm:$0xff]
    %s2930 = scalar_lea.vmem [#allocation10], 6
    %v2931 = vld [vmem:[%s2930] sm:$0x7]
    %v2933 = vperm.slane %v2931, 0
    %v2934 = vperm.slane %v2931, 1
    %v2935 = vperm.slane %v2931, 2
    %2939 = vmatpush.msra.mxu0 %v2927
    %2940 = vmatpush.msra.mxu0 %v2924
    %2941 = vmatpush.msra.mxu0 %v2921
    %2942 = vmatpush.msra.mxu0 %v2918
    %2943 = vmatpush.msra.mxu0 %v2915
    %2944 = vmatpush.msra.mxu0 %v2912
    %2945 = vmatpush.msra.mxu0 %v2909
    %2946 = vmatpush.msra.mxu0 %v2906
    %2947 = vmatpush.msra.mxu0 %v2903
    %2948 = vmatpush.msra.mxu0 %v2900
    %2949 = vmatpush.msra.mxu0 %v2897
    %2950 = vmatpush.msra.mxu0 %v2894
    %2951 = vmatpush.msra.mxu0 %v2891
    %2952 = vmatpush.msra.mxu0 %v2888
    %2953 = vmatpush.msra.mxu0 %v2885
    %2954 = vmatpush.msra.mxu0 %v2882
    %2955 = vmatmul.f32.gmra.mxu0 %v2873
    %v2956 = vpop.f32.mrf.mxu0
    %v2957 = vadd.f32 %v2933, %v2956
    %2958 = vmatmul.f32.gmra.mxu0 %v2874
    %v2959 = vpop.f32.mrf.mxu0
    %v2960 = vadd.f32 %v2933, %v2959
    %2961 = vmatmul.f32.gmra.mxu0 %v2875
    %v2962 = vpop.f32.mrf.mxu0
    %v2963 = vadd.f32 %v2933, %v2962
    %2964 = vmatmul.f32.gmra.mxu0 %v2876
    %v2965 = vpop.f32.mrf.mxu0
    %v2966 = vadd.f32 %v2933, %v2965
    %2967 = vmatmul.f32.gmra.mxu0 %v2877
    %v2968 = vpop.f32.mrf.mxu0
    %v2969 = vadd.f32 %v2933, %v2968
    %2970 = vmatmul.f32.gmra.mxu0 %v2878
    %v2971 = vpop.f32.mrf.mxu0
    %v2972 = vadd.f32 %v2933, %v2971
    %2973 = vmatmul.f32.gmra.mxu0 %v2879
    %v2974 = vpop.f32.mrf.mxu0
    %v2975 = vadd.f32 %v2933, %v2974
    %2976 = vmatmul.f32.gmra.mxu0 %v2880
    %v2977 = vpop.f32.mrf.mxu0
    %v2978 = vadd.f32 %v2933, %v2977
    %2979 = vdwg.mxu0
    %2980 = vmatpush.msra.mxu0 %v2928
    %2981 = vmatpush.msra.mxu0 %v2925
    %2982 = vmatpush.msra.mxu0 %v2922
    %2983 = vmatpush.msra.mxu0 %v2919
    %2984 = vmatpush.msra.mxu0 %v2916
    %2985 = vmatpush.msra.mxu0 %v2913
    %2986 = vmatpush.msra.mxu0 %v2910
    %2987 = vmatpush.msra.mxu0 %v2907
    %2988 = vmatpush.msra.mxu0 %v2904
    %2989 = vmatpush.msra.mxu0 %v2901
    %2990 = vmatpush.msra.mxu0 %v2898
    %2991 = vmatpush.msra.mxu0 %v2895
    %2992 = vmatpush.msra.mxu0 %v2892
    %2993 = vmatpush.msra.mxu0 %v2889
    %2994 = vmatpush.msra.mxu0 %v2886
    %2995 = vmatpush.msra.mxu0 %v2883
    %2996 = vmatmul.f32.gmra.mxu0 %v2873
    %v2997 = vpop.f32.mrf.mxu0
    %v2998 = vadd.f32 %v2934, %v2997
    %2999 = vmatmul.f32.gmra.mxu0 %v2874
    %v3000 = vpop.f32.mrf.mxu0
    %v3001 = vadd.f32 %v2934, %v3000
    %3002 = vmatmul.f32.gmra.mxu0 %v2875
    %v3003 = vpop.f32.mrf.mxu0
    %v3004 = vadd.f32 %v2934, %v3003
    %3005 = vmatmul.f32.gmra.mxu0 %v2876
    %v3006 = vpop.f32.mrf.mxu0
    %v3007 = vadd.f32 %v2934, %v3006
    %3008 = vmatmul.f32.gmra.mxu0 %v2877
    %v3009 = vpop.f32.mrf.mxu0
    %v3010 = vadd.f32 %v2934, %v3009
    %3011 = vmatmul.f32.gmra.mxu0 %v2878
    %v3012 = vpop.f32.mrf.mxu0
    %v3013 = vadd.f32 %v2934, %v3012
    %3014 = vmatmul.f32.gmra.mxu0 %v2879
    %v3015 = vpop.f32.mrf.mxu0
    %v3016 = vadd.f32 %v2934, %v3015
    %3017 = vmatmul.f32.gmra.mxu0 %v2880
    %v3018 = vpop.f32.mrf.mxu0
    %v3019 = vadd.f32 %v2934, %v3018
    %3020 = vdwg.mxu0
    %3021 = vmatpush.msra.mxu0 %v2929
    %3022 = vmatpush.msra.mxu0 %v2926
    %3023 = vmatpush.msra.mxu0 %v2923
    %3024 = vmatpush.msra.mxu0 %v2920
    %3025 = vmatpush.msra.mxu0 %v2917
    %3026 = vmatpush.msra.mxu0 %v2914
    %3027 = vmatpush.msra.mxu0 %v2911
    %3028 = vmatpush.msra.mxu0 %v2908
    %3029 = vmatpush.msra.mxu0 %v2905
    %3030 = vmatpush.msra.mxu0 %v2902
    %3031 = vmatpush.msra.mxu0 %v2899
    %3032 = vmatpush.msra.mxu0 %v2896
    %3033 = vmatpush.msra.mxu0 %v2893
    %3034 = vmatpush.msra.mxu0 %v2890
    %3035 = vmatpush.msra.mxu0 %v2887
    %3036 = vmatpush.msra.mxu0 %v2884
    %3037 = vmatmul.f32.gmra.mxu0 %v2873
    %v3038 = vpop.f32.mrf.mxu0
    %v3039 = vadd.f32 %v2935, %v3038
    %3040 = vmatmul.f32.gmra.mxu0 %v2874
    %v3041 = vpop.f32.mrf.mxu0
    %v3042 = vadd.f32 %v2935, %v3041
    %3043 = vmatmul.f32.gmra.mxu0 %v2875
    %v3044 = vpop.f32.mrf.mxu0
    %v3045 = vadd.f32 %v2935, %v3044
    %3046 = vmatmul.f32.gmra.mxu0 %v2876
    %v3047 = vpop.f32.mrf.mxu0
    %v3048 = vadd.f32 %v2935, %v3047
    %3049 = vmatmul.f32.gmra.mxu0 %v2877
    %v3050 = vpop.f32.mrf.mxu0
    %v3051 = vadd.f32 %v2935, %v3050
    %3052 = vmatmul.f32.gmra.mxu0 %v2878
    %v3053 = vpop.f32.mrf.mxu0
    %v3054 = vadd.f32 %v2935, %v3053
    %3055 = vmatmul.f32.gmra.mxu0 %v2879
    %v3056 = vpop.f32.mrf.mxu0
    %v3057 = vadd.f32 %v2935, %v3056
    %3058 = vmatmul.f32.gmra.mxu0 %v2880
    %v3059 = vpop.f32.mrf.mxu0
    %v3060 = vadd.f32 %v2935, %v3059
    %3061 = vdwg.mxu0
    %3062 = vst [vmem:[#allocation3] sm:$0xff] %v2957
    %3063 = vst [vmem:[#allocation3 + $0x8] sm:$0xff] %v2998
    %3064 = vst [vmem:[#allocation3 + $0x10] sm:$0xff] %v3039
    %3065 = vst [vmem:[#allocation3 + $0x18] sm:$0xff] %v2960
    %3066 = vst [vmem:[#allocation3 + $0x20] sm:$0xff] %v3001
    %3067 = vst [vmem:[#allocation3 + $0x28] sm:$0xff] %v3042
    %3068 = vst [vmem:[#allocation3 + $0x30] sm:$0xff] %v2963
    %3069 = vst [vmem:[#allocation3 + $0x38] sm:$0xff] %v3004
    %3070 = vst [vmem:[#allocation3 + $0x40] sm:$0xff] %v3045
    %3071 = vst [vmem:[#allocation3 + $0x48] sm:$0xff] %v2966
    %3072 = vst [vmem:[#allocation3 + $0x50] sm:$0xff] %v3007
    %3073 = vst [vmem:[#allocation3 + $0x58] sm:$0xff] %v3048
    %3074 = vst [vmem:[#allocation3 + $0x60] sm:$0xff] %v2969
    %3075 = vst [vmem:[#allocation3 + $0x68] sm:$0xff] %v3010
    %3076 = vst [vmem:[#allocation3 + $0x70] sm:$0xff] %v3051
    %3077 = vst [vmem:[#allocation3 + $0x78] sm:$0xff] %v2972
    %3078 = vst [vmem:[#allocation3 + $0x80] sm:$0xff] %v3013
    %3079 = vst [vmem:[#allocation3 + $0x88] sm:$0xff] %v3054
    %3080 = vst [vmem:[#allocation3 + $0x90] sm:$0xff] %v2975
    %3081 = vst [vmem:[#allocation3 + $0x98] sm:$0xff] %v3016
    %3082 = vst [vmem:[#allocation3 + $0xa0] sm:$0xff] %v3057
    %3083 = vst [vmem:[#allocation3 + $0xa8] sm:$0xff] %v2978
    %3084 = vst [vmem:[#allocation3 + $0xb0] sm:$0xff] %v3019
    %3085 = vst [vmem:[#allocation3 + $0xb8] sm:$0xff] %v3060
    %s3086 = scalar_lea.vmem %s4, 2
    %v3087 = vld [vmem:[%s3086] sm:$0x1]
    %v3089 = vperm.slane %v3087, 0
    %v3091 = vld [vmem:[#allocation3] sm:$0xff]
    %v3092 = vld [vmem:[#allocation3 + $0x8] sm:$0xff]
    %v3093 = vld [vmem:[#allocation3 + $0x10] sm:$0xff]
    %v3094 = vxor.u32 %v3091, 2147483648
    %v3095 = vxor.u32 %v3092, 2147483648
    %v3096 = vmul.f32 %v3094, 1.442695
    %v3097 = vpow.pop %v3096
    %v3098 = vmul.f32 %v3095, 1.442695
    %v3099 = vpow.pop %v3098
    %v3100 = vadd.f32 %v3097, 1.0
    %v3101 = vadd.f32 %v3099, 1.0
    %v3102 = vrcp.pop %v3100
    %v3103 = vmul.f32 %v3100, %v3102
    %v3104 = vsub.f32 1.0, %v3103
    %v3105 = vmul.f32 %v3102, %v3104
    %v3106 = vadd.f32 %v3102, %v3105
    %vm3107 = vweird.f32 %v3100
    %vm3108 = vweird.f32 %v3102
    %vm3109 = vmor %vm3107, %vm3108
    %v3110 = vsel %vm3109, %v3102, %v3106
    %v3111 = vand.u32 2147483647, %v3100
    %vm3112 = vcmp.eq.f32.partialorder %v3111, 8.507059e+37
    %v3113 = vand.u32 %v3100, 2147483648
    %v3114 = vor.u32 1.1754944e-38, %v3113
    %v3115 = vsel %vm3112, %v3114, %v3110
    %v3116 = vmul.f32 1.0, %v3115
    %v3117 = vrcp.pop %v3101
    %v3118 = vmul.f32 %v3101, %v3117
    %v3119 = vsub.f32 1.0, %v3118
    %v3120 = vmul.f32 %v3117, %v3119
    %v3121 = vadd.f32 %v3117, %v3120
    %vm3122 = vweird.f32 %v3101
    %vm3123 = vweird.f32 %v3117
    %vm3124 = vmor %vm3122, %vm3123
    %v3125 = vsel %vm3124, %v3117, %v3121
    %v3126 = vand.u32 2147483647, %v3101
    %vm3127 = vcmp.eq.f32.partialorder %v3126, 8.507059e+37
    %v3128 = vand.u32 %v3101, 2147483648
    %v3129 = vor.u32 1.1754944e-38, %v3128
    %v3130 = vsel %vm3127, %v3129, %v3125
    %v3131 = vmul.f32 1.0, %v3130
    %v3132 = vmul.f32 %v3116, %v3089
    %v3133 = vadd.f32 %v3093, %v3132
    %v3134 = vtanh.pop %v3133
    %v3135 = vsub.f32 1.0, %v3131
    %v3136 = vmul.f32 %v3135, %v3134
    %3137 = vst [vmem:[#allocation2] sm:$0xff] %v3136
    %v3138 = vld [vmem:[%s353] sm:$0xff]
    %v3139 = vld [vmem:[%s353 + $0x8] sm:$0xff]
    %v3140 = vld [vmem:[%s353 + $0x10] sm:$0xff]
    %s3141 = scalar_lea.vmem [#allocation9], 768
    %v3142 = vld [vmem:[%s3141] sm:$0xff]
    %v3143 = vld [vmem:[%s3141 + $0x8] sm:$0xff]
    %v3144 = vld [vmem:[%s3141 + $0x10] sm:$0xff]
    %v3145 = vld [vmem:[%s3141 + $0x18] sm:$0xff]
    %v3146 = vld [vmem:[%s3141 + $0x20] sm:$0xff]
    %v3147 = vld [vmem:[%s3141 + $0x28] sm:$0xff]
    %v3148 = vld [vmem:[%s3141 + $0x30] sm:$0xff]
    %v3149 = vld [vmem:[%s3141 + $0x38] sm:$0xff]
    %v3150 = vld [vmem:[%s3141 + $0x40] sm:$0xff]
    %v3151 = vld [vmem:[%s3141 + $0x48] sm:$0xff]
    %v3152 = vld [vmem:[%s3141 + $0x50] sm:$0xff]
    %v3153 = vld [vmem:[%s3141 + $0x58] sm:$0xff]
    %v3154 = vld [vmem:[%s3141 + $0x60] sm:$0xff]
    %v3155 = vld [vmem:[%s3141 + $0x68] sm:$0xff]
    %v3156 = vld [vmem:[%s3141 + $0x70] sm:$0xff]
    %v3157 = vld [vmem:[%s3141 + $0x78] sm:$0xff]
    %v3158 = vld [vmem:[%s3141 + $0x80] sm:$0xff]
    %v3159 = vld [vmem:[%s3141 + $0x88] sm:$0xff]
    %v3160 = vld [vmem:[%s3141 + $0x90] sm:$0xff]
    %v3161 = vld [vmem:[%s3141 + $0x98] sm:$0xff]
    %v3162 = vld [vmem:[%s3141 + $0xa0] sm:$0xff]
    %v3163 = vld [vmem:[%s3141 + $0xa8] sm:$0xff]
    %v3164 = vld [vmem:[%s3141 + $0xb0] sm:$0xff]
    %v3165 = vld [vmem:[%s3141 + $0xb8] sm:$0xff]
    %v3166 = vld [vmem:[%s3141 + $0xc0] sm:$0xff]
    %v3167 = vld [vmem:[%s3141 + $0xc8] sm:$0xff]
    %v3168 = vld [vmem:[%s3141 + $0xd0] sm:$0xff]
    %v3169 = vld [vmem:[%s3141 + $0xd8] sm:$0xff]
    %v3170 = vld [vmem:[%s3141 + $0xe0] sm:$0xff]
    %v3171 = vld [vmem:[%s3141 + $0xe8] sm:$0xff]
    %v3172 = vld [vmem:[%s3141 + $0xf0] sm:$0xff]
    %v3173 = vld [vmem:[%s3141 + $0xf8] sm:$0xff]
    %v3174 = vld [vmem:[%s3141 + $0x100] sm:$0xff]
    %v3175 = vld [vmem:[%s3141 + $0x108] sm:$0xff]
    %v3176 = vld [vmem:[%s3141 + $0x110] sm:$0xff]
    %v3177 = vld [vmem:[%s3141 + $0x118] sm:$0xff]
    %v3178 = vld [vmem:[%s3141 + $0x120] sm:$0xff]
    %v3179 = vld [vmem:[%s3141 + $0x128] sm:$0xff]
    %v3180 = vld [vmem:[%s3141 + $0x130] sm:$0xff]
    %v3181 = vld [vmem:[%s3141 + $0x138] sm:$0xff]
    %v3182 = vld [vmem:[%s3141 + $0x140] sm:$0xff]
    %v3183 = vld [vmem:[%s3141 + $0x148] sm:$0xff]
    %v3184 = vld [vmem:[%s3141 + $0x150] sm:$0xff]
    %v3185 = vld [vmem:[%s3141 + $0x158] sm:$0xff]
    %v3186 = vld [vmem:[%s3141 + $0x160] sm:$0xff]
    %v3187 = vld [vmem:[%s3141 + $0x168] sm:$0xff]
    %v3188 = vld [vmem:[%s3141 + $0x170] sm:$0xff]
    %v3189 = vld [vmem:[%s3141 + $0x178] sm:$0xff]
    %3190 = vmatpush.msra.mxu0 %v3187
    %3191 = vmatpush.msra.mxu0 %v3184
    %3192 = vmatpush.msra.mxu0 %v3181
    %3193 = vmatpush.msra.mxu0 %v3178
    %3194 = vmatpush.msra.mxu0 %v3175
    %3195 = vmatpush.msra.mxu0 %v3172
    %3196 = vmatpush.msra.mxu0 %v3169
    %3197 = vmatpush.msra.mxu0 %v3166
    %3198 = vmatpush.msra.mxu0 %v3163
    %3199 = vmatpush.msra.mxu0 %v3160
    %3200 = vmatpush.msra.mxu0 %v3157
    %3201 = vmatpush.msra.mxu0 %v3154
    %3202 = vmatpush.msra.mxu0 %v3151
    %3203 = vmatpush.msra.mxu0 %v3148
    %3204 = vmatpush.msra.mxu0 %v3145
    %3205 = vmatpush.msra.mxu0 %v3142
    %3206 = vmatmul.f32.gmra.mxu0 %v3136
    %v3207 = vpop.f32.mrf.mxu0
    %v3208 = vadd.f32 0.0, %v3207
    %3209 = vdwg.mxu0
    %3210 = vmatpush.msra.mxu0 %v3188
    %3211 = vmatpush.msra.mxu0 %v3185
    %3212 = vmatpush.msra.mxu0 %v3182
    %3213 = vmatpush.msra.mxu0 %v3179
    %3214 = vmatpush.msra.mxu0 %v3176
    %3215 = vmatpush.msra.mxu0 %v3173
    %3216 = vmatpush.msra.mxu0 %v3170
    %3217 = vmatpush.msra.mxu0 %v3167
    %3218 = vmatpush.msra.mxu0 %v3164
    %3219 = vmatpush.msra.mxu0 %v3161
    %3220 = vmatpush.msra.mxu0 %v3158
    %3221 = vmatpush.msra.mxu0 %v3155
    %3222 = vmatpush.msra.mxu0 %v3152
    %3223 = vmatpush.msra.mxu0 %v3149
    %3224 = vmatpush.msra.mxu0 %v3146
    %3225 = vmatpush.msra.mxu0 %v3143
    %3226 = vmatmul.f32.gmra.mxu0 %v3136
    %v3227 = vpop.f32.mrf.mxu0
    %v3228 = vadd.f32 0.0, %v3227
    %3229 = vdwg.mxu0
    %3230 = vmatpush.msra.mxu0 %v3189
    %3231 = vmatpush.msra.mxu0 %v3186
    %3232 = vmatpush.msra.mxu0 %v3183
    %3233 = vmatpush.msra.mxu0 %v3180
    %3234 = vmatpush.msra.mxu0 %v3177
    %3235 = vmatpush.msra.mxu0 %v3174
    %3236 = vmatpush.msra.mxu0 %v3171
    %3237 = vmatpush.msra.mxu0 %v3168
    %3238 = vmatpush.msra.mxu0 %v3165
    %3239 = vmatpush.msra.mxu0 %v3162
    %3240 = vmatpush.msra.mxu0 %v3159
    %3241 = vmatpush.msra.mxu0 %v3156
    %3242 = vmatpush.msra.mxu0 %v3153
    %3243 = vmatpush.msra.mxu0 %v3150
    %3244 = vmatpush.msra.mxu0 %v3147
    %3245 = vmatpush.msra.mxu0 %v3144
    %3246 = vmatmul.f32.gmra.mxu0 %v3136
    %v3247 = vpop.f32.mrf.mxu0
    %v3248 = vadd.f32 0.0, %v3247
    %3249 = vdwg.mxu0
    %v3250 = vadd.f32 %v3138, %v3208
    %v3251 = vadd.f32 %v3139, %v3228
    %v3252 = vxor.u32 %v3250, 2147483648
    %v3253 = vxor.u32 %v3251, 2147483648
    %v3254 = vmul.f32 %v3252, 1.442695
    %v3255 = vpow.pop %v3254
    %v3256 = vmul.f32 %v3253, 1.442695
    %v3257 = vpow.pop %v3256
    %v3258 = vadd.f32 %v3255, 1.0
    %v3259 = vadd.f32 %v3257, 1.0
    %v3260 = vrcp.pop %v3258
    %v3261 = vmul.f32 %v3258, %v3260
    %v3262 = vsub.f32 1.0, %v3261
    %v3263 = vmul.f32 %v3260, %v3262
    %v3264 = vadd.f32 %v3260, %v3263
    %vm3265 = vweird.f32 %v3258
    %vm3266 = vweird.f32 %v3260
    %vm3267 = vmor %vm3265, %vm3266
    %v3268 = vsel %vm3267, %v3260, %v3264
    %v3269 = vand.u32 2147483647, %v3258
    %vm3270 = vcmp.eq.f32.partialorder %v3269, 8.507059e+37
    %v3271 = vand.u32 %v3258, 2147483648
    %v3272 = vor.u32 1.1754944e-38, %v3271
    %v3273 = vsel %vm3270, %v3272, %v3268
    %v3274 = vmul.f32 1.0, %v3273
    %v3275 = vrcp.pop %v3259
    %v3276 = vmul.f32 %v3259, %v3275
    %v3277 = vsub.f32 1.0, %v3276
    %v3278 = vmul.f32 %v3275, %v3277
    %v3279 = vadd.f32 %v3275, %v3278
    %vm3280 = vweird.f32 %v3259
    %vm3281 = vweird.f32 %v3275
    %vm3282 = vmor %vm3280, %vm3281
    %v3283 = vsel %vm3282, %v3275, %v3279
    %v3284 = vand.u32 2147483647, %v3259
    %vm3285 = vcmp.eq.f32.partialorder %v3284, 8.507059e+37
    %v3286 = vand.u32 %v3259, 2147483648
    %v3287 = vor.u32 1.1754944e-38, %v3286
    %v3288 = vsel %vm3285, %v3287, %v3283
    %v3289 = vmul.f32 1.0, %v3288
    %v3290 = vadd.f32 %v3248, %v3089
    %v3291 = vmul.f32 %v3274, %v3290
    %v3292 = vadd.f32 %v3140, %v3291
    %v3293 = vtanh.pop %v3292
    %v3294 = vsub.f32 1.0, %v3289
    %v3295 = vmul.f32 %v3294, %v3293
    %v3296 = vmul.f32 %v3289, %v3136
    %v3297 = vadd.f32 %v3295, %v3296
    %3298 = vst [vmem:[%s513] sm:$0xff] %v3297
    %v3299 = vld [vmem:[%s515] sm:$0xff]
    %v3300 = vld [vmem:[%s515 + $0x8] sm:$0xff]
    %v3301 = vld [vmem:[%s515 + $0x10] sm:$0xff]
    %v3302 = vld [vmem:[%s3141] sm:$0xff]
    %v3303 = vld [vmem:[%s3141 + $0x8] sm:$0xff]
    %v3304 = vld [vmem:[%s3141 + $0x10] sm:$0xff]
    %v3305 = vld [vmem:[%s3141 + $0x18] sm:$0xff]
    %v3306 = vld [vmem:[%s3141 + $0x20] sm:$0xff]
    %v3307 = vld [vmem:[%s3141 + $0x28] sm:$0xff]
    %v3308 = vld [vmem:[%s3141 + $0x30] sm:$0xff]
    %v3309 = vld [vmem:[%s3141 + $0x38] sm:$0xff]
    %v3310 = vld [vmem:[%s3141 + $0x40] sm:$0xff]
    %v3311 = vld [vmem:[%s3141 + $0x48] sm:$0xff]
    %v3312 = vld [vmem:[%s3141 + $0x50] sm:$0xff]
    %v3313 = vld [vmem:[%s3141 + $0x58] sm:$0xff]
    %v3314 = vld [vmem:[%s3141 + $0x60] sm:$0xff]
    %v3315 = vld [vmem:[%s3141 + $0x68] sm:$0xff]
    %v3316 = vld [vmem:[%s3141 + $0x70] sm:$0xff]
    %v3317 = vld [vmem:[%s3141 + $0x78] sm:$0xff]
    %v3318 = vld [vmem:[%s3141 + $0x80] sm:$0xff]
    %v3319 = vld [vmem:[%s3141 + $0x88] sm:$0xff]
    %v3320 = vld [vmem:[%s3141 + $0x90] sm:$0xff]
    %v3321 = vld [vmem:[%s3141 + $0x98] sm:$0xff]
    %v3322 = vld [vmem:[%s3141 + $0xa0] sm:$0xff]
    %v3323 = vld [vmem:[%s3141 + $0xa8] sm:$0xff]
    %v3324 = vld [vmem:[%s3141 + $0xb0] sm:$0xff]
    %v3325 = vld [vmem:[%s3141 + $0xb8] sm:$0xff]
    %v3326 = vld [vmem:[%s3141 + $0xc0] sm:$0xff]
    %v3327 = vld [vmem:[%s3141 + $0xc8] sm:$0xff]
    %v3328 = vld [vmem:[%s3141 + $0xd0] sm:$0xff]
    %v3329 = vld [vmem:[%s3141 + $0xd8] sm:$0xff]
    %v3330 = vld [vmem:[%s3141 + $0xe0] sm:$0xff]
    %v3331 = vld [vmem:[%s3141 + $0xe8] sm:$0xff]
    %v3332 = vld [vmem:[%s3141 + $0xf0] sm:$0xff]
    %v3333 = vld [vmem:[%s3141 + $0xf8] sm:$0xff]
    %v3334 = vld [vmem:[%s3141 + $0x100] sm:$0xff]
    %v3335 = vld [vmem:[%s3141 + $0x108] sm:$0xff]
    %v3336 = vld [vmem:[%s3141 + $0x110] sm:$0xff]
    %v3337 = vld [vmem:[%s3141 + $0x118] sm:$0xff]
    %v3338 = vld [vmem:[%s3141 + $0x120] sm:$0xff]
    %v3339 = vld [vmem:[%s3141 + $0x128] sm:$0xff]
    %v3340 = vld [vmem:[%s3141 + $0x130] sm:$0xff]
    %v3341 = vld [vmem:[%s3141 + $0x138] sm:$0xff]
    %v3342 = vld [vmem:[%s3141 + $0x140] sm:$0xff]
    %v3343 = vld [vmem:[%s3141 + $0x148] sm:$0xff]
    %v3344 = vld [vmem:[%s3141 + $0x150] sm:$0xff]
    %v3345 = vld [vmem:[%s3141 + $0x158] sm:$0xff]
    %v3346 = vld [vmem:[%s3141 + $0x160] sm:$0xff]
    %v3347 = vld [vmem:[%s3141 + $0x168] sm:$0xff]
    %v3348 = vld [vmem:[%s3141 + $0x170] sm:$0xff]
    %v3349 = vld [vmem:[%s3141 + $0x178] sm:$0xff]
    %3350 = vmatpush.msra.mxu0 %v3347
    %3351 = vmatpush.msra.mxu0 %v3344
    %3352 = vmatpush.msra.mxu0 %v3341
    %3353 = vmatpush.msra.mxu0 %v3338
    %3354 = vmatpush.msra.mxu0 %v3335
    %3355 = vmatpush.msra.mxu0 %v3332
    %3356 = vmatpush.msra.mxu0 %v3329
    %3357 = vmatpush.msra.mxu0 %v3326
    %3358 = vmatpush.msra.mxu0 %v3323
    %3359 = vmatpush.msra.mxu0 %v3320
    %3360 = vmatpush.msra.mxu0 %v3317
    %3361 = vmatpush.msra.mxu0 %v3314
    %3362 = vmatpush.msra.mxu0 %v3311
    %3363 = vmatpush.msra.mxu0 %v3308
    %3364 = vmatpush.msra.mxu0 %v3305
    %3365 = vmatpush.msra.mxu0 %v3302
    %3366 = vmatmul.f32.gmra.mxu0 %v3297
    %v3367 = vpop.f32.mrf.mxu0
    %v3368 = vadd.f32 0.0, %v3367
    %3369 = vdwg.mxu0
    %3370 = vmatpush.msra.mxu0 %v3348
    %3371 = vmatpush.msra.mxu0 %v3345
    %3372 = vmatpush.msra.mxu0 %v3342
    %3373 = vmatpush.msra.mxu0 %v3339
    %3374 = vmatpush.msra.mxu0 %v3336
    %3375 = vmatpush.msra.mxu0 %v3333
    %3376 = vmatpush.msra.mxu0 %v3330
    %3377 = vmatpush.msra.mxu0 %v3327
    %3378 = vmatpush.msra.mxu0 %v3324
    %3379 = vmatpush.msra.mxu0 %v3321
    %3380 = vmatpush.msra.mxu0 %v3318
    %3381 = vmatpush.msra.mxu0 %v3315
    %3382 = vmatpush.msra.mxu0 %v3312
    %3383 = vmatpush.msra.mxu0 %v3309
    %3384 = vmatpush.msra.mxu0 %v3306
    %3385 = vmatpush.msra.mxu0 %v3303
    %3386 = vmatmul.f32.gmra.mxu0 %v3297
    %v3387 = vpop.f32.mrf.mxu0
    %v3388 = vadd.f32 0.0, %v3387
    %3389 = vdwg.mxu0
    %3390 = vmatpush.msra.mxu0 %v3349
    %3391 = vmatpush.msra.mxu0 %v3346
    %3392 = vmatpush.msra.mxu0 %v3343
    %3393 = vmatpush.msra.mxu0 %v3340
    %3394 = vmatpush.msra.mxu0 %v3337
    %3395 = vmatpush.msra.mxu0 %v3334
    %3396 = vmatpush.msra.mxu0 %v3331
    %3397 = vmatpush.msra.mxu0 %v3328
    %3398 = vmatpush.msra.mxu0 %v3325
    %3399 = vmatpush.msra.mxu0 %v3322
    %3400 = vmatpush.msra.mxu0 %v3319
    %3401 = vmatpush.msra.mxu0 %v3316
    %3402 = vmatpush.msra.mxu0 %v3313
    %3403 = vmatpush.msra.mxu0 %v3310
    %3404 = vmatpush.msra.mxu0 %v3307
    %3405 = vmatpush.msra.mxu0 %v3304
    %3406 = vmatmul.f32.gmra.mxu0 %v3297
    %v3407 = vpop.f32.mrf.mxu0
    %v3408 = vadd.f32 0.0, %v3407
    %3409 = vdwg.mxu0
    %v3410 = vadd.f32 %v3299, %v3368
    %v3411 = vadd.f32 %v3300, %v3388
    %v3412 = vxor.u32 %v3410, 2147483648
    %v3413 = vxor.u32 %v3411, 2147483648
    %v3414 = vmul.f32 %v3412, 1.442695
    %v3415 = vpow.pop %v3414
    %v3416 = vmul.f32 %v3413, 1.442695
    %v3417 = vpow.pop %v3416
    %v3418 = vadd.f32 %v3415, 1.0
    %v3419 = vadd.f32 %v3417, 1.0
    %v3420 = vrcp.pop %v3418
    %v3421 = vmul.f32 %v3418, %v3420
    %v3422 = vsub.f32 1.0, %v3421
    %v3423 = vmul.f32 %v3420, %v3422
    %v3424 = vadd.f32 %v3420, %v3423
    %vm3425 = vweird.f32 %v3418
    %vm3426 = vweird.f32 %v3420
    %vm3427 = vmor %vm3425, %vm3426
    %v3428 = vsel %vm3427, %v3420, %v3424
    %v3429 = vand.u32 2147483647, %v3418
    %vm3430 = vcmp.eq.f32.partialorder %v3429, 8.507059e+37
    %v3431 = vand.u32 %v3418, 2147483648
    %v3432 = vor.u32 1.1754944e-38, %v3431
    %v3433 = vsel %vm3430, %v3432, %v3428
    %v3434 = vmul.f32 1.0, %v3433
    %v3435 = vrcp.pop %v3419
    %v3436 = vmul.f32 %v3419, %v3435
    %v3437 = vsub.f32 1.0, %v3436
    %v3438 = vmul.f32 %v3435, %v3437
    %v3439 = vadd.f32 %v3435, %v3438
    %vm3440 = vweird.f32 %v3419
    %vm3441 = vweird.f32 %v3435
    %vm3442 = vmor %vm3440, %vm3441
    %v3443 = vsel %vm3442, %v3435, %v3439
    %v3444 = vand.u32 2147483647, %v3419
    %vm3445 = vcmp.eq.f32.partialorder %v3444, 8.507059e+37
    %v3446 = vand.u32 %v3419, 2147483648
    %v3447 = vor.u32 1.1754944e-38, %v3446
    %v3448 = vsel %vm3445, %v3447, %v3443
    %v3449 = vmul.f32 1.0, %v3448
    %v3450 = vadd.f32 %v3408, %v3089
    %v3451 = vmul.f32 %v3434, %v3450
    %v3452 = vadd.f32 %v3301, %v3451
    %v3453 = vtanh.pop %v3452
    %v3454 = vsub.f32 1.0, %v3449
    %v3455 = vmul.f32 %v3454, %v3453
    %v3456 = vmul.f32 %v3449, %v3297
    %v3457 = vadd.f32 %v3455, %v3456
    %3458 = vst [vmem:[%s675] sm:$0xff] %v3457
    %v3459 = vld [vmem:[%s677] sm:$0xff]
    %v3460 = vld [vmem:[%s677 + $0x8] sm:$0xff]
    %v3461 = vld [vmem:[%s677 + $0x10] sm:$0xff]
    %v3462 = vld [vmem:[%s3141] sm:$0xff]
    %v3463 = vld [vmem:[%s3141 + $0x8] sm:$0xff]
    %v3464 = vld [vmem:[%s3141 + $0x10] sm:$0xff]
    %v3465 = vld [vmem:[%s3141 + $0x18] sm:$0xff]
    %v3466 = vld [vmem:[%s3141 + $0x20] sm:$0xff]
    %v3467 = vld [vmem:[%s3141 + $0x28] sm:$0xff]
    %v3468 = vld [vmem:[%s3141 + $0x30] sm:$0xff]
    %v3469 = vld [vmem:[%s3141 + $0x38] sm:$0xff]
    %v3470 = vld [vmem:[%s3141 + $0x40] sm:$0xff]
    %v3471 = vld [vmem:[%s3141 + $0x48] sm:$0xff]
    %v3472 = vld [vmem:[%s3141 + $0x50] sm:$0xff]
    %v3473 = vld [vmem:[%s3141 + $0x58] sm:$0xff]
    %v3474 = vld [vmem:[%s3141 + $0x60] sm:$0xff]
    %v3475 = vld [vmem:[%s3141 + $0x68] sm:$0xff]
    %v3476 = vld [vmem:[%s3141 + $0x70] sm:$0xff]
    %v3477 = vld [vmem:[%s3141 + $0x78] sm:$0xff]
    %v3478 = vld [vmem:[%s3141 + $0x80] sm:$0xff]
    %v3479 = vld [vmem:[%s3141 + $0x88] sm:$0xff]
    %v3480 = vld [vmem:[%s3141 + $0x90] sm:$0xff]
    %v3481 = vld [vmem:[%s3141 + $0x98] sm:$0xff]
    %v3482 = vld [vmem:[%s3141 + $0xa0] sm:$0xff]
    %v3483 = vld [vmem:[%s3141 + $0xa8] sm:$0xff]
    %v3484 = vld [vmem:[%s3141 + $0xb0] sm:$0xff]
    %v3485 = vld [vmem:[%s3141 + $0xb8] sm:$0xff]
    %v3486 = vld [vmem:[%s3141 + $0xc0] sm:$0xff]
    %v3487 = vld [vmem:[%s3141 + $0xc8] sm:$0xff]
    %v3488 = vld [vmem:[%s3141 + $0xd0] sm:$0xff]
    %v3489 = vld [vmem:[%s3141 + $0xd8] sm:$0xff]
    %v3490 = vld [vmem:[%s3141 + $0xe0] sm:$0xff]
    %v3491 = vld [vmem:[%s3141 + $0xe8] sm:$0xff]
    %v3492 = vld [vmem:[%s3141 + $0xf0] sm:$0xff]
    %v3493 = vld [vmem:[%s3141 + $0xf8] sm:$0xff]
    %v3494 = vld [vmem:[%s3141 + $0x100] sm:$0xff]
    %v3495 = vld [vmem:[%s3141 + $0x108] sm:$0xff]
    %v3496 = vld [vmem:[%s3141 + $0x110] sm:$0xff]
    %v3497 = vld [vmem:[%s3141 + $0x118] sm:$0xff]
    %v3498 = vld [vmem:[%s3141 + $0x120] sm:$0xff]
    %v3499 = vld [vmem:[%s3141 + $0x128] sm:$0xff]
    %v3500 = vld [vmem:[%s3141 + $0x130] sm:$0xff]
    %v3501 = vld [vmem:[%s3141 + $0x138] sm:$0xff]
    %v3502 = vld [vmem:[%s3141 + $0x140] sm:$0xff]
    %v3503 = vld [vmem:[%s3141 + $0x148] sm:$0xff]
    %v3504 = vld [vmem:[%s3141 + $0x150] sm:$0xff]
    %v3505 = vld [vmem:[%s3141 + $0x158] sm:$0xff]
    %v3506 = vld [vmem:[%s3141 + $0x160] sm:$0xff]
    %v3507 = vld [vmem:[%s3141 + $0x168] sm:$0xff]
    %v3508 = vld [vmem:[%s3141 + $0x170] sm:$0xff]
    %v3509 = vld [vmem:[%s3141 + $0x178] sm:$0xff]
    %3510 = vmatpush.msra.mxu0 %v3507
    %3511 = vmatpush.msra.mxu0 %v3504
    %3512 = vmatpush.msra.mxu0 %v3501
    %3513 = vmatpush.msra.mxu0 %v3498
    %3514 = vmatpush.msra.mxu0 %v3495
    %3515 = vmatpush.msra.mxu0 %v3492
    %3516 = vmatpush.msra.mxu0 %v3489
    %3517 = vmatpush.msra.mxu0 %v3486
    %3518 = vmatpush.msra.mxu0 %v3483
    %3519 = vmatpush.msra.mxu0 %v3480
    %3520 = vmatpush.msra.mxu0 %v3477
    %3521 = vmatpush.msra.mxu0 %v3474
    %3522 = vmatpush.msra.mxu0 %v3471
    %3523 = vmatpush.msra.mxu0 %v3468
    %3524 = vmatpush.msra.mxu0 %v3465
    %3525 = vmatpush.msra.mxu0 %v3462
    %3526 = vmatmul.f32.gmra.mxu0 %v3457
    %v3527 = vpop.f32.mrf.mxu0
    %v3528 = vadd.f32 0.0, %v3527
    %3529 = vdwg.mxu0
    %3530 = vmatpush.msra.mxu0 %v3508
    %3531 = vmatpush.msra.mxu0 %v3505
    %3532 = vmatpush.msra.mxu0 %v3502
    %3533 = vmatpush.msra.mxu0 %v3499
    %3534 = vmatpush.msra.mxu0 %v3496
    %3535 = vmatpush.msra.mxu0 %v3493
    %3536 = vmatpush.msra.mxu0 %v3490
    %3537 = vmatpush.msra.mxu0 %v3487
    %3538 = vmatpush.msra.mxu0 %v3484
    %3539 = vmatpush.msra.mxu0 %v3481
    %3540 = vmatpush.msra.mxu0 %v3478
    %3541 = vmatpush.msra.mxu0 %v3475
    %3542 = vmatpush.msra.mxu0 %v3472
    %3543 = vmatpush.msra.mxu0 %v3469
    %3544 = vmatpush.msra.mxu0 %v3466
    %3545 = vmatpush.msra.mxu0 %v3463
    %3546 = vmatmul.f32.gmra.mxu0 %v3457
    %v3547 = vpop.f32.mrf.mxu0
    %v3548 = vadd.f32 0.0, %v3547
    %3549 = vdwg.mxu0
    %3550 = vmatpush.msra.mxu0 %v3509
    %3551 = vmatpush.msra.mxu0 %v3506
    %3552 = vmatpush.msra.mxu0 %v3503
    %3553 = vmatpush.msra.mxu0 %v3500
    %3554 = vmatpush.msra.mxu0 %v3497
    %3555 = vmatpush.msra.mxu0 %v3494
    %3556 = vmatpush.msra.mxu0 %v3491
    %3557 = vmatpush.msra.mxu0 %v3488
    %3558 = vmatpush.msra.mxu0 %v3485
    %3559 = vmatpush.msra.mxu0 %v3482
    %3560 = vmatpush.msra.mxu0 %v3479
    %3561 = vmatpush.msra.mxu0 %v3476
    %3562 = vmatpush.msra.mxu0 %v3473
    %3563 = vmatpush.msra.mxu0 %v3470
    %3564 = vmatpush.msra.mxu0 %v3467
    %3565 = vmatpush.msra.mxu0 %v3464
    %3566 = vmatmul.f32.gmra.mxu0 %v3457
    %v3567 = vpop.f32.mrf.mxu0
    %v3568 = vadd.f32 0.0, %v3567
    %3569 = vdwg.mxu0
    %v3570 = vadd.f32 %v3459, %v3528
    %v3571 = vadd.f32 %v3460, %v3548
    %v3572 = vxor.u32 %v3570, 2147483648
    %v3573 = vxor.u32 %v3571, 2147483648
    %v3574 = vmul.f32 %v3572, 1.442695
    %v3575 = vpow.pop %v3574
    %v3576 = vmul.f32 %v3573, 1.442695
    %v3577 = vpow.pop %v3576
    %v3578 = vadd.f32 %v3575, 1.0
    %v3579 = vadd.f32 %v3577, 1.0
    %v3580 = vrcp.pop %v3578
    %v3581 = vmul.f32 %v3578, %v3580
    %v3582 = vsub.f32 1.0, %v3581
    %v3583 = vmul.f32 %v3580, %v3582
    %v3584 = vadd.f32 %v3580, %v3583
    %vm3585 = vweird.f32 %v3578
    %vm3586 = vweird.f32 %v3580
    %vm3587 = vmor %vm3585, %vm3586
    %v3588 = vsel %vm3587, %v3580, %v3584
    %v3589 = vand.u32 2147483647, %v3578
    %vm3590 = vcmp.eq.f32.partialorder %v3589, 8.507059e+37
    %v3591 = vand.u32 %v3578, 2147483648
    %v3592 = vor.u32 1.1754944e-38, %v3591
    %v3593 = vsel %vm3590, %v3592, %v3588
    %v3594 = vmul.f32 1.0, %v3593
    %v3595 = vrcp.pop %v3579
    %v3596 = vmul.f32 %v3579, %v3595
    %v3597 = vsub.f32 1.0, %v3596
    %v3598 = vmul.f32 %v3595, %v3597
    %v3599 = vadd.f32 %v3595, %v3598
    %vm3600 = vweird.f32 %v3579
    %vm3601 = vweird.f32 %v3595
    %vm3602 = vmor %vm3600, %vm3601
    %v3603 = vsel %vm3602, %v3595, %v3599
    %v3604 = vand.u32 2147483647, %v3579
    %vm3605 = vcmp.eq.f32.partialorder %v3604, 8.507059e+37
    %v3606 = vand.u32 %v3579, 2147483648
    %v3607 = vor.u32 1.1754944e-38, %v3606
    %v3608 = vsel %vm3605, %v3607, %v3603
    %v3609 = vmul.f32 1.0, %v3608
    %v3610 = vadd.f32 %v3568, %v3089
    %v3611 = vmul.f32 %v3594, %v3610
    %v3612 = vadd.f32 %v3461, %v3611
    %v3613 = vtanh.pop %v3612
    %v3614 = vsub.f32 1.0, %v3609
    %v3615 = vmul.f32 %v3614, %v3613
    %v3616 = vmul.f32 %v3609, %v3457
    %v3617 = vadd.f32 %v3615, %v3616
    %3618 = vst [vmem:[%s837] sm:$0xff] %v3617
    %v3619 = vld [vmem:[%s839] sm:$0xff]
    %v3620 = vld [vmem:[%s839 + $0x8] sm:$0xff]
    %v3621 = vld [vmem:[%s839 + $0x10] sm:$0xff]
    %v3622 = vld [vmem:[%s3141] sm:$0xff]
    %v3623 = vld [vmem:[%s3141 + $0x8] sm:$0xff]
    %v3624 = vld [vmem:[%s3141 + $0x10] sm:$0xff]
    %v3625 = vld [vmem:[%s3141 + $0x18] sm:$0xff]
    %v3626 = vld [vmem:[%s3141 + $0x20] sm:$0xff]
    %v3627 = vld [vmem:[%s3141 + $0x28] sm:$0xff]
    %v3628 = vld [vmem:[%s3141 + $0x30] sm:$0xff]
    %v3629 = vld [vmem:[%s3141 + $0x38] sm:$0xff]
    %v3630 = vld [vmem:[%s3141 + $0x40] sm:$0xff]
    %v3631 = vld [vmem:[%s3141 + $0x48] sm:$0xff]
    %v3632 = vld [vmem:[%s3141 + $0x50] sm:$0xff]
    %v3633 = vld [vmem:[%s3141 + $0x58] sm:$0xff]
    %v3634 = vld [vmem:[%s3141 + $0x60] sm:$0xff]
    %v3635 = vld [vmem:[%s3141 + $0x68] sm:$0xff]
    %v3636 = vld [vmem:[%s3141 + $0x70] sm:$0xff]
    %v3637 = vld [vmem:[%s3141 + $0x78] sm:$0xff]
    %v3638 = vld [vmem:[%s3141 + $0x80] sm:$0xff]
    %v3639 = vld [vmem:[%s3141 + $0x88] sm:$0xff]
    %v3640 = vld [vmem:[%s3141 + $0x90] sm:$0xff]
    %v3641 = vld [vmem:[%s3141 + $0x98] sm:$0xff]
    %v3642 = vld [vmem:[%s3141 + $0xa0] sm:$0xff]
    %v3643 = vld [vmem:[%s3141 + $0xa8] sm:$0xff]
    %v3644 = vld [vmem:[%s3141 + $0xb0] sm:$0xff]
    %v3645 = vld [vmem:[%s3141 + $0xb8] sm:$0xff]
    %v3646 = vld [vmem:[%s3141 + $0xc0] sm:$0xff]
    %v3647 = vld [vmem:[%s3141 + $0xc8] sm:$0xff]
    %v3648 = vld [vmem:[%s3141 + $0xd0] sm:$0xff]
    %v3649 = vld [vmem:[%s3141 + $0xd8] sm:$0xff]
    %v3650 = vld [vmem:[%s3141 + $0xe0] sm:$0xff]
    %v3651 = vld [vmem:[%s3141 + $0xe8] sm:$0xff]
    %v3652 = vld [vmem:[%s3141 + $0xf0] sm:$0xff]
    %v3653 = vld [vmem:[%s3141 + $0xf8] sm:$0xff]
    %v3654 = vld [vmem:[%s3141 + $0x100] sm:$0xff]
    %v3655 = vld [vmem:[%s3141 + $0x108] sm:$0xff]
    %v3656 = vld [vmem:[%s3141 + $0x110] sm:$0xff]
    %v3657 = vld [vmem:[%s3141 + $0x118] sm:$0xff]
    %v3658 = vld [vmem:[%s3141 + $0x120] sm:$0xff]
    %v3659 = vld [vmem:[%s3141 + $0x128] sm:$0xff]
    %v3660 = vld [vmem:[%s3141 + $0x130] sm:$0xff]
    %v3661 = vld [vmem:[%s3141 + $0x138] sm:$0xff]
    %v3662 = vld [vmem:[%s3141 + $0x140] sm:$0xff]
    %v3663 = vld [vmem:[%s3141 + $0x148] sm:$0xff]
    %v3664 = vld [vmem:[%s3141 + $0x150] sm:$0xff]
    %v3665 = vld [vmem:[%s3141 + $0x158] sm:$0xff]
    %v3666 = vld [vmem:[%s3141 + $0x160] sm:$0xff]
    %v3667 = vld [vmem:[%s3141 + $0x168] sm:$0xff]
    %v3668 = vld [vmem:[%s3141 + $0x170] sm:$0xff]
    %v3669 = vld [vmem:[%s3141 + $0x178] sm:$0xff]
    %3670 = vmatpush.msra.mxu0 %v3667
    %3671 = vmatpush.msra.mxu0 %v3664
    %3672 = vmatpush.msra.mxu0 %v3661
    %3673 = vmatpush.msra.mxu0 %v3658
    %3674 = vmatpush.msra.mxu0 %v3655
    %3675 = vmatpush.msra.mxu0 %v3652
    %3676 = vmatpush.msra.mxu0 %v3649
    %3677 = vmatpush.msra.mxu0 %v3646
    %3678 = vmatpush.msra.mxu0 %v3643
    %3679 = vmatpush.msra.mxu0 %v3640
    %3680 = vmatpush.msra.mxu0 %v3637
    %3681 = vmatpush.msra.mxu0 %v3634
    %3682 = vmatpush.msra.mxu0 %v3631
    %3683 = vmatpush.msra.mxu0 %v3628
    %3684 = vmatpush.msra.mxu0 %v3625
    %3685 = vmatpush.msra.mxu0 %v3622
    %3686 = vmatmul.f32.gmra.mxu0 %v3617
    %v3687 = vpop.f32.mrf.mxu0
    %v3688 = vadd.f32 0.0, %v3687
    %3689 = vdwg.mxu0
    %3690 = vmatpush.msra.mxu0 %v3668
    %3691 = vmatpush.msra.mxu0 %v3665
    %3692 = vmatpush.msra.mxu0 %v3662
    %3693 = vmatpush.msra.mxu0 %v3659
    %3694 = vmatpush.msra.mxu0 %v3656
    %3695 = vmatpush.msra.mxu0 %v3653
    %3696 = vmatpush.msra.mxu0 %v3650
    %3697 = vmatpush.msra.mxu0 %v3647
    %3698 = vmatpush.msra.mxu0 %v3644
    %3699 = vmatpush.msra.mxu0 %v3641
    %3700 = vmatpush.msra.mxu0 %v3638
    %3701 = vmatpush.msra.mxu0 %v3635
    %3702 = vmatpush.msra.mxu0 %v3632
    %3703 = vmatpush.msra.mxu0 %v3629
    %3704 = vmatpush.msra.mxu0 %v3626
    %3705 = vmatpush.msra.mxu0 %v3623
    %3706 = vmatmul.f32.gmra.mxu0 %v3617
    %v3707 = vpop.f32.mrf.mxu0
    %v3708 = vadd.f32 0.0, %v3707
    %3709 = vdwg.mxu0
    %3710 = vmatpush.msra.mxu0 %v3669
    %3711 = vmatpush.msra.mxu0 %v3666
    %3712 = vmatpush.msra.mxu0 %v3663
    %3713 = vmatpush.msra.mxu0 %v3660
    %3714 = vmatpush.msra.mxu0 %v3657
    %3715 = vmatpush.msra.mxu0 %v3654
    %3716 = vmatpush.msra.mxu0 %v3651
    %3717 = vmatpush.msra.mxu0 %v3648
    %3718 = vmatpush.msra.mxu0 %v3645
    %3719 = vmatpush.msra.mxu0 %v3642
    %3720 = vmatpush.msra.mxu0 %v3639
    %3721 = vmatpush.msra.mxu0 %v3636
    %3722 = vmatpush.msra.mxu0 %v3633
    %3723 = vmatpush.msra.mxu0 %v3630
    %3724 = vmatpush.msra.mxu0 %v3627
    %3725 = vmatpush.msra.mxu0 %v3624
    %3726 = vmatmul.f32.gmra.mxu0 %v3617
    %v3727 = vpop.f32.mrf.mxu0
    %v3728 = vadd.f32 0.0, %v3727
    %3729 = vdwg.mxu0
    %v3730 = vadd.f32 %v3619, %v3688
    %v3731 = vadd.f32 %v3620, %v3708
    %v3732 = vxor.u32 %v3730, 2147483648
    %v3733 = vxor.u32 %v3731, 2147483648
    %v3734 = vmul.f32 %v3732, 1.442695
    %v3735 = vpow.pop %v3734
    %v3736 = vmul.f32 %v3733, 1.442695
    %v3737 = vpow.pop %v3736
    %v3738 = vadd.f32 %v3735, 1.0
    %v3739 = vadd.f32 %v3737, 1.0
    %v3740 = vrcp.pop %v3738
    %v3741 = vmul.f32 %v3738, %v3740
    %v3742 = vsub.f32 1.0, %v3741
    %v3743 = vmul.f32 %v3740, %v3742
    %v3744 = vadd.f32 %v3740, %v3743
    %vm3745 = vweird.f32 %v3738
    %vm3746 = vweird.f32 %v3740
    %vm3747 = vmor %vm3745, %vm3746
    %v3748 = vsel %vm3747, %v3740, %v3744
    %v3749 = vand.u32 2147483647, %v3738
    %vm3750 = vcmp.eq.f32.partialorder %v3749, 8.507059e+37
    %v3751 = vand.u32 %v3738, 2147483648
    %v3752 = vor.u32 1.1754944e-38, %v3751
    %v3753 = vsel %vm3750, %v3752, %v3748
    %v3754 = vmul.f32 1.0, %v3753
    %v3755 = vrcp.pop %v3739
    %v3756 = vmul.f32 %v3739, %v3755
    %v3757 = vsub.f32 1.0, %v3756
    %v3758 = vmul.f32 %v3755, %v3757
    %v3759 = vadd.f32 %v3755, %v3758
    %vm3760 = vweird.f32 %v3739
    %vm3761 = vweird.f32 %v3755
    %vm3762 = vmor %vm3760, %vm3761
    %v3763 = vsel %vm3762, %v3755, %v3759
    %v3764 = vand.u32 2147483647, %v3739
    %vm3765 = vcmp.eq.f32.partialorder %v3764, 8.507059e+37
    %v3766 = vand.u32 %v3739, 2147483648
    %v3767 = vor.u32 1.1754944e-38, %v3766
    %v3768 = vsel %vm3765, %v3767, %v3763
    %v3769 = vmul.f32 1.0, %v3768
    %v3770 = vadd.f32 %v3728, %v3089
    %v3771 = vmul.f32 %v3754, %v3770
    %v3772 = vadd.f32 %v3621, %v3771
    %v3773 = vtanh.pop %v3772
    %v3774 = vsub.f32 1.0, %v3769
    %v3775 = vmul.f32 %v3774, %v3773
    %v3776 = vmul.f32 %v3769, %v3617
    %v3777 = vadd.f32 %v3775, %v3776
    %3778 = vst [vmem:[%s999] sm:$0xff] %v3777
    %v3779 = vld [vmem:[%s1001] sm:$0xff]
    %v3780 = vld [vmem:[%s1001 + $0x8] sm:$0xff]
    %v3781 = vld [vmem:[%s1001 + $0x10] sm:$0xff]
    %v3782 = vld [vmem:[%s3141] sm:$0xff]
    %v3783 = vld [vmem:[%s3141 + $0x8] sm:$0xff]
    %v3784 = vld [vmem:[%s3141 + $0x10] sm:$0xff]
    %v3785 = vld [vmem:[%s3141 + $0x18] sm:$0xff]
    %v3786 = vld [vmem:[%s3141 + $0x20] sm:$0xff]
    %v3787 = vld [vmem:[%s3141 + $0x28] sm:$0xff]
    %v3788 = vld [vmem:[%s3141 + $0x30] sm:$0xff]
    %v3789 = vld [vmem:[%s3141 + $0x38] sm:$0xff]
    %v3790 = vld [vmem:[%s3141 + $0x40] sm:$0xff]
    %v3791 = vld [vmem:[%s3141 + $0x48] sm:$0xff]
    %v3792 = vld [vmem:[%s3141 + $0x50] sm:$0xff]
    %v3793 = vld [vmem:[%s3141 + $0x58] sm:$0xff]
    %v3794 = vld [vmem:[%s3141 + $0x60] sm:$0xff]
    %v3795 = vld [vmem:[%s3141 + $0x68] sm:$0xff]
    %v3796 = vld [vmem:[%s3141 + $0x70] sm:$0xff]
    %v3797 = vld [vmem:[%s3141 + $0x78] sm:$0xff]
    %v3798 = vld [vmem:[%s3141 + $0x80] sm:$0xff]
    %v3799 = vld [vmem:[%s3141 + $0x88] sm:$0xff]
    %v3800 = vld [vmem:[%s3141 + $0x90] sm:$0xff]
    %v3801 = vld [vmem:[%s3141 + $0x98] sm:$0xff]
    %v3802 = vld [vmem:[%s3141 + $0xa0] sm:$0xff]
    %v3803 = vld [vmem:[%s3141 + $0xa8] sm:$0xff]
    %v3804 = vld [vmem:[%s3141 + $0xb0] sm:$0xff]
    %v3805 = vld [vmem:[%s3141 + $0xb8] sm:$0xff]
    %v3806 = vld [vmem:[%s3141 + $0xc0] sm:$0xff]
    %v3807 = vld [vmem:[%s3141 + $0xc8] sm:$0xff]
    %v3808 = vld [vmem:[%s3141 + $0xd0] sm:$0xff]
    %v3809 = vld [vmem:[%s3141 + $0xd8] sm:$0xff]
    %v3810 = vld [vmem:[%s3141 + $0xe0] sm:$0xff]
    %v3811 = vld [vmem:[%s3141 + $0xe8] sm:$0xff]
    %v3812 = vld [vmem:[%s3141 + $0xf0] sm:$0xff]
    %v3813 = vld [vmem:[%s3141 + $0xf8] sm:$0xff]
    %v3814 = vld [vmem:[%s3141 + $0x100] sm:$0xff]
    %v3815 = vld [vmem:[%s3141 + $0x108] sm:$0xff]
    %v3816 = vld [vmem:[%s3141 + $0x110] sm:$0xff]
    %v3817 = vld [vmem:[%s3141 + $0x118] sm:$0xff]
    %v3818 = vld [vmem:[%s3141 + $0x120] sm:$0xff]
    %v3819 = vld [vmem:[%s3141 + $0x128] sm:$0xff]
    %v3820 = vld [vmem:[%s3141 + $0x130] sm:$0xff]
    %v3821 = vld [vmem:[%s3141 + $0x138] sm:$0xff]
    %v3822 = vld [vmem:[%s3141 + $0x140] sm:$0xff]
    %v3823 = vld [vmem:[%s3141 + $0x148] sm:$0xff]
    %v3824 = vld [vmem:[%s3141 + $0x150] sm:$0xff]
    %v3825 = vld [vmem:[%s3141 + $0x158] sm:$0xff]
    %v3826 = vld [vmem:[%s3141 + $0x160] sm:$0xff]
    %v3827 = vld [vmem:[%s3141 + $0x168] sm:$0xff]
    %v3828 = vld [vmem:[%s3141 + $0x170] sm:$0xff]
    %v3829 = vld [vmem:[%s3141 + $0x178] sm:$0xff]
    %3830 = vmatpush.msra.mxu0 %v3827
    %3831 = vmatpush.msra.mxu0 %v3824
    %3832 = vmatpush.msra.mxu0 %v3821
    %3833 = vmatpush.msra.mxu0 %v3818
    %3834 = vmatpush.msra.mxu0 %v3815
    %3835 = vmatpush.msra.mxu0 %v3812
    %3836 = vmatpush.msra.mxu0 %v3809
    %3837 = vmatpush.msra.mxu0 %v3806
    %3838 = vmatpush.msra.mxu0 %v3803
    %3839 = vmatpush.msra.mxu0 %v3800
    %3840 = vmatpush.msra.mxu0 %v3797
    %3841 = vmatpush.msra.mxu0 %v3794
    %3842 = vmatpush.msra.mxu0 %v3791
    %3843 = vmatpush.msra.mxu0 %v3788
    %3844 = vmatpush.msra.mxu0 %v3785
    %3845 = vmatpush.msra.mxu0 %v3782
    %3846 = vmatmul.f32.gmra.mxu0 %v3777
    %v3847 = vpop.f32.mrf.mxu0
    %v3848 = vadd.f32 0.0, %v3847
    %3849 = vdwg.mxu0
    %3850 = vmatpush.msra.mxu0 %v3828
    %3851 = vmatpush.msra.mxu0 %v3825
    %3852 = vmatpush.msra.mxu0 %v3822
    %3853 = vmatpush.msra.mxu0 %v3819
    %3854 = vmatpush.msra.mxu0 %v3816
    %3855 = vmatpush.msra.mxu0 %v3813
    %3856 = vmatpush.msra.mxu0 %v3810
    %3857 = vmatpush.msra.mxu0 %v3807
    %3858 = vmatpush.msra.mxu0 %v3804
    %3859 = vmatpush.msra.mxu0 %v3801
    %3860 = vmatpush.msra.mxu0 %v3798
    %3861 = vmatpush.msra.mxu0 %v3795
    %3862 = vmatpush.msra.mxu0 %v3792
    %3863 = vmatpush.msra.mxu0 %v3789
    %3864 = vmatpush.msra.mxu0 %v3786
    %3865 = vmatpush.msra.mxu0 %v3783
    %3866 = vmatmul.f32.gmra.mxu0 %v3777
    %v3867 = vpop.f32.mrf.mxu0
    %v3868 = vadd.f32 0.0, %v3867
    %3869 = vdwg.mxu0
    %3870 = vmatpush.msra.mxu0 %v3829
    %3871 = vmatpush.msra.mxu0 %v3826
    %3872 = vmatpush.msra.mxu0 %v3823
    %3873 = vmatpush.msra.mxu0 %v3820
    %3874 = vmatpush.msra.mxu0 %v3817
    %3875 = vmatpush.msra.mxu0 %v3814
    %3876 = vmatpush.msra.mxu0 %v3811
    %3877 = vmatpush.msra.mxu0 %v3808
    %3878 = vmatpush.msra.mxu0 %v3805
    %3879 = vmatpush.msra.mxu0 %v3802
    %3880 = vmatpush.msra.mxu0 %v3799
    %3881 = vmatpush.msra.mxu0 %v3796
    %3882 = vmatpush.msra.mxu0 %v3793
    %3883 = vmatpush.msra.mxu0 %v3790
    %3884 = vmatpush.msra.mxu0 %v3787
    %3885 = vmatpush.msra.mxu0 %v3784
    %3886 = vmatmul.f32.gmra.mxu0 %v3777
    %v3887 = vpop.f32.mrf.mxu0
    %v3888 = vadd.f32 0.0, %v3887
    %3889 = vdwg.mxu0
    %v3890 = vadd.f32 %v3779, %v3848
    %v3891 = vadd.f32 %v3780, %v3868
    %v3892 = vxor.u32 %v3890, 2147483648
    %v3893 = vxor.u32 %v3891, 2147483648
    %v3894 = vmul.f32 %v3892, 1.442695
    %v3895 = vpow.pop %v3894
    %v3896 = vmul.f32 %v3893, 1.442695
    %v3897 = vpow.pop %v3896
    %v3898 = vadd.f32 %v3895, 1.0
    %v3899 = vadd.f32 %v3897, 1.0
    %v3900 = vrcp.pop %v3898
    %v3901 = vmul.f32 %v3898, %v3900
    %v3902 = vsub.f32 1.0, %v3901
    %v3903 = vmul.f32 %v3900, %v3902
    %v3904 = vadd.f32 %v3900, %v3903
    %vm3905 = vweird.f32 %v3898
    %vm3906 = vweird.f32 %v3900
    %vm3907 = vmor %vm3905, %vm3906
    %v3908 = vsel %vm3907, %v3900, %v3904
    %v3909 = vand.u32 2147483647, %v3898
    %vm3910 = vcmp.eq.f32.partialorder %v3909, 8.507059e+37
    %v3911 = vand.u32 %v3898, 2147483648
    %v3912 = vor.u32 1.1754944e-38, %v3911
    %v3913 = vsel %vm3910, %v3912, %v3908
    %v3914 = vmul.f32 1.0, %v3913
    %v3915 = vrcp.pop %v3899
    %v3916 = vmul.f32 %v3899, %v3915
    %v3917 = vsub.f32 1.0, %v3916
    %v3918 = vmul.f32 %v3915, %v3917
    %v3919 = vadd.f32 %v3915, %v3918
    %vm3920 = vweird.f32 %v3899
    %vm3921 = vweird.f32 %v3915
    %vm3922 = vmor %vm3920, %vm3921
    %v3923 = vsel %vm3922, %v3915, %v3919
    %v3924 = vand.u32 2147483647, %v3899
    %vm3925 = vcmp.eq.f32.partialorder %v3924, 8.507059e+37
    %v3926 = vand.u32 %v3899, 2147483648
    %v3927 = vor.u32 1.1754944e-38, %v3926
    %v3928 = vsel %vm3925, %v3927, %v3923
    %v3929 = vmul.f32 1.0, %v3928
    %v3930 = vadd.f32 %v3888, %v3089
    %v3931 = vmul.f32 %v3914, %v3930
    %v3932 = vadd.f32 %v3781, %v3931
    %v3933 = vtanh.pop %v3932
    %v3934 = vsub.f32 1.0, %v3929
    %v3935 = vmul.f32 %v3934, %v3933
    %v3936 = vmul.f32 %v3929, %v3777
    %v3937 = vadd.f32 %v3935, %v3936
    %3938 = vst [vmem:[%s1161] sm:$0xff] %v3937
    %v3939 = vld [vmem:[%s1163] sm:$0xff]
    %v3940 = vld [vmem:[%s1163 + $0x8] sm:$0xff]
    %v3941 = vld [vmem:[%s1163 + $0x10] sm:$0xff]
    %v3942 = vld [vmem:[%s3141] sm:$0xff]
    %v3943 = vld [vmem:[%s3141 + $0x8] sm:$0xff]
    %v3944 = vld [vmem:[%s3141 + $0x10] sm:$0xff]
    %v3945 = vld [vmem:[%s3141 + $0x18] sm:$0xff]
    %v3946 = vld [vmem:[%s3141 + $0x20] sm:$0xff]
    %v3947 = vld [vmem:[%s3141 + $0x28] sm:$0xff]
    %v3948 = vld [vmem:[%s3141 + $0x30] sm:$0xff]
    %v3949 = vld [vmem:[%s3141 + $0x38] sm:$0xff]
    %v3950 = vld [vmem:[%s3141 + $0x40] sm:$0xff]
    %v3951 = vld [vmem:[%s3141 + $0x48] sm:$0xff]
    %v3952 = vld [vmem:[%s3141 + $0x50] sm:$0xff]
    %v3953 = vld [vmem:[%s3141 + $0x58] sm:$0xff]
    %v3954 = vld [vmem:[%s3141 + $0x60] sm:$0xff]
    %v3955 = vld [vmem:[%s3141 + $0x68] sm:$0xff]
    %v3956 = vld [vmem:[%s3141 + $0x70] sm:$0xff]
    %v3957 = vld [vmem:[%s3141 + $0x78] sm:$0xff]
    %v3958 = vld [vmem:[%s3141 + $0x80] sm:$0xff]
    %v3959 = vld [vmem:[%s3141 + $0x88] sm:$0xff]
    %v3960 = vld [vmem:[%s3141 + $0x90] sm:$0xff]
    %v3961 = vld [vmem:[%s3141 + $0x98] sm:$0xff]
    %v3962 = vld [vmem:[%s3141 + $0xa0] sm:$0xff]
    %v3963 = vld [vmem:[%s3141 + $0xa8] sm:$0xff]
    %v3964 = vld [vmem:[%s3141 + $0xb0] sm:$0xff]
    %v3965 = vld [vmem:[%s3141 + $0xb8] sm:$0xff]
    %v3966 = vld [vmem:[%s3141 + $0xc0] sm:$0xff]
    %v3967 = vld [vmem:[%s3141 + $0xc8] sm:$0xff]
    %v3968 = vld [vmem:[%s3141 + $0xd0] sm:$0xff]
    %v3969 = vld [vmem:[%s3141 + $0xd8] sm:$0xff]
    %v3970 = vld [vmem:[%s3141 + $0xe0] sm:$0xff]
    %v3971 = vld [vmem:[%s3141 + $0xe8] sm:$0xff]
    %v3972 = vld [vmem:[%s3141 + $0xf0] sm:$0xff]
    %v3973 = vld [vmem:[%s3141 + $0xf8] sm:$0xff]
    %v3974 = vld [vmem:[%s3141 + $0x100] sm:$0xff]
    %v3975 = vld [vmem:[%s3141 + $0x108] sm:$0xff]
    %v3976 = vld [vmem:[%s3141 + $0x110] sm:$0xff]
    %v3977 = vld [vmem:[%s3141 + $0x118] sm:$0xff]
    %v3978 = vld [vmem:[%s3141 + $0x120] sm:$0xff]
    %v3979 = vld [vmem:[%s3141 + $0x128] sm:$0xff]
    %v3980 = vld [vmem:[%s3141 + $0x130] sm:$0xff]
    %v3981 = vld [vmem:[%s3141 + $0x138] sm:$0xff]
    %v3982 = vld [vmem:[%s3141 + $0x140] sm:$0xff]
    %v3983 = vld [vmem:[%s3141 + $0x148] sm:$0xff]
    %v3984 = vld [vmem:[%s3141 + $0x150] sm:$0xff]
    %v3985 = vld [vmem:[%s3141 + $0x158] sm:$0xff]
    %v3986 = vld [vmem:[%s3141 + $0x160] sm:$0xff]
    %v3987 = vld [vmem:[%s3141 + $0x168] sm:$0xff]
    %v3988 = vld [vmem:[%s3141 + $0x170] sm:$0xff]
    %v3989 = vld [vmem:[%s3141 + $0x178] sm:$0xff]
    %3990 = vmatpush.msra.mxu0 %v3987
    %3991 = vmatpush.msra.mxu0 %v3984
    %3992 = vmatpush.msra.mxu0 %v3981
    %3993 = vmatpush.msra.mxu0 %v3978
    %3994 = vmatpush.msra.mxu0 %v3975
    %3995 = vmatpush.msra.mxu0 %v3972
    %3996 = vmatpush.msra.mxu0 %v3969
    %3997 = vmatpush.msra.mxu0 %v3966
    %3998 = vmatpush.msra.mxu0 %v3963
    %3999 = vmatpush.msra.mxu0 %v3960
    %4000 = vmatpush.msra.mxu0 %v3957
    %4001 = vmatpush.msra.mxu0 %v3954
    %4002 = vmatpush.msra.mxu0 %v3951
    %4003 = vmatpush.msra.mxu0 %v3948
    %4004 = vmatpush.msra.mxu0 %v3945
    %4005 = vmatpush.msra.mxu0 %v3942
    %4006 = vmatmul.f32.gmra.mxu0 %v3937
    %v4007 = vpop.f32.mrf.mxu0
    %v4008 = vadd.f32 0.0, %v4007
    %4009 = vdwg.mxu0
    %4010 = vmatpush.msra.mxu0 %v3988
    %4011 = vmatpush.msra.mxu0 %v3985
    %4012 = vmatpush.msra.mxu0 %v3982
    %4013 = vmatpush.msra.mxu0 %v3979
    %4014 = vmatpush.msra.mxu0 %v3976
    %4015 = vmatpush.msra.mxu0 %v3973
    %4016 = vmatpush.msra.mxu0 %v3970
    %4017 = vmatpush.msra.mxu0 %v3967
    %4018 = vmatpush.msra.mxu0 %v3964
    %4019 = vmatpush.msra.mxu0 %v3961
    %4020 = vmatpush.msra.mxu0 %v3958
    %4021 = vmatpush.msra.mxu0 %v3955
    %4022 = vmatpush.msra.mxu0 %v3952
    %4023 = vmatpush.msra.mxu0 %v3949
    %4024 = vmatpush.msra.mxu0 %v3946
    %4025 = vmatpush.msra.mxu0 %v3943
    %4026 = vmatmul.f32.gmra.mxu0 %v3937
    %v4027 = vpop.f32.mrf.mxu0
    %v4028 = vadd.f32 0.0, %v4027
    %4029 = vdwg.mxu0
    %4030 = vmatpush.msra.mxu0 %v3989
    %4031 = vmatpush.msra.mxu0 %v3986
    %4032 = vmatpush.msra.mxu0 %v3983
    %4033 = vmatpush.msra.mxu0 %v3980
    %4034 = vmatpush.msra.mxu0 %v3977
    %4035 = vmatpush.msra.mxu0 %v3974
    %4036 = vmatpush.msra.mxu0 %v3971
    %4037 = vmatpush.msra.mxu0 %v3968
    %4038 = vmatpush.msra.mxu0 %v3965
    %4039 = vmatpush.msra.mxu0 %v3962
    %4040 = vmatpush.msra.mxu0 %v3959
    %4041 = vmatpush.msra.mxu0 %v3956
    %4042 = vmatpush.msra.mxu0 %v3953
    %4043 = vmatpush.msra.mxu0 %v3950
    %4044 = vmatpush.msra.mxu0 %v3947
    %4045 = vmatpush.msra.mxu0 %v3944
    %4046 = vmatmul.f32.gmra.mxu0 %v3937
    %v4047 = vpop.f32.mrf.mxu0
    %v4048 = vadd.f32 0.0, %v4047
    %4049 = vdwg.mxu0
    %v4050 = vadd.f32 %v3939, %v4008
    %v4051 = vadd.f32 %v3940, %v4028
    %v4052 = vxor.u32 %v4050, 2147483648
    %v4053 = vxor.u32 %v4051, 2147483648
    %v4054 = vmul.f32 %v4052, 1.442695
    %v4055 = vpow.pop %v4054
    %v4056 = vmul.f32 %v4053, 1.442695
    %v4057 = vpow.pop %v4056
    %v4058 = vadd.f32 %v4055, 1.0
    %v4059 = vadd.f32 %v4057, 1.0
    %v4060 = vrcp.pop %v4058
    %v4061 = vmul.f32 %v4058, %v4060
    %v4062 = vsub.f32 1.0, %v4061
    %v4063 = vmul.f32 %v4060, %v4062
    %v4064 = vadd.f32 %v4060, %v4063
    %vm4065 = vweird.f32 %v4058
    %vm4066 = vweird.f32 %v4060
    %vm4067 = vmor %vm4065, %vm4066
    %v4068 = vsel %vm4067, %v4060, %v4064
    %v4069 = vand.u32 2147483647, %v4058
    %vm4070 = vcmp.eq.f32.partialorder %v4069, 8.507059e+37
    %v4071 = vand.u32 %v4058, 2147483648
    %v4072 = vor.u32 1.1754944e-38, %v4071
    %v4073 = vsel %vm4070, %v4072, %v4068
    %v4074 = vmul.f32 1.0, %v4073
    %v4075 = vrcp.pop %v4059
    %v4076 = vmul.f32 %v4059, %v4075
    %v4077 = vsub.f32 1.0, %v4076
    %v4078 = vmul.f32 %v4075, %v4077
    %v4079 = vadd.f32 %v4075, %v4078
    %vm4080 = vweird.f32 %v4059
    %vm4081 = vweird.f32 %v4075
    %vm4082 = vmor %vm4080, %vm4081
    %v4083 = vsel %vm4082, %v4075, %v4079
    %v4084 = vand.u32 2147483647, %v4059
    %vm4085 = vcmp.eq.f32.partialorder %v4084, 8.507059e+37
    %v4086 = vand.u32 %v4059, 2147483648
    %v4087 = vor.u32 1.1754944e-38, %v4086
    %v4088 = vsel %vm4085, %v4087, %v4083
    %v4089 = vmul.f32 1.0, %v4088
    %v4090 = vadd.f32 %v4048, %v3089
    %v4091 = vmul.f32 %v4074, %v4090
    %v4092 = vadd.f32 %v3941, %v4091
    %v4093 = vtanh.pop %v4092
    %v4094 = vsub.f32 1.0, %v4089
    %v4095 = vmul.f32 %v4094, %v4093
    %v4096 = vmul.f32 %v4089, %v3937
    %v4097 = vadd.f32 %v4095, %v4096
    %4098 = vst [vmem:[%s1323] sm:$0xff] %v4097
    %v4099 = vld [vmem:[%s1325] sm:$0xff]
    %v4100 = vld [vmem:[%s1325 + $0x8] sm:$0xff]
    %v4101 = vld [vmem:[%s1325 + $0x10] sm:$0xff]
    %v4102 = vld [vmem:[%s3141] sm:$0xff]
    %v4103 = vld [vmem:[%s3141 + $0x8] sm:$0xff]
    %v4104 = vld [vmem:[%s3141 + $0x10] sm:$0xff]
    %v4105 = vld [vmem:[%s3141 + $0x18] sm:$0xff]
    %v4106 = vld [vmem:[%s3141 + $0x20] sm:$0xff]
    %v4107 = vld [vmem:[%s3141 + $0x28] sm:$0xff]
    %v4108 = vld [vmem:[%s3141 + $0x30] sm:$0xff]
    %v4109 = vld [vmem:[%s3141 + $0x38] sm:$0xff]
    %v4110 = vld [vmem:[%s3141 + $0x40] sm:$0xff]
    %v4111 = vld [vmem:[%s3141 + $0x48] sm:$0xff]
    %v4112 = vld [vmem:[%s3141 + $0x50] sm:$0xff]
    %v4113 = vld [vmem:[%s3141 + $0x58] sm:$0xff]
    %v4114 = vld [vmem:[%s3141 + $0x60] sm:$0xff]
    %v4115 = vld [vmem:[%s3141 + $0x68] sm:$0xff]
    %v4116 = vld [vmem:[%s3141 + $0x70] sm:$0xff]
    %v4117 = vld [vmem:[%s3141 + $0x78] sm:$0xff]
    %v4118 = vld [vmem:[%s3141 + $0x80] sm:$0xff]
    %v4119 = vld [vmem:[%s3141 + $0x88] sm:$0xff]
    %v4120 = vld [vmem:[%s3141 + $0x90] sm:$0xff]
    %v4121 = vld [vmem:[%s3141 + $0x98] sm:$0xff]
    %v4122 = vld [vmem:[%s3141 + $0xa0] sm:$0xff]
    %v4123 = vld [vmem:[%s3141 + $0xa8] sm:$0xff]
    %v4124 = vld [vmem:[%s3141 + $0xb0] sm:$0xff]
    %v4125 = vld [vmem:[%s3141 + $0xb8] sm:$0xff]
    %v4126 = vld [vmem:[%s3141 + $0xc0] sm:$0xff]
    %v4127 = vld [vmem:[%s3141 + $0xc8] sm:$0xff]
    %v4128 = vld [vmem:[%s3141 + $0xd0] sm:$0xff]
    %v4129 = vld [vmem:[%s3141 + $0xd8] sm:$0xff]
    %v4130 = vld [vmem:[%s3141 + $0xe0] sm:$0xff]
    %v4131 = vld [vmem:[%s3141 + $0xe8] sm:$0xff]
    %v4132 = vld [vmem:[%s3141 + $0xf0] sm:$0xff]
    %v4133 = vld [vmem:[%s3141 + $0xf8] sm:$0xff]
    %v4134 = vld [vmem:[%s3141 + $0x100] sm:$0xff]
    %v4135 = vld [vmem:[%s3141 + $0x108] sm:$0xff]
    %v4136 = vld [vmem:[%s3141 + $0x110] sm:$0xff]
    %v4137 = vld [vmem:[%s3141 + $0x118] sm:$0xff]
    %v4138 = vld [vmem:[%s3141 + $0x120] sm:$0xff]
    %v4139 = vld [vmem:[%s3141 + $0x128] sm:$0xff]
    %v4140 = vld [vmem:[%s3141 + $0x130] sm:$0xff]
    %v4141 = vld [vmem:[%s3141 + $0x138] sm:$0xff]
    %v4142 = vld [vmem:[%s3141 + $0x140] sm:$0xff]
    %v4143 = vld [vmem:[%s3141 + $0x148] sm:$0xff]
    %v4144 = vld [vmem:[%s3141 + $0x150] sm:$0xff]
    %v4145 = vld [vmem:[%s3141 + $0x158] sm:$0xff]
    %v4146 = vld [vmem:[%s3141 + $0x160] sm:$0xff]
    %v4147 = vld [vmem:[%s3141 + $0x168] sm:$0xff]
    %v4148 = vld [vmem:[%s3141 + $0x170] sm:$0xff]
    %v4149 = vld [vmem:[%s3141 + $0x178] sm:$0xff]
    %4150 = vmatpush.msra.mxu0 %v4147
    %4151 = vmatpush.msra.mxu0 %v4144
    %4152 = vmatpush.msra.mxu0 %v4141
    %4153 = vmatpush.msra.mxu0 %v4138
    %4154 = vmatpush.msra.mxu0 %v4135
    %4155 = vmatpush.msra.mxu0 %v4132
    %4156 = vmatpush.msra.mxu0 %v4129
    %4157 = vmatpush.msra.mxu0 %v4126
    %4158 = vmatpush.msra.mxu0 %v4123
    %4159 = vmatpush.msra.mxu0 %v4120
    %4160 = vmatpush.msra.mxu0 %v4117
    %4161 = vmatpush.msra.mxu0 %v4114
    %4162 = vmatpush.msra.mxu0 %v4111
    %4163 = vmatpush.msra.mxu0 %v4108
    %4164 = vmatpush.msra.mxu0 %v4105
    %4165 = vmatpush.msra.mxu0 %v4102
    %4166 = vmatmul.f32.gmra.mxu0 %v4097
    %v4167 = vpop.f32.mrf.mxu0
    %v4168 = vadd.f32 0.0, %v4167
    %4169 = vdwg.mxu0
    %4170 = vmatpush.msra.mxu0 %v4148
    %4171 = vmatpush.msra.mxu0 %v4145
    %4172 = vmatpush.msra.mxu0 %v4142
    %4173 = vmatpush.msra.mxu0 %v4139
    %4174 = vmatpush.msra.mxu0 %v4136
    %4175 = vmatpush.msra.mxu0 %v4133
    %4176 = vmatpush.msra.mxu0 %v4130
    %4177 = vmatpush.msra.mxu0 %v4127
    %4178 = vmatpush.msra.mxu0 %v4124
    %4179 = vmatpush.msra.mxu0 %v4121
    %4180 = vmatpush.msra.mxu0 %v4118
    %4181 = vmatpush.msra.mxu0 %v4115
    %4182 = vmatpush.msra.mxu0 %v4112
    %4183 = vmatpush.msra.mxu0 %v4109
    %4184 = vmatpush.msra.mxu0 %v4106
    %4185 = vmatpush.msra.mxu0 %v4103
    %4186 = vmatmul.f32.gmra.mxu0 %v4097
    %v4187 = vpop.f32.mrf.mxu0
    %v4188 = vadd.f32 0.0, %v4187
    %4189 = vdwg.mxu0
    %4190 = vmatpush.msra.mxu0 %v4149
    %4191 = vmatpush.msra.mxu0 %v4146
    %4192 = vmatpush.msra.mxu0 %v4143
    %4193 = vmatpush.msra.mxu0 %v4140
    %4194 = vmatpush.msra.mxu0 %v4137
    %4195 = vmatpush.msra.mxu0 %v4134
    %4196 = vmatpush.msra.mxu0 %v4131
    %4197 = vmatpush.msra.mxu0 %v4128
    %4198 = vmatpush.msra.mxu0 %v4125
    %4199 = vmatpush.msra.mxu0 %v4122
    %4200 = vmatpush.msra.mxu0 %v4119
    %4201 = vmatpush.msra.mxu0 %v4116
    %4202 = vmatpush.msra.mxu0 %v4113
    %4203 = vmatpush.msra.mxu0 %v4110
    %4204 = vmatpush.msra.mxu0 %v4107
    %4205 = vmatpush.msra.mxu0 %v4104
    %4206 = vmatmul.f32.gmra.mxu0 %v4097
    %v4207 = vpop.f32.mrf.mxu0
    %v4208 = vadd.f32 0.0, %v4207
    %4209 = vdwg.mxu0
    %v4210 = vadd.f32 %v4099, %v4168
    %v4211 = vadd.f32 %v4100, %v4188
    %v4212 = vxor.u32 %v4210, 2147483648
    %v4213 = vxor.u32 %v4211, 2147483648
    %v4214 = vmul.f32 %v4212, 1.442695
    %v4215 = vpow.pop %v4214
    %v4216 = vmul.f32 %v4213, 1.442695
    %v4217 = vpow.pop %v4216
    %v4218 = vadd.f32 %v4215, 1.0
    %v4219 = vadd.f32 %v4217, 1.0
    %v4220 = vrcp.pop %v4218
    %v4221 = vmul.f32 %v4218, %v4220
    %v4222 = vsub.f32 1.0, %v4221
    %v4223 = vmul.f32 %v4220, %v4222
    %v4224 = vadd.f32 %v4220, %v4223
    %vm4225 = vweird.f32 %v4218
    %vm4226 = vweird.f32 %v4220
    %vm4227 = vmor %vm4225, %vm4226
    %v4228 = vsel %vm4227, %v4220, %v4224
    %v4229 = vand.u32 2147483647, %v4218
    %vm4230 = vcmp.eq.f32.partialorder %v4229, 8.507059e+37
    %v4231 = vand.u32 %v4218, 2147483648
    %v4232 = vor.u32 1.1754944e-38, %v4231
    %v4233 = vsel %vm4230, %v4232, %v4228
    %v4234 = vmul.f32 1.0, %v4233
    %v4235 = vrcp.pop %v4219
    %v4236 = vmul.f32 %v4219, %v4235
    %v4237 = vsub.f32 1.0, %v4236
    %v4238 = vmul.f32 %v4235, %v4237
    %v4239 = vadd.f32 %v4235, %v4238
    %vm4240 = vweird.f32 %v4219
    %vm4241 = vweird.f32 %v4235
    %vm4242 = vmor %vm4240, %vm4241
    %v4243 = vsel %vm4242, %v4235, %v4239
    %v4244 = vand.u32 2147483647, %v4219
    %vm4245 = vcmp.eq.f32.partialorder %v4244, 8.507059e+37
    %v4246 = vand.u32 %v4219, 2147483648
    %v4247 = vor.u32 1.1754944e-38, %v4246
    %v4248 = vsel %vm4245, %v4247, %v4243
    %v4249 = vmul.f32 1.0, %v4248
    %v4250 = vadd.f32 %v4208, %v3089
    %v4251 = vmul.f32 %v4234, %v4250
    %v4252 = vadd.f32 %v4101, %v4251
    %v4253 = vtanh.pop %v4252
    %v4254 = vsub.f32 1.0, %v4249
    %v4255 = vmul.f32 %v4254, %v4253
    %v4256 = vmul.f32 %v4249, %v4097
    %v4257 = vadd.f32 %v4255, %v4256
    %4258 = vst [vmem:[%s1485] sm:$0xff] %v4257
    %v4259 = vld [vmem:[#allocation2] sm:$0xff]
    %v4260 = vld [vmem:[#allocation2 + $0x8] sm:$0xff]
    %v4261 = vld [vmem:[#allocation2 + $0x10] sm:$0xff]
    %v4262 = vld [vmem:[#allocation2 + $0x18] sm:$0xff]
    %v4263 = vld [vmem:[#allocation2 + $0x20] sm:$0xff]
    %v4264 = vld [vmem:[#allocation2 + $0x28] sm:$0xff]
    %v4265 = vld [vmem:[#allocation2 + $0x30] sm:$0xff]
    %v4266 = vld [vmem:[#allocation2 + $0x38] sm:$0xff]
    %s4267 = scalar_lea.vmem [#allocation7], 1152
    %v4268 = vld [vmem:[%s4267] sm:$0xff]
    %v4269 = vld [vmem:[%s4267 + $0x8] sm:$0xff]
    %v4270 = vld [vmem:[%s4267 + $0x10] sm:$0xff]
    %v4271 = vld [vmem:[%s4267 + $0x18] sm:$0xff]
    %v4272 = vld [vmem:[%s4267 + $0x20] sm:$0xff]
    %v4273 = vld [vmem:[%s4267 + $0x28] sm:$0xff]
    %v4274 = vld [vmem:[%s4267 + $0x30] sm:$0xff]
    %v4275 = vld [vmem:[%s4267 + $0x38] sm:$0xff]
    %v4276 = vld [vmem:[%s4267 + $0x40] sm:$0xff]
    %v4277 = vld [vmem:[%s4267 + $0x48] sm:$0xff]
    %v4278 = vld [vmem:[%s4267 + $0x50] sm:$0xff]
    %v4279 = vld [vmem:[%s4267 + $0x58] sm:$0xff]
    %v4280 = vld [vmem:[%s4267 + $0x60] sm:$0xff]
    %v4281 = vld [vmem:[%s4267 + $0x68] sm:$0xff]
    %v4282 = vld [vmem:[%s4267 + $0x70] sm:$0xff]
    %v4283 = vld [vmem:[%s4267 + $0x78] sm:$0xff]
    %v4284 = vld [vmem:[%s4267 + $0x80] sm:$0xff]
    %v4285 = vld [vmem:[%s4267 + $0x88] sm:$0xff]
    %v4286 = vld [vmem:[%s4267 + $0x90] sm:$0xff]
    %v4287 = vld [vmem:[%s4267 + $0x98] sm:$0xff]
    %v4288 = vld [vmem:[%s4267 + $0xa0] sm:$0xff]
    %v4289 = vld [vmem:[%s4267 + $0xa8] sm:$0xff]
    %v4290 = vld [vmem:[%s4267 + $0xb0] sm:$0xff]
    %v4291 = vld [vmem:[%s4267 + $0xb8] sm:$0xff]
    %v4292 = vld [vmem:[%s4267 + $0xc0] sm:$0xff]
    %v4293 = vld [vmem:[%s4267 + $0xc8] sm:$0xff]
    %v4294 = vld [vmem:[%s4267 + $0xd0] sm:$0xff]
    %v4295 = vld [vmem:[%s4267 + $0xd8] sm:$0xff]
    %v4296 = vld [vmem:[%s4267 + $0xe0] sm:$0xff]
    %v4297 = vld [vmem:[%s4267 + $0xe8] sm:$0xff]
    %v4298 = vld [vmem:[%s4267 + $0xf0] sm:$0xff]
    %v4299 = vld [vmem:[%s4267 + $0xf8] sm:$0xff]
    %v4300 = vld [vmem:[%s4267 + $0x100] sm:$0xff]
    %v4301 = vld [vmem:[%s4267 + $0x108] sm:$0xff]
    %v4302 = vld [vmem:[%s4267 + $0x110] sm:$0xff]
    %v4303 = vld [vmem:[%s4267 + $0x118] sm:$0xff]
    %v4304 = vld [vmem:[%s4267 + $0x120] sm:$0xff]
    %v4305 = vld [vmem:[%s4267 + $0x128] sm:$0xff]
    %v4306 = vld [vmem:[%s4267 + $0x130] sm:$0xff]
    %v4307 = vld [vmem:[%s4267 + $0x138] sm:$0xff]
    %v4308 = vld [vmem:[%s4267 + $0x140] sm:$0xff]
    %v4309 = vld [vmem:[%s4267 + $0x148] sm:$0xff]
    %v4310 = vld [vmem:[%s4267 + $0x150] sm:$0xff]
    %v4311 = vld [vmem:[%s4267 + $0x158] sm:$0xff]
    %v4312 = vld [vmem:[%s4267 + $0x160] sm:$0xff]
    %v4313 = vld [vmem:[%s4267 + $0x168] sm:$0xff]
    %v4314 = vld [vmem:[%s4267 + $0x170] sm:$0xff]
    %v4315 = vld [vmem:[%s4267 + $0x178] sm:$0xff]
    %s4316 = scalar_lea.vmem [#allocation10], 9
    %v4317 = vld [vmem:[%s4316] sm:$0x7]
    %v4319 = vperm.slane %v4317, 0
    %v4320 = vperm.slane %v4317, 1
    %v4321 = vperm.slane %v4317, 2
    %4325 = vmatpush.msra.mxu0 %v4313
    %4326 = vmatpush.msra.mxu0 %v4310
    %4327 = vmatpush.msra.mxu0 %v4307
    %4328 = vmatpush.msra.mxu0 %v4304
    %4329 = vmatpush.msra.mxu0 %v4301
    %4330 = vmatpush.msra.mxu0 %v4298
    %4331 = vmatpush.msra.mxu0 %v4295
    %4332 = vmatpush.msra.mxu0 %v4292
    %4333 = vmatpush.msra.mxu0 %v4289
    %4334 = vmatpush.msra.mxu0 %v4286
    %4335 = vmatpush.msra.mxu0 %v4283
    %4336 = vmatpush.msra.mxu0 %v4280
    %4337 = vmatpush.msra.mxu0 %v4277
    %4338 = vmatpush.msra.mxu0 %v4274
    %4339 = vmatpush.msra.mxu0 %v4271
    %4340 = vmatpush.msra.mxu0 %v4268
    %4341 = vmatmul.f32.gmra.mxu0 %v4259
    %v4342 = vpop.f32.mrf.mxu0
    %v4343 = vadd.f32 %v4319, %v4342
    %4344 = vmatmul.f32.gmra.mxu0 %v4260
    %v4345 = vpop.f32.mrf.mxu0
    %v4346 = vadd.f32 %v4319, %v4345
    %4347 = vmatmul.f32.gmra.mxu0 %v4261
    %v4348 = vpop.f32.mrf.mxu0
    %v4349 = vadd.f32 %v4319, %v4348
    %4350 = vmatmul.f32.gmra.mxu0 %v4262
    %v4351 = vpop.f32.mrf.mxu0
    %v4352 = vadd.f32 %v4319, %v4351
    %4353 = vmatmul.f32.gmra.mxu0 %v4263
    %v4354 = vpop.f32.mrf.mxu0
    %v4355 = vadd.f32 %v4319, %v4354
    %4356 = vmatmul.f32.gmra.mxu0 %v4264
    %v4357 = vpop.f32.mrf.mxu0
    %v4358 = vadd.f32 %v4319, %v4357
    %4359 = vmatmul.f32.gmra.mxu0 %v4265
    %v4360 = vpop.f32.mrf.mxu0
    %v4361 = vadd.f32 %v4319, %v4360
    %4362 = vmatmul.f32.gmra.mxu0 %v4266
    %v4363 = vpop.f32.mrf.mxu0
    %v4364 = vadd.f32 %v4319, %v4363
    %4365 = vdwg.mxu0
    %4366 = vmatpush.msra.mxu0 %v4314
    %4367 = vmatpush.msra.mxu0 %v4311
    %4368 = vmatpush.msra.mxu0 %v4308
    %4369 = vmatpush.msra.mxu0 %v4305
    %4370 = vmatpush.msra.mxu0 %v4302
    %4371 = vmatpush.msra.mxu0 %v4299
    %4372 = vmatpush.msra.mxu0 %v4296
    %4373 = vmatpush.msra.mxu0 %v4293
    %4374 = vmatpush.msra.mxu0 %v4290
    %4375 = vmatpush.msra.mxu0 %v4287
    %4376 = vmatpush.msra.mxu0 %v4284
    %4377 = vmatpush.msra.mxu0 %v4281
    %4378 = vmatpush.msra.mxu0 %v4278
    %4379 = vmatpush.msra.mxu0 %v4275
    %4380 = vmatpush.msra.mxu0 %v4272
    %4381 = vmatpush.msra.mxu0 %v4269
    %4382 = vmatmul.f32.gmra.mxu0 %v4259
    %v4383 = vpop.f32.mrf.mxu0
    %v4384 = vadd.f32 %v4320, %v4383
    %4385 = vmatmul.f32.gmra.mxu0 %v4260
    %v4386 = vpop.f32.mrf.mxu0
    %v4387 = vadd.f32 %v4320, %v4386
    %4388 = vmatmul.f32.gmra.mxu0 %v4261
    %v4389 = vpop.f32.mrf.mxu0
    %v4390 = vadd.f32 %v4320, %v4389
    %4391 = vmatmul.f32.gmra.mxu0 %v4262
    %v4392 = vpop.f32.mrf.mxu0
    %v4393 = vadd.f32 %v4320, %v4392
    %4394 = vmatmul.f32.gmra.mxu0 %v4263
    %v4395 = vpop.f32.mrf.mxu0
    %v4396 = vadd.f32 %v4320, %v4395
    %4397 = vmatmul.f32.gmra.mxu0 %v4264
    %v4398 = vpop.f32.mrf.mxu0
    %v4399 = vadd.f32 %v4320, %v4398
    %4400 = vmatmul.f32.gmra.mxu0 %v4265
    %v4401 = vpop.f32.mrf.mxu0
    %v4402 = vadd.f32 %v4320, %v4401
    %4403 = vmatmul.f32.gmra.mxu0 %v4266
    %v4404 = vpop.f32.mrf.mxu0
    %v4405 = vadd.f32 %v4320, %v4404
    %4406 = vdwg.mxu0
    %4407 = vmatpush.msra.mxu0 %v4315
    %4408 = vmatpush.msra.mxu0 %v4312
    %4409 = vmatpush.msra.mxu0 %v4309
    %4410 = vmatpush.msra.mxu0 %v4306
    %4411 = vmatpush.msra.mxu0 %v4303
    %4412 = vmatpush.msra.mxu0 %v4300
    %4413 = vmatpush.msra.mxu0 %v4297
    %4414 = vmatpush.msra.mxu0 %v4294
    %4415 = vmatpush.msra.mxu0 %v4291
    %4416 = vmatpush.msra.mxu0 %v4288
    %4417 = vmatpush.msra.mxu0 %v4285
    %4418 = vmatpush.msra.mxu0 %v4282
    %4419 = vmatpush.msra.mxu0 %v4279
    %4420 = vmatpush.msra.mxu0 %v4276
    %4421 = vmatpush.msra.mxu0 %v4273
    %4422 = vmatpush.msra.mxu0 %v4270
    %4423 = vmatmul.f32.gmra.mxu0 %v4259
    %v4424 = vpop.f32.mrf.mxu0
    %v4425 = vadd.f32 %v4321, %v4424
    %4426 = vmatmul.f32.gmra.mxu0 %v4260
    %v4427 = vpop.f32.mrf.mxu0
    %v4428 = vadd.f32 %v4321, %v4427
    %4429 = vmatmul.f32.gmra.mxu0 %v4261
    %v4430 = vpop.f32.mrf.mxu0
    %v4431 = vadd.f32 %v4321, %v4430
    %4432 = vmatmul.f32.gmra.mxu0 %v4262
    %v4433 = vpop.f32.mrf.mxu0
    %v4434 = vadd.f32 %v4321, %v4433
    %4435 = vmatmul.f32.gmra.mxu0 %v4263
    %v4436 = vpop.f32.mrf.mxu0
    %v4437 = vadd.f32 %v4321, %v4436
    %4438 = vmatmul.f32.gmra.mxu0 %v4264
    %v4439 = vpop.f32.mrf.mxu0
    %v4440 = vadd.f32 %v4321, %v4439
    %4441 = vmatmul.f32.gmra.mxu0 %v4265
    %v4442 = vpop.f32.mrf.mxu0
    %v4443 = vadd.f32 %v4321, %v4442
    %4444 = vmatmul.f32.gmra.mxu0 %v4266
    %v4445 = vpop.f32.mrf.mxu0
    %v4446 = vadd.f32 %v4321, %v4445
    %4447 = vdwg.mxu0
    %4448 = vst [vmem:[#allocation3] sm:$0xff] %v4343
    %4449 = vst [vmem:[#allocation3 + $0x8] sm:$0xff] %v4384
    %4450 = vst [vmem:[#allocation3 + $0x10] sm:$0xff] %v4425
    %4451 = vst [vmem:[#allocation3 + $0x18] sm:$0xff] %v4346
    %4452 = vst [vmem:[#allocation3 + $0x20] sm:$0xff] %v4387
    %4453 = vst [vmem:[#allocation3 + $0x28] sm:$0xff] %v4428
    %4454 = vst [vmem:[#allocation3 + $0x30] sm:$0xff] %v4349
    %4455 = vst [vmem:[#allocation3 + $0x38] sm:$0xff] %v4390
    %4456 = vst [vmem:[#allocation3 + $0x40] sm:$0xff] %v4431
    %4457 = vst [vmem:[#allocation3 + $0x48] sm:$0xff] %v4352
    %4458 = vst [vmem:[#allocation3 + $0x50] sm:$0xff] %v4393
    %4459 = vst [vmem:[#allocation3 + $0x58] sm:$0xff] %v4434
    %4460 = vst [vmem:[#allocation3 + $0x60] sm:$0xff] %v4355
    %4461 = vst [vmem:[#allocation3 + $0x68] sm:$0xff] %v4396
    %4462 = vst [vmem:[#allocation3 + $0x70] sm:$0xff] %v4437
    %4463 = vst [vmem:[#allocation3 + $0x78] sm:$0xff] %v4358
    %4464 = vst [vmem:[#allocation3 + $0x80] sm:$0xff] %v4399
    %4465 = vst [vmem:[#allocation3 + $0x88] sm:$0xff] %v4440
    %4466 = vst [vmem:[#allocation3 + $0x90] sm:$0xff] %v4361
    %4467 = vst [vmem:[#allocation3 + $0x98] sm:$0xff] %v4402
    %4468 = vst [vmem:[#allocation3 + $0xa0] sm:$0xff] %v4443
    %4469 = vst [vmem:[#allocation3 + $0xa8] sm:$0xff] %v4364
    %4470 = vst [vmem:[#allocation3 + $0xb0] sm:$0xff] %v4405
    %4471 = vst [vmem:[#allocation3 + $0xb8] sm:$0xff] %v4446
    %s4472 = scalar_lea.vmem %s4, 3
    %v4473 = vld [vmem:[%s4472] sm:$0x1]
    %v4475 = vperm.slane %v4473, 0
    %v4477 = vld [vmem:[#allocation3] sm:$0xff]
    %v4478 = vld [vmem:[#allocation3 + $0x8] sm:$0xff]
    %v4479 = vld [vmem:[#allocation3 + $0x10] sm:$0xff]
    %v4480 = vxor.u32 %v4477, 2147483648
    %v4481 = vxor.u32 %v4478, 2147483648
    %v4482 = vmul.f32 %v4480, 1.442695
    %v4483 = vpow.pop %v4482
    %v4484 = vmul.f32 %v4481, 1.442695
    %v4485 = vpow.pop %v4484
    %v4486 = vadd.f32 %v4483, 1.0
    %v4487 = vadd.f32 %v4485, 1.0
    %v4488 = vrcp.pop %v4486
    %v4489 = vmul.f32 %v4486, %v4488
    %v4490 = vsub.f32 1.0, %v4489
    %v4491 = vmul.f32 %v4488, %v4490
    %v4492 = vadd.f32 %v4488, %v4491
    %vm4493 = vweird.f32 %v4486
    %vm4494 = vweird.f32 %v4488
    %vm4495 = vmor %vm4493, %vm4494
    %v4496 = vsel %vm4495, %v4488, %v4492
    %v4497 = vand.u32 2147483647, %v4486
    %vm4498 = vcmp.eq.f32.partialorder %v4497, 8.507059e+37
    %v4499 = vand.u32 %v4486, 2147483648
    %v4500 = vor.u32 1.1754944e-38, %v4499
    %v4501 = vsel %vm4498, %v4500, %v4496
    %v4502 = vmul.f32 1.0, %v4501
    %v4503 = vrcp.pop %v4487
    %v4504 = vmul.f32 %v4487, %v4503
    %v4505 = vsub.f32 1.0, %v4504
    %v4506 = vmul.f32 %v4503, %v4505
    %v4507 = vadd.f32 %v4503, %v4506
    %vm4508 = vweird.f32 %v4487
    %vm4509 = vweird.f32 %v4503
    %vm4510 = vmor %vm4508, %vm4509
    %v4511 = vsel %vm4510, %v4503, %v4507
    %v4512 = vand.u32 2147483647, %v4487
    %vm4513 = vcmp.eq.f32.partialorder %v4512, 8.507059e+37
    %v4514 = vand.u32 %v4487, 2147483648
    %v4515 = vor.u32 1.1754944e-38, %v4514
    %v4516 = vsel %vm4513, %v4515, %v4511
    %v4517 = vmul.f32 1.0, %v4516
    %v4518 = vmul.f32 %v4502, %v4475
    %v4519 = vadd.f32 %v4479, %v4518
    %v4520 = vtanh.pop %v4519
    %v4521 = vsub.f32 1.0, %v4517
    %v4522 = vmul.f32 %v4521, %v4520
    %4523 = vst [vmem:[#allocation2] sm:$0xff] %v4522
    %v4524 = vld [vmem:[%s353] sm:$0xff]
    %v4525 = vld [vmem:[%s353 + $0x8] sm:$0xff]
    %v4526 = vld [vmem:[%s353 + $0x10] sm:$0xff]
    %s4527 = scalar_lea.vmem [#allocation9], 1152
    %v4528 = vld [vmem:[%s4527] sm:$0xff]
    %v4529 = vld [vmem:[%s4527 + $0x8] sm:$0xff]
    %v4530 = vld [vmem:[%s4527 + $0x10] sm:$0xff]
    %v4531 = vld [vmem:[%s4527 + $0x18] sm:$0xff]
    %v4532 = vld [vmem:[%s4527 + $0x20] sm:$0xff]
    %v4533 = vld [vmem:[%s4527 + $0x28] sm:$0xff]
    %v4534 = vld [vmem:[%s4527 + $0x30] sm:$0xff]
    %v4535 = vld [vmem:[%s4527 + $0x38] sm:$0xff]
    %v4536 = vld [vmem:[%s4527 + $0x40] sm:$0xff]
    %v4537 = vld [vmem:[%s4527 + $0x48] sm:$0xff]
    %v4538 = vld [vmem:[%s4527 + $0x50] sm:$0xff]
    %v4539 = vld [vmem:[%s4527 + $0x58] sm:$0xff]
    %v4540 = vld [vmem:[%s4527 + $0x60] sm:$0xff]
    %v4541 = vld [vmem:[%s4527 + $0x68] sm:$0xff]
    %v4542 = vld [vmem:[%s4527 + $0x70] sm:$0xff]
    %v4543 = vld [vmem:[%s4527 + $0x78] sm:$0xff]
    %v4544 = vld [vmem:[%s4527 + $0x80] sm:$0xff]
    %v4545 = vld [vmem:[%s4527 + $0x88] sm:$0xff]
    %v4546 = vld [vmem:[%s4527 + $0x90] sm:$0xff]
    %v4547 = vld [vmem:[%s4527 + $0x98] sm:$0xff]
    %v4548 = vld [vmem:[%s4527 + $0xa0] sm:$0xff]
    %v4549 = vld [vmem:[%s4527 + $0xa8] sm:$0xff]
    %v4550 = vld [vmem:[%s4527 + $0xb0] sm:$0xff]
    %v4551 = vld [vmem:[%s4527 + $0xb8] sm:$0xff]
    %v4552 = vld [vmem:[%s4527 + $0xc0] sm:$0xff]
    %v4553 = vld [vmem:[%s4527 + $0xc8] sm:$0xff]
    %v4554 = vld [vmem:[%s4527 + $0xd0] sm:$0xff]
    %v4555 = vld [vmem:[%s4527 + $0xd8] sm:$0xff]
    %v4556 = vld [vmem:[%s4527 + $0xe0] sm:$0xff]
    %v4557 = vld [vmem:[%s4527 + $0xe8] sm:$0xff]
    %v4558 = vld [vmem:[%s4527 + $0xf0] sm:$0xff]
    %v4559 = vld [vmem:[%s4527 + $0xf8] sm:$0xff]
    %v4560 = vld [vmem:[%s4527 + $0x100] sm:$0xff]
    %v4561 = vld [vmem:[%s4527 + $0x108] sm:$0xff]
    %v4562 = vld [vmem:[%s4527 + $0x110] sm:$0xff]
    %v4563 = vld [vmem:[%s4527 + $0x118] sm:$0xff]
    %v4564 = vld [vmem:[%s4527 + $0x120] sm:$0xff]
    %v4565 = vld [vmem:[%s4527 + $0x128] sm:$0xff]
    %v4566 = vld [vmem:[%s4527 + $0x130] sm:$0xff]
    %v4567 = vld [vmem:[%s4527 + $0x138] sm:$0xff]
    %v4568 = vld [vmem:[%s4527 + $0x140] sm:$0xff]
    %v4569 = vld [vmem:[%s4527 + $0x148] sm:$0xff]
    %v4570 = vld [vmem:[%s4527 + $0x150] sm:$0xff]
    %v4571 = vld [vmem:[%s4527 + $0x158] sm:$0xff]
    %v4572 = vld [vmem:[%s4527 + $0x160] sm:$0xff]
    %v4573 = vld [vmem:[%s4527 + $0x168] sm:$0xff]
    %v4574 = vld [vmem:[%s4527 + $0x170] sm:$0xff]
    %v4575 = vld [vmem:[%s4527 + $0x178] sm:$0xff]
    %4576 = vmatpush.msra.mxu0 %v4573
    %4577 = vmatpush.msra.mxu0 %v4570
    %4578 = vmatpush.msra.mxu0 %v4567
    %4579 = vmatpush.msra.mxu0 %v4564
    %4580 = vmatpush.msra.mxu0 %v4561
    %4581 = vmatpush.msra.mxu0 %v4558
    %4582 = vmatpush.msra.mxu0 %v4555
    %4583 = vmatpush.msra.mxu0 %v4552
    %4584 = vmatpush.msra.mxu0 %v4549
    %4585 = vmatpush.msra.mxu0 %v4546
    %4586 = vmatpush.msra.mxu0 %v4543
    %4587 = vmatpush.msra.mxu0 %v4540
    %4588 = vmatpush.msra.mxu0 %v4537
    %4589 = vmatpush.msra.mxu0 %v4534
    %4590 = vmatpush.msra.mxu0 %v4531
    %4591 = vmatpush.msra.mxu0 %v4528
    %4592 = vmatmul.f32.gmra.mxu0 %v4522
    %v4593 = vpop.f32.mrf.mxu0
    %v4594 = vadd.f32 0.0, %v4593
    %4595 = vdwg.mxu0
    %4596 = vmatpush.msra.mxu0 %v4574
    %4597 = vmatpush.msra.mxu0 %v4571
    %4598 = vmatpush.msra.mxu0 %v4568
    %4599 = vmatpush.msra.mxu0 %v4565
    %4600 = vmatpush.msra.mxu0 %v4562
    %4601 = vmatpush.msra.mxu0 %v4559
    %4602 = vmatpush.msra.mxu0 %v4556
    %4603 = vmatpush.msra.mxu0 %v4553
    %4604 = vmatpush.msra.mxu0 %v4550
    %4605 = vmatpush.msra.mxu0 %v4547
    %4606 = vmatpush.msra.mxu0 %v4544
    %4607 = vmatpush.msra.mxu0 %v4541
    %4608 = vmatpush.msra.mxu0 %v4538
    %4609 = vmatpush.msra.mxu0 %v4535
    %4610 = vmatpush.msra.mxu0 %v4532
    %4611 = vmatpush.msra.mxu0 %v4529
    %4612 = vmatmul.f32.gmra.mxu0 %v4522
    %v4613 = vpop.f32.mrf.mxu0
    %v4614 = vadd.f32 0.0, %v4613
    %4615 = vdwg.mxu0
    %4616 = vmatpush.msra.mxu0 %v4575
    %4617 = vmatpush.msra.mxu0 %v4572
    %4618 = vmatpush.msra.mxu0 %v4569
    %4619 = vmatpush.msra.mxu0 %v4566
    %4620 = vmatpush.msra.mxu0 %v4563
    %4621 = vmatpush.msra.mxu0 %v4560
    %4622 = vmatpush.msra.mxu0 %v4557
    %4623 = vmatpush.msra.mxu0 %v4554
    %4624 = vmatpush.msra.mxu0 %v4551
    %4625 = vmatpush.msra.mxu0 %v4548
    %4626 = vmatpush.msra.mxu0 %v4545
    %4627 = vmatpush.msra.mxu0 %v4542
    %4628 = vmatpush.msra.mxu0 %v4539
    %4629 = vmatpush.msra.mxu0 %v4536
    %4630 = vmatpush.msra.mxu0 %v4533
    %4631 = vmatpush.msra.mxu0 %v4530
    %4632 = vmatmul.f32.gmra.mxu0 %v4522
    %v4633 = vpop.f32.mrf.mxu0
    %v4634 = vadd.f32 0.0, %v4633
    %4635 = vdwg.mxu0
    %v4636 = vadd.f32 %v4524, %v4594
    %v4637 = vadd.f32 %v4525, %v4614
    %v4638 = vxor.u32 %v4636, 2147483648
    %v4639 = vxor.u32 %v4637, 2147483648
    %v4640 = vmul.f32 %v4638, 1.442695
    %v4641 = vpow.pop %v4640
    %v4642 = vmul.f32 %v4639, 1.442695
    %v4643 = vpow.pop %v4642
    %v4644 = vadd.f32 %v4641, 1.0
    %v4645 = vadd.f32 %v4643, 1.0
    %v4646 = vrcp.pop %v4644
    %v4647 = vmul.f32 %v4644, %v4646
    %v4648 = vsub.f32 1.0, %v4647
    %v4649 = vmul.f32 %v4646, %v4648
    %v4650 = vadd.f32 %v4646, %v4649
    %vm4651 = vweird.f32 %v4644
    %vm4652 = vweird.f32 %v4646
    %vm4653 = vmor %vm4651, %vm4652
    %v4654 = vsel %vm4653, %v4646, %v4650
    %v4655 = vand.u32 2147483647, %v4644
    %vm4656 = vcmp.eq.f32.partialorder %v4655, 8.507059e+37
    %v4657 = vand.u32 %v4644, 2147483648
    %v4658 = vor.u32 1.1754944e-38, %v4657
    %v4659 = vsel %vm4656, %v4658, %v4654
    %v4660 = vmul.f32 1.0, %v4659
    %v4661 = vrcp.pop %v4645
    %v4662 = vmul.f32 %v4645, %v4661
    %v4663 = vsub.f32 1.0, %v4662
    %v4664 = vmul.f32 %v4661, %v4663
    %v4665 = vadd.f32 %v4661, %v4664
    %vm4666 = vweird.f32 %v4645
    %vm4667 = vweird.f32 %v4661
    %vm4668 = vmor %vm4666, %vm4667
    %v4669 = vsel %vm4668, %v4661, %v4665
    %v4670 = vand.u32 2147483647, %v4645
    %vm4671 = vcmp.eq.f32.partialorder %v4670, 8.507059e+37
    %v4672 = vand.u32 %v4645, 2147483648
    %v4673 = vor.u32 1.1754944e-38, %v4672
    %v4674 = vsel %vm4671, %v4673, %v4669
    %v4675 = vmul.f32 1.0, %v4674
    %v4676 = vadd.f32 %v4634, %v4475
    %v4677 = vmul.f32 %v4660, %v4676
    %v4678 = vadd.f32 %v4526, %v4677
    %v4679 = vtanh.pop %v4678
    %v4680 = vsub.f32 1.0, %v4675
    %v4681 = vmul.f32 %v4680, %v4679
    %v4682 = vmul.f32 %v4675, %v4522
    %v4683 = vadd.f32 %v4681, %v4682
    %4684 = vst [vmem:[%s513] sm:$0xff] %v4683
    %v4685 = vld [vmem:[%s515] sm:$0xff]
    %v4686 = vld [vmem:[%s515 + $0x8] sm:$0xff]
    %v4687 = vld [vmem:[%s515 + $0x10] sm:$0xff]
    %v4688 = vld [vmem:[%s4527] sm:$0xff]
    %v4689 = vld [vmem:[%s4527 + $0x8] sm:$0xff]
    %v4690 = vld [vmem:[%s4527 + $0x10] sm:$0xff]
    %v4691 = vld [vmem:[%s4527 + $0x18] sm:$0xff]
    %v4692 = vld [vmem:[%s4527 + $0x20] sm:$0xff]
    %v4693 = vld [vmem:[%s4527 + $0x28] sm:$0xff]
    %v4694 = vld [vmem:[%s4527 + $0x30] sm:$0xff]
    %v4695 = vld [vmem:[%s4527 + $0x38] sm:$0xff]
    %v4696 = vld [vmem:[%s4527 + $0x40] sm:$0xff]
    %v4697 = vld [vmem:[%s4527 + $0x48] sm:$0xff]
    %v4698 = vld [vmem:[%s4527 + $0x50] sm:$0xff]
    %v4699 = vld [vmem:[%s4527 + $0x58] sm:$0xff]
    %v4700 = vld [vmem:[%s4527 + $0x60] sm:$0xff]
    %v4701 = vld [vmem:[%s4527 + $0x68] sm:$0xff]
    %v4702 = vld [vmem:[%s4527 + $0x70] sm:$0xff]
    %v4703 = vld [vmem:[%s4527 + $0x78] sm:$0xff]
    %v4704 = vld [vmem:[%s4527 + $0x80] sm:$0xff]
    %v4705 = vld [vmem:[%s4527 + $0x88] sm:$0xff]
    %v4706 = vld [vmem:[%s4527 + $0x90] sm:$0xff]
    %v4707 = vld [vmem:[%s4527 + $0x98] sm:$0xff]
    %v4708 = vld [vmem:[%s4527 + $0xa0] sm:$0xff]
    %v4709 = vld [vmem:[%s4527 + $0xa8] sm:$0xff]
    %v4710 = vld [vmem:[%s4527 + $0xb0] sm:$0xff]
    %v4711 = vld [vmem:[%s4527 + $0xb8] sm:$0xff]
    %v4712 = vld [vmem:[%s4527 + $0xc0] sm:$0xff]
    %v4713 = vld [vmem:[%s4527 + $0xc8] sm:$0xff]
    %v4714 = vld [vmem:[%s4527 + $0xd0] sm:$0xff]
    %v4715 = vld [vmem:[%s4527 + $0xd8] sm:$0xff]
    %v4716 = vld [vmem:[%s4527 + $0xe0] sm:$0xff]
    %v4717 = vld [vmem:[%s4527 + $0xe8] sm:$0xff]
    %v4718 = vld [vmem:[%s4527 + $0xf0] sm:$0xff]
    %v4719 = vld [vmem:[%s4527 + $0xf8] sm:$0xff]
    %v4720 = vld [vmem:[%s4527 + $0x100] sm:$0xff]
    %v4721 = vld [vmem:[%s4527 + $0x108] sm:$0xff]
    %v4722 = vld [vmem:[%s4527 + $0x110] sm:$0xff]
    %v4723 = vld [vmem:[%s4527 + $0x118] sm:$0xff]
    %v4724 = vld [vmem:[%s4527 + $0x120] sm:$0xff]
    %v4725 = vld [vmem:[%s4527 + $0x128] sm:$0xff]
    %v4726 = vld [vmem:[%s4527 + $0x130] sm:$0xff]
    %v4727 = vld [vmem:[%s4527 + $0x138] sm:$0xff]
    %v4728 = vld [vmem:[%s4527 + $0x140] sm:$0xff]
    %v4729 = vld [vmem:[%s4527 + $0x148] sm:$0xff]
    %v4730 = vld [vmem:[%s4527 + $0x150] sm:$0xff]
    %v4731 = vld [vmem:[%s4527 + $0x158] sm:$0xff]
    %v4732 = vld [vmem:[%s4527 + $0x160] sm:$0xff]
    %v4733 = vld [vmem:[%s4527 + $0x168] sm:$0xff]
    %v4734 = vld [vmem:[%s4527 + $0x170] sm:$0xff]
    %v4735 = vld [vmem:[%s4527 + $0x178] sm:$0xff]
    %4736 = vmatpush.msra.mxu0 %v4733
    %4737 = vmatpush.msra.mxu0 %v4730
    %4738 = vmatpush.msra.mxu0 %v4727
    %4739 = vmatpush.msra.mxu0 %v4724
    %4740 = vmatpush.msra.mxu0 %v4721
    %4741 = vmatpush.msra.mxu0 %v4718
    %4742 = vmatpush.msra.mxu0 %v4715
    %4743 = vmatpush.msra.mxu0 %v4712
    %4744 = vmatpush.msra.mxu0 %v4709
    %4745 = vmatpush.msra.mxu0 %v4706
    %4746 = vmatpush.msra.mxu0 %v4703
    %4747 = vmatpush.msra.mxu0 %v4700
    %4748 = vmatpush.msra.mxu0 %v4697
    %4749 = vmatpush.msra.mxu0 %v4694
    %4750 = vmatpush.msra.mxu0 %v4691
    %4751 = vmatpush.msra.mxu0 %v4688
    %4752 = vmatmul.f32.gmra.mxu0 %v4683
    %v4753 = vpop.f32.mrf.mxu0
    %v4754 = vadd.f32 0.0, %v4753
    %4755 = vdwg.mxu0
    %4756 = vmatpush.msra.mxu0 %v4734
    %4757 = vmatpush.msra.mxu0 %v4731
    %4758 = vmatpush.msra.mxu0 %v4728
    %4759 = vmatpush.msra.mxu0 %v4725
    %4760 = vmatpush.msra.mxu0 %v4722
    %4761 = vmatpush.msra.mxu0 %v4719
    %4762 = vmatpush.msra.mxu0 %v4716
    %4763 = vmatpush.msra.mxu0 %v4713
    %4764 = vmatpush.msra.mxu0 %v4710
    %4765 = vmatpush.msra.mxu0 %v4707
    %4766 = vmatpush.msra.mxu0 %v4704
    %4767 = vmatpush.msra.mxu0 %v4701
    %4768 = vmatpush.msra.mxu0 %v4698
    %4769 = vmatpush.msra.mxu0 %v4695
    %4770 = vmatpush.msra.mxu0 %v4692
    %4771 = vmatpush.msra.mxu0 %v4689
    %4772 = vmatmul.f32.gmra.mxu0 %v4683
    %v4773 = vpop.f32.mrf.mxu0
    %v4774 = vadd.f32 0.0, %v4773
    %4775 = vdwg.mxu0
    %4776 = vmatpush.msra.mxu0 %v4735
    %4777 = vmatpush.msra.mxu0 %v4732
    %4778 = vmatpush.msra.mxu0 %v4729
    %4779 = vmatpush.msra.mxu0 %v4726
    %4780 = vmatpush.msra.mxu0 %v4723
    %4781 = vmatpush.msra.mxu0 %v4720
    %4782 = vmatpush.msra.mxu0 %v4717
    %4783 = vmatpush.msra.mxu0 %v4714
    %4784 = vmatpush.msra.mxu0 %v4711
    %4785 = vmatpush.msra.mxu0 %v4708
    %4786 = vmatpush.msra.mxu0 %v4705
    %4787 = vmatpush.msra.mxu0 %v4702
    %4788 = vmatpush.msra.mxu0 %v4699
    %4789 = vmatpush.msra.mxu0 %v4696
    %4790 = vmatpush.msra.mxu0 %v4693
    %4791 = vmatpush.msra.mxu0 %v4690
    %4792 = vmatmul.f32.gmra.mxu0 %v4683
    %v4793 = vpop.f32.mrf.mxu0
    %v4794 = vadd.f32 0.0, %v4793
    %4795 = vdwg.mxu0
    %v4796 = vadd.f32 %v4685, %v4754
    %v4797 = vadd.f32 %v4686, %v4774
    %v4798 = vxor.u32 %v4796, 2147483648
    %v4799 = vxor.u32 %v4797, 2147483648
    %v4800 = vmul.f32 %v4798, 1.442695
    %v4801 = vpow.pop %v4800
    %v4802 = vmul.f32 %v4799, 1.442695
    %v4803 = vpow.pop %v4802
    %v4804 = vadd.f32 %v4801, 1.0
    %v4805 = vadd.f32 %v4803, 1.0
    %v4806 = vrcp.pop %v4804
    %v4807 = vmul.f32 %v4804, %v4806
    %v4808 = vsub.f32 1.0, %v4807
    %v4809 = vmul.f32 %v4806, %v4808
    %v4810 = vadd.f32 %v4806, %v4809
    %vm4811 = vweird.f32 %v4804
    %vm4812 = vweird.f32 %v4806
    %vm4813 = vmor %vm4811, %vm4812
    %v4814 = vsel %vm4813, %v4806, %v4810
    %v4815 = vand.u32 2147483647, %v4804
    %vm4816 = vcmp.eq.f32.partialorder %v4815, 8.507059e+37
    %v4817 = vand.u32 %v4804, 2147483648
    %v4818 = vor.u32 1.1754944e-38, %v4817
    %v4819 = vsel %vm4816, %v4818, %v4814
    %v4820 = vmul.f32 1.0, %v4819
    %v4821 = vrcp.pop %v4805
    %v4822 = vmul.f32 %v4805, %v4821
    %v4823 = vsub.f32 1.0, %v4822
    %v4824 = vmul.f32 %v4821, %v4823
    %v4825 = vadd.f32 %v4821, %v4824
    %vm4826 = vweird.f32 %v4805
    %vm4827 = vweird.f32 %v4821
    %vm4828 = vmor %vm4826, %vm4827
    %v4829 = vsel %vm4828, %v4821, %v4825
    %v4830 = vand.u32 2147483647, %v4805
    %vm4831 = vcmp.eq.f32.partialorder %v4830, 8.507059e+37
    %v4832 = vand.u32 %v4805, 2147483648
    %v4833 = vor.u32 1.1754944e-38, %v4832
    %v4834 = vsel %vm4831, %v4833, %v4829
    %v4835 = vmul.f32 1.0, %v4834
    %v4836 = vadd.f32 %v4794, %v4475
    %v4837 = vmul.f32 %v4820, %v4836
    %v4838 = vadd.f32 %v4687, %v4837
    %v4839 = vtanh.pop %v4838
    %v4840 = vsub.f32 1.0, %v4835
    %v4841 = vmul.f32 %v4840, %v4839
    %v4842 = vmul.f32 %v4835, %v4683
    %v4843 = vadd.f32 %v4841, %v4842
    %4844 = vst [vmem:[%s675] sm:$0xff] %v4843
    %v4845 = vld [vmem:[%s677] sm:$0xff]
    %v4846 = vld [vmem:[%s677 + $0x8] sm:$0xff]
    %v4847 = vld [vmem:[%s677 + $0x10] sm:$0xff]
    %v4848 = vld [vmem:[%s4527] sm:$0xff]
    %v4849 = vld [vmem:[%s4527 + $0x8] sm:$0xff]
    %v4850 = vld [vmem:[%s4527 + $0x10] sm:$0xff]
    %v4851 = vld [vmem:[%s4527 + $0x18] sm:$0xff]
    %v4852 = vld [vmem:[%s4527 + $0x20] sm:$0xff]
    %v4853 = vld [vmem:[%s4527 + $0x28] sm:$0xff]
    %v4854 = vld [vmem:[%s4527 + $0x30] sm:$0xff]
    %v4855 = vld [vmem:[%s4527 + $0x38] sm:$0xff]
    %v4856 = vld [vmem:[%s4527 + $0x40] sm:$0xff]
    %v4857 = vld [vmem:[%s4527 + $0x48] sm:$0xff]
    %v4858 = vld [vmem:[%s4527 + $0x50] sm:$0xff]
    %v4859 = vld [vmem:[%s4527 + $0x58] sm:$0xff]
    %v4860 = vld [vmem:[%s4527 + $0x60] sm:$0xff]
    %v4861 = vld [vmem:[%s4527 + $0x68] sm:$0xff]
    %v4862 = vld [vmem:[%s4527 + $0x70] sm:$0xff]
    %v4863 = vld [vmem:[%s4527 + $0x78] sm:$0xff]
    %v4864 = vld [vmem:[%s4527 + $0x80] sm:$0xff]
    %v4865 = vld [vmem:[%s4527 + $0x88] sm:$0xff]
    %v4866 = vld [vmem:[%s4527 + $0x90] sm:$0xff]
    %v4867 = vld [vmem:[%s4527 + $0x98] sm:$0xff]
    %v4868 = vld [vmem:[%s4527 + $0xa0] sm:$0xff]
    %v4869 = vld [vmem:[%s4527 + $0xa8] sm:$0xff]
    %v4870 = vld [vmem:[%s4527 + $0xb0] sm:$0xff]
    %v4871 = vld [vmem:[%s4527 + $0xb8] sm:$0xff]
    %v4872 = vld [vmem:[%s4527 + $0xc0] sm:$0xff]
    %v4873 = vld [vmem:[%s4527 + $0xc8] sm:$0xff]
    %v4874 = vld [vmem:[%s4527 + $0xd0] sm:$0xff]
    %v4875 = vld [vmem:[%s4527 + $0xd8] sm:$0xff]
    %v4876 = vld [vmem:[%s4527 + $0xe0] sm:$0xff]
    %v4877 = vld [vmem:[%s4527 + $0xe8] sm:$0xff]
    %v4878 = vld [vmem:[%s4527 + $0xf0] sm:$0xff]
    %v4879 = vld [vmem:[%s4527 + $0xf8] sm:$0xff]
    %v4880 = vld [vmem:[%s4527 + $0x100] sm:$0xff]
    %v4881 = vld [vmem:[%s4527 + $0x108] sm:$0xff]
    %v4882 = vld [vmem:[%s4527 + $0x110] sm:$0xff]
    %v4883 = vld [vmem:[%s4527 + $0x118] sm:$0xff]
    %v4884 = vld [vmem:[%s4527 + $0x120] sm:$0xff]
    %v4885 = vld [vmem:[%s4527 + $0x128] sm:$0xff]
    %v4886 = vld [vmem:[%s4527 + $0x130] sm:$0xff]
    %v4887 = vld [vmem:[%s4527 + $0x138] sm:$0xff]
    %v4888 = vld [vmem:[%s4527 + $0x140] sm:$0xff]
    %v4889 = vld [vmem:[%s4527 + $0x148] sm:$0xff]
    %v4890 = vld [vmem:[%s4527 + $0x150] sm:$0xff]
    %v4891 = vld [vmem:[%s4527 + $0x158] sm:$0xff]
    %v4892 = vld [vmem:[%s4527 + $0x160] sm:$0xff]
    %v4893 = vld [vmem:[%s4527 + $0x168] sm:$0xff]
    %v4894 = vld [vmem:[%s4527 + $0x170] sm:$0xff]
    %v4895 = vld [vmem:[%s4527 + $0x178] sm:$0xff]
    %4896 = vmatpush.msra.mxu0 %v4893
    %4897 = vmatpush.msra.mxu0 %v4890
    %4898 = vmatpush.msra.mxu0 %v4887
    %4899 = vmatpush.msra.mxu0 %v4884
    %4900 = vmatpush.msra.mxu0 %v4881
    %4901 = vmatpush.msra.mxu0 %v4878
    %4902 = vmatpush.msra.mxu0 %v4875
    %4903 = vmatpush.msra.mxu0 %v4872
    %4904 = vmatpush.msra.mxu0 %v4869
    %4905 = vmatpush.msra.mxu0 %v4866
    %4906 = vmatpush.msra.mxu0 %v4863
    %4907 = vmatpush.msra.mxu0 %v4860
    %4908 = vmatpush.msra.mxu0 %v4857
    %4909 = vmatpush.msra.mxu0 %v4854
    %4910 = vmatpush.msra.mxu0 %v4851
    %4911 = vmatpush.msra.mxu0 %v4848
    %4912 = vmatmul.f32.gmra.mxu0 %v4843
    %v4913 = vpop.f32.mrf.mxu0
    %v4914 = vadd.f32 0.0, %v4913
    %4915 = vdwg.mxu0
    %4916 = vmatpush.msra.mxu0 %v4894
    %4917 = vmatpush.msra.mxu0 %v4891
    %4918 = vmatpush.msra.mxu0 %v4888
    %4919 = vmatpush.msra.mxu0 %v4885
    %4920 = vmatpush.msra.mxu0 %v4882
    %4921 = vmatpush.msra.mxu0 %v4879
    %4922 = vmatpush.msra.mxu0 %v4876
    %4923 = vmatpush.msra.mxu0 %v4873
    %4924 = vmatpush.msra.mxu0 %v4870
    %4925 = vmatpush.msra.mxu0 %v4867
    %4926 = vmatpush.msra.mxu0 %v4864
    %4927 = vmatpush.msra.mxu0 %v4861
    %4928 = vmatpush.msra.mxu0 %v4858
    %4929 = vmatpush.msra.mxu0 %v4855
    %4930 = vmatpush.msra.mxu0 %v4852
    %4931 = vmatpush.msra.mxu0 %v4849
    %4932 = vmatmul.f32.gmra.mxu0 %v4843
    %v4933 = vpop.f32.mrf.mxu0
    %v4934 = vadd.f32 0.0, %v4933
    %4935 = vdwg.mxu0
    %4936 = vmatpush.msra.mxu0 %v4895
    %4937 = vmatpush.msra.mxu0 %v4892
    %4938 = vmatpush.msra.mxu0 %v4889
    %4939 = vmatpush.msra.mxu0 %v4886
    %4940 = vmatpush.msra.mxu0 %v4883
    %4941 = vmatpush.msra.mxu0 %v4880
    %4942 = vmatpush.msra.mxu0 %v4877
    %4943 = vmatpush.msra.mxu0 %v4874
    %4944 = vmatpush.msra.mxu0 %v4871
    %4945 = vmatpush.msra.mxu0 %v4868
    %4946 = vmatpush.msra.mxu0 %v4865
    %4947 = vmatpush.msra.mxu0 %v4862
    %4948 = vmatpush.msra.mxu0 %v4859
    %4949 = vmatpush.msra.mxu0 %v4856
    %4950 = vmatpush.msra.mxu0 %v4853
    %4951 = vmatpush.msra.mxu0 %v4850
    %4952 = vmatmul.f32.gmra.mxu0 %v4843
    %v4953 = vpop.f32.mrf.mxu0
    %v4954 = vadd.f32 0.0, %v4953
    %4955 = vdwg.mxu0
    %v4956 = vadd.f32 %v4845, %v4914
    %v4957 = vadd.f32 %v4846, %v4934
    %v4958 = vxor.u32 %v4956, 2147483648
    %v4959 = vxor.u32 %v4957, 2147483648
    %v4960 = vmul.f32 %v4958, 1.442695
    %v4961 = vpow.pop %v4960
    %v4962 = vmul.f32 %v4959, 1.442695
    %v4963 = vpow.pop %v4962
    %v4964 = vadd.f32 %v4961, 1.0
    %v4965 = vadd.f32 %v4963, 1.0
    %v4966 = vrcp.pop %v4964
    %v4967 = vmul.f32 %v4964, %v4966
    %v4968 = vsub.f32 1.0, %v4967
    %v4969 = vmul.f32 %v4966, %v4968
    %v4970 = vadd.f32 %v4966, %v4969
    %vm4971 = vweird.f32 %v4964
    %vm4972 = vweird.f32 %v4966
    %vm4973 = vmor %vm4971, %vm4972
    %v4974 = vsel %vm4973, %v4966, %v4970
    %v4975 = vand.u32 2147483647, %v4964
    %vm4976 = vcmp.eq.f32.partialorder %v4975, 8.507059e+37
    %v4977 = vand.u32 %v4964, 2147483648
    %v4978 = vor.u32 1.1754944e-38, %v4977
    %v4979 = vsel %vm4976, %v4978, %v4974
    %v4980 = vmul.f32 1.0, %v4979
    %v4981 = vrcp.pop %v4965
    %v4982 = vmul.f32 %v4965, %v4981
    %v4983 = vsub.f32 1.0, %v4982
    %v4984 = vmul.f32 %v4981, %v4983
    %v4985 = vadd.f32 %v4981, %v4984
    %vm4986 = vweird.f32 %v4965
    %vm4987 = vweird.f32 %v4981
    %vm4988 = vmor %vm4986, %vm4987
    %v4989 = vsel %vm4988, %v4981, %v4985
    %v4990 = vand.u32 2147483647, %v4965
    %vm4991 = vcmp.eq.f32.partialorder %v4990, 8.507059e+37
    %v4992 = vand.u32 %v4965, 2147483648
    %v4993 = vor.u32 1.1754944e-38, %v4992
    %v4994 = vsel %vm4991, %v4993, %v4989
    %v4995 = vmul.f32 1.0, %v4994
    %v4996 = vadd.f32 %v4954, %v4475
    %v4997 = vmul.f32 %v4980, %v4996
    %v4998 = vadd.f32 %v4847, %v4997
    %v4999 = vtanh.pop %v4998
    %v5000 = vsub.f32 1.0, %v4995
    %v5001 = vmul.f32 %v5000, %v4999
    %v5002 = vmul.f32 %v4995, %v4843
    %v5003 = vadd.f32 %v5001, %v5002
    %5004 = vst [vmem:[%s837] sm:$0xff] %v5003
    %v5005 = vld [vmem:[%s839] sm:$0xff]
    %v5006 = vld [vmem:[%s839 + $0x8] sm:$0xff]
    %v5007 = vld [vmem:[%s839 + $0x10] sm:$0xff]
    %v5008 = vld [vmem:[%s4527] sm:$0xff]
    %v5009 = vld [vmem:[%s4527 + $0x8] sm:$0xff]
    %v5010 = vld [vmem:[%s4527 + $0x10] sm:$0xff]
    %v5011 = vld [vmem:[%s4527 + $0x18] sm:$0xff]
    %v5012 = vld [vmem:[%s4527 + $0x20] sm:$0xff]
    %v5013 = vld [vmem:[%s4527 + $0x28] sm:$0xff]
    %v5014 = vld [vmem:[%s4527 + $0x30] sm:$0xff]
    %v5015 = vld [vmem:[%s4527 + $0x38] sm:$0xff]
    %v5016 = vld [vmem:[%s4527 + $0x40] sm:$0xff]
    %v5017 = vld [vmem:[%s4527 + $0x48] sm:$0xff]
    %v5018 = vld [vmem:[%s4527 + $0x50] sm:$0xff]
    %v5019 = vld [vmem:[%s4527 + $0x58] sm:$0xff]
    %v5020 = vld [vmem:[%s4527 + $0x60] sm:$0xff]
    %v5021 = vld [vmem:[%s4527 + $0x68] sm:$0xff]
    %v5022 = vld [vmem:[%s4527 + $0x70] sm:$0xff]
    %v5023 = vld [vmem:[%s4527 + $0x78] sm:$0xff]
    %v5024 = vld [vmem:[%s4527 + $0x80] sm:$0xff]
    %v5025 = vld [vmem:[%s4527 + $0x88] sm:$0xff]
    %v5026 = vld [vmem:[%s4527 + $0x90] sm:$0xff]
    %v5027 = vld [vmem:[%s4527 + $0x98] sm:$0xff]
    %v5028 = vld [vmem:[%s4527 + $0xa0] sm:$0xff]
    %v5029 = vld [vmem:[%s4527 + $0xa8] sm:$0xff]
    %v5030 = vld [vmem:[%s4527 + $0xb0] sm:$0xff]
    %v5031 = vld [vmem:[%s4527 + $0xb8] sm:$0xff]
    %v5032 = vld [vmem:[%s4527 + $0xc0] sm:$0xff]
    %v5033 = vld [vmem:[%s4527 + $0xc8] sm:$0xff]
    %v5034 = vld [vmem:[%s4527 + $0xd0] sm:$0xff]
    %v5035 = vld [vmem:[%s4527 + $0xd8] sm:$0xff]
    %v5036 = vld [vmem:[%s4527 + $0xe0] sm:$0xff]
    %v5037 = vld [vmem:[%s4527 + $0xe8] sm:$0xff]
    %v5038 = vld [vmem:[%s4527 + $0xf0] sm:$0xff]
    %v5039 = vld [vmem:[%s4527 + $0xf8] sm:$0xff]
    %v5040 = vld [vmem:[%s4527 + $0x100] sm:$0xff]
    %v5041 = vld [vmem:[%s4527 + $0x108] sm:$0xff]
    %v5042 = vld [vmem:[%s4527 + $0x110] sm:$0xff]
    %v5043 = vld [vmem:[%s4527 + $0x118] sm:$0xff]
    %v5044 = vld [vmem:[%s4527 + $0x120] sm:$0xff]
    %v5045 = vld [vmem:[%s4527 + $0x128] sm:$0xff]
    %v5046 = vld [vmem:[%s4527 + $0x130] sm:$0xff]
    %v5047 = vld [vmem:[%s4527 + $0x138] sm:$0xff]
    %v5048 = vld [vmem:[%s4527 + $0x140] sm:$0xff]
    %v5049 = vld [vmem:[%s4527 + $0x148] sm:$0xff]
    %v5050 = vld [vmem:[%s4527 + $0x150] sm:$0xff]
    %v5051 = vld [vmem:[%s4527 + $0x158] sm:$0xff]
    %v5052 = vld [vmem:[%s4527 + $0x160] sm:$0xff]
    %v5053 = vld [vmem:[%s4527 + $0x168] sm:$0xff]
    %v5054 = vld [vmem:[%s4527 + $0x170] sm:$0xff]
    %v5055 = vld [vmem:[%s4527 + $0x178] sm:$0xff]
    %5056 = vmatpush.msra.mxu0 %v5053
    %5057 = vmatpush.msra.mxu0 %v5050
    %5058 = vmatpush.msra.mxu0 %v5047
    %5059 = vmatpush.msra.mxu0 %v5044
    %5060 = vmatpush.msra.mxu0 %v5041
    %5061 = vmatpush.msra.mxu0 %v5038
    %5062 = vmatpush.msra.mxu0 %v5035
    %5063 = vmatpush.msra.mxu0 %v5032
    %5064 = vmatpush.msra.mxu0 %v5029
    %5065 = vmatpush.msra.mxu0 %v5026
    %5066 = vmatpush.msra.mxu0 %v5023
    %5067 = vmatpush.msra.mxu0 %v5020
    %5068 = vmatpush.msra.mxu0 %v5017
    %5069 = vmatpush.msra.mxu0 %v5014
    %5070 = vmatpush.msra.mxu0 %v5011
    %5071 = vmatpush.msra.mxu0 %v5008
    %5072 = vmatmul.f32.gmra.mxu0 %v5003
    %v5073 = vpop.f32.mrf.mxu0
    %v5074 = vadd.f32 0.0, %v5073
    %5075 = vdwg.mxu0
    %5076 = vmatpush.msra.mxu0 %v5054
    %5077 = vmatpush.msra.mxu0 %v5051
    %5078 = vmatpush.msra.mxu0 %v5048
    %5079 = vmatpush.msra.mxu0 %v5045
    %5080 = vmatpush.msra.mxu0 %v5042
    %5081 = vmatpush.msra.mxu0 %v5039
    %5082 = vmatpush.msra.mxu0 %v5036
    %5083 = vmatpush.msra.mxu0 %v5033
    %5084 = vmatpush.msra.mxu0 %v5030
    %5085 = vmatpush.msra.mxu0 %v5027
    %5086 = vmatpush.msra.mxu0 %v5024
    %5087 = vmatpush.msra.mxu0 %v5021
    %5088 = vmatpush.msra.mxu0 %v5018
    %5089 = vmatpush.msra.mxu0 %v5015
    %5090 = vmatpush.msra.mxu0 %v5012
    %5091 = vmatpush.msra.mxu0 %v5009
    %5092 = vmatmul.f32.gmra.mxu0 %v5003
    %v5093 = vpop.f32.mrf.mxu0
    %v5094 = vadd.f32 0.0, %v5093
    %5095 = vdwg.mxu0
    %5096 = vmatpush.msra.mxu0 %v5055
    %5097 = vmatpush.msra.mxu0 %v5052
    %5098 = vmatpush.msra.mxu0 %v5049
    %5099 = vmatpush.msra.mxu0 %v5046
    %5100 = vmatpush.msra.mxu0 %v5043
    %5101 = vmatpush.msra.mxu0 %v5040
    %5102 = vmatpush.msra.mxu0 %v5037
    %5103 = vmatpush.msra.mxu0 %v5034
    %5104 = vmatpush.msra.mxu0 %v5031
    %5105 = vmatpush.msra.mxu0 %v5028
    %5106 = vmatpush.msra.mxu0 %v5025
    %5107 = vmatpush.msra.mxu0 %v5022
    %5108 = vmatpush.msra.mxu0 %v5019
    %5109 = vmatpush.msra.mxu0 %v5016
    %5110 = vmatpush.msra.mxu0 %v5013
    %5111 = vmatpush.msra.mxu0 %v5010
    %5112 = vmatmul.f32.gmra.mxu0 %v5003
    %v5113 = vpop.f32.mrf.mxu0
    %v5114 = vadd.f32 0.0, %v5113
    %5115 = vdwg.mxu0
    %v5116 = vadd.f32 %v5005, %v5074
    %v5117 = vadd.f32 %v5006, %v5094
    %v5118 = vxor.u32 %v5116, 2147483648
    %v5119 = vxor.u32 %v5117, 2147483648
    %v5120 = vmul.f32 %v5118, 1.442695
    %v5121 = vpow.pop %v5120
    %v5122 = vmul.f32 %v5119, 1.442695
    %v5123 = vpow.pop %v5122
    %v5124 = vadd.f32 %v5121, 1.0
    %v5125 = vadd.f32 %v5123, 1.0
    %v5126 = vrcp.pop %v5124
    %v5127 = vmul.f32 %v5124, %v5126
    %v5128 = vsub.f32 1.0, %v5127
    %v5129 = vmul.f32 %v5126, %v5128
    %v5130 = vadd.f32 %v5126, %v5129
    %vm5131 = vweird.f32 %v5124
    %vm5132 = vweird.f32 %v5126
    %vm5133 = vmor %vm5131, %vm5132
    %v5134 = vsel %vm5133, %v5126, %v5130
    %v5135 = vand.u32 2147483647, %v5124
    %vm5136 = vcmp.eq.f32.partialorder %v5135, 8.507059e+37
    %v5137 = vand.u32 %v5124, 2147483648
    %v5138 = vor.u32 1.1754944e-38, %v5137
    %v5139 = vsel %vm5136, %v5138, %v5134
    %v5140 = vmul.f32 1.0, %v5139
    %v5141 = vrcp.pop %v5125
    %v5142 = vmul.f32 %v5125, %v5141
    %v5143 = vsub.f32 1.0, %v5142
    %v5144 = vmul.f32 %v5141, %v5143
    %v5145 = vadd.f32 %v5141, %v5144
    %vm5146 = vweird.f32 %v5125
    %vm5147 = vweird.f32 %v5141
    %vm5148 = vmor %vm5146, %vm5147
    %v5149 = vsel %vm5148, %v5141, %v5145
    %v5150 = vand.u32 2147483647, %v5125
    %vm5151 = vcmp.eq.f32.partialorder %v5150, 8.507059e+37
    %v5152 = vand.u32 %v5125, 2147483648
    %v5153 = vor.u32 1.1754944e-38, %v5152
    %v5154 = vsel %vm5151, %v5153, %v5149
    %v5155 = vmul.f32 1.0, %v5154
    %v5156 = vadd.f32 %v5114, %v4475
    %v5157 = vmul.f32 %v5140, %v5156
    %v5158 = vadd.f32 %v5007, %v5157
    %v5159 = vtanh.pop %v5158
    %v5160 = vsub.f32 1.0, %v5155
    %v5161 = vmul.f32 %v5160, %v5159
    %v5162 = vmul.f32 %v5155, %v5003
    %v5163 = vadd.f32 %v5161, %v5162
    %5164 = vst [vmem:[%s999] sm:$0xff] %v5163
    %v5165 = vld [vmem:[%s1001] sm:$0xff]
    %v5166 = vld [vmem:[%s1001 + $0x8] sm:$0xff]
    %v5167 = vld [vmem:[%s1001 + $0x10] sm:$0xff]
    %v5168 = vld [vmem:[%s4527] sm:$0xff]
    %v5169 = vld [vmem:[%s4527 + $0x8] sm:$0xff]
    %v5170 = vld [vmem:[%s4527 + $0x10] sm:$0xff]
    %v5171 = vld [vmem:[%s4527 + $0x18] sm:$0xff]
    %v5172 = vld [vmem:[%s4527 + $0x20] sm:$0xff]
    %v5173 = vld [vmem:[%s4527 + $0x28] sm:$0xff]
    %v5174 = vld [vmem:[%s4527 + $0x30] sm:$0xff]
    %v5175 = vld [vmem:[%s4527 + $0x38] sm:$0xff]
    %v5176 = vld [vmem:[%s4527 + $0x40] sm:$0xff]
    %v5177 = vld [vmem:[%s4527 + $0x48] sm:$0xff]
    %v5178 = vld [vmem:[%s4527 + $0x50] sm:$0xff]
    %v5179 = vld [vmem:[%s4527 + $0x58] sm:$0xff]
    %v5180 = vld [vmem:[%s4527 + $0x60] sm:$0xff]
    %v5181 = vld [vmem:[%s4527 + $0x68] sm:$0xff]
    %v5182 = vld [vmem:[%s4527 + $0x70] sm:$0xff]
    %v5183 = vld [vmem:[%s4527 + $0x78] sm:$0xff]
    %v5184 = vld [vmem:[%s4527 + $0x80] sm:$0xff]
    %v5185 = vld [vmem:[%s4527 + $0x88] sm:$0xff]
    %v5186 = vld [vmem:[%s4527 + $0x90] sm:$0xff]
    %v5187 = vld [vmem:[%s4527 + $0x98] sm:$0xff]
    %v5188 = vld [vmem:[%s4527 + $0xa0] sm:$0xff]
    %v5189 = vld [vmem:[%s4527 + $0xa8] sm:$0xff]
    %v5190 = vld [vmem:[%s4527 + $0xb0] sm:$0xff]
    %v5191 = vld [vmem:[%s4527 + $0xb8] sm:$0xff]
    %v5192 = vld [vmem:[%s4527 + $0xc0] sm:$0xff]
    %v5193 = vld [vmem:[%s4527 + $0xc8] sm:$0xff]
    %v5194 = vld [vmem:[%s4527 + $0xd0] sm:$0xff]
    %v5195 = vld [vmem:[%s4527 + $0xd8] sm:$0xff]
    %v5196 = vld [vmem:[%s4527 + $0xe0] sm:$0xff]
    %v5197 = vld [vmem:[%s4527 + $0xe8] sm:$0xff]
    %v5198 = vld [vmem:[%s4527 + $0xf0] sm:$0xff]
    %v5199 = vld [vmem:[%s4527 + $0xf8] sm:$0xff]
    %v5200 = vld [vmem:[%s4527 + $0x100] sm:$0xff]
    %v5201 = vld [vmem:[%s4527 + $0x108] sm:$0xff]
    %v5202 = vld [vmem:[%s4527 + $0x110] sm:$0xff]
    %v5203 = vld [vmem:[%s4527 + $0x118] sm:$0xff]
    %v5204 = vld [vmem:[%s4527 + $0x120] sm:$0xff]
    %v5205 = vld [vmem:[%s4527 + $0x128] sm:$0xff]
    %v5206 = vld [vmem:[%s4527 + $0x130] sm:$0xff]
    %v5207 = vld [vmem:[%s4527 + $0x138] sm:$0xff]
    %v5208 = vld [vmem:[%s4527 + $0x140] sm:$0xff]
    %v5209 = vld [vmem:[%s4527 + $0x148] sm:$0xff]
    %v5210 = vld [vmem:[%s4527 + $0x150] sm:$0xff]
    %v5211 = vld [vmem:[%s4527 + $0x158] sm:$0xff]
    %v5212 = vld [vmem:[%s4527 + $0x160] sm:$0xff]
    %v5213 = vld [vmem:[%s4527 + $0x168] sm:$0xff]
    %v5214 = vld [vmem:[%s4527 + $0x170] sm:$0xff]
    %v5215 = vld [vmem:[%s4527 + $0x178] sm:$0xff]
    %5216 = vmatpush.msra.mxu0 %v5213
    %5217 = vmatpush.msra.mxu0 %v5210
    %5218 = vmatpush.msra.mxu0 %v5207
    %5219 = vmatpush.msra.mxu0 %v5204
    %5220 = vmatpush.msra.mxu0 %v5201
    %5221 = vmatpush.msra.mxu0 %v5198
    %5222 = vmatpush.msra.mxu0 %v5195
    %5223 = vmatpush.msra.mxu0 %v5192
    %5224 = vmatpush.msra.mxu0 %v5189
    %5225 = vmatpush.msra.mxu0 %v5186
    %5226 = vmatpush.msra.mxu0 %v5183
    %5227 = vmatpush.msra.mxu0 %v5180
    %5228 = vmatpush.msra.mxu0 %v5177
    %5229 = vmatpush.msra.mxu0 %v5174
    %5230 = vmatpush.msra.mxu0 %v5171
    %5231 = vmatpush.msra.mxu0 %v5168
    %5232 = vmatmul.f32.gmra.mxu0 %v5163
    %v5233 = vpop.f32.mrf.mxu0
    %v5234 = vadd.f32 0.0, %v5233
    %5235 = vdwg.mxu0
    %5236 = vmatpush.msra.mxu0 %v5214
    %5237 = vmatpush.msra.mxu0 %v5211
    %5238 = vmatpush.msra.mxu0 %v5208
    %5239 = vmatpush.msra.mxu0 %v5205
    %5240 = vmatpush.msra.mxu0 %v5202
    %5241 = vmatpush.msra.mxu0 %v5199
    %5242 = vmatpush.msra.mxu0 %v5196
    %5243 = vmatpush.msra.mxu0 %v5193
    %5244 = vmatpush.msra.mxu0 %v5190
    %5245 = vmatpush.msra.mxu0 %v5187
    %5246 = vmatpush.msra.mxu0 %v5184
    %5247 = vmatpush.msra.mxu0 %v5181
    %5248 = vmatpush.msra.mxu0 %v5178
    %5249 = vmatpush.msra.mxu0 %v5175
    %5250 = vmatpush.msra.mxu0 %v5172
    %5251 = vmatpush.msra.mxu0 %v5169
    %5252 = vmatmul.f32.gmra.mxu0 %v5163
    %v5253 = vpop.f32.mrf.mxu0
    %v5254 = vadd.f32 0.0, %v5253
    %5255 = vdwg.mxu0
    %5256 = vmatpush.msra.mxu0 %v5215
    %5257 = vmatpush.msra.mxu0 %v5212
    %5258 = vmatpush.msra.mxu0 %v5209
    %5259 = vmatpush.msra.mxu0 %v5206
    %5260 = vmatpush.msra.mxu0 %v5203
    %5261 = vmatpush.msra.mxu0 %v5200
    %5262 = vmatpush.msra.mxu0 %v5197
    %5263 = vmatpush.msra.mxu0 %v5194
    %5264 = vmatpush.msra.mxu0 %v5191
    %5265 = vmatpush.msra.mxu0 %v5188
    %5266 = vmatpush.msra.mxu0 %v5185
    %5267 = vmatpush.msra.mxu0 %v5182
    %5268 = vmatpush.msra.mxu0 %v5179
    %5269 = vmatpush.msra.mxu0 %v5176
    %5270 = vmatpush.msra.mxu0 %v5173
    %5271 = vmatpush.msra.mxu0 %v5170
    %5272 = vmatmul.f32.gmra.mxu0 %v5163
    %v5273 = vpop.f32.mrf.mxu0
    %v5274 = vadd.f32 0.0, %v5273
    %5275 = vdwg.mxu0
    %v5276 = vadd.f32 %v5165, %v5234
    %v5277 = vadd.f32 %v5166, %v5254
    %v5278 = vxor.u32 %v5276, 2147483648
    %v5279 = vxor.u32 %v5277, 2147483648
    %v5280 = vmul.f32 %v5278, 1.442695
    %v5281 = vpow.pop %v5280
    %v5282 = vmul.f32 %v5279, 1.442695
    %v5283 = vpow.pop %v5282
    %v5284 = vadd.f32 %v5281, 1.0
    %v5285 = vadd.f32 %v5283, 1.0
    %v5286 = vrcp.pop %v5284
    %v5287 = vmul.f32 %v5284, %v5286
    %v5288 = vsub.f32 1.0, %v5287
    %v5289 = vmul.f32 %v5286, %v5288
    %v5290 = vadd.f32 %v5286, %v5289
    %vm5291 = vweird.f32 %v5284
    %vm5292 = vweird.f32 %v5286
    %vm5293 = vmor %vm5291, %vm5292
    %v5294 = vsel %vm5293, %v5286, %v5290
    %v5295 = vand.u32 2147483647, %v5284
    %vm5296 = vcmp.eq.f32.partialorder %v5295, 8.507059e+37
    %v5297 = vand.u32 %v5284, 2147483648
    %v5298 = vor.u32 1.1754944e-38, %v5297
    %v5299 = vsel %vm5296, %v5298, %v5294
    %v5300 = vmul.f32 1.0, %v5299
    %v5301 = vrcp.pop %v5285
    %v5302 = vmul.f32 %v5285, %v5301
    %v5303 = vsub.f32 1.0, %v5302
    %v5304 = vmul.f32 %v5301, %v5303
    %v5305 = vadd.f32 %v5301, %v5304
    %vm5306 = vweird.f32 %v5285
    %vm5307 = vweird.f32 %v5301
    %vm5308 = vmor %vm5306, %vm5307
    %v5309 = vsel %vm5308, %v5301, %v5305
    %v5310 = vand.u32 2147483647, %v5285
    %vm5311 = vcmp.eq.f32.partialorder %v5310, 8.507059e+37
    %v5312 = vand.u32 %v5285, 2147483648
    %v5313 = vor.u32 1.1754944e-38, %v5312
    %v5314 = vsel %vm5311, %v5313, %v5309
    %v5315 = vmul.f32 1.0, %v5314
    %v5316 = vadd.f32 %v5274, %v4475
    %v5317 = vmul.f32 %v5300, %v5316
    %v5318 = vadd.f32 %v5167, %v5317
    %v5319 = vtanh.pop %v5318
    %v5320 = vsub.f32 1.0, %v5315
    %v5321 = vmul.f32 %v5320, %v5319
    %v5322 = vmul.f32 %v5315, %v5163
    %v5323 = vadd.f32 %v5321, %v5322
    %5324 = vst [vmem:[%s1161] sm:$0xff] %v5323
    %v5325 = vld [vmem:[%s1163] sm:$0xff]
    %v5326 = vld [vmem:[%s1163 + $0x8] sm:$0xff]
    %v5327 = vld [vmem:[%s1163 + $0x10] sm:$0xff]
    %v5328 = vld [vmem:[%s4527] sm:$0xff]
    %v5329 = vld [vmem:[%s4527 + $0x8] sm:$0xff]
    %v5330 = vld [vmem:[%s4527 + $0x10] sm:$0xff]
    %v5331 = vld [vmem:[%s4527 + $0x18] sm:$0xff]
    %v5332 = vld [vmem:[%s4527 + $0x20] sm:$0xff]
    %v5333 = vld [vmem:[%s4527 + $0x28] sm:$0xff]
    %v5334 = vld [vmem:[%s4527 + $0x30] sm:$0xff]
    %v5335 = vld [vmem:[%s4527 + $0x38] sm:$0xff]
    %v5336 = vld [vmem:[%s4527 + $0x40] sm:$0xff]
    %v5337 = vld [vmem:[%s4527 + $0x48] sm:$0xff]
    %v5338 = vld [vmem:[%s4527 + $0x50] sm:$0xff]
    %v5339 = vld [vmem:[%s4527 + $0x58] sm:$0xff]
    %v5340 = vld [vmem:[%s4527 + $0x60] sm:$0xff]
    %v5341 = vld [vmem:[%s4527 + $0x68] sm:$0xff]
    %v5342 = vld [vmem:[%s4527 + $0x70] sm:$0xff]
    %v5343 = vld [vmem:[%s4527 + $0x78] sm:$0xff]
    %v5344 = vld [vmem:[%s4527 + $0x80] sm:$0xff]
    %v5345 = vld [vmem:[%s4527 + $0x88] sm:$0xff]
    %v5346 = vld [vmem:[%s4527 + $0x90] sm:$0xff]
    %v5347 = vld [vmem:[%s4527 + $0x98] sm:$0xff]
    %v5348 = vld [vmem:[%s4527 + $0xa0] sm:$0xff]
    %v5349 = vld [vmem:[%s4527 + $0xa8] sm:$0xff]
    %v5350 = vld [vmem:[%s4527 + $0xb0] sm:$0xff]
    %v5351 = vld [vmem:[%s4527 + $0xb8] sm:$0xff]
    %v5352 = vld [vmem:[%s4527 + $0xc0] sm:$0xff]
    %v5353 = vld [vmem:[%s4527 + $0xc8] sm:$0xff]
    %v5354 = vld [vmem:[%s4527 + $0xd0] sm:$0xff]
    %v5355 = vld [vmem:[%s4527 + $0xd8] sm:$0xff]
    %v5356 = vld [vmem:[%s4527 + $0xe0] sm:$0xff]
    %v5357 = vld [vmem:[%s4527 + $0xe8] sm:$0xff]
    %v5358 = vld [vmem:[%s4527 + $0xf0] sm:$0xff]
    %v5359 = vld [vmem:[%s4527 + $0xf8] sm:$0xff]
    %v5360 = vld [vmem:[%s4527 + $0x100] sm:$0xff]
    %v5361 = vld [vmem:[%s4527 + $0x108] sm:$0xff]
    %v5362 = vld [vmem:[%s4527 + $0x110] sm:$0xff]
    %v5363 = vld [vmem:[%s4527 + $0x118] sm:$0xff]
    %v5364 = vld [vmem:[%s4527 + $0x120] sm:$0xff]
    %v5365 = vld [vmem:[%s4527 + $0x128] sm:$0xff]
    %v5366 = vld [vmem:[%s4527 + $0x130] sm:$0xff]
    %v5367 = vld [vmem:[%s4527 + $0x138] sm:$0xff]
    %v5368 = vld [vmem:[%s4527 + $0x140] sm:$0xff]
    %v5369 = vld [vmem:[%s4527 + $0x148] sm:$0xff]
    %v5370 = vld [vmem:[%s4527 + $0x150] sm:$0xff]
    %v5371 = vld [vmem:[%s4527 + $0x158] sm:$0xff]
    %v5372 = vld [vmem:[%s4527 + $0x160] sm:$0xff]
    %v5373 = vld [vmem:[%s4527 + $0x168] sm:$0xff]
    %v5374 = vld [vmem:[%s4527 + $0x170] sm:$0xff]
    %v5375 = vld [vmem:[%s4527 + $0x178] sm:$0xff]
    %5376 = vmatpush.msra.mxu0 %v5373
    %5377 = vmatpush.msra.mxu0 %v5370
    %5378 = vmatpush.msra.mxu0 %v5367
    %5379 = vmatpush.msra.mxu0 %v5364
    %5380 = vmatpush.msra.mxu0 %v5361
    %5381 = vmatpush.msra.mxu0 %v5358
    %5382 = vmatpush.msra.mxu0 %v5355
    %5383 = vmatpush.msra.mxu0 %v5352
    %5384 = vmatpush.msra.mxu0 %v5349
    %5385 = vmatpush.msra.mxu0 %v5346
    %5386 = vmatpush.msra.mxu0 %v5343
    %5387 = vmatpush.msra.mxu0 %v5340
    %5388 = vmatpush.msra.mxu0 %v5337
    %5389 = vmatpush.msra.mxu0 %v5334
    %5390 = vmatpush.msra.mxu0 %v5331
    %5391 = vmatpush.msra.mxu0 %v5328
    %5392 = vmatmul.f32.gmra.mxu0 %v5323
    %v5393 = vpop.f32.mrf.mxu0
    %v5394 = vadd.f32 0.0, %v5393
    %5395 = vdwg.mxu0
    %5396 = vmatpush.msra.mxu0 %v5374
    %5397 = vmatpush.msra.mxu0 %v5371
    %5398 = vmatpush.msra.mxu0 %v5368
    %5399 = vmatpush.msra.mxu0 %v5365
    %5400 = vmatpush.msra.mxu0 %v5362
    %5401 = vmatpush.msra.mxu0 %v5359
    %5402 = vmatpush.msra.mxu0 %v5356
    %5403 = vmatpush.msra.mxu0 %v5353
    %5404 = vmatpush.msra.mxu0 %v5350
    %5405 = vmatpush.msra.mxu0 %v5347
    %5406 = vmatpush.msra.mxu0 %v5344
    %5407 = vmatpush.msra.mxu0 %v5341
    %5408 = vmatpush.msra.mxu0 %v5338
    %5409 = vmatpush.msra.mxu0 %v5335
    %5410 = vmatpush.msra.mxu0 %v5332
    %5411 = vmatpush.msra.mxu0 %v5329
    %5412 = vmatmul.f32.gmra.mxu0 %v5323
    %v5413 = vpop.f32.mrf.mxu0
    %v5414 = vadd.f32 0.0, %v5413
    %5415 = vdwg.mxu0
    %5416 = vmatpush.msra.mxu0 %v5375
    %5417 = vmatpush.msra.mxu0 %v5372
    %5418 = vmatpush.msra.mxu0 %v5369
    %5419 = vmatpush.msra.mxu0 %v5366
    %5420 = vmatpush.msra.mxu0 %v5363
    %5421 = vmatpush.msra.mxu0 %v5360
    %5422 = vmatpush.msra.mxu0 %v5357
    %5423 = vmatpush.msra.mxu0 %v5354
    %5424 = vmatpush.msra.mxu0 %v5351
    %5425 = vmatpush.msra.mxu0 %v5348
    %5426 = vmatpush.msra.mxu0 %v5345
    %5427 = vmatpush.msra.mxu0 %v5342
    %5428 = vmatpush.msra.mxu0 %v5339
    %5429 = vmatpush.msra.mxu0 %v5336
    %5430 = vmatpush.msra.mxu0 %v5333
    %5431 = vmatpush.msra.mxu0 %v5330
    %5432 = vmatmul.f32.gmra.mxu0 %v5323
    %v5433 = vpop.f32.mrf.mxu0
    %v5434 = vadd.f32 0.0, %v5433
    %5435 = vdwg.mxu0
    %v5436 = vadd.f32 %v5325, %v5394
    %v5437 = vadd.f32 %v5326, %v5414
    %v5438 = vxor.u32 %v5436, 2147483648
    %v5439 = vxor.u32 %v5437, 2147483648
    %v5440 = vmul.f32 %v5438, 1.442695
    %v5441 = vpow.pop %v5440
    %v5442 = vmul.f32 %v5439, 1.442695
    %v5443 = vpow.pop %v5442
    %v5444 = vadd.f32 %v5441, 1.0
    %v5445 = vadd.f32 %v5443, 1.0
    %v5446 = vrcp.pop %v5444
    %v5447 = vmul.f32 %v5444, %v5446
    %v5448 = vsub.f32 1.0, %v5447
    %v5449 = vmul.f32 %v5446, %v5448
    %v5450 = vadd.f32 %v5446, %v5449
    %vm5451 = vweird.f32 %v5444
    %vm5452 = vweird.f32 %v5446
    %vm5453 = vmor %vm5451, %vm5452
    %v5454 = vsel %vm5453, %v5446, %v5450
    %v5455 = vand.u32 2147483647, %v5444
    %vm5456 = vcmp.eq.f32.partialorder %v5455, 8.507059e+37
    %v5457 = vand.u32 %v5444, 2147483648
    %v5458 = vor.u32 1.1754944e-38, %v5457
    %v5459 = vsel %vm5456, %v5458, %v5454
    %v5460 = vmul.f32 1.0, %v5459
    %v5461 = vrcp.pop %v5445
    %v5462 = vmul.f32 %v5445, %v5461
    %v5463 = vsub.f32 1.0, %v5462
    %v5464 = vmul.f32 %v5461, %v5463
    %v5465 = vadd.f32 %v5461, %v5464
    %vm5466 = vweird.f32 %v5445
    %vm5467 = vweird.f32 %v5461
    %vm5468 = vmor %vm5466, %vm5467
    %v5469 = vsel %vm5468, %v5461, %v5465
    %v5470 = vand.u32 2147483647, %v5445
    %vm5471 = vcmp.eq.f32.partialorder %v5470, 8.507059e+37
    %v5472 = vand.u32 %v5445, 2147483648
    %v5473 = vor.u32 1.1754944e-38, %v5472
    %v5474 = vsel %vm5471, %v5473, %v5469
    %v5475 = vmul.f32 1.0, %v5474
    %v5476 = vadd.f32 %v5434, %v4475
    %v5477 = vmul.f32 %v5460, %v5476
    %v5478 = vadd.f32 %v5327, %v5477
    %v5479 = vtanh.pop %v5478
    %v5480 = vsub.f32 1.0, %v5475
    %v5481 = vmul.f32 %v5480, %v5479
    %v5482 = vmul.f32 %v5475, %v5323
    %v5483 = vadd.f32 %v5481, %v5482
    %5484 = vst [vmem:[%s1323] sm:$0xff] %v5483
    %v5485 = vld [vmem:[%s1325] sm:$0xff]
    %v5486 = vld [vmem:[%s1325 + $0x8] sm:$0xff]
    %v5487 = vld [vmem:[%s1325 + $0x10] sm:$0xff]
    %v5488 = vld [vmem:[%s4527] sm:$0xff]
    %v5489 = vld [vmem:[%s4527 + $0x8] sm:$0xff]
    %v5490 = vld [vmem:[%s4527 + $0x10] sm:$0xff]
    %v5491 = vld [vmem:[%s4527 + $0x18] sm:$0xff]
    %v5492 = vld [vmem:[%s4527 + $0x20] sm:$0xff]
    %v5493 = vld [vmem:[%s4527 + $0x28] sm:$0xff]
    %v5494 = vld [vmem:[%s4527 + $0x30] sm:$0xff]
    %v5495 = vld [vmem:[%s4527 + $0x38] sm:$0xff]
    %v5496 = vld [vmem:[%s4527 + $0x40] sm:$0xff]
    %v5497 = vld [vmem:[%s4527 + $0x48] sm:$0xff]
    %v5498 = vld [vmem:[%s4527 + $0x50] sm:$0xff]
    %v5499 = vld [vmem:[%s4527 + $0x58] sm:$0xff]
    %v5500 = vld [vmem:[%s4527 + $0x60] sm:$0xff]
    %v5501 = vld [vmem:[%s4527 + $0x68] sm:$0xff]
    %v5502 = vld [vmem:[%s4527 + $0x70] sm:$0xff]
    %v5503 = vld [vmem:[%s4527 + $0x78] sm:$0xff]
    %v5504 = vld [vmem:[%s4527 + $0x80] sm:$0xff]
    %v5505 = vld [vmem:[%s4527 + $0x88] sm:$0xff]
    %v5506 = vld [vmem:[%s4527 + $0x90] sm:$0xff]
    %v5507 = vld [vmem:[%s4527 + $0x98] sm:$0xff]
    %v5508 = vld [vmem:[%s4527 + $0xa0] sm:$0xff]
    %v5509 = vld [vmem:[%s4527 + $0xa8] sm:$0xff]
    %v5510 = vld [vmem:[%s4527 + $0xb0] sm:$0xff]
    %v5511 = vld [vmem:[%s4527 + $0xb8] sm:$0xff]
    %v5512 = vld [vmem:[%s4527 + $0xc0] sm:$0xff]
    %v5513 = vld [vmem:[%s4527 + $0xc8] sm:$0xff]
    %v5514 = vld [vmem:[%s4527 + $0xd0] sm:$0xff]
    %v5515 = vld [vmem:[%s4527 + $0xd8] sm:$0xff]
    %v5516 = vld [vmem:[%s4527 + $0xe0] sm:$0xff]
    %v5517 = vld [vmem:[%s4527 + $0xe8] sm:$0xff]
    %v5518 = vld [vmem:[%s4527 + $0xf0] sm:$0xff]
    %v5519 = vld [vmem:[%s4527 + $0xf8] sm:$0xff]
    %v5520 = vld [vmem:[%s4527 + $0x100] sm:$0xff]
    %v5521 = vld [vmem:[%s4527 + $0x108] sm:$0xff]
    %v5522 = vld [vmem:[%s4527 + $0x110] sm:$0xff]
    %v5523 = vld [vmem:[%s4527 + $0x118] sm:$0xff]
    %v5524 = vld [vmem:[%s4527 + $0x120] sm:$0xff]
    %v5525 = vld [vmem:[%s4527 + $0x128] sm:$0xff]
    %v5526 = vld [vmem:[%s4527 + $0x130] sm:$0xff]
    %v5527 = vld [vmem:[%s4527 + $0x138] sm:$0xff]
    %v5528 = vld [vmem:[%s4527 + $0x140] sm:$0xff]
    %v5529 = vld [vmem:[%s4527 + $0x148] sm:$0xff]
    %v5530 = vld [vmem:[%s4527 + $0x150] sm:$0xff]
    %v5531 = vld [vmem:[%s4527 + $0x158] sm:$0xff]
    %v5532 = vld [vmem:[%s4527 + $0x160] sm:$0xff]
    %v5533 = vld [vmem:[%s4527 + $0x168] sm:$0xff]
    %v5534 = vld [vmem:[%s4527 + $0x170] sm:$0xff]
    %v5535 = vld [vmem:[%s4527 + $0x178] sm:$0xff]
    %5536 = vmatpush.msra.mxu0 %v5533
    %5537 = vmatpush.msra.mxu0 %v5530
    %5538 = vmatpush.msra.mxu0 %v5527
    %5539 = vmatpush.msra.mxu0 %v5524
    %5540 = vmatpush.msra.mxu0 %v5521
    %5541 = vmatpush.msra.mxu0 %v5518
    %5542 = vmatpush.msra.mxu0 %v5515
    %5543 = vmatpush.msra.mxu0 %v5512
    %5544 = vmatpush.msra.mxu0 %v5509
    %5545 = vmatpush.msra.mxu0 %v5506
    %5546 = vmatpush.msra.mxu0 %v5503
    %5547 = vmatpush.msra.mxu0 %v5500
    %5548 = vmatpush.msra.mxu0 %v5497
    %5549 = vmatpush.msra.mxu0 %v5494
    %5550 = vmatpush.msra.mxu0 %v5491
    %5551 = vmatpush.msra.mxu0 %v5488
    %5552 = vmatmul.f32.gmra.mxu0 %v5483
    %v5553 = vpop.f32.mrf.mxu0
    %v5554 = vadd.f32 0.0, %v5553
    %5555 = vdwg.mxu0
    %5556 = vmatpush.msra.mxu0 %v5534
    %5557 = vmatpush.msra.mxu0 %v5531
    %5558 = vmatpush.msra.mxu0 %v5528
    %5559 = vmatpush.msra.mxu0 %v5525
    %5560 = vmatpush.msra.mxu0 %v5522
    %5561 = vmatpush.msra.mxu0 %v5519
    %5562 = vmatpush.msra.mxu0 %v5516
    %5563 = vmatpush.msra.mxu0 %v5513
    %5564 = vmatpush.msra.mxu0 %v5510
    %5565 = vmatpush.msra.mxu0 %v5507
    %5566 = vmatpush.msra.mxu0 %v5504
    %5567 = vmatpush.msra.mxu0 %v5501
    %5568 = vmatpush.msra.mxu0 %v5498
    %5569 = vmatpush.msra.mxu0 %v5495
    %5570 = vmatpush.msra.mxu0 %v5492
    %5571 = vmatpush.msra.mxu0 %v5489
    %5572 = vmatmul.f32.gmra.mxu0 %v5483
    %v5573 = vpop.f32.mrf.mxu0
    %v5574 = vadd.f32 0.0, %v5573
    %5575 = vdwg.mxu0
    %5576 = vmatpush.msra.mxu0 %v5535
    %5577 = vmatpush.msra.mxu0 %v5532
    %5578 = vmatpush.msra.mxu0 %v5529
    %5579 = vmatpush.msra.mxu0 %v5526
    %5580 = vmatpush.msra.mxu0 %v5523
    %5581 = vmatpush.msra.mxu0 %v5520
    %5582 = vmatpush.msra.mxu0 %v5517
    %5583 = vmatpush.msra.mxu0 %v5514
    %5584 = vmatpush.msra.mxu0 %v5511
    %5585 = vmatpush.msra.mxu0 %v5508
    %5586 = vmatpush.msra.mxu0 %v5505
    %5587 = vmatpush.msra.mxu0 %v5502
    %5588 = vmatpush.msra.mxu0 %v5499
    %5589 = vmatpush.msra.mxu0 %v5496
    %5590 = vmatpush.msra.mxu0 %v5493
    %5591 = vmatpush.msra.mxu0 %v5490
    %5592 = vmatmul.f32.gmra.mxu0 %v5483
    %v5593 = vpop.f32.mrf.mxu0
    %v5594 = vadd.f32 0.0, %v5593
    %5595 = vdwg.mxu0
    %v5596 = vadd.f32 %v5485, %v5554
    %v5597 = vadd.f32 %v5486, %v5574
    %v5598 = vxor.u32 %v5596, 2147483648
    %v5599 = vxor.u32 %v5597, 2147483648
    %v5600 = vmul.f32 %v5598, 1.442695
    %v5601 = vpow.pop %v5600
    %v5602 = vmul.f32 %v5599, 1.442695
    %v5603 = vpow.pop %v5602
    %v5604 = vadd.f32 %v5601, 1.0
    %v5605 = vadd.f32 %v5603, 1.0
    %v5606 = vrcp.pop %v5604
    %v5607 = vmul.f32 %v5604, %v5606
    %v5608 = vsub.f32 1.0, %v5607
    %v5609 = vmul.f32 %v5606, %v5608
    %v5610 = vadd.f32 %v5606, %v5609
    %vm5611 = vweird.f32 %v5604
    %vm5612 = vweird.f32 %v5606
    %vm5613 = vmor %vm5611, %vm5612
    %v5614 = vsel %vm5613, %v5606, %v5610
    %v5615 = vand.u32 2147483647, %v5604
    %vm5616 = vcmp.eq.f32.partialorder %v5615, 8.507059e+37
    %v5617 = vand.u32 %v5604, 2147483648
    %v5618 = vor.u32 1.1754944e-38, %v5617
    %v5619 = vsel %vm5616, %v5618, %v5614
    %v5620 = vmul.f32 1.0, %v5619
    %v5621 = vrcp.pop %v5605
    %v5622 = vmul.f32 %v5605, %v5621
    %v5623 = vsub.f32 1.0, %v5622
    %v5624 = vmul.f32 %v5621, %v5623
    %v5625 = vadd.f32 %v5621, %v5624
    %vm5626 = vweird.f32 %v5605
    %vm5627 = vweird.f32 %v5621
    %vm5628 = vmor %vm5626, %vm5627
    %v5629 = vsel %vm5628, %v5621, %v5625
    %v5630 = vand.u32 2147483647, %v5605
    %vm5631 = vcmp.eq.f32.partialorder %v5630, 8.507059e+37
    %v5632 = vand.u32 %v5605, 2147483648
    %v5633 = vor.u32 1.1754944e-38, %v5632
    %v5634 = vsel %vm5631, %v5633, %v5629
    %v5635 = vmul.f32 1.0, %v5634
    %v5636 = vadd.f32 %v5594, %v4475
    %v5637 = vmul.f32 %v5620, %v5636
    %v5638 = vadd.f32 %v5487, %v5637
    %v5639 = vtanh.pop %v5638
    %v5640 = vsub.f32 1.0, %v5635
    %v5641 = vmul.f32 %v5640, %v5639
    %v5642 = vmul.f32 %v5635, %v5483
    %v5643 = vadd.f32 %v5641, %v5642
    %5644 = vst [vmem:[%s1485] sm:$0xff] %v5643
    %v5645 = vld [vmem:[%s5] sm:$0x1]
    %v5647 = vperm.slane %v5645, 0
    %v5649 = vmul.f32 %v5643, %v5647
    %5650 = vadd.xlane.f32.xlu0 %v5649
    %v5651 = vpop.xlane.xlu0 %5650
    %v5652 = vld [vmem:[#allocation4] sm:$0x1]
    %v5654 = vperm.slane %v5652, 0
    %v5656 = vadd.f32 %v5651, %v5654
    %vm5657 = vcmask 7168
    %5658 = vst.msk [vmem:[%s7] sm:$0xff] %vm5657, %v5656
    // Predicated region
    $region46: #{tpu_custom_call.1} parent=1 // pred_check
      _
    $region47: #{tpu_custom_call.1} parent=1 // pred_check_branch
      %5660 = sbr.rel (0) target = $region49
    $region48: #{tpu_custom_call.1} parent=1 // pred_region
      _
    $region49: #{tpu_custom_call.1} parent=1 // pred_fallthru
      _
    // Predicated region
    $region50: #{tpu_custom_call.1} parent=1 // pred_check
      _
    $region51: #{tpu_custom_call.1} parent=1 // pred_check_branch
      %5662 = sbr.rel (0) target = $region53
    $region52: #{tpu_custom_call.1} parent=1 // pred_region
      _
    $region53: #{tpu_custom_call.1} parent=1 // pred_fallthru
      _
    %5663 = vsyncpa [#allocation6], 1
    %5664 = vsyncpa [#allocation8], 1
    %5665 = vsyncpa [#allocation11], 1

</llo_original>
